<compile_context>
chip_gen: v6e
topology: v6e:2x2x1
jax: 0.10.0
libtpu: 0.0.40
codegen_flags: <defaults>
</compile_context>

<pallas_src>
import jax
import jax.numpy as jnp
from jax.experimental import pallas as pl
from jax.experimental.pallas import tpu as pltpu

C = 64        # fixed by the module (GenConvBlock(64, 64, ...))
EPS = 1e-5    # BatchNorm eps (PyTorch default)


def _round_up(x, m):
    return (x + m - 1) // m * m


def _pick_chunk_rows(H):
    """Image rows per M-chunk. Whole image when small, else the largest
    divisor of H among (8, 4, 2, 1) -- bigger M keeps the MXU streaming."""
    if H <= 16:
        return H
    for r in (8, 4, 2, 1):
        if H % r == 0:
            return r
    return 1


def _build_kernel(H, W, R):
    S = _round_up(W + 2, 8)          # padded-row stride (multiple of 8 sublanes)
    LEAD = (-(S + 1)) % 8            # makes IBASE (interior start) 8-aligned
    IBASE = LEAD + S + 1             # flat row of padded pixel (1,1) == image (0,0)
    MB = R * S                       # slab rows per chunk
    NCH = H // R                     # number of chunks
    CW = R * W                       # compact output columns per chunk
    ROWS = _round_up(LEAD + (H + 2) * S + 2, 8)   # +2: overrun of the (2,2) tap slice
    BOT = IBASE + H * S              # first flat row past the interior block

    def kernel(x_ref, w1_ref, b1_ref, w2_ref, b2_ref,
               o_ref, xpad_ref, hpad_ref):
        f32 = jnp.float32

        # ---- padded input slab: halo-only zeroing + one-shot interior store ----
        xpad_ref[0:IBASE, :] = jnp.zeros((IBASE, C), f32)
        xpad_ref[BOT:ROWS, :] = jnp.zeros((ROWS - BOT, C), f32)

        xt = jnp.transpose(x_ref[0])                       # (C, H*W) -> (H*W, C)
        if (W % 8) == 0:
            # single aligned contiguous store of the whole interior
            gap = jnp.zeros((H, S - W, C), f32)
            xpad_ref[IBASE:BOT, :] = jnp.concatenate(
                [xt.reshape(H, W, C), gap], axis=1).reshape(H * S, C)
        else:
            # TODO(synk): non-8-multiple W falls back to the per-row store path.
            xpad_ref[IBASE:BOT, :] = jnp.zeros((H * S, C), f32)
            for y in range(H):
                xpad_ref[IBASE + y * S: IBASE + y * S + W, :] = xt[y * W:(y + 1) * W, :]

        # ---- intermediate slab: zero only the top/bottom halo strips ----
        hpad_ref[0:IBASE, :] = jnp.zeros((IBASE, C), f32)
        hpad_ref[BOT:ROWS, :] = jnp.zeros((ROWS - BOT, C), f32)

        # ---- in-kernel 0/1 column mask: 1.0 for real cols, 0.0 for pad/gap cols
        col = jax.lax.broadcasted_iota(jnp.int32, (R, S, C), 1)
        msk = (col < W).astype(f32).reshape(MB, C)

        b1 = b1_ref[0]
        b2 = b2_ref[0]

        # ---- conv1 (+ folded BN) + ReLU: 9 shifted MXU matmuls per row chunk ----
        # (NCH is 1 at the tested size; kept as a static loop -- switch to
        #  lax.fori_loop if NCH grows large.)
        for c in range(NCH):
            base = c * MB
            acc = jnp.dot(xpad_ref[LEAD + base: LEAD + base + MB, :], w1_ref[0],
                          preferred_element_type=f32)
            for t in range(1, 9):
                dy, dx = t // 3, t % 3
                src = LEAD + dy * S + dx + base
                acc = acc + jnp.dot(xpad_ref[src:src + MB, :], w1_ref[t],
                                    preferred_element_type=f32)
            h = jnp.maximum(acc + b1, 0.0) * msk            # mask zeroes the pad columns
            hpad_ref[IBASE + base: IBASE + base + MB, :] = h   # aligned contiguous store

        # ---- conv2 (+ folded BN) + residual, direct lane-dense output store ----
        for c in range(NCH):
            base = c * MB
            acc = jnp.dot(hpad_ref[LEAD + base: LEAD + base + MB, :], w2_ref[0],
                          preferred_element_type=f32)
            for t in range(1, 9):
                dy, dx = t // 3, t % 3
                src = LEAD + dy * S + dx + base
                acc = acc + jnp.dot(hpad_ref[src:src + MB, :], w2_ref[t],
                                    preferred_element_type=f32)
            # residual comes straight from the padded-input slab interior
            y2 = acc + b2 + xpad_ref[IBASE + base: IBASE + base + MB, :]
            # drop the pad columns: (MB, C) -> (R, S, C) -> (R, W, C) -> (R*W, C)
            y3 = y2.reshape(R, S, C)[:, :W, :].reshape(CW, C)
            # transpose once and store straight into the (C, H*W) NCHW block
            o_ref[0, :, c * CW:(c + 1) * CW] = jnp.transpose(y3)

    return kernel, ROWS, MB


def residual_block_pallas(x_nchw, w1, b1, w2, b2):
    """x_nchw: (B, 64, H, W) float32; returns (B, 64, H, W) float32."""
    B, Cin, H, W = x_nchw.shape
    assert Cin == C
    R = _pick_chunk_rows(H)
    kernel, ROWS, MB = _build_kernel(H, W, R)
    HW = H * W

    # VMEM budget guard: 2 slabs + double-buffered in/out blocks + weights.
    est_bytes = 4 * (2 * ROWS * C          # padded input + intermediate slabs
                     + 4 * C * HW          # in/out blocks, double-buffered
                     + 4 * 9 * C * C       # two weight blocks, double-buffered
                     + 4 * C)              # biases
    assert est_bytes < 48 * 1024 * 1024, (
        "image too large for whole-image slabs; add an H-chunk grid axis")
    vmem_limit = int(min(max(2 * est_bytes, 16 * 1024 * 1024), 56 * 1024 * 1024))

    x2 = x_nchw.reshape(B, Cin, HW)          # free reshape, data stays NCHW in HBM

    out = pl.pallas_call(
        kernel,
        out_shape=jax.ShapeDtypeStruct((B, Cin, HW), jnp.float32),
        grid_spec=pltpu.PrefetchScalarGridSpec(
            num_scalar_prefetch=0,
            grid=(B,),                       # B>=2 keeps both v7x TensorCores busy
            in_specs=[
                pl.BlockSpec((1, Cin, HW), lambda b: (b, 0, 0)),
                pl.BlockSpec((9, Cin, Cin), lambda b: (0, 0, 0)),
                pl.BlockSpec((1, Cin), lambda b: (0, 0)),
                pl.BlockSpec((9, Cin, Cin), lambda b: (0, 0, 0)),
                pl.BlockSpec((1, Cin), lambda b: (0, 0)),
            ],
            out_specs=pl.BlockSpec((1, Cin, HW), lambda b: (b, 0, 0)),
            scratch_shapes=[
                pltpu.VMEM((ROWS, Cin), jnp.float32),   # padded input slab (flat)
                pltpu.VMEM((ROWS, Cin), jnp.float32),   # padded intermediate slab (flat)
            ],
        ),
        compiler_params=pltpu.CompilerParams(
            dimension_semantics=("parallel",),
            vmem_limit_bytes=vmem_limit),
    )(x2, w1, b1, w2, b2)

    return out.reshape(B, Cin, H, W)


# ------------------------- parameter construction -------------------------

def _init_genconv_params(key):
    """One GenConvBlock: Conv2d(64,64,3,1,1) + BatchNorm2d(64) (eval stats)."""
    k_w, k_b, k_g, k_be, k_m, k_v = jax.random.split(key, 6)
    fan_in = C * 3 * 3
    w = jax.random.normal(k_w, (C, C, 3, 3), jnp.float32) / jnp.sqrt(fan_in)  # OIHW
    conv_b = 0.05 * jax.random.normal(k_b, (C,), jnp.float32)
    gamma = 0.5 + jax.random.uniform(k_g, (C,), jnp.float32)
    beta = 0.1 * jax.random.normal(k_be, (C,), jnp.float32)
    run_mean = 0.1 * jax.random.normal(k_m, (C,), jnp.float32)
    run_var = 0.5 + jax.random.uniform(k_v, (C,), jnp.float32)
    return w, conv_b, gamma, beta, run_mean, run_var


def _fold_for_kernel(w, conv_b, gamma, beta, run_mean, run_var):
    # BN scale folded into the conv weights; tap layout (9, Cin, Cout), t = dy*3+dx.
    scale = gamma / jnp.sqrt(run_var + EPS)                 # (Cout,)
    w_scaled = w * scale[:, None, None, None]               # OIHW, scaled per out-channel
    w_k = jnp.transpose(w_scaled, (2, 3, 1, 0)).reshape(9, C, C)
    bias = beta + scale * (conv_b - run_mean)
    return w_k, bias.reshape(1, C)


# ------------------------- pure-JAX reference -------------------------

def _ref_forward(x_nchw, p1, p2):
    def conv_bn(x, p, relu):
        w, conv_b, g, be, m, v = p
        y = jax.lax.conv_general_dilated(
            x, w, window_strides=(1, 1), padding=((1, 1), (1, 1)),
            dimension_numbers=("NCHW", "OIHW", "NCHW"))
        y = y + conv_b[None, :, None, None]
        y = g[None, :, None, None] * (y - m[None, :, None, None]) \
            / jnp.sqrt(v[None, :, None, None] + EPS) + be[None, :, None, None]
        return jnp.maximum(y, 0.0) if relu else y

    h = conv_bn(x_nchw, p1, relu=True)
    y = conv_bn(h, p2, relu=False)
    return x_nchw + y


# ------------------------- main -------------------------

if __name__ == "__main__":
    key = jax.random.PRNGKey(0)
    k_x, k_p1, k_p2 = jax.random.split(key, 3)

    B, H, W = 2, 16, 16
    x = jax.random.normal(k_x, (B, C, H, W), jnp.float32)   # [batch, 64, 16, 16]

    p1 = _init_genconv_params(k_p1)
    p2 = _init_genconv_params(k_p2)
    w1, b1 = _fold_for_kernel(*p1)
    w2, b2 = _fold_for_kernel(*p2)

    run = jax.jit(residual_block_pallas)
    out = jax.block_until_ready(run(x, w1, b1, w2, b2))

    ref = _ref_forward(x, p1, p2)
    assert out.shape == x.shape
    err = jnp.max(jnp.abs(out - ref))
    assert jnp.allclose(out, ref, rtol=2e-4, atol=2e-4), f"max abs err = {err}"

    print("KERNEL_OK")
</pallas_src>

<mosaic_0001>
module attributes {stable_mosaic.version = 11 : i64} {
  func.func @kernel(%arg0: i32, %arg1: memref<1x64x256xf32, #tpu.memory_space<vmem>>, %arg2: memref<9x64x64xf32, #tpu.memory_space<vmem>>, %arg3: memref<1x64xf32, #tpu.memory_space<vmem>>, %arg4: memref<9x64x64xf32, #tpu.memory_space<vmem>>, %arg5: memref<1x64xf32, #tpu.memory_space<vmem>>, %arg6: memref<1x64x256xf32, #tpu.memory_space<vmem>>, %arg7: memref<448x64xf32, #tpu.memory_space<vmem>>, %arg8: memref<448x64xf32, #tpu.memory_space<vmem>>) attributes {dimension_semantics = [#tpu.dimension_semantics<parallel>], iteration_bounds = array<i64: 2>, scalar_prefetch = 0 : i64, scratch_operands = 2 : i64, tpu.core_type = #tpu.core_type<tc>, window_params = [{transform_indices = @transform_0, window_bounds = array<i64: 1, 64, 256>}, {pipeline_mode = #tpu.pipeline_mode<synchronous>, transform_indices = @transform_1, window_bounds = array<i64: 9, 64, 64>}, {pipeline_mode = #tpu.pipeline_mode<synchronous>, transform_indices = @transform_2, window_bounds = array<i64: 1, 64>}, {pipeline_mode = #tpu.pipeline_mode<synchronous>, transform_indices = @transform_3, window_bounds = array<i64: 9, 64, 64>}, {pipeline_mode = #tpu.pipeline_mode<synchronous>, transform_indices = @transform_4, window_bounds = array<i64: 1, 64>}, {transform_indices = @transform_5, window_bounds = array<i64: 1, 64, 256>}]} {
    %cst = arith.constant 0.000000e+00 : f32
    %0 = vector.broadcast %cst : f32 to vector<32x64xf32>
    %c0 = arith.constant 0 : index
    %c0_0 = arith.constant 0 : index
    %1 = vector.load %arg7[%c0, %c0_0] : memref<448x64xf32, #tpu.memory_space<vmem>>, vector<32x64xf32>
    tpu.vector_store %arg7[%c0, %c0_0], %0 {strides = array<i32>} : memref<448x64xf32, #tpu.memory_space<vmem>>, vector<32x64xf32>,
    %cst_1 = arith.constant 0.000000e+00 : f32
    %2 = vector.broadcast %cst_1 : f32 to vector<32x64xf32>
    %c416 = arith.constant 416 : index
    %c0_2 = arith.constant 0 : index
    %3 = vector.load %arg7[%c416, %c0_2] : memref<448x64xf32, #tpu.memory_space<vmem>>, vector<32x64xf32>
    tpu.vector_store %arg7[%c416, %c0_2], %2 {strides = array<i32>} : memref<448x64xf32, #tpu.memory_space<vmem>>, vector<32x64xf32>,
    %c0_3 = arith.constant 0 : index
    %c0_4 = arith.constant 0 : index
    %c0_5 = arith.constant 0 : index
    %4 = vector.load %arg1[%c0_3, %c0_4, %c0_5] : memref<1x64x256xf32, #tpu.memory_space<vmem>>, vector<1x64x256xf32>
    %5 = vector.shape_cast %4 : vector<1x64x256xf32> to vector<64x256xf32>
    %6 = tpu.transpose %5, [1, 0] : vector<64x256xf32> -> vector<256x64xf32>
    %cst_6 = arith.constant 0.000000e+00 : f32
    %7 = vector.broadcast %cst_6 : f32 to vector<16x8x64xf32>
    %8 = vector.shape_cast %6 : vector<256x64xf32> to vector<16x16x64xf32>
    %9 = tpu.concatenate %8, %7 in 1 : vector<16x16x64xf32>, vector<16x8x64xf32> -> vector<16x24x64xf32>
    %10 = vector.shape_cast %9 : vector<16x24x64xf32> to vector<384x64xf32>
    %c32 = arith.constant 32 : index
    %c0_7 = arith.constant 0 : index
    %11 = vector.load %arg7[%c32, %c0_7] : memref<448x64xf32, #tpu.memory_space<vmem>>, vector<384x64xf32>
    tpu.vector_store %arg7[%c32, %c0_7], %10 {strides = array<i32>} : memref<448x64xf32, #tpu.memory_space<vmem>>, vector<384x64xf32>,
    %cst_8 = arith.constant 0.000000e+00 : f32
    %12 = vector.broadcast %cst_8 : f32 to vector<32x64xf32>
    %c0_9 = arith.constant 0 : index
    %c0_10 = arith.constant 0 : index
    %13 = vector.load %arg8[%c0_9, %c0_10] : memref<448x64xf32, #tpu.memory_space<vmem>>, vector<32x64xf32>
    tpu.vector_store %arg8[%c0_9, %c0_10], %12 {strides = array<i32>} : memref<448x64xf32, #tpu.memory_space<vmem>>, vector<32x64xf32>,
    %cst_11 = arith.constant 0.000000e+00 : f32
    %14 = vector.broadcast %cst_11 : f32 to vector<32x64xf32>
    %c416_12 = arith.constant 416 : index
    %c0_13 = arith.constant 0 : index
    %15 = vector.load %arg8[%c416_12, %c0_13] : memref<448x64xf32, #tpu.memory_space<vmem>>, vector<32x64xf32>
    tpu.vector_store %arg8[%c416_12, %c0_13], %14 {strides = array<i32>} : memref<448x64xf32, #tpu.memory_space<vmem>>, vector<32x64xf32>,
    %16 = tpu.iota {dimensions = array<i32: 1>} : vector<16x24x64xi32>
    %c16_i32 = arith.constant 16 : i32
    %17 = vector.broadcast %c16_i32 : i32 to vector<16x24x64xi32>
    %18 = arith.cmpi slt, %16, %17 : vector<16x24x64xi32>
    %19 = arith.extui %18 : vector<16x24x64xi1> to vector<16x24x64xi32>
    %20 = arith.sitofp %19 : vector<16x24x64xi32> to vector<16x24x64xf32>
    %21 = vector.shape_cast %20 : vector<16x24x64xf32> to vector<384x64xf32>
    %c0_14 = arith.constant 0 : index
    %c0_15 = arith.constant 0 : index
    %22 = vector.load %arg3[%c0_14, %c0_15] : memref<1x64xf32, #tpu.memory_space<vmem>>, vector<1x64xf32>
    %23 = vector.shape_cast %22 : vector<1x64xf32> to vector<64xf32>
    %c0_16 = arith.constant 0 : index
    %c0_17 = arith.constant 0 : index
    %24 = vector.load %arg5[%c0_16, %c0_17] : memref<1x64xf32, #tpu.memory_space<vmem>>, vector<1x64xf32>
    %25 = vector.shape_cast %24 : vector<1x64xf32> to vector<64xf32>
    %c7 = arith.constant 7 : index
    %c0_18 = arith.constant 0 : index
    %26 = vector.load %arg7[%c7, %c0_18] : memref<448x64xf32, #tpu.memory_space<vmem>>, vector<384x64xf32>
    %c0_19 = arith.constant 0 : index
    %c0_20 = arith.constant 0 : index
    %c0_21 = arith.constant 0 : index
    %27 = vector.load %arg2[%c0_19, %c0_20, %c0_21] : memref<9x64x64xf32, #tpu.memory_space<vmem>>, vector<1x64x64xf32>
    %28 = vector.shape_cast %27 : vector<1x64x64xf32> to vector<64x64xf32>
    %cst_22 = arith.constant dense<0.000000e+00> : vector<384x64xf32>
    %29 = tpu.matmul %26, %28, %cst_22 {dimension_numbers = #tpu.dot_dimension_numbers<[1], [0], [0], [1], [0, 0, 1, 1], [], []>} : vector<384x64xf32>, vector<64x64xf32>, vector<384x64xf32> -> vector<384x64xf32>
    %c8 = arith.constant 8 : index
    %c0_23 = arith.constant 0 : index
    %30 = vector.load %arg7[%c8, %c0_23] : memref<448x64xf32, #tpu.memory_space<vmem>>, vector<384x64xf32>
    %c1 = arith.constant 1 : index
    %c0_24 = arith.constant 0 : index
    %c0_25 = arith.constant 0 : index
    %31 = vector.load %arg2[%c1, %c0_24, %c0_25] : memref<9x64x64xf32, #tpu.memory_space<vmem>>, vector<1x64x64xf32>
    %32 = vector.shape_cast %31 : vector<1x64x64xf32> to vector<64x64xf32>
    %cst_26 = arith.constant dense<0.000000e+00> : vector<384x64xf32>
    %33 = tpu.matmul %30, %32, %cst_26 {dimension_numbers = #tpu.dot_dimension_numbers<[1], [0], [0], [1], [0, 0, 1, 1], [], []>} : vector<384x64xf32>, vector<64x64xf32>, vector<384x64xf32> -> vector<384x64xf32>
    %34 = arith.addf %29, %33 : vector<384x64xf32>
    %c9 = arith.constant 9 : index
    %c0_27 = arith.constant 0 : index
    %35 = vector.load %arg7[%c9, %c0_27] : memref<448x64xf32, #tpu.memory_space<vmem>>, vector<384x64xf32>
    %c2 = arith.constant 2 : index
    %c0_28 = arith.constant 0 : index
    %c0_29 = arith.constant 0 : index
    %36 = vector.load %arg2[%c2, %c0_28, %c0_29] : memref<9x64x64xf32, #tpu.memory_space<vmem>>, vector<1x64x64xf32>
    %37 = vector.shape_cast %36 : vector<1x64x64xf32> to vector<64x64xf32>
    %cst_30 = arith.constant dense<0.000000e+00> : vector<384x64xf32>
    %38 = tpu.matmul %35, %37, %cst_30 {dimension_numbers = #tpu.dot_dimension_numbers<[1], [0], [0], [1], [0, 0, 1, 1], [], []>} : vector<384x64xf32>, vector<64x64xf32>, vector<384x64xf32> -> vector<384x64xf32>
    %39 = arith.addf %34, %38 : vector<384x64xf32>
    %c31 = arith.constant 31 : index
    %c0_31 = arith.constant 0 : index
    %40 = vector.load %arg7[%c31, %c0_31] : memref<448x64xf32, #tpu.memory_space<vmem>>, vector<384x64xf32>
    %c3 = arith.constant 3 : index
    %c0_32 = arith.constant 0 : index
    %c0_33 = arith.constant 0 : index
    %41 = vector.load %arg2[%c3, %c0_32, %c0_33] : memref<9x64x64xf32, #tpu.memory_space<vmem>>, vector<1x64x64xf32>
    %42 = vector.shape_cast %41 : vector<1x64x64xf32> to vector<64x64xf32>
    %cst_34 = arith.constant dense<0.000000e+00> : vector<384x64xf32>
    %43 = tpu.matmul %40, %42, %cst_34 {dimension_numbers = #tpu.dot_dimension_numbers<[1], [0], [0], [1], [0, 0, 1, 1], [], []>} : vector<384x64xf32>, vector<64x64xf32>, vector<384x64xf32> -> vector<384x64xf32>
    %44 = arith.addf %39, %43 : vector<384x64xf32>
    %c32_35 = arith.constant 32 : index
    %c0_36 = arith.constant 0 : index
    %45 = vector.load %arg7[%c32_35, %c0_36] : memref<448x64xf32, #tpu.memory_space<vmem>>, vector<384x64xf32>
    %c4 = arith.constant 4 : index
    %c0_37 = arith.constant 0 : index
    %c0_38 = arith.constant 0 : index
    %46 = vector.load %arg2[%c4, %c0_37, %c0_38] : memref<9x64x64xf32, #tpu.memory_space<vmem>>, vector<1x64x64xf32>
    %47 = vector.shape_cast %46 : vector<1x64x64xf32> to vector<64x64xf32>
    %cst_39 = arith.constant dense<0.000000e+00> : vector<384x64xf32>
    %48 = tpu.matmul %45, %47, %cst_39 {dimension_numbers = #tpu.dot_dimension_numbers<[1], [0], [0], [1], [0, 0, 1, 1], [], []>} : vector<384x64xf32>, vector<64x64xf32>, vector<384x64xf32> -> vector<384x64xf32>
    %49 = arith.addf %44, %48 : vector<384x64xf32>
    %c33 = arith.constant 33 : index
    %c0_40 = arith.constant 0 : index
    %50 = vector.load %arg7[%c33, %c0_40] : memref<448x64xf32, #tpu.memory_space<vmem>>, vector<384x64xf32>
    %c5 = arith.constant 5 : index
    %c0_41 = arith.constant 0 : index
    %c0_42 = arith.constant 0 : index
    %51 = vector.load %arg2[%c5, %c0_41, %c0_42] : memref<9x64x64xf32, #tpu.memory_space<vmem>>, vector<1x64x64xf32>
    %52 = vector.shape_cast %51 : vector<1x64x64xf32> to vector<64x64xf32>
    %cst_43 = arith.constant dense<0.000000e+00> : vector<384x64xf32>
    %53 = tpu.matmul %50, %52, %cst_43 {dimension_numbers = #tpu.dot_dimension_numbers<[1], [0], [0], [1], [0, 0, 1, 1], [], []>} : vector<384x64xf32>, vector<64x64xf32>, vector<384x64xf32> -> vector<384x64xf32>
    %54 = arith.addf %49, %53 : vector<384x64xf32>
    %c55 = arith.constant 55 : index
    %c0_44 = arith.constant 0 : index
    %55 = vector.load %arg7[%c55, %c0_44] : memref<448x64xf32, #tpu.memory_space<vmem>>, vector<384x64xf32>
    %c6 = arith.constant 6 : index
    %c0_45 = arith.constant 0 : index
    %c0_46 = arith.constant 0 : index
    %56 = vector.load %arg2[%c6, %c0_45, %c0_46] : memref<9x64x64xf32, #tpu.memory_space<vmem>>, vector<1x64x64xf32>
    %57 = vector.shape_cast %56 : vector<1x64x64xf32> to vector<64x64xf32>
    %cst_47 = arith.constant dense<0.000000e+00> : vector<384x64xf32>
    %58 = tpu.matmul %55, %57, %cst_47 {dimension_numbers = #tpu.dot_dimension_numbers<[1], [0], [0], [1], [0, 0, 1, 1], [], []>} : vector<384x64xf32>, vector<64x64xf32>, vector<384x64xf32> -> vector<384x64xf32>
    %59 = arith.addf %54, %58 : vector<384x64xf32>
    %c56 = arith.constant 56 : index
    %c0_48 = arith.constant 0 : index
    %60 = vector.load %arg7[%c56, %c0_48] : memref<448x64xf32, #tpu.memory_space<vmem>>, vector<384x64xf32>
    %c7_49 = arith.constant 7 : index
    %c0_50 = arith.constant 0 : index
    %c0_51 = arith.constant 0 : index
    %61 = vector.load %arg2[%c7_49, %c0_50, %c0_51] : memref<9x64x64xf32, #tpu.memory_space<vmem>>, vector<1x64x64xf32>
    %62 = vector.shape_cast %61 : vector<1x64x64xf32> to vector<64x64xf32>
    %cst_52 = arith.constant dense<0.000000e+00> : vector<384x64xf32>
    %63 = tpu.matmul %60, %62, %cst_52 {dimension_numbers = #tpu.dot_dimension_numbers<[1], [0], [0], [1], [0, 0, 1, 1], [], []>} : vector<384x64xf32>, vector<64x64xf32>, vector<384x64xf32> -> vector<384x64xf32>
    %64 = arith.addf %59, %63 : vector<384x64xf32>
    %c57 = arith.constant 57 : index
    %c0_53 = arith.constant 0 : index
    %65 = vector.load %arg7[%c57, %c0_53] : memref<448x64xf32, #tpu.memory_space<vmem>>, vector<384x64xf32>
    %c8_54 = arith.constant 8 : index
    %c0_55 = arith.constant 0 : index
    %c0_56 = arith.constant 0 : index
    %66 = vector.load %arg2[%c8_54, %c0_55, %c0_56] : memref<9x64x64xf32, #tpu.memory_space<vmem>>, vector<1x64x64xf32>
    %67 = vector.shape_cast %66 : vector<1x64x64xf32> to vector<64x64xf32>
    %cst_57 = arith.constant dense<0.000000e+00> : vector<384x64xf32>
    %68 = tpu.matmul %65, %67, %cst_57 {dimension_numbers = #tpu.dot_dimension_numbers<[1], [0], [0], [1], [0, 0, 1, 1], [], []>} : vector<384x64xf32>, vector<64x64xf32>, vector<384x64xf32> -> vector<384x64xf32>
    %69 = arith.addf %64, %68 : vector<384x64xf32>
    %70 = vector.shape_cast %23 : vector<64xf32> to vector<1x64xf32>
    %71 = vector.broadcast %70 : vector<1x64xf32> to vector<384x64xf32>
    %72 = arith.addf %69, %71 : vector<384x64xf32>
    %cst_58 = arith.constant 0.000000e+00 : f32
    %73 = vector.broadcast %cst_58 : f32 to vector<384x64xf32>
    %74 = arith.maximumf %72, %73 : vector<384x64xf32>
    %75 = arith.mulf %74, %21 : vector<384x64xf32>
    %c32_59 = arith.constant 32 : index
    %c0_60 = arith.constant 0 : index
    %76 = vector.load %arg8[%c32_59, %c0_60] : memref<448x64xf32, #tpu.memory_space<vmem>>, vector<384x64xf32>
    tpu.vector_store %arg8[%c32_59, %c0_60], %75 {strides = array<i32>} : memref<448x64xf32, #tpu.memory_space<vmem>>, vector<384x64xf32>,
    %c7_61 = arith.constant 7 : index
    %c0_62 = arith.constant 0 : index
    %77 = vector.load %arg8[%c7_61, %c0_62] : memref<448x64xf32, #tpu.memory_space<vmem>>, vector<384x64xf32>
    %c0_63 = arith.constant 0 : index
    %c0_64 = arith.constant 0 : index
    %c0_65 = arith.constant 0 : index
    %78 = vector.load %arg4[%c0_63, %c0_64, %c0_65] : memref<9x64x64xf32, #tpu.memory_space<vmem>>, vector<1x64x64xf32>
    %79 = vector.shape_cast %78 : vector<1x64x64xf32> to vector<64x64xf32>
    %cst_66 = arith.constant dense<0.000000e+00> : vector<384x64xf32>
    %80 = tpu.matmul %77, %79, %cst_66 {dimension_numbers = #tpu.dot_dimension_numbers<[1], [0], [0], [1], [0, 0, 1, 1], [], []>} : vector<384x64xf32>, vector<64x64xf32>, vector<384x64xf32> -> vector<384x64xf32>
    %c8_67 = arith.constant 8 : index
    %c0_68 = arith.constant 0 : index
    %81 = vector.load %arg8[%c8_67, %c0_68] : memref<448x64xf32, #tpu.memory_space<vmem>>, vector<384x64xf32>
    %c1_69 = arith.constant 1 : index
    %c0_70 = arith.constant 0 : index
    %c0_71 = arith.constant 0 : index
    %82 = vector.load %arg4[%c1_69, %c0_70, %c0_71] : memref<9x64x64xf32, #tpu.memory_space<vmem>>, vector<1x64x64xf32>
    %83 = vector.shape_cast %82 : vector<1x64x64xf32> to vector<64x64xf32>
    %cst_72 = arith.constant dense<0.000000e+00> : vector<384x64xf32>
    %84 = tpu.matmul %81, %83, %cst_72 {dimension_numbers = #tpu.dot_dimension_numbers<[1], [0], [0], [1], [0, 0, 1, 1], [], []>} : vector<384x64xf32>, vector<64x64xf32>, vector<384x64xf32> -> vector<384x64xf32>
    %85 = arith.addf %80, %84 : vector<384x64xf32>
    %c9_73 = arith.constant 9 : index
    %c0_74 = arith.constant 0 : index
    %86 = vector.load %arg8[%c9_73, %c0_74] : memref<448x64xf32, #tpu.memory_space<vmem>>, vector<384x64xf32>
    %c2_75 = arith.constant 2 : index
    %c0_76 = arith.constant 0 : index
    %c0_77 = arith.constant 0 : index
    %87 = vector.load %arg4[%c2_75, %c0_76, %c0_77] : memref<9x64x64xf32, #tpu.memory_space<vmem>>, vector<1x64x64xf32>
    %88 = vector.shape_cast %87 : vector<1x64x64xf32> to vector<64x64xf32>
    %cst_78 = arith.constant dense<0.000000e+00> : vector<384x64xf32>
    %89 = tpu.matmul %86, %88, %cst_78 {dimension_numbers = #tpu.dot_dimension_numbers<[1], [0], [0], [1], [0, 0, 1, 1], [], []>} : vector<384x64xf32>, vector<64x64xf32>, vector<384x64xf32> -> vector<384x64xf32>
    %90 = arith.addf %85, %89 : vector<384x64xf32>
    %c31_79 = arith.constant 31 : index
    %c0_80 = arith.constant 0 : index
    %91 = vector.load %arg8[%c31_79, %c0_80] : memref<448x64xf32, #tpu.memory_space<vmem>>, vector<384x64xf32>
    %c3_81 = arith.constant 3 : index
    %c0_82 = arith.constant 0 : index
    %c0_83 = arith.constant 0 : index
    %92 = vector.load %arg4[%c3_81, %c0_82, %c0_83] : memref<9x64x64xf32, #tpu.memory_space<vmem>>, vector<1x64x64xf32>
    %93 = vector.shape_cast %92 : vector<1x64x64xf32> to vector<64x64xf32>
    %cst_84 = arith.constant dense<0.000000e+00> : vector<384x64xf32>
    %94 = tpu.matmul %91, %93, %cst_84 {dimension_numbers = #tpu.dot_dimension_numbers<[1], [0], [0], [1], [0, 0, 1, 1], [], []>} : vector<384x64xf32>, vector<64x64xf32>, vector<384x64xf32> -> vector<384x64xf32>
    %95 = arith.addf %90, %94 : vector<384x64xf32>
    %c32_85 = arith.constant 32 : index
    %c0_86 = arith.constant 0 : index
    %96 = vector.load %arg8[%c32_85, %c0_86] : memref<448x64xf32, #tpu.memory_space<vmem>>, vector<384x64xf32>
    %c4_87 = arith.constant 4 : index
    %c0_88 = arith.constant 0 : index
    %c0_89 = arith.constant 0 : index
    %97 = vector.load %arg4[%c4_87, %c0_88, %c0_89] : memref<9x64x64xf32, #tpu.memory_space<vmem>>, vector<1x64x64xf32>
    %98 = vector.shape_cast %97 : vector<1x64x64xf32> to vector<64x64xf32>
    %cst_90 = arith.constant dense<0.000000e+00> : vector<384x64xf32>
    %99 = tpu.matmul %96, %98, %cst_90 {dimension_numbers = #tpu.dot_dimension_numbers<[1], [0], [0], [1], [0, 0, 1, 1], [], []>} : vector<384x64xf32>, vector<64x64xf32>, vector<384x64xf32> -> vector<384x64xf32>
    %100 = arith.addf %95, %99 : vector<384x64xf32>
    %c33_91 = arith.constant 33 : index
    %c0_92 = arith.constant 0 : index
    %101 = vector.load %arg8[%c33_91, %c0_92] : memref<448x64xf32, #tpu.memory_space<vmem>>, vector<384x64xf32>
    %c5_93 = arith.constant 5 : index
    %c0_94 = arith.constant 0 : index
    %c0_95 = arith.constant 0 : index
    %102 = vector.load %arg4[%c5_93, %c0_94, %c0_95] : memref<9x64x64xf32, #tpu.memory_space<vmem>>, vector<1x64x64xf32>
    %103 = vector.shape_cast %102 : vector<1x64x64xf32> to vector<64x64xf32>
    %cst_96 = arith.constant dense<0.000000e+00> : vector<384x64xf32>
    %104 = tpu.matmul %101, %103, %cst_96 {dimension_numbers = #tpu.dot_dimension_numbers<[1], [0], [0], [1], [0, 0, 1, 1], [], []>} : vector<384x64xf32>, vector<64x64xf32>, vector<384x64xf32> -> vector<384x64xf32>
    %105 = arith.addf %100, %104 : vector<384x64xf32>
    %c55_97 = arith.constant 55 : index
    %c0_98 = arith.constant 0 : index
    %106 = vector.load %arg8[%c55_97, %c0_98] : memref<448x64xf32, #tpu.memory_space<vmem>>, vector<384x64xf32>
    %c6_99 = arith.constant 6 : index
    %c0_100 = arith.constant 0 : index
    %c0_101 = arith.constant 0 : index
    %107 = vector.load %arg4[%c6_99, %c0_100, %c0_101] : memref<9x64x64xf32, #tpu.memory_space<vmem>>, vector<1x64x64xf32>
    %108 = vector.shape_cast %107 : vector<1x64x64xf32> to vector<64x64xf32>
    %cst_102 = arith.constant dense<0.000000e+00> : vector<384x64xf32>
    %109 = tpu.matmul %106, %108, %cst_102 {dimension_numbers = #tpu.dot_dimension_numbers<[1], [0], [0], [1], [0, 0, 1, 1], [], []>} : vector<384x64xf32>, vector<64x64xf32>, vector<384x64xf32> -> vector<384x64xf32>
    %110 = arith.addf %105, %109 : vector<384x64xf32>
    %c56_103 = arith.constant 56 : index
    %c0_104 = arith.constant 0 : index
    %111 = vector.load %arg8[%c56_103, %c0_104] : memref<448x64xf32, #tpu.memory_space<vmem>>, vector<384x64xf32>
    %c7_105 = arith.constant 7 : index
    %c0_106 = arith.constant 0 : index
    %c0_107 = arith.constant 0 : index
    %112 = vector.load %arg4[%c7_105, %c0_106, %c0_107] : memref<9x64x64xf32, #tpu.memory_space<vmem>>, vector<1x64x64xf32>
    %113 = vector.shape_cast %112 : vector<1x64x64xf32> to vector<64x64xf32>
    %cst_108 = arith.constant dense<0.000000e+00> : vector<384x64xf32>
    %114 = tpu.matmul %111, %113, %cst_108 {dimension_numbers = #tpu.dot_dimension_numbers<[1], [0], [0], [1], [0, 0, 1, 1], [], []>} : vector<384x64xf32>, vector<64x64xf32>, vector<384x64xf32> -> vector<384x64xf32>
    %115 = arith.addf %110, %114 : vector<384x64xf32>
    %c57_109 = arith.constant 57 : index
    %c0_110 = arith.constant 0 : index
    %116 = vector.load %arg8[%c57_109, %c0_110] : memref<448x64xf32, #tpu.memory_space<vmem>>, vector<384x64xf32>
    %c8_111 = arith.constant 8 : index
    %c0_112 = arith.constant 0 : index
    %c0_113 = arith.constant 0 : index
    %117 = vector.load %arg4[%c8_111, %c0_112, %c0_113] : memref<9x64x64xf32, #tpu.memory_space<vmem>>, vector<1x64x64xf32>
    %118 = vector.shape_cast %117 : vector<1x64x64xf32> to vector<64x64xf32>
    %cst_114 = arith.constant dense<0.000000e+00> : vector<384x64xf32>
    %119 = tpu.matmul %116, %118, %cst_114 {dimension_numbers = #tpu.dot_dimension_numbers<[1], [0], [0], [1], [0, 0, 1, 1], [], []>} : vector<384x64xf32>, vector<64x64xf32>, vector<384x64xf32> -> vector<384x64xf32>
    %120 = arith.addf %115, %119 : vector<384x64xf32>
    %121 = vector.shape_cast %25 : vector<64xf32> to vector<1x64xf32>
    %122 = vector.broadcast %121 : vector<1x64xf32> to vector<384x64xf32>
    %123 = arith.addf %120, %122 : vector<384x64xf32>
    %c32_115 = arith.constant 32 : index
    %c0_116 = arith.constant 0 : index
    %124 = vector.load %arg7[%c32_115, %c0_116] : memref<448x64xf32, #tpu.memory_space<vmem>>, vector<384x64xf32>
    %125 = arith.addf %123, %124 : vector<384x64xf32>
    %126 = vector.shape_cast %125 : vector<384x64xf32> to vector<16x24x64xf32>
    %127 = vector.extract_strided_slice %126 {offsets = [0, 0, 0], sizes = [16, 16, 64], strides = [1, 1, 1]} : vector<16x24x64xf32> to vector<16x16x64xf32>
    %128 = vector.shape_cast %127 : vector<16x16x64xf32> to vector<256x64xf32>
    %129 = tpu.transpose %128, [1, 0] : vector<256x64xf32> -> vector<64x256xf32>
    %c0_117 = arith.constant 0 : index
    %c0_118 = arith.constant 0 : index
    %c0_119 = arith.constant 0 : index
    %130 = vector.load %arg6[%c0_117, %c0_118, %c0_119] : memref<1x64x256xf32, #tpu.memory_space<vmem>>, vector<1x64x256xf32>
    %131 = vector.shape_cast %130 : vector<1x64x256xf32> to vector<64x256xf32>
    %132 = vector.shape_cast %129 : vector<64x256xf32> to vector<1x64x256xf32>
    tpu.vector_store %arg6[%c0_117, %c0_118, %c0_119], %132 {strides = array<i32>} : memref<1x64x256xf32, #tpu.memory_space<vmem>>, vector<1x64x256xf32>,
    return
  }
  func.func @transform_0(%arg0: i32) -> (i32, i32, i32) {
    %c0_i32 = arith.constant 0 : i32
    %c0_i32_0 = arith.constant 0 : i32
    %c0_i32_1 = arith.constant 0 : i32
    return %arg0, %c0_i32, %c0_i32_0 : i32, i32, i32
  }
  func.func @transform_1(%arg0: i32) -> (i32, i32, i32) {
    %c0_i32 = arith.constant 0 : i32
    %c0_i32_0 = arith.constant 0 : i32
    %c0_i32_1 = arith.constant 0 : i32
    %c0_i32_2 = arith.constant 0 : i32
    return %c0_i32, %c0_i32_0, %c0_i32_1 : i32, i32, i32
  }
  func.func @transform_2(%arg0: i32) -> (i32, i32) {
    %c0_i32 = arith.constant 0 : i32
    %c0_i32_0 = arith.constant 0 : i32
    %c0_i32_1 = arith.constant 0 : i32
    return %c0_i32, %c0_i32_0 : i32, i32
  }
  func.func @transform_3(%arg0: i32) -> (i32, i32, i32) {
    %c0_i32 = arith.constant 0 : i32
    %c0_i32_0 = arith.constant 0 : i32
    %c0_i32_1 = arith.constant 0 : i32
    %c0_i32_2 = arith.constant 0 : i32
    return %c0_i32, %c0_i32_0, %c0_i32_1 : i32, i32, i32
  }
  func.func @transform_4(%arg0: i32) -> (i32, i32) {
    %c0_i32 = arith.constant 0 : i32
    %c0_i32_0 = arith.constant 0 : i32
    %c0_i32_1 = arith.constant 0 : i32
    return %c0_i32, %c0_i32_0 : i32, i32
  }
  func.func @transform_5(%arg0: i32) -> (i32, i32, i32) {
    %c0_i32 = arith.constant 0 : i32
    %c0_i32_0 = arith.constant 0 : i32
    %c0_i32_1 = arith.constant 0 : i32
    return %arg0, %c0_i32, %c0_i32_0 : i32, i32, i32
  }
}

</mosaic_0001>

<llo_original>
// kernel: residual_block_pallas.1
$region0: #{residual_block_pallas.1}
  #allocation0 [shape = 'u32[]', space=smem, size = 0x4, offset = 0x4, fixed_abs, tag = 'smem constant byte address 0x4 - core index']
  #allocation1 [shape = 'u32[144,128]{1,0:T(1,128)}', space=vmem, size = 0x12000, scoped, tag = 'internal scratch']
  #allocation2 [shape = 'f32[448,64]{1,0:T(8,128)}', space=vmem, size = 0x38000, scoped, tag = 'scratch operand']
  #allocation3 [shape = 'f32[448,64]{1,0:T(8,128)}', space=vmem, size = 0x38000, scoped, tag = 'scratch operand']
  %s0 = inlined_call_operand.vmem [shape: f32[2,64,256], index: 0, kind: input, shape index: {}]
  %s1 = inlined_call_operand.vmem [shape: f32[9,64,64], index: 1, kind: input, shape index: {}]
  %s2 = inlined_call_operand.vmem [shape: f32[1,64], index: 2, kind: input, shape index: {}]
  %s3 = inlined_call_operand.hbm [shape: f32[9,64,64], index: 3, kind: input, shape index: {}]
  %s4 = inlined_call_operand.vmem [shape: f32[1,64], index: 4, kind: input, shape index: {}]
  %s5 = inlined_call_operand.vmem [shape: f32[2,64,256], index: 5, kind: output, shape index: {}]
  %s6 = sld [smem:[#allocation0]]
  $region57: #{residual_block_pallas.1} parent=0
    _
  %s8 = ssub.s32 1, %s6
  %s9 = scalar_select 0, %s8, %s6
  $region1: #{residual_block_pallas.1} parent=0
    #allocation4 [shape = 'u8[294912]{0}', space=vmem, size = 0x48000, scoped, tag = 'input window, operand 3, single buffered']
    #allocation5 [shape = 's32[2]{0}', space=sflag, size = 0x8, scoped, tag = 'scoped memory for residual_block_pallas.1']
    %10 = vsyncpa [#allocation5], 0
    loop: start=0, step=1, limit=4
    $region2: #{residual_block_pallas.1} parent=1 // loop_pre_header
      _
    $region3: #{residual_block_pallas.1} parent=1 // loop_header
      %s12 = sphi 0, %s16
      %p13 = scmp.ge.s32.totalorder %s12, 4
      %s22 = sphi 0, %s24
      %s25 = sphi 0, %s22
      %s26 = sphi 0, %s25
      %s42 = sphi 0, %s26
      %s46 = sphi 0, %s46
      %s48 = sphi 0, %s46
      %s49 = sphi 0, %s48
      %s63 = sphi 0, %s49
      %s67 = sphi 0, %s67
      %s69 = sphi 0, %s67
      %s70 = sphi 0, %s69
      %s84 = sphi 0, %s70
      %s88 = sphi 0, %s88
      %s90 = sphi 0, %s88
      %s91 = sphi 0, %s90
      %s105 = sphi 0, %s91
      %s109 = sphi 0, %s109
      %s111 = sphi 0, %s109
      %s112 = sphi 0, %s111
      %s126 = sphi 0, %s112
      %s132 = sphi 0, %s134
      %s135 = sphi 0, %s132
      %s136 = sphi 0, %s135
      %s152 = sphi 0, %s136
    $region4: #{residual_block_pallas.1} parent=1 // loop_header_branch
      %15 = sbr.rel (%p13) target = $region8
    $region5: #{residual_block_pallas.1} parent=1 // loop_body
      %s17 = ssub.s32 %s12, 1
      %s18 = ssub.s32 %s12, 2
      %s19 = sadd.s32 %s12, 1
      %s20 = ssub.s32 %s12, %s19
      %p21 = scmp.eq.s32.totalorder %s20, 0
      %s23 = sadd.s32 %s22, 1
      %s24 = scalar_select %p21, %s22, %s23
      %p27 = pneg %p21
      %p28 = scmp.eq.s32.totalorder %s12, 1
      %p29 = por %p27, %p28
      %p30 = scmp.ne.s32.totalorder %s22, %s25
      %p31 = scmp.eq.s32.totalorder %s12, 0
      %p32 = por %p30, %p31
      %p33 = scmp.ne.s32.totalorder %s22, %s25
      %p34 = scmp.eq.s32.totalorder %s17, 1
      %p35 = por %p33, %p34
      %p36 = scmp.ne.s32.totalorder %s25, %s26
      %p37 = scmp.eq.s32.totalorder %s17, 0
      %p38 = por %p36, %p37
      %p39 = scmp.ne.s32.totalorder %s25, %s26
      %p40 = scmp.eq.s32.totalorder %s18, 1
      %p41 = por %p39, %p40
      %p43 = scmp.ne.s32.totalorder %s26, %s42
      %p44 = scmp.eq.s32.totalorder %s18, 0
      %p45 = por %p43, %p44
      %s47 = sadd.s32 %s46, 1
      %p50 = scmp.eq.s32.totalorder %s12, 1
      %p51 = scmp.ne.s32.totalorder %s46, %s48
      %p52 = scmp.eq.s32.totalorder %s12, 0
      %p53 = por %p51, %p52
      %p54 = scmp.ne.s32.totalorder %s46, %s48
      %p55 = scmp.eq.s32.totalorder %s17, 1
      %p56 = por %p54, %p55
      %p57 = scmp.ne.s32.totalorder %s48, %s49
      %p58 = scmp.eq.s32.totalorder %s17, 0
      %p59 = por %p57, %p58
      %p60 = scmp.ne.s32.totalorder %s48, %s49
      %p61 = scmp.eq.s32.totalorder %s18, 1
      %p62 = por %p60, %p61
      %p64 = scmp.ne.s32.totalorder %s49, %s63
      %p65 = scmp.eq.s32.totalorder %s18, 0
      %p66 = por %p64, %p65
      %s68 = sadd.s32 %s67, 1
      %p71 = scmp.eq.s32.totalorder %s12, 1
      %p72 = scmp.ne.s32.totalorder %s67, %s69
      %p73 = scmp.eq.s32.totalorder %s12, 0
      %p74 = por %p72, %p73
      %p75 = scmp.ne.s32.totalorder %s67, %s69
      %p76 = scmp.eq.s32.totalorder %s17, 1
      %p77 = por %p75, %p76
      %p78 = scmp.ne.s32.totalorder %s69, %s70
      %p79 = scmp.eq.s32.totalorder %s17, 0
      %p80 = por %p78, %p79
      %p81 = scmp.ne.s32.totalorder %s69, %s70
      %p82 = scmp.eq.s32.totalorder %s18, 1
      %p83 = por %p81, %p82
      %p85 = scmp.ne.s32.totalorder %s70, %s84
      %p86 = scmp.eq.s32.totalorder %s18, 0
      %p87 = por %p85, %p86
      %s89 = sadd.s32 %s88, 1
      %p92 = scmp.eq.s32.totalorder %s12, 1
      %p93 = scmp.ne.s32.totalorder %s88, %s90
      %p94 = scmp.eq.s32.totalorder %s12, 0
      %p95 = por %p93, %p94
      %p96 = scmp.ne.s32.totalorder %s88, %s90
      %p97 = scmp.eq.s32.totalorder %s17, 1
      %p98 = por %p96, %p97
      %p99 = scmp.ne.s32.totalorder %s90, %s91
      %p100 = scmp.eq.s32.totalorder %s17, 0
      %p101 = por %p99, %p100
      %p102 = scmp.ne.s32.totalorder %s90, %s91
      %p103 = scmp.eq.s32.totalorder %s18, 1
      %p104 = por %p102, %p103
      %p106 = scmp.ne.s32.totalorder %s91, %s105
      %p107 = scmp.eq.s32.totalorder %s18, 0
      %p108 = por %p106, %p107
      %s110 = sadd.s32 %s109, 1
      %p113 = scmp.eq.s32.totalorder %s12, 1
      %p114 = scmp.ne.s32.totalorder %s109, %s111
      %p115 = scmp.eq.s32.totalorder %s12, 0
      %p116 = por %p114, %p115
      %p117 = scmp.ne.s32.totalorder %s109, %s111
      %p118 = scmp.eq.s32.totalorder %s17, 1
      %p119 = por %p117, %p118
      %p120 = scmp.ne.s32.totalorder %s111, %s112
      %p121 = scmp.eq.s32.totalorder %s17, 0
      %p122 = por %p120, %p121
      %p123 = scmp.ne.s32.totalorder %s111, %s112
      %p124 = scmp.eq.s32.totalorder %s18, 1
      %p125 = por %p123, %p124
      %p127 = scmp.ne.s32.totalorder %s112, %s126
      %p128 = scmp.eq.s32.totalorder %s18, 0
      %p129 = por %p127, %p128
      %s130 = ssub.s32 %s12, %s19
      %p131 = scmp.eq.s32.totalorder %s130, 0
      %s133 = sadd.s32 %s132, 1
      %s134 = scalar_select %p131, %s132, %s133
      %p137 = pneg %p131
      %p138 = scmp.eq.s32.totalorder %s12, 1
      %p139 = por %p137, %p138
      %p140 = scmp.ne.s32.totalorder %s132, %s135
      %p141 = scmp.eq.s32.totalorder %s12, 0
      %p142 = por %p140, %p141
      %p143 = scmp.ne.s32.totalorder %s132, %s135
      %p144 = scmp.eq.s32.totalorder %s17, 1
      %p145 = por %p143, %p144
      %p146 = scmp.ne.s32.totalorder %s135, %s136
      %p147 = scmp.eq.s32.totalorder %s17, 0
      %p148 = por %p146, %p147
      %p149 = scmp.ne.s32.totalorder %s135, %s136
      %p150 = scmp.eq.s32.totalorder %s18, 1
      %p151 = por %p149, %p150
      %p153 = scmp.ne.s32.totalorder %s136, %s152
      %p154 = scmp.eq.s32.totalorder %s18, 0
      %p155 = por %p153, %p154
      %p156 = scmp.le.s32.totalorder 1, %s12
      %p157 = scmp.lt.s32.totalorder %s12, 3
      %p158 = pnand %p156, %p157
      %p159 = pneg %p158
      // Predicated region
      $region9: #{residual_block_pallas.1} parent=5 // pred_check
        _
      $region10: #{residual_block_pallas.1} parent=5 // pred_check_branch
        %161 = sbr.rel (%p158) target = $region12
      $region11: #{residual_block_pallas.1} parent=5 // pred_region
        %s162 = ssub.s32 %s12, 1
        // Predicated region
        $region13: #{residual_block_pallas.1} parent=11 // pred_check
          %p163 = pneg %p59
        $region14: #{residual_block_pallas.1} parent=11 // pred_check_branch
          %165 = sbr.rel (%p163) target = $region16
        $region15: #{residual_block_pallas.1} parent=11 // pred_region
          _
        $region16: #{residual_block_pallas.1} parent=11 // pred_fallthru
          _
        // Predicated region
        $region17: #{residual_block_pallas.1} parent=11 // pred_check
          %p166 = pneg %p80
        $region18: #{residual_block_pallas.1} parent=11 // pred_check_branch
          %168 = sbr.rel (%p166) target = $region20
        $region19: #{residual_block_pallas.1} parent=11 // pred_region
          _
        $region20: #{residual_block_pallas.1} parent=11 // pred_fallthru
          _
        // Predicated region
        $region21: #{residual_block_pallas.1} parent=11 // pred_check
          %p169 = pneg %p101
        $region22: #{residual_block_pallas.1} parent=11 // pred_check_branch
          %171 = sbr.rel (%p169) target = $region24
        $region23: #{residual_block_pallas.1} parent=11 // pred_region
          %s173 = ssub.s32 9216, 9216
          %174 = vsyncadd [#allocation5], %s173
          %s175 = sshll.u32 [#allocation4], 4
          %s176 = int_to_ptr.vmem [resolvable:$true] %s175
          %181 = dma.hbm_to_vmem [thread:$0]  %s3, 9216, %s176, [#allocation5], 128, 128, 8
        $region24: #{residual_block_pallas.1} parent=11 // pred_fallthru
          _
        // Predicated region
        $region25: #{residual_block_pallas.1} parent=11 // pred_check
          %p182 = pneg %p122
        $region26: #{residual_block_pallas.1} parent=11 // pred_check_branch
          %184 = sbr.rel (%p182) target = $region28
        $region27: #{residual_block_pallas.1} parent=11 // pred_region
          _
        $region28: #{residual_block_pallas.1} parent=11 // pred_fallthru
          _
      $region12: #{residual_block_pallas.1} parent=5 // pred_fallthru
        _
      %p185 = scmp.lt.s32.totalorder %s12, 2
      // Predicated region
      $region29: #{residual_block_pallas.1} parent=5 // pred_check
        %p186 = pneg %p185
      $region30: #{residual_block_pallas.1} parent=5 // pred_check_branch
        %188 = sbr.rel (%p186) target = $region32
      $region31: #{residual_block_pallas.1} parent=5 // pred_region
        // Predicated region
        $region33: #{residual_block_pallas.1} parent=31 // pred_check
          %p189 = pneg %p32
        $region34: #{residual_block_pallas.1} parent=31 // pred_check_branch
          %191 = sbr.rel (%p189) target = $region36
        $region35: #{residual_block_pallas.1} parent=31 // pred_region
          %p192 = scmp.lt.s32.totalorder %s12, 1
          %s193 = scalar_select %p192, %s12, 1
          %s194 = smul.addr %s193, 16
          %s195 = smul.addr %s194, 8
          %s196 = scalar_lea.vmem %s0, %s195
        $region36: #{residual_block_pallas.1} parent=31 // pred_fallthru
          _
      $region32: #{residual_block_pallas.1} parent=5 // pred_fallthru
        _
      %p197 = scmp.le.s32.totalorder 1, %s12
      %p198 = scmp.lt.s32.totalorder %s12, 3
      %p199 = pnand %p197, %p198
      %p200 = pneg %p199
      // Predicated region
      $region37: #{residual_block_pallas.1} parent=5 // pred_check
        _
      $region38: #{residual_block_pallas.1} parent=5 // pred_check_branch
        %202 = sbr.rel (%p199) target = $region40
      $region39: #{residual_block_pallas.1} parent=5 // pred_region
        %s203 = ssub.s32 %s12, 1
        // Predicated region
        $region41: #{residual_block_pallas.1} parent=39 // pred_check
          %p204 = pneg %p101
        $region42: #{residual_block_pallas.1} parent=39 // pred_check_branch
          %206 = sbr.rel (%p204) target = $region44
        $region43: #{residual_block_pallas.1} parent=39 // pred_region
          %207 = dma.done [#allocation5], 9216
        $region44: #{residual_block_pallas.1} parent=39 // pred_fallthru
          _
        %p208 = scmp.lt.s32.totalorder %s17, 1
        %s209 = scalar_select %p208, %s17, 1
        %s210 = smul.addr %s209, 16
        %s211 = smul.addr %s210, 8
        %s212 = scalar_lea.vmem %s0, %s211
        %p213 = pneg %p38
        %p214 = pneg %p35
        %p215 = pneg %p59
        %p216 = pneg %p56
        %p217 = pneg %p80
        %p218 = pneg %p77
        %p219 = pneg %p101
        %p220 = pneg %p98
        %p221 = pneg %p122
        %p222 = pneg %p119
        %p223 = pneg %p148
        %p224 = pneg %p145
        %p225 = scmp.lt.s32.totalorder %s17, 1
        %s226 = scalar_select %p225, %s17, 1
        %s227 = smul.addr %s226, 16
        %s228 = smul.addr %s227, 8
        %s229 = scalar_lea.vmem %s5, %s228
        %p230 = scmp.lt.s32.totalorder %s17, 1
        %s231 = scalar_select %p230, %s17, 1
        %s232 = smul.addr %s231, 16
        %s233 = smul.addr %s232, 8
        %s234 = scalar_lea.vmem %s0, %s233
        %p235 = scmp.lt.s32.totalorder %s17, 1
        %s236 = scalar_select %p235, %s17, 1
        %s237 = smul.addr %s236, 16
        %s238 = smul.addr %s237, 8
        %s239 = scalar_lea.vmem %s5, %s238
        %vm240 = vcmask 523264
        %241 = vst.msk [vmem:[#allocation2] sm:$0xff] %vm240, 0.0
        %242 = vst.msk [vmem:[#allocation2 + $0x8] sm:$0xff] %vm240, 0.0
        %243 = vst.msk [vmem:[#allocation2 + $0x10] sm:$0xff] %vm240, 0.0
        %244 = vst.msk [vmem:[#allocation2 + $0x18] sm:$0xff] %vm240, 0.0
        %245 = vst.msk [vmem:[#allocation2 + $0x1a0] sm:$0xff] %vm240, 0.0
        %246 = vst.msk [vmem:[#allocation2 + $0x1a8] sm:$0xff] %vm240, 0.0
        %247 = vst.msk [vmem:[#allocation2 + $0x1b0] sm:$0xff] %vm240, 0.0
        %248 = vst.msk [vmem:[#allocation2 + $0x1b8] sm:$0xff] %vm240, 0.0
        %v249 = vld [vmem:[%s234] sm:$0xff]
        %v250 = vld [vmem:[%s234 + $0x8] sm:$0xff]
        %v251 = vld [vmem:[%s234 + $0x10] sm:$0xff]
        %v252 = vld [vmem:[%s234 + $0x18] sm:$0xff]
        %v253 = vld [vmem:[%s234 + $0x20] sm:$0xff]
        %v254 = vld [vmem:[%s234 + $0x28] sm:$0xff]
        %v255 = vld [vmem:[%s234 + $0x30] sm:$0xff]
        %v256 = vld [vmem:[%s234 + $0x38] sm:$0xff]
        %v257 = vld [vmem:[%s234 + $0x40] sm:$0xff]
        %v258 = vld [vmem:[%s234 + $0x48] sm:$0xff]
        %v259 = vld [vmem:[%s234 + $0x50] sm:$0xff]
        %v260 = vld [vmem:[%s234 + $0x58] sm:$0xff]
        %v261 = vld [vmem:[%s234 + $0x60] sm:$0xff]
        %v262 = vld [vmem:[%s234 + $0x68] sm:$0xff]
        %v263 = vld [vmem:[%s234 + $0x70] sm:$0xff]
        %v264 = vld [vmem:[%s234 + $0x78] sm:$0xff]
        %265 = vxpose.xlu0.b32.start [1/16] %v249, 128
        %266 = vxpose.xlu0.b32.cont [2/16] %v251, 128
        %267 = vxpose.xlu0.b32.cont [3/16] %v253, 128
        %268 = vxpose.xlu0.b32.cont [4/16] %v255, 128
        %269 = vxpose.xlu0.b32.cont [5/16] %v257, 128
        %270 = vxpose.xlu0.b32.cont [6/16] %v259, 128
        %271 = vxpose.xlu0.b32.cont [7/16] %v261, 128
        %272 = vxpose.xlu0.b32.cont [8/16] %v263, 128
        %273 = vxpose.xlu0.b32.cont [9/16] 0.0, 128
        %274 = vxpose.xlu0.b32.cont [10/16] 0.0, 128
        %275 = vxpose.xlu0.b32.cont [11/16] 0.0, 128
        %276 = vxpose.xlu0.b32.cont [12/16] 0.0, 128
        %277 = vxpose.xlu0.b32.cont [13/16] 0.0, 128
        %278 = vxpose.xlu0.b32.cont [14/16] 0.0, 128
        %279 = vxpose.xlu0.b32.cont [15/16] 0.0, 128
        %280 = vxpose.xlu0.b32.end [16/16] 0.0, 128
        %v281 = vpop.trf.xlu0
        %v282 = vpop.trf.xlu0
        %v283 = vpop.trf.xlu0
        %v284 = vpop.trf.xlu0
        %v285 = vpop.trf.xlu0
        %v286 = vpop.trf.xlu0
        %v287 = vpop.trf.xlu0
        %v288 = vpop.trf.xlu0
        %v289 = vpop.trf.xlu0
        %v290 = vpop.trf.xlu0
        %v291 = vpop.trf.xlu0
        %v292 = vpop.trf.xlu0
        %v293 = vpop.trf.xlu0
        %v294 = vpop.trf.xlu0
        %v295 = vpop.trf.xlu0
        %v296 = vpop.trf.xlu0
        %297 = vxpose.xlu0.b32.start [1/16] %v250, 128
        %298 = vxpose.xlu0.b32.cont [2/16] %v252, 128
        %299 = vxpose.xlu0.b32.cont [3/16] %v254, 128
        %300 = vxpose.xlu0.b32.cont [4/16] %v256, 128
        %301 = vxpose.xlu0.b32.cont [5/16] %v258, 128
        %302 = vxpose.xlu0.b32.cont [6/16] %v260, 128
        %303 = vxpose.xlu0.b32.cont [7/16] %v262, 128
        %304 = vxpose.xlu0.b32.cont [8/16] %v264, 128
        %305 = vxpose.xlu0.b32.cont [9/16] 0.0, 128
        %306 = vxpose.xlu0.b32.cont [10/16] 0.0, 128
        %307 = vxpose.xlu0.b32.cont [11/16] 0.0, 128
        %308 = vxpose.xlu0.b32.cont [12/16] 0.0, 128
        %309 = vxpose.xlu0.b32.cont [13/16] 0.0, 128
        %310 = vxpose.xlu0.b32.cont [14/16] 0.0, 128
        %311 = vxpose.xlu0.b32.cont [15/16] 0.0, 128
        %312 = vxpose.xlu0.b32.end [16/16] 0.0, 128
        %v313 = vpop.trf.xlu0
        %v314 = vpop.trf.xlu0
        %v315 = vpop.trf.xlu0
        %v316 = vpop.trf.xlu0
        %v317 = vpop.trf.xlu0
        %v318 = vpop.trf.xlu0
        %v319 = vpop.trf.xlu0
        %v320 = vpop.trf.xlu0
        %v321 = vpop.trf.xlu0
        %v322 = vpop.trf.xlu0
        %v323 = vpop.trf.xlu0
        %v324 = vpop.trf.xlu0
        %v325 = vpop.trf.xlu0
        %v326 = vpop.trf.xlu0
        %v327 = vpop.trf.xlu0
        %v328 = vpop.trf.xlu0
        %329 = vst.msk [vmem:[#allocation2 + $0x20] sm:$0xff] %vm240, %v281
        %330 = vst.msk [vmem:[#allocation2 + $0x28] sm:$0xff] %vm240, %v282
        %331 = vst.msk [vmem:[#allocation2 + $0x30] sm:$0xff] %vm240, 0.0
        %332 = vst.msk [vmem:[#allocation2 + $0x38] sm:$0xff] %vm240, %v283
        %333 = vst.msk [vmem:[#allocation2 + $0x40] sm:$0xff] %vm240, %v284
        %334 = vst.msk [vmem:[#allocation2 + $0x48] sm:$0xff] %vm240, 0.0
        %335 = vst.msk [vmem:[#allocation2 + $0x50] sm:$0xff] %vm240, %v285
        %336 = vst.msk [vmem:[#allocation2 + $0x58] sm:$0xff] %vm240, %v286
        %337 = vst.msk [vmem:[#allocation2 + $0x60] sm:$0xff] %vm240, 0.0
        %338 = vst.msk [vmem:[#allocation2 + $0x68] sm:$0xff] %vm240, %v287
        %339 = vst.msk [vmem:[#allocation2 + $0x70] sm:$0xff] %vm240, %v288
        %340 = vst.msk [vmem:[#allocation2 + $0x78] sm:$0xff] %vm240, 0.0
        %341 = vst.msk [vmem:[#allocation2 + $0x80] sm:$0xff] %vm240, %v289
        %342 = vst.msk [vmem:[#allocation2 + $0x88] sm:$0xff] %vm240, %v290
        %343 = vst.msk [vmem:[#allocation2 + $0x90] sm:$0xff] %vm240, 0.0
        %344 = vst.msk [vmem:[#allocation2 + $0x98] sm:$0xff] %vm240, %v291
        %345 = vst.msk [vmem:[#allocation2 + $0xa0] sm:$0xff] %vm240, %v292
        %346 = vst.msk [vmem:[#allocation2 + $0xa8] sm:$0xff] %vm240, 0.0
        %347 = vst.msk [vmem:[#allocation2 + $0xb0] sm:$0xff] %vm240, %v293
        %348 = vst.msk [vmem:[#allocation2 + $0xb8] sm:$0xff] %vm240, %v294
        %349 = vst.msk [vmem:[#allocation2 + $0xc0] sm:$0xff] %vm240, 0.0
        %350 = vst.msk [vmem:[#allocation2 + $0xc8] sm:$0xff] %vm240, %v295
        %351 = vst.msk [vmem:[#allocation2 + $0xd0] sm:$0xff] %vm240, %v296
        %352 = vst.msk [vmem:[#allocation2 + $0xd8] sm:$0xff] %vm240, 0.0
        %353 = vst.msk [vmem:[#allocation2 + $0xe0] sm:$0xff] %vm240, %v313
        %354 = vst.msk [vmem:[#allocation2 + $0xe8] sm:$0xff] %vm240, %v314
        %355 = vst.msk [vmem:[#allocation2 + $0xf0] sm:$0xff] %vm240, 0.0
        %356 = vst.msk [vmem:[#allocation2 + $0xf8] sm:$0xff] %vm240, %v315
        %357 = vst.msk [vmem:[#allocation2 + $0x100] sm:$0xff] %vm240, %v316
        %358 = vst.msk [vmem:[#allocation2 + $0x108] sm:$0xff] %vm240, 0.0
        %359 = vst.msk [vmem:[#allocation2 + $0x110] sm:$0xff] %vm240, %v317
        %360 = vst.msk [vmem:[#allocation2 + $0x118] sm:$0xff] %vm240, %v318
        %361 = vst.msk [vmem:[#allocation2 + $0x120] sm:$0xff] %vm240, 0.0
        %362 = vst.msk [vmem:[#allocation2 + $0x128] sm:$0xff] %vm240, %v319
        %363 = vst.msk [vmem:[#allocation2 + $0x130] sm:$0xff] %vm240, %v320
        %364 = vst.msk [vmem:[#allocation2 + $0x138] sm:$0xff] %vm240, 0.0
        %365 = vst.msk [vmem:[#allocation2 + $0x140] sm:$0xff] %vm240, %v321
        %366 = vst.msk [vmem:[#allocation2 + $0x148] sm:$0xff] %vm240, %v322
        %367 = vst.msk [vmem:[#allocation2 + $0x150] sm:$0xff] %vm240, 0.0
        %368 = vst.msk [vmem:[#allocation2 + $0x158] sm:$0xff] %vm240, %v323
        %369 = vst.msk [vmem:[#allocation2 + $0x160] sm:$0xff] %vm240, %v324
        %370 = vst.msk [vmem:[#allocation2 + $0x168] sm:$0xff] %vm240, 0.0
        %371 = vst.msk [vmem:[#allocation2 + $0x170] sm:$0xff] %vm240, %v325
        %372 = vst.msk [vmem:[#allocation2 + $0x178] sm:$0xff] %vm240, %v326
        %373 = vst.msk [vmem:[#allocation2 + $0x180] sm:$0xff] %vm240, 0.0
        %374 = vst.msk [vmem:[#allocation2 + $0x188] sm:$0xff] %vm240, %v327
        %375 = vst.msk [vmem:[#allocation2 + $0x190] sm:$0xff] %vm240, %v328
        %376 = vst.msk [vmem:[#allocation2 + $0x198] sm:$0xff] %vm240, 0.0
        %377 = vst.msk [vmem:[#allocation3] sm:$0xff] %vm240, 0.0
        %378 = vst.msk [vmem:[#allocation3 + $0x8] sm:$0xff] %vm240, 0.0
        %379 = vst.msk [vmem:[#allocation3 + $0x10] sm:$0xff] %vm240, 0.0
        %380 = vst.msk [vmem:[#allocation3 + $0x18] sm:$0xff] %vm240, 0.0
        %381 = vst.msk [vmem:[#allocation3 + $0x1a0] sm:$0xff] %vm240, 0.0
        %382 = vst.msk [vmem:[#allocation3 + $0x1a8] sm:$0xff] %vm240, 0.0
        %383 = vst.msk [vmem:[#allocation3 + $0x1b0] sm:$0xff] %vm240, 0.0
        %384 = vst.msk [vmem:[#allocation3 + $0x1b8] sm:$0xff] %vm240, 0.0
        %v385 = vlaneseq
        %v386 = vshrl.u32 %v385, 7
        %v387 = vadd.s32 %v386, 8
        %v388 = vadd.s32 %v386, 16
        %vm389 = vcmp.lt.s32.totalorder %v386, 16
        %vm390 = vcmp.lt.s32.totalorder %v387, 16
        %vm391 = vcmp.lt.s32.totalorder %v388, 16
        %v392 = vsel %vm389, 1, 0
        %v393 = vsel %vm390, 1, 0
        %v394 = vsel %vm391, 1, 0
        %v395 = vcvt.s32.f32 %v392
        %v396 = vcvt.s32.f32 %v393
        %v397 = vcvt.s32.f32 %v394
        %v398 = vld [vmem:[%s2] sm:$0x1]
        %v399 = vld [vmem:[%s4] sm:$0x1]
        %v400 = vld [vmem:[#allocation2 + $0x7] sm:$0xff]
        %v401 = vld [vmem:[#allocation2 + $0xf] sm:$0xff]
        %v402 = vld [vmem:[#allocation2 + $0x17] sm:$0xff]
        %v403 = vld [vmem:[#allocation2 + $0x1f] sm:$0xff]
        %v404 = vld [vmem:[#allocation2 + $0x27] sm:$0xff]
        %v405 = vld [vmem:[#allocation2 + $0x2f] sm:$0xff]
        %v406 = vld [vmem:[#allocation2 + $0x37] sm:$0xff]
        %v407 = vld [vmem:[#allocation2 + $0x3f] sm:$0xff]
        %v408 = vld [vmem:[#allocation2 + $0x47] sm:$0xff]
        %v409 = vld [vmem:[#allocation2 + $0x4f] sm:$0xff]
        %v410 = vld [vmem:[#allocation2 + $0x57] sm:$0xff]
        %v411 = vld [vmem:[#allocation2 + $0x5f] sm:$0xff]
        %v412 = vld [vmem:[#allocation2 + $0x67] sm:$0xff]
        %v413 = vld [vmem:[#allocation2 + $0x6f] sm:$0xff]
        %v414 = vld [vmem:[#allocation2 + $0x77] sm:$0xff]
        %v415 = vld [vmem:[#allocation2 + $0x7f] sm:$0xff]
        %v416 = vld [vmem:[#allocation2 + $0x87] sm:$0xff]
        %v417 = vld [vmem:[#allocation2 + $0x8f] sm:$0xff]
        %v418 = vld [vmem:[#allocation2 + $0x97] sm:$0xff]
        %v419 = vld [vmem:[#allocation2 + $0x9f] sm:$0xff]
        %v420 = vld [vmem:[#allocation2 + $0xa7] sm:$0xff]
        %v421 = vld [vmem:[#allocation2 + $0xaf] sm:$0xff]
        %v422 = vld [vmem:[#allocation2 + $0xb7] sm:$0xff]
        %v423 = vld [vmem:[#allocation2 + $0xbf] sm:$0xff]
        %v424 = vld [vmem:[#allocation2 + $0xc7] sm:$0xff]
        %v425 = vld [vmem:[#allocation2 + $0xcf] sm:$0xff]
        %v426 = vld [vmem:[#allocation2 + $0xd7] sm:$0xff]
        %v427 = vld [vmem:[#allocation2 + $0xdf] sm:$0xff]
        %v428 = vld [vmem:[#allocation2 + $0xe7] sm:$0xff]
        %v429 = vld [vmem:[#allocation2 + $0xef] sm:$0xff]
        %v430 = vld [vmem:[#allocation2 + $0xf7] sm:$0xff]
        %v431 = vld [vmem:[#allocation2 + $0xff] sm:$0xff]
        %v432 = vld [vmem:[#allocation2 + $0x107] sm:$0xff]
        %v433 = vld [vmem:[#allocation2 + $0x10f] sm:$0xff]
        %v434 = vld [vmem:[#allocation2 + $0x117] sm:$0xff]
        %v435 = vld [vmem:[#allocation2 + $0x11f] sm:$0xff]
        %v436 = vld [vmem:[#allocation2 + $0x127] sm:$0xff]
        %v437 = vld [vmem:[#allocation2 + $0x12f] sm:$0xff]
        %v438 = vld [vmem:[#allocation2 + $0x137] sm:$0xff]
        %v439 = vld [vmem:[#allocation2 + $0x13f] sm:$0xff]
        %v440 = vld [vmem:[#allocation2 + $0x147] sm:$0xff]
        %v441 = vld [vmem:[#allocation2 + $0x14f] sm:$0xff]
        %v442 = vld [vmem:[#allocation2 + $0x157] sm:$0xff]
        %v443 = vld [vmem:[#allocation2 + $0x15f] sm:$0xff]
        %v444 = vld [vmem:[#allocation2 + $0x167] sm:$0xff]
        %v445 = vld [vmem:[#allocation2 + $0x16f] sm:$0xff]
        %v446 = vld [vmem:[#allocation2 + $0x177] sm:$0xff]
        %v447 = vld [vmem:[#allocation2 + $0x17f] sm:$0xff]
        %v448 = vld [vmem:[%s1] sm:$0xff]
        %v449 = vld [vmem:[%s1 + $0x8] sm:$0xff]
        %v450 = vld [vmem:[%s1 + $0x10] sm:$0xff]
        %v451 = vld [vmem:[%s1 + $0x18] sm:$0xff]
        %v452 = vld [vmem:[%s1 + $0x20] sm:$0xff]
        %v453 = vld [vmem:[%s1 + $0x28] sm:$0xff]
        %v454 = vld [vmem:[%s1 + $0x30] sm:$0xff]
        %v455 = vld [vmem:[%s1 + $0x38] sm:$0xff]
        %v456 = vld [vmem:[#allocation2 + $0x8] sm:$0xff]
        %v457 = vld [vmem:[#allocation2 + $0x10] sm:$0xff]
        %v458 = vld [vmem:[#allocation2 + $0x18] sm:$0xff]
        %v459 = vld [vmem:[#allocation2 + $0x20] sm:$0xff]
        %v460 = vld [vmem:[#allocation2 + $0x28] sm:$0xff]
        %v461 = vld [vmem:[#allocation2 + $0x30] sm:$0xff]
        %v462 = vld [vmem:[#allocation2 + $0x38] sm:$0xff]
        %v463 = vld [vmem:[#allocation2 + $0x40] sm:$0xff]
        %v464 = vld [vmem:[#allocation2 + $0x48] sm:$0xff]
        %v465 = vld [vmem:[#allocation2 + $0x50] sm:$0xff]
        %v466 = vld [vmem:[#allocation2 + $0x58] sm:$0xff]
        %v467 = vld [vmem:[#allocation2 + $0x60] sm:$0xff]
        %v468 = vld [vmem:[#allocation2 + $0x68] sm:$0xff]
        %v469 = vld [vmem:[#allocation2 + $0x70] sm:$0xff]
        %v470 = vld [vmem:[#allocation2 + $0x78] sm:$0xff]
        %v471 = vld [vmem:[#allocation2 + $0x80] sm:$0xff]
        %v472 = vld [vmem:[#allocation2 + $0x88] sm:$0xff]
        %v473 = vld [vmem:[#allocation2 + $0x90] sm:$0xff]
        %v474 = vld [vmem:[#allocation2 + $0x98] sm:$0xff]
        %v475 = vld [vmem:[#allocation2 + $0xa0] sm:$0xff]
        %v476 = vld [vmem:[#allocation2 + $0xa8] sm:$0xff]
        %v477 = vld [vmem:[#allocation2 + $0xb0] sm:$0xff]
        %v478 = vld [vmem:[#allocation2 + $0xb8] sm:$0xff]
        %v479 = vld [vmem:[#allocation2 + $0xc0] sm:$0xff]
        %v480 = vld [vmem:[#allocation2 + $0xc8] sm:$0xff]
        %v481 = vld [vmem:[#allocation2 + $0xd0] sm:$0xff]
        %v482 = vld [vmem:[#allocation2 + $0xd8] sm:$0xff]
        %v483 = vld [vmem:[#allocation2 + $0xe0] sm:$0xff]
        %v484 = vld [vmem:[#allocation2 + $0xe8] sm:$0xff]
        %v485 = vld [vmem:[#allocation2 + $0xf0] sm:$0xff]
        %v486 = vld [vmem:[#allocation2 + $0xf8] sm:$0xff]
        %v487 = vld [vmem:[#allocation2 + $0x100] sm:$0xff]
        %v488 = vld [vmem:[#allocation2 + $0x108] sm:$0xff]
        %v489 = vld [vmem:[#allocation2 + $0x110] sm:$0xff]
        %v490 = vld [vmem:[#allocation2 + $0x118] sm:$0xff]
        %v491 = vld [vmem:[#allocation2 + $0x120] sm:$0xff]
        %v492 = vld [vmem:[#allocation2 + $0x128] sm:$0xff]
        %v493 = vld [vmem:[#allocation2 + $0x130] sm:$0xff]
        %v494 = vld [vmem:[#allocation2 + $0x138] sm:$0xff]
        %v495 = vld [vmem:[#allocation2 + $0x140] sm:$0xff]
        %v496 = vld [vmem:[#allocation2 + $0x148] sm:$0xff]
        %v497 = vld [vmem:[#allocation2 + $0x150] sm:$0xff]
        %v498 = vld [vmem:[#allocation2 + $0x158] sm:$0xff]
        %v499 = vld [vmem:[#allocation2 + $0x160] sm:$0xff]
        %v500 = vld [vmem:[#allocation2 + $0x168] sm:$0xff]
        %v501 = vld [vmem:[#allocation2 + $0x170] sm:$0xff]
        %v502 = vld [vmem:[#allocation2 + $0x178] sm:$0xff]
        %v503 = vld [vmem:[#allocation2 + $0x180] sm:$0xff]
        %s504 = scalar_lea.vmem %s1, 64
        %v505 = vld [vmem:[%s504] sm:$0xff]
        %v506 = vld [vmem:[%s504 + $0x8] sm:$0xff]
        %v507 = vld [vmem:[%s504 + $0x10] sm:$0xff]
        %v508 = vld [vmem:[%s504 + $0x18] sm:$0xff]
        %v509 = vld [vmem:[%s504 + $0x20] sm:$0xff]
        %v510 = vld [vmem:[%s504 + $0x28] sm:$0xff]
        %v511 = vld [vmem:[%s504 + $0x30] sm:$0xff]
        %v512 = vld [vmem:[%s504 + $0x38] sm:$0xff]
        %v514 = vsel %vm240, %v456, 0
        %v517 = vsel %vm240, %v457, 0
        %v520 = vsel %vm240, %v458, 0
        %v523 = vsel %vm240, %v459, 0
        %v526 = vsel %vm240, %v460, 0
        %v529 = vsel %vm240, %v461, 0
        %v532 = vsel %vm240, %v462, 0
        %v535 = vsel %vm240, %v463, 0
        %v538 = vsel %vm240, %v464, 0
        %v541 = vsel %vm240, %v465, 0
        %v544 = vsel %vm240, %v466, 0
        %v547 = vsel %vm240, %v467, 0
        %v550 = vsel %vm240, %v468, 0
        %v553 = vsel %vm240, %v469, 0
        %v556 = vsel %vm240, %v470, 0
        %v559 = vsel %vm240, %v471, 0
        %v562 = vsel %vm240, %v472, 0
        %v565 = vsel %vm240, %v473, 0
        %v568 = vsel %vm240, %v474, 0
        %v571 = vsel %vm240, %v475, 0
        %v574 = vsel %vm240, %v476, 0
        %v577 = vsel %vm240, %v477, 0
        %v580 = vsel %vm240, %v478, 0
        %v583 = vsel %vm240, %v479, 0
        %v586 = vsel %vm240, %v480, 0
        %v589 = vsel %vm240, %v481, 0
        %v592 = vsel %vm240, %v482, 0
        %v595 = vsel %vm240, %v483, 0
        %v598 = vsel %vm240, %v484, 0
        %v601 = vsel %vm240, %v485, 0
        %v604 = vsel %vm240, %v486, 0
        %v607 = vsel %vm240, %v487, 0
        %v610 = vsel %vm240, %v488, 0
        %v613 = vsel %vm240, %v489, 0
        %v616 = vsel %vm240, %v490, 0
        %v619 = vsel %vm240, %v491, 0
        %v622 = vsel %vm240, %v492, 0
        %v625 = vsel %vm240, %v493, 0
        %v628 = vsel %vm240, %v494, 0
        %v631 = vsel %vm240, %v495, 0
        %v634 = vsel %vm240, %v496, 0
        %v637 = vsel %vm240, %v497, 0
        %v640 = vsel %vm240, %v498, 0
        %v643 = vsel %vm240, %v499, 0
        %v646 = vsel %vm240, %v500, 0
        %v649 = vsel %vm240, %v501, 0
        %v652 = vsel %vm240, %v502, 0
        %v655 = vsel %vm240, %v503, 0
        %657 = vmatprep.subr.mxu0 0.0
        %658 = vmatpush1.msra.mxu0 0.0
        %659 = vmatprep.subr.mxu0 0.0
        %660 = vmatpush1.msra.mxu0 0.0
        %661 = vmatprep.subr.mxu0 0.0
        %662 = vmatpush1.msra.mxu0 0.0
        %663 = vmatprep.subr.mxu0 0.0
        %664 = vmatpush1.msra.mxu0 0.0
        %665 = vmatprep.subr.mxu0 0.0
        %666 = vmatpush1.msra.mxu0 0.0
        %667 = vmatprep.subr.mxu0 0.0
        %668 = vmatpush1.msra.mxu0 0.0
        %669 = vmatprep.subr.mxu0 0.0
        %670 = vmatpush1.msra.mxu0 0.0
        %671 = vmatprep.subr.mxu0 0.0
        %672 = vmatpush1.msra.mxu0 0.0
        %673 = vmatprep.subr.mxu0 0.0
        %674 = vmatpush1.msra.mxu0 %v512
        %675 = vmatprep.subr.mxu0 0.0
        %676 = vmatpush1.msra.mxu0 %v511
        %677 = vmatprep.subr.mxu0 0.0
        %678 = vmatpush1.msra.mxu0 %v510
        %679 = vmatprep.subr.mxu0 0.0
        %680 = vmatpush1.msra.mxu0 %v509
        %681 = vmatprep.subr.mxu0 0.0
        %682 = vmatpush1.msra.mxu0 %v508
        %683 = vmatprep.subr.mxu0 0.0
        %684 = vmatpush1.msra.mxu0 %v507
        %685 = vmatprep.subr.mxu0 0.0
        %686 = vmatpush1.msra.mxu0 %v506
        %687 = vmatprep.subr.mxu0 0.0
        %688 = vmatpush1.msra.mxu0 %v505
        %689 = vmatprep.subr.mxu0 0.0
        %690 = vmatpush2.msra.mxu0 0.0
        %691 = vmatprep.subr.mxu0 0.0
        %692 = vmatpush2.msra.mxu0 0.0
        %693 = vmatprep.subr.mxu0 0.0
        %694 = vmatpush2.msra.mxu0 0.0
        %695 = vmatprep.subr.mxu0 0.0
        %696 = vmatpush2.msra.mxu0 0.0
        %697 = vmatprep.subr.mxu0 0.0
        %698 = vmatpush2.msra.mxu0 0.0
        %699 = vmatprep.subr.mxu0 0.0
        %700 = vmatpush2.msra.mxu0 0.0
        %701 = vmatprep.subr.mxu0 0.0
        %702 = vmatpush2.msra.mxu0 0.0
        %703 = vmatprep.subr.mxu0 0.0
        %704 = vmatpush2.msra.mxu0 0.0
        %705 = vmatprep.subr.mxu0 0.0
        %706 = vmatpush2.msra.mxu0 0.0
        %707 = vmatprep.subr.mxu0 0.0
        %708 = vmatpush2.msra.mxu0 0.0
        %709 = vmatprep.subr.mxu0 0.0
        %710 = vmatpush2.msra.mxu0 0.0
        %711 = vmatprep.subr.mxu0 0.0
        %712 = vmatpush2.msra.mxu0 0.0
        %713 = vmatprep.subr.mxu0 0.0
        %714 = vmatpush2.msra.mxu0 0.0
        %715 = vmatprep.subr.mxu0 0.0
        %716 = vmatpush2.msra.mxu0 0.0
        %717 = vmatprep.subr.mxu0 0.0
        %718 = vmatpush2.msra.mxu0 0.0
        %719 = vmatprep.subr.mxu0 0.0
        %720 = vmatpush2.msra.mxu0 0.0
        %721 = vmatprep.mubr.f32.mxu0 0.0
        %722 = vmatmul.mubr.f32.gmra.mxu0 %v514
        %v723 = vpop.f32.mrf.mxu0
        %v724 = vadd.f32 0.0, %v723
        %v725 = vpop.f32.mrf.mxu0
        %726 = vmatprep.mubr.f32.mxu0 0.0
        %727 = vmatmul.mubr.f32.gmra.mxu0 %v517
        %v728 = vpop.f32.mrf.mxu0
        %v729 = vadd.f32 0.0, %v728
        %v730 = vpop.f32.mrf.mxu0
        %731 = vmatprep.mubr.f32.mxu0 0.0
        %732 = vmatmul.mubr.f32.gmra.mxu0 %v520
        %v733 = vpop.f32.mrf.mxu0
        %v734 = vadd.f32 0.0, %v733
        %v735 = vpop.f32.mrf.mxu0
        %736 = vmatprep.mubr.f32.mxu0 0.0
        %737 = vmatmul.mubr.f32.gmra.mxu0 %v523
        %v738 = vpop.f32.mrf.mxu0
        %v739 = vadd.f32 0.0, %v738
        %v740 = vpop.f32.mrf.mxu0
        %741 = vmatprep.mubr.f32.mxu0 0.0
        %742 = vmatmul.mubr.f32.gmra.mxu0 %v526
        %v743 = vpop.f32.mrf.mxu0
        %v744 = vadd.f32 0.0, %v743
        %v745 = vpop.f32.mrf.mxu0
        %746 = vmatprep.mubr.f32.mxu0 0.0
        %747 = vmatmul.mubr.f32.gmra.mxu0 %v529
        %v748 = vpop.f32.mrf.mxu0
        %v749 = vadd.f32 0.0, %v748
        %v750 = vpop.f32.mrf.mxu0
        %751 = vmatprep.mubr.f32.mxu0 0.0
        %752 = vmatmul.mubr.f32.gmra.mxu0 %v532
        %v753 = vpop.f32.mrf.mxu0
        %v754 = vadd.f32 0.0, %v753
        %v755 = vpop.f32.mrf.mxu0
        %756 = vmatprep.mubr.f32.mxu0 0.0
        %757 = vmatmul.mubr.f32.gmra.mxu0 %v535
        %v758 = vpop.f32.mrf.mxu0
        %v759 = vadd.f32 0.0, %v758
        %v760 = vpop.f32.mrf.mxu0
        %761 = vmatprep.mubr.f32.mxu0 0.0
        %762 = vmatmul.mubr.f32.gmra.mxu0 %v538
        %v763 = vpop.f32.mrf.mxu0
        %v764 = vadd.f32 0.0, %v763
        %v765 = vpop.f32.mrf.mxu0
        %766 = vmatprep.mubr.f32.mxu0 0.0
        %767 = vmatmul.mubr.f32.gmra.mxu0 %v541
        %v768 = vpop.f32.mrf.mxu0
        %v769 = vadd.f32 0.0, %v768
        %v770 = vpop.f32.mrf.mxu0
        %771 = vmatprep.mubr.f32.mxu0 0.0
        %772 = vmatmul.mubr.f32.gmra.mxu0 %v544
        %v773 = vpop.f32.mrf.mxu0
        %v774 = vadd.f32 0.0, %v773
        %v775 = vpop.f32.mrf.mxu0
        %776 = vmatprep.mubr.f32.mxu0 0.0
        %777 = vmatmul.mubr.f32.gmra.mxu0 %v547
        %v778 = vpop.f32.mrf.mxu0
        %v779 = vadd.f32 0.0, %v778
        %v780 = vpop.f32.mrf.mxu0
        %781 = vmatprep.mubr.f32.mxu0 0.0
        %782 = vmatmul.mubr.f32.gmra.mxu0 %v550
        %v783 = vpop.f32.mrf.mxu0
        %v784 = vadd.f32 0.0, %v783
        %v785 = vpop.f32.mrf.mxu0
        %786 = vmatprep.mubr.f32.mxu0 0.0
        %787 = vmatmul.mubr.f32.gmra.mxu0 %v553
        %v788 = vpop.f32.mrf.mxu0
        %v789 = vadd.f32 0.0, %v788
        %v790 = vpop.f32.mrf.mxu0
        %791 = vmatprep.mubr.f32.mxu0 0.0
        %792 = vmatmul.mubr.f32.gmra.mxu0 %v556
        %v793 = vpop.f32.mrf.mxu0
        %v794 = vadd.f32 0.0, %v793
        %v795 = vpop.f32.mrf.mxu0
        %796 = vmatprep.mubr.f32.mxu0 0.0
        %797 = vmatmul.mubr.f32.gmra.mxu0 %v559
        %v798 = vpop.f32.mrf.mxu0
        %v799 = vadd.f32 0.0, %v798
        %v800 = vpop.f32.mrf.mxu0
        %801 = vmatprep.mubr.f32.mxu0 0.0
        %802 = vmatmul.mubr.f32.gmra.mxu0 %v562
        %v803 = vpop.f32.mrf.mxu0
        %v804 = vadd.f32 0.0, %v803
        %v805 = vpop.f32.mrf.mxu0
        %806 = vmatprep.mubr.f32.mxu0 0.0
        %807 = vmatmul.mubr.f32.gmra.mxu0 %v565
        %v808 = vpop.f32.mrf.mxu0
        %v809 = vadd.f32 0.0, %v808
        %v810 = vpop.f32.mrf.mxu0
        %811 = vmatprep.mubr.f32.mxu0 0.0
        %812 = vmatmul.mubr.f32.gmra.mxu0 %v568
        %v813 = vpop.f32.mrf.mxu0
        %v814 = vadd.f32 0.0, %v813
        %v815 = vpop.f32.mrf.mxu0
        %816 = vmatprep.mubr.f32.mxu0 0.0
        %817 = vmatmul.mubr.f32.gmra.mxu0 %v571
        %v818 = vpop.f32.mrf.mxu0
        %v819 = vadd.f32 0.0, %v818
        %v820 = vpop.f32.mrf.mxu0
        %821 = vmatprep.mubr.f32.mxu0 0.0
        %822 = vmatmul.mubr.f32.gmra.mxu0 %v574
        %v823 = vpop.f32.mrf.mxu0
        %v824 = vadd.f32 0.0, %v823
        %v825 = vpop.f32.mrf.mxu0
        %826 = vmatprep.mubr.f32.mxu0 0.0
        %827 = vmatmul.mubr.f32.gmra.mxu0 %v577
        %v828 = vpop.f32.mrf.mxu0
        %v829 = vadd.f32 0.0, %v828
        %v830 = vpop.f32.mrf.mxu0
        %831 = vmatprep.mubr.f32.mxu0 0.0
        %832 = vmatmul.mubr.f32.gmra.mxu0 %v580
        %v833 = vpop.f32.mrf.mxu0
        %v834 = vadd.f32 0.0, %v833
        %v835 = vpop.f32.mrf.mxu0
        %836 = vmatprep.mubr.f32.mxu0 0.0
        %837 = vmatmul.mubr.f32.gmra.mxu0 %v583
        %v838 = vpop.f32.mrf.mxu0
        %v839 = vadd.f32 0.0, %v838
        %v840 = vpop.f32.mrf.mxu0
        %841 = vmatprep.mubr.f32.mxu0 0.0
        %842 = vmatmul.mubr.f32.gmra.mxu0 %v586
        %v843 = vpop.f32.mrf.mxu0
        %v844 = vadd.f32 0.0, %v843
        %v845 = vpop.f32.mrf.mxu0
        %846 = vmatprep.mubr.f32.mxu0 0.0
        %847 = vmatmul.mubr.f32.gmra.mxu0 %v589
        %v848 = vpop.f32.mrf.mxu0
        %v849 = vadd.f32 0.0, %v848
        %v850 = vpop.f32.mrf.mxu0
        %851 = vmatprep.mubr.f32.mxu0 0.0
        %852 = vmatmul.mubr.f32.gmra.mxu0 %v592
        %v853 = vpop.f32.mrf.mxu0
        %v854 = vadd.f32 0.0, %v853
        %v855 = vpop.f32.mrf.mxu0
        %856 = vmatprep.mubr.f32.mxu0 0.0
        %857 = vmatmul.mubr.f32.gmra.mxu0 %v595
        %v858 = vpop.f32.mrf.mxu0
        %v859 = vadd.f32 0.0, %v858
        %v860 = vpop.f32.mrf.mxu0
        %861 = vmatprep.mubr.f32.mxu0 0.0
        %862 = vmatmul.mubr.f32.gmra.mxu0 %v598
        %v863 = vpop.f32.mrf.mxu0
        %v864 = vadd.f32 0.0, %v863
        %v865 = vpop.f32.mrf.mxu0
        %866 = vmatprep.mubr.f32.mxu0 0.0
        %867 = vmatmul.mubr.f32.gmra.mxu0 %v601
        %v868 = vpop.f32.mrf.mxu0
        %v869 = vadd.f32 0.0, %v868
        %v870 = vpop.f32.mrf.mxu0
        %871 = vmatprep.mubr.f32.mxu0 0.0
        %872 = vmatmul.mubr.f32.gmra.mxu0 %v604
        %v873 = vpop.f32.mrf.mxu0
        %v874 = vadd.f32 0.0, %v873
        %v875 = vpop.f32.mrf.mxu0
        %876 = vmatprep.mubr.f32.mxu0 0.0
        %877 = vmatmul.mubr.f32.gmra.mxu0 %v607
        %v878 = vpop.f32.mrf.mxu0
        %v879 = vadd.f32 0.0, %v878
        %v880 = vpop.f32.mrf.mxu0
        %881 = vmatprep.mubr.f32.mxu0 0.0
        %882 = vmatmul.mubr.f32.gmra.mxu0 %v610
        %v883 = vpop.f32.mrf.mxu0
        %v884 = vadd.f32 0.0, %v883
        %v885 = vpop.f32.mrf.mxu0
        %886 = vmatprep.mubr.f32.mxu0 0.0
        %887 = vmatmul.mubr.f32.gmra.mxu0 %v613
        %v888 = vpop.f32.mrf.mxu0
        %v889 = vadd.f32 0.0, %v888
        %v890 = vpop.f32.mrf.mxu0
        %891 = vmatprep.mubr.f32.mxu0 0.0
        %892 = vmatmul.mubr.f32.gmra.mxu0 %v616
        %v893 = vpop.f32.mrf.mxu0
        %v894 = vadd.f32 0.0, %v893
        %v895 = vpop.f32.mrf.mxu0
        %896 = vmatprep.mubr.f32.mxu0 0.0
        %897 = vmatmul.mubr.f32.gmra.mxu0 %v619
        %v898 = vpop.f32.mrf.mxu0
        %v899 = vadd.f32 0.0, %v898
        %v900 = vpop.f32.mrf.mxu0
        %901 = vmatprep.mubr.f32.mxu0 0.0
        %902 = vmatmul.mubr.f32.gmra.mxu0 %v622
        %v903 = vpop.f32.mrf.mxu0
        %v904 = vadd.f32 0.0, %v903
        %v905 = vpop.f32.mrf.mxu0
        %906 = vmatprep.mubr.f32.mxu0 0.0
        %907 = vmatmul.mubr.f32.gmra.mxu0 %v625
        %v908 = vpop.f32.mrf.mxu0
        %v909 = vadd.f32 0.0, %v908
        %v910 = vpop.f32.mrf.mxu0
        %911 = vmatprep.mubr.f32.mxu0 0.0
        %912 = vmatmul.mubr.f32.gmra.mxu0 %v628
        %v913 = vpop.f32.mrf.mxu0
        %v914 = vadd.f32 0.0, %v913
        %v915 = vpop.f32.mrf.mxu0
        %916 = vmatprep.mubr.f32.mxu0 0.0
        %917 = vmatmul.mubr.f32.gmra.mxu0 %v631
        %v918 = vpop.f32.mrf.mxu0
        %v919 = vadd.f32 0.0, %v918
        %v920 = vpop.f32.mrf.mxu0
        %921 = vmatprep.mubr.f32.mxu0 0.0
        %922 = vmatmul.mubr.f32.gmra.mxu0 %v634
        %v923 = vpop.f32.mrf.mxu0
        %v924 = vadd.f32 0.0, %v923
        %v925 = vpop.f32.mrf.mxu0
        %926 = vmatprep.mubr.f32.mxu0 0.0
        %927 = vmatmul.mubr.f32.gmra.mxu0 %v637
        %v928 = vpop.f32.mrf.mxu0
        %v929 = vadd.f32 0.0, %v928
        %v930 = vpop.f32.mrf.mxu0
        %931 = vmatprep.mubr.f32.mxu0 0.0
        %932 = vmatmul.mubr.f32.gmra.mxu0 %v640
        %v933 = vpop.f32.mrf.mxu0
        %v934 = vadd.f32 0.0, %v933
        %v935 = vpop.f32.mrf.mxu0
        %936 = vmatprep.mubr.f32.mxu0 0.0
        %937 = vmatmul.mubr.f32.gmra.mxu0 %v643
        %v938 = vpop.f32.mrf.mxu0
        %v939 = vadd.f32 0.0, %v938
        %v940 = vpop.f32.mrf.mxu0
        %941 = vmatprep.mubr.f32.mxu0 0.0
        %942 = vmatmul.mubr.f32.gmra.mxu0 %v646
        %v943 = vpop.f32.mrf.mxu0
        %v944 = vadd.f32 0.0, %v943
        %v945 = vpop.f32.mrf.mxu0
        %946 = vmatprep.mubr.f32.mxu0 0.0
        %947 = vmatmul.mubr.f32.gmra.mxu0 %v649
        %v948 = vpop.f32.mrf.mxu0
        %v949 = vadd.f32 0.0, %v948
        %v950 = vpop.f32.mrf.mxu0
        %951 = vmatprep.mubr.f32.mxu0 0.0
        %952 = vmatmul.mubr.f32.gmra.mxu0 %v652
        %v953 = vpop.f32.mrf.mxu0
        %v954 = vadd.f32 0.0, %v953
        %v955 = vpop.f32.mrf.mxu0
        %956 = vmatprep.mubr.f32.mxu0 0.0
        %957 = vmatmul.mubr.f32.gmra.mxu0 %v655
        %v958 = vpop.f32.mrf.mxu0
        %v959 = vadd.f32 0.0, %v958
        %v960 = vpop.f32.mrf.mxu0
        %961 = vdwg.mxu0
        %v963 = vsel %vm240, %v400, 0
        %v966 = vsel %vm240, %v401, 0
        %v969 = vsel %vm240, %v402, 0
        %v972 = vsel %vm240, %v403, 0
        %v975 = vsel %vm240, %v404, 0
        %v978 = vsel %vm240, %v405, 0
        %v981 = vsel %vm240, %v406, 0
        %v984 = vsel %vm240, %v407, 0
        %v987 = vsel %vm240, %v408, 0
        %v990 = vsel %vm240, %v409, 0
        %v993 = vsel %vm240, %v410, 0
        %v996 = vsel %vm240, %v411, 0
        %v999 = vsel %vm240, %v412, 0
        %v1002 = vsel %vm240, %v413, 0
        %v1005 = vsel %vm240, %v414, 0
        %v1008 = vsel %vm240, %v415, 0
        %v1011 = vsel %vm240, %v416, 0
        %v1014 = vsel %vm240, %v417, 0
        %v1017 = vsel %vm240, %v418, 0
        %v1020 = vsel %vm240, %v419, 0
        %v1023 = vsel %vm240, %v420, 0
        %v1026 = vsel %vm240, %v421, 0
        %v1029 = vsel %vm240, %v422, 0
        %v1032 = vsel %vm240, %v423, 0
        %v1035 = vsel %vm240, %v424, 0
        %v1038 = vsel %vm240, %v425, 0
        %v1041 = vsel %vm240, %v426, 0
        %v1044 = vsel %vm240, %v427, 0
        %v1047 = vsel %vm240, %v428, 0
        %v1050 = vsel %vm240, %v429, 0
        %v1053 = vsel %vm240, %v430, 0
        %v1056 = vsel %vm240, %v431, 0
        %v1059 = vsel %vm240, %v432, 0
        %v1062 = vsel %vm240, %v433, 0
        %v1065 = vsel %vm240, %v434, 0
        %v1068 = vsel %vm240, %v435, 0
        %v1071 = vsel %vm240, %v436, 0
        %v1074 = vsel %vm240, %v437, 0
        %v1077 = vsel %vm240, %v438, 0
        %v1080 = vsel %vm240, %v439, 0
        %v1083 = vsel %vm240, %v440, 0
        %v1086 = vsel %vm240, %v441, 0
        %v1089 = vsel %vm240, %v442, 0
        %v1092 = vsel %vm240, %v443, 0
        %v1095 = vsel %vm240, %v444, 0
        %v1098 = vsel %vm240, %v445, 0
        %v1101 = vsel %vm240, %v446, 0
        %v1104 = vsel %vm240, %v447, 0
        %1106 = vmatprep.subr.mxu0 0.0
        %1107 = vmatpush1.msra.mxu0 0.0
        %1108 = vmatprep.subr.mxu0 0.0
        %1109 = vmatpush1.msra.mxu0 0.0
        %1110 = vmatprep.subr.mxu0 0.0
        %1111 = vmatpush1.msra.mxu0 0.0
        %1112 = vmatprep.subr.mxu0 0.0
        %1113 = vmatpush1.msra.mxu0 0.0
        %1114 = vmatprep.subr.mxu0 0.0
        %1115 = vmatpush1.msra.mxu0 0.0
        %1116 = vmatprep.subr.mxu0 0.0
        %1117 = vmatpush1.msra.mxu0 0.0
        %1118 = vmatprep.subr.mxu0 0.0
        %1119 = vmatpush1.msra.mxu0 0.0
        %1120 = vmatprep.subr.mxu0 0.0
        %1121 = vmatpush1.msra.mxu0 0.0
        %1122 = vmatprep.subr.mxu0 0.0
        %1123 = vmatpush1.msra.mxu0 %v455
        %1124 = vmatprep.subr.mxu0 0.0
        %1125 = vmatpush1.msra.mxu0 %v454
        %1126 = vmatprep.subr.mxu0 0.0
        %1127 = vmatpush1.msra.mxu0 %v453
        %1128 = vmatprep.subr.mxu0 0.0
        %1129 = vmatpush1.msra.mxu0 %v452
        %1130 = vmatprep.subr.mxu0 0.0
        %1131 = vmatpush1.msra.mxu0 %v451
        %1132 = vmatprep.subr.mxu0 0.0
        %1133 = vmatpush1.msra.mxu0 %v450
        %1134 = vmatprep.subr.mxu0 0.0
        %1135 = vmatpush1.msra.mxu0 %v449
        %1136 = vmatprep.subr.mxu0 0.0
        %1137 = vmatpush1.msra.mxu0 %v448
        %1138 = vmatprep.subr.mxu0 0.0
        %1139 = vmatpush2.msra.mxu0 0.0
        %1140 = vmatprep.subr.mxu0 0.0
        %1141 = vmatpush2.msra.mxu0 0.0
        %1142 = vmatprep.subr.mxu0 0.0
        %1143 = vmatpush2.msra.mxu0 0.0
        %1144 = vmatprep.subr.mxu0 0.0
        %1145 = vmatpush2.msra.mxu0 0.0
        %1146 = vmatprep.subr.mxu0 0.0
        %1147 = vmatpush2.msra.mxu0 0.0
        %1148 = vmatprep.subr.mxu0 0.0
        %1149 = vmatpush2.msra.mxu0 0.0
        %1150 = vmatprep.subr.mxu0 0.0
        %1151 = vmatpush2.msra.mxu0 0.0
        %1152 = vmatprep.subr.mxu0 0.0
        %1153 = vmatpush2.msra.mxu0 0.0
        %1154 = vmatprep.subr.mxu0 0.0
        %1155 = vmatpush2.msra.mxu0 0.0
        %1156 = vmatprep.subr.mxu0 0.0
        %1157 = vmatpush2.msra.mxu0 0.0
        %1158 = vmatprep.subr.mxu0 0.0
        %1159 = vmatpush2.msra.mxu0 0.0
        %1160 = vmatprep.subr.mxu0 0.0
        %1161 = vmatpush2.msra.mxu0 0.0
        %1162 = vmatprep.subr.mxu0 0.0
        %1163 = vmatpush2.msra.mxu0 0.0
        %1164 = vmatprep.subr.mxu0 0.0
        %1165 = vmatpush2.msra.mxu0 0.0
        %1166 = vmatprep.subr.mxu0 0.0
        %1167 = vmatpush2.msra.mxu0 0.0
        %1168 = vmatprep.subr.mxu0 0.0
        %1169 = vmatpush2.msra.mxu0 0.0
        %1170 = vmatprep.mubr.f32.mxu0 0.0
        %1171 = vmatmul.mubr.f32.gmra.mxu0 %v963
        %v1172 = vpop.f32.mrf.mxu0
        %v1173 = vadd.f32 %v724, %v1172
        %v1174 = vpop.f32.mrf.mxu0
        %1175 = vmatprep.mubr.f32.mxu0 0.0
        %1176 = vmatmul.mubr.f32.gmra.mxu0 %v966
        %v1177 = vpop.f32.mrf.mxu0
        %v1178 = vadd.f32 %v729, %v1177
        %v1179 = vpop.f32.mrf.mxu0
        %1180 = vmatprep.mubr.f32.mxu0 0.0
        %1181 = vmatmul.mubr.f32.gmra.mxu0 %v969
        %v1182 = vpop.f32.mrf.mxu0
        %v1183 = vadd.f32 %v734, %v1182
        %v1184 = vpop.f32.mrf.mxu0
        %1185 = vmatprep.mubr.f32.mxu0 0.0
        %1186 = vmatmul.mubr.f32.gmra.mxu0 %v972
        %v1187 = vpop.f32.mrf.mxu0
        %v1188 = vadd.f32 %v739, %v1187
        %v1189 = vpop.f32.mrf.mxu0
        %1190 = vmatprep.mubr.f32.mxu0 0.0
        %1191 = vmatmul.mubr.f32.gmra.mxu0 %v975
        %v1192 = vpop.f32.mrf.mxu0
        %v1193 = vadd.f32 %v744, %v1192
        %v1194 = vpop.f32.mrf.mxu0
        %1195 = vmatprep.mubr.f32.mxu0 0.0
        %1196 = vmatmul.mubr.f32.gmra.mxu0 %v978
        %v1197 = vpop.f32.mrf.mxu0
        %v1198 = vadd.f32 %v749, %v1197
        %v1199 = vpop.f32.mrf.mxu0
        %1200 = vmatprep.mubr.f32.mxu0 0.0
        %1201 = vmatmul.mubr.f32.gmra.mxu0 %v981
        %v1202 = vpop.f32.mrf.mxu0
        %v1203 = vadd.f32 %v754, %v1202
        %v1204 = vpop.f32.mrf.mxu0
        %1205 = vmatprep.mubr.f32.mxu0 0.0
        %1206 = vmatmul.mubr.f32.gmra.mxu0 %v984
        %v1207 = vpop.f32.mrf.mxu0
        %v1208 = vadd.f32 %v759, %v1207
        %v1209 = vpop.f32.mrf.mxu0
        %1210 = vmatprep.mubr.f32.mxu0 0.0
        %1211 = vmatmul.mubr.f32.gmra.mxu0 %v987
        %v1212 = vpop.f32.mrf.mxu0
        %v1213 = vadd.f32 %v764, %v1212
        %v1214 = vpop.f32.mrf.mxu0
        %1215 = vmatprep.mubr.f32.mxu0 0.0
        %1216 = vmatmul.mubr.f32.gmra.mxu0 %v990
        %v1217 = vpop.f32.mrf.mxu0
        %v1218 = vadd.f32 %v769, %v1217
        %v1219 = vpop.f32.mrf.mxu0
        %1220 = vmatprep.mubr.f32.mxu0 0.0
        %1221 = vmatmul.mubr.f32.gmra.mxu0 %v993
        %v1222 = vpop.f32.mrf.mxu0
        %v1223 = vadd.f32 %v774, %v1222
        %v1224 = vpop.f32.mrf.mxu0
        %1225 = vmatprep.mubr.f32.mxu0 0.0
        %1226 = vmatmul.mubr.f32.gmra.mxu0 %v996
        %v1227 = vpop.f32.mrf.mxu0
        %v1228 = vadd.f32 %v779, %v1227
        %v1229 = vpop.f32.mrf.mxu0
        %1230 = vmatprep.mubr.f32.mxu0 0.0
        %1231 = vmatmul.mubr.f32.gmra.mxu0 %v999
        %v1232 = vpop.f32.mrf.mxu0
        %v1233 = vadd.f32 %v784, %v1232
        %v1234 = vpop.f32.mrf.mxu0
        %1235 = vmatprep.mubr.f32.mxu0 0.0
        %1236 = vmatmul.mubr.f32.gmra.mxu0 %v1002
        %v1237 = vpop.f32.mrf.mxu0
        %v1238 = vadd.f32 %v789, %v1237
        %v1239 = vpop.f32.mrf.mxu0
        %1240 = vmatprep.mubr.f32.mxu0 0.0
        %1241 = vmatmul.mubr.f32.gmra.mxu0 %v1005
        %v1242 = vpop.f32.mrf.mxu0
        %v1243 = vadd.f32 %v794, %v1242
        %v1244 = vpop.f32.mrf.mxu0
        %1245 = vmatprep.mubr.f32.mxu0 0.0
        %1246 = vmatmul.mubr.f32.gmra.mxu0 %v1008
        %v1247 = vpop.f32.mrf.mxu0
        %v1248 = vadd.f32 %v799, %v1247
        %v1249 = vpop.f32.mrf.mxu0
        %1250 = vmatprep.mubr.f32.mxu0 0.0
        %1251 = vmatmul.mubr.f32.gmra.mxu0 %v1011
        %v1252 = vpop.f32.mrf.mxu0
        %v1253 = vadd.f32 %v804, %v1252
        %v1254 = vpop.f32.mrf.mxu0
        %1255 = vmatprep.mubr.f32.mxu0 0.0
        %1256 = vmatmul.mubr.f32.gmra.mxu0 %v1014
        %v1257 = vpop.f32.mrf.mxu0
        %v1258 = vadd.f32 %v809, %v1257
        %v1259 = vpop.f32.mrf.mxu0
        %1260 = vmatprep.mubr.f32.mxu0 0.0
        %1261 = vmatmul.mubr.f32.gmra.mxu0 %v1017
        %v1262 = vpop.f32.mrf.mxu0
        %v1263 = vadd.f32 %v814, %v1262
        %v1264 = vpop.f32.mrf.mxu0
        %1265 = vmatprep.mubr.f32.mxu0 0.0
        %1266 = vmatmul.mubr.f32.gmra.mxu0 %v1020
        %v1267 = vpop.f32.mrf.mxu0
        %v1268 = vadd.f32 %v819, %v1267
        %v1269 = vpop.f32.mrf.mxu0
        %1270 = vmatprep.mubr.f32.mxu0 0.0
        %1271 = vmatmul.mubr.f32.gmra.mxu0 %v1023
        %v1272 = vpop.f32.mrf.mxu0
        %v1273 = vadd.f32 %v824, %v1272
        %v1274 = vpop.f32.mrf.mxu0
        %1275 = vmatprep.mubr.f32.mxu0 0.0
        %1276 = vmatmul.mubr.f32.gmra.mxu0 %v1026
        %v1277 = vpop.f32.mrf.mxu0
        %v1278 = vadd.f32 %v829, %v1277
        %v1279 = vpop.f32.mrf.mxu0
        %1280 = vmatprep.mubr.f32.mxu0 0.0
        %1281 = vmatmul.mubr.f32.gmra.mxu0 %v1029
        %v1282 = vpop.f32.mrf.mxu0
        %v1283 = vadd.f32 %v834, %v1282
        %v1284 = vpop.f32.mrf.mxu0
        %1285 = vmatprep.mubr.f32.mxu0 0.0
        %1286 = vmatmul.mubr.f32.gmra.mxu0 %v1032
        %v1287 = vpop.f32.mrf.mxu0
        %v1288 = vadd.f32 %v839, %v1287
        %v1289 = vpop.f32.mrf.mxu0
        %1290 = vmatprep.mubr.f32.mxu0 0.0
        %1291 = vmatmul.mubr.f32.gmra.mxu0 %v1035
        %v1292 = vpop.f32.mrf.mxu0
        %v1293 = vadd.f32 %v844, %v1292
        %v1294 = vpop.f32.mrf.mxu0
        %1295 = vmatprep.mubr.f32.mxu0 0.0
        %1296 = vmatmul.mubr.f32.gmra.mxu0 %v1038
        %v1297 = vpop.f32.mrf.mxu0
        %v1298 = vadd.f32 %v849, %v1297
        %v1299 = vpop.f32.mrf.mxu0
        %1300 = vmatprep.mubr.f32.mxu0 0.0
        %1301 = vmatmul.mubr.f32.gmra.mxu0 %v1041
        %v1302 = vpop.f32.mrf.mxu0
        %v1303 = vadd.f32 %v854, %v1302
        %v1304 = vpop.f32.mrf.mxu0
        %1305 = vmatprep.mubr.f32.mxu0 0.0
        %1306 = vmatmul.mubr.f32.gmra.mxu0 %v1044
        %v1307 = vpop.f32.mrf.mxu0
        %v1308 = vadd.f32 %v859, %v1307
        %v1309 = vpop.f32.mrf.mxu0
        %1310 = vmatprep.mubr.f32.mxu0 0.0
        %1311 = vmatmul.mubr.f32.gmra.mxu0 %v1047
        %v1312 = vpop.f32.mrf.mxu0
        %v1313 = vadd.f32 %v864, %v1312
        %v1314 = vpop.f32.mrf.mxu0
        %1315 = vmatprep.mubr.f32.mxu0 0.0
        %1316 = vmatmul.mubr.f32.gmra.mxu0 %v1050
        %v1317 = vpop.f32.mrf.mxu0
        %v1318 = vadd.f32 %v869, %v1317
        %v1319 = vpop.f32.mrf.mxu0
        %1320 = vmatprep.mubr.f32.mxu0 0.0
        %1321 = vmatmul.mubr.f32.gmra.mxu0 %v1053
        %v1322 = vpop.f32.mrf.mxu0
        %v1323 = vadd.f32 %v874, %v1322
        %v1324 = vpop.f32.mrf.mxu0
        %1325 = vmatprep.mubr.f32.mxu0 0.0
        %1326 = vmatmul.mubr.f32.gmra.mxu0 %v1056
        %v1327 = vpop.f32.mrf.mxu0
        %v1328 = vadd.f32 %v879, %v1327
        %v1329 = vpop.f32.mrf.mxu0
        %1330 = vmatprep.mubr.f32.mxu0 0.0
        %1331 = vmatmul.mubr.f32.gmra.mxu0 %v1059
        %v1332 = vpop.f32.mrf.mxu0
        %v1333 = vadd.f32 %v884, %v1332
        %v1334 = vpop.f32.mrf.mxu0
        %1335 = vmatprep.mubr.f32.mxu0 0.0
        %1336 = vmatmul.mubr.f32.gmra.mxu0 %v1062
        %v1337 = vpop.f32.mrf.mxu0
        %v1338 = vadd.f32 %v889, %v1337
        %v1339 = vpop.f32.mrf.mxu0
        %1340 = vmatprep.mubr.f32.mxu0 0.0
        %1341 = vmatmul.mubr.f32.gmra.mxu0 %v1065
        %v1342 = vpop.f32.mrf.mxu0
        %v1343 = vadd.f32 %v894, %v1342
        %v1344 = vpop.f32.mrf.mxu0
        %1345 = vmatprep.mubr.f32.mxu0 0.0
        %1346 = vmatmul.mubr.f32.gmra.mxu0 %v1068
        %v1347 = vpop.f32.mrf.mxu0
        %v1348 = vadd.f32 %v899, %v1347
        %v1349 = vpop.f32.mrf.mxu0
        %1350 = vmatprep.mubr.f32.mxu0 0.0
        %1351 = vmatmul.mubr.f32.gmra.mxu0 %v1071
        %v1352 = vpop.f32.mrf.mxu0
        %v1353 = vadd.f32 %v904, %v1352
        %v1354 = vpop.f32.mrf.mxu0
        %1355 = vmatprep.mubr.f32.mxu0 0.0
        %1356 = vmatmul.mubr.f32.gmra.mxu0 %v1074
        %v1357 = vpop.f32.mrf.mxu0
        %v1358 = vadd.f32 %v909, %v1357
        %v1359 = vpop.f32.mrf.mxu0
        %1360 = vmatprep.mubr.f32.mxu0 0.0
        %1361 = vmatmul.mubr.f32.gmra.mxu0 %v1077
        %v1362 = vpop.f32.mrf.mxu0
        %v1363 = vadd.f32 %v914, %v1362
        %v1364 = vpop.f32.mrf.mxu0
        %1365 = vmatprep.mubr.f32.mxu0 0.0
        %1366 = vmatmul.mubr.f32.gmra.mxu0 %v1080
        %v1367 = vpop.f32.mrf.mxu0
        %v1368 = vadd.f32 %v919, %v1367
        %v1369 = vpop.f32.mrf.mxu0
        %1370 = vmatprep.mubr.f32.mxu0 0.0
        %1371 = vmatmul.mubr.f32.gmra.mxu0 %v1083
        %v1372 = vpop.f32.mrf.mxu0
        %v1373 = vadd.f32 %v924, %v1372
        %v1374 = vpop.f32.mrf.mxu0
        %1375 = vmatprep.mubr.f32.mxu0 0.0
        %1376 = vmatmul.mubr.f32.gmra.mxu0 %v1086
        %v1377 = vpop.f32.mrf.mxu0
        %v1378 = vadd.f32 %v929, %v1377
        %v1379 = vpop.f32.mrf.mxu0
        %1380 = vmatprep.mubr.f32.mxu0 0.0
        %1381 = vmatmul.mubr.f32.gmra.mxu0 %v1089
        %v1382 = vpop.f32.mrf.mxu0
        %v1383 = vadd.f32 %v934, %v1382
        %v1384 = vpop.f32.mrf.mxu0
        %1385 = vmatprep.mubr.f32.mxu0 0.0
        %1386 = vmatmul.mubr.f32.gmra.mxu0 %v1092
        %v1387 = vpop.f32.mrf.mxu0
        %v1388 = vadd.f32 %v939, %v1387
        %v1389 = vpop.f32.mrf.mxu0
        %1390 = vmatprep.mubr.f32.mxu0 0.0
        %1391 = vmatmul.mubr.f32.gmra.mxu0 %v1095
        %v1392 = vpop.f32.mrf.mxu0
        %v1393 = vadd.f32 %v944, %v1392
        %v1394 = vpop.f32.mrf.mxu0
        %1395 = vmatprep.mubr.f32.mxu0 0.0
        %1396 = vmatmul.mubr.f32.gmra.mxu0 %v1098
        %v1397 = vpop.f32.mrf.mxu0
        %v1398 = vadd.f32 %v949, %v1397
        %v1399 = vpop.f32.mrf.mxu0
        %1400 = vmatprep.mubr.f32.mxu0 0.0
        %1401 = vmatmul.mubr.f32.gmra.mxu0 %v1101
        %v1402 = vpop.f32.mrf.mxu0
        %v1403 = vadd.f32 %v954, %v1402
        %v1404 = vpop.f32.mrf.mxu0
        %1405 = vmatprep.mubr.f32.mxu0 0.0
        %1406 = vmatmul.mubr.f32.gmra.mxu0 %v1104
        %v1407 = vpop.f32.mrf.mxu0
        %v1408 = vadd.f32 %v959, %v1407
        %v1409 = vpop.f32.mrf.mxu0
        %1410 = vdwg.mxu0
        %v1411 = vld [vmem:[#allocation2 + $0x9] sm:$0xff]
        %v1412 = vld [vmem:[#allocation2 + $0x11] sm:$0xff]
        %v1413 = vld [vmem:[#allocation2 + $0x19] sm:$0xff]
        %v1414 = vld [vmem:[#allocation2 + $0x21] sm:$0xff]
        %v1415 = vld [vmem:[#allocation2 + $0x29] sm:$0xff]
        %v1416 = vld [vmem:[#allocation2 + $0x31] sm:$0xff]
        %v1417 = vld [vmem:[#allocation2 + $0x39] sm:$0xff]
        %v1418 = vld [vmem:[#allocation2 + $0x41] sm:$0xff]
        %v1419 = vld [vmem:[#allocation2 + $0x49] sm:$0xff]
        %v1420 = vld [vmem:[#allocation2 + $0x51] sm:$0xff]
        %v1421 = vld [vmem:[#allocation2 + $0x59] sm:$0xff]
        %v1422 = vld [vmem:[#allocation2 + $0x61] sm:$0xff]
        %v1423 = vld [vmem:[#allocation2 + $0x69] sm:$0xff]
        %v1424 = vld [vmem:[#allocation2 + $0x71] sm:$0xff]
        %v1425 = vld [vmem:[#allocation2 + $0x79] sm:$0xff]
        %v1426 = vld [vmem:[#allocation2 + $0x81] sm:$0xff]
        %v1427 = vld [vmem:[#allocation2 + $0x89] sm:$0xff]
        %v1428 = vld [vmem:[#allocation2 + $0x91] sm:$0xff]
        %v1429 = vld [vmem:[#allocation2 + $0x99] sm:$0xff]
        %v1430 = vld [vmem:[#allocation2 + $0xa1] sm:$0xff]
        %v1431 = vld [vmem:[#allocation2 + $0xa9] sm:$0xff]
        %v1432 = vld [vmem:[#allocation2 + $0xb1] sm:$0xff]
        %v1433 = vld [vmem:[#allocation2 + $0xb9] sm:$0xff]
        %v1434 = vld [vmem:[#allocation2 + $0xc1] sm:$0xff]
        %v1435 = vld [vmem:[#allocation2 + $0xc9] sm:$0xff]
        %v1436 = vld [vmem:[#allocation2 + $0xd1] sm:$0xff]
        %v1437 = vld [vmem:[#allocation2 + $0xd9] sm:$0xff]
        %v1438 = vld [vmem:[#allocation2 + $0xe1] sm:$0xff]
        %v1439 = vld [vmem:[#allocation2 + $0xe9] sm:$0xff]
        %v1440 = vld [vmem:[#allocation2 + $0xf1] sm:$0xff]
        %v1441 = vld [vmem:[#allocation2 + $0xf9] sm:$0xff]
        %v1442 = vld [vmem:[#allocation2 + $0x101] sm:$0xff]
        %v1443 = vld [vmem:[#allocation2 + $0x109] sm:$0xff]
        %v1444 = vld [vmem:[#allocation2 + $0x111] sm:$0xff]
        %v1445 = vld [vmem:[#allocation2 + $0x119] sm:$0xff]
        %v1446 = vld [vmem:[#allocation2 + $0x121] sm:$0xff]
        %v1447 = vld [vmem:[#allocation2 + $0x129] sm:$0xff]
        %v1448 = vld [vmem:[#allocation2 + $0x131] sm:$0xff]
        %v1449 = vld [vmem:[#allocation2 + $0x139] sm:$0xff]
        %v1450 = vld [vmem:[#allocation2 + $0x141] sm:$0xff]
        %v1451 = vld [vmem:[#allocation2 + $0x149] sm:$0xff]
        %v1452 = vld [vmem:[#allocation2 + $0x151] sm:$0xff]
        %v1453 = vld [vmem:[#allocation2 + $0x159] sm:$0xff]
        %v1454 = vld [vmem:[#allocation2 + $0x161] sm:$0xff]
        %v1455 = vld [vmem:[#allocation2 + $0x169] sm:$0xff]
        %v1456 = vld [vmem:[#allocation2 + $0x171] sm:$0xff]
        %v1457 = vld [vmem:[#allocation2 + $0x179] sm:$0xff]
        %v1458 = vld [vmem:[#allocation2 + $0x181] sm:$0xff]
        %s1459 = scalar_lea.vmem %s1, 128
        %v1460 = vld [vmem:[%s1459] sm:$0xff]
        %v1461 = vld [vmem:[%s1459 + $0x8] sm:$0xff]
        %v1462 = vld [vmem:[%s1459 + $0x10] sm:$0xff]
        %v1463 = vld [vmem:[%s1459 + $0x18] sm:$0xff]
        %v1464 = vld [vmem:[%s1459 + $0x20] sm:$0xff]
        %v1465 = vld [vmem:[%s1459 + $0x28] sm:$0xff]
        %v1466 = vld [vmem:[%s1459 + $0x30] sm:$0xff]
        %v1467 = vld [vmem:[%s1459 + $0x38] sm:$0xff]
        %v1469 = vsel %vm240, %v1411, 0
        %v1472 = vsel %vm240, %v1412, 0
        %v1475 = vsel %vm240, %v1413, 0
        %v1478 = vsel %vm240, %v1414, 0
        %v1481 = vsel %vm240, %v1415, 0
        %v1484 = vsel %vm240, %v1416, 0
        %v1487 = vsel %vm240, %v1417, 0
        %v1490 = vsel %vm240, %v1418, 0
        %v1493 = vsel %vm240, %v1419, 0
        %v1496 = vsel %vm240, %v1420, 0
        %v1499 = vsel %vm240, %v1421, 0
        %v1502 = vsel %vm240, %v1422, 0
        %v1505 = vsel %vm240, %v1423, 0
        %v1508 = vsel %vm240, %v1424, 0
        %v1511 = vsel %vm240, %v1425, 0
        %v1514 = vsel %vm240, %v1426, 0
        %v1517 = vsel %vm240, %v1427, 0
        %v1520 = vsel %vm240, %v1428, 0
        %v1523 = vsel %vm240, %v1429, 0
        %v1526 = vsel %vm240, %v1430, 0
        %v1529 = vsel %vm240, %v1431, 0
        %v1532 = vsel %vm240, %v1432, 0
        %v1535 = vsel %vm240, %v1433, 0
        %v1538 = vsel %vm240, %v1434, 0
        %v1541 = vsel %vm240, %v1435, 0
        %v1544 = vsel %vm240, %v1436, 0
        %v1547 = vsel %vm240, %v1437, 0
        %v1550 = vsel %vm240, %v1438, 0
        %v1553 = vsel %vm240, %v1439, 0
        %v1556 = vsel %vm240, %v1440, 0
        %v1559 = vsel %vm240, %v1441, 0
        %v1562 = vsel %vm240, %v1442, 0
        %v1565 = vsel %vm240, %v1443, 0
        %v1568 = vsel %vm240, %v1444, 0
        %v1571 = vsel %vm240, %v1445, 0
        %v1574 = vsel %vm240, %v1446, 0
        %v1577 = vsel %vm240, %v1447, 0
        %v1580 = vsel %vm240, %v1448, 0
        %v1583 = vsel %vm240, %v1449, 0
        %v1586 = vsel %vm240, %v1450, 0
        %v1589 = vsel %vm240, %v1451, 0
        %v1592 = vsel %vm240, %v1452, 0
        %v1595 = vsel %vm240, %v1453, 0
        %v1598 = vsel %vm240, %v1454, 0
        %v1601 = vsel %vm240, %v1455, 0
        %v1604 = vsel %vm240, %v1456, 0
        %v1607 = vsel %vm240, %v1457, 0
        %v1610 = vsel %vm240, %v1458, 0
        %1612 = vmatprep.subr.mxu0 0.0
        %1613 = vmatpush1.msra.mxu0 0.0
        %1614 = vmatprep.subr.mxu0 0.0
        %1615 = vmatpush1.msra.mxu0 0.0
        %1616 = vmatprep.subr.mxu0 0.0
        %1617 = vmatpush1.msra.mxu0 0.0
        %1618 = vmatprep.subr.mxu0 0.0
        %1619 = vmatpush1.msra.mxu0 0.0
        %1620 = vmatprep.subr.mxu0 0.0
        %1621 = vmatpush1.msra.mxu0 0.0
        %1622 = vmatprep.subr.mxu0 0.0
        %1623 = vmatpush1.msra.mxu0 0.0
        %1624 = vmatprep.subr.mxu0 0.0
        %1625 = vmatpush1.msra.mxu0 0.0
        %1626 = vmatprep.subr.mxu0 0.0
        %1627 = vmatpush1.msra.mxu0 0.0
        %1628 = vmatprep.subr.mxu0 0.0
        %1629 = vmatpush1.msra.mxu0 %v1467
        %1630 = vmatprep.subr.mxu0 0.0
        %1631 = vmatpush1.msra.mxu0 %v1466
        %1632 = vmatprep.subr.mxu0 0.0
        %1633 = vmatpush1.msra.mxu0 %v1465
        %1634 = vmatprep.subr.mxu0 0.0
        %1635 = vmatpush1.msra.mxu0 %v1464
        %1636 = vmatprep.subr.mxu0 0.0
        %1637 = vmatpush1.msra.mxu0 %v1463
        %1638 = vmatprep.subr.mxu0 0.0
        %1639 = vmatpush1.msra.mxu0 %v1462
        %1640 = vmatprep.subr.mxu0 0.0
        %1641 = vmatpush1.msra.mxu0 %v1461
        %1642 = vmatprep.subr.mxu0 0.0
        %1643 = vmatpush1.msra.mxu0 %v1460
        %1644 = vmatprep.subr.mxu0 0.0
        %1645 = vmatpush2.msra.mxu0 0.0
        %1646 = vmatprep.subr.mxu0 0.0
        %1647 = vmatpush2.msra.mxu0 0.0
        %1648 = vmatprep.subr.mxu0 0.0
        %1649 = vmatpush2.msra.mxu0 0.0
        %1650 = vmatprep.subr.mxu0 0.0
        %1651 = vmatpush2.msra.mxu0 0.0
        %1652 = vmatprep.subr.mxu0 0.0
        %1653 = vmatpush2.msra.mxu0 0.0
        %1654 = vmatprep.subr.mxu0 0.0
        %1655 = vmatpush2.msra.mxu0 0.0
        %1656 = vmatprep.subr.mxu0 0.0
        %1657 = vmatpush2.msra.mxu0 0.0
        %1658 = vmatprep.subr.mxu0 0.0
        %1659 = vmatpush2.msra.mxu0 0.0
        %1660 = vmatprep.subr.mxu0 0.0
        %1661 = vmatpush2.msra.mxu0 0.0
        %1662 = vmatprep.subr.mxu0 0.0
        %1663 = vmatpush2.msra.mxu0 0.0
        %1664 = vmatprep.subr.mxu0 0.0
        %1665 = vmatpush2.msra.mxu0 0.0
        %1666 = vmatprep.subr.mxu0 0.0
        %1667 = vmatpush2.msra.mxu0 0.0
        %1668 = vmatprep.subr.mxu0 0.0
        %1669 = vmatpush2.msra.mxu0 0.0
        %1670 = vmatprep.subr.mxu0 0.0
        %1671 = vmatpush2.msra.mxu0 0.0
        %1672 = vmatprep.subr.mxu0 0.0
        %1673 = vmatpush2.msra.mxu0 0.0
        %1674 = vmatprep.subr.mxu0 0.0
        %1675 = vmatpush2.msra.mxu0 0.0
        %1676 = vmatprep.mubr.f32.mxu0 0.0
        %1677 = vmatmul.mubr.f32.gmra.mxu0 %v1469
        %v1678 = vpop.f32.mrf.mxu0
        %v1679 = vadd.f32 0.0, %v1678
        %v1680 = vpop.f32.mrf.mxu0
        %1681 = vmatprep.mubr.f32.mxu0 0.0
        %1682 = vmatmul.mubr.f32.gmra.mxu0 %v1472
        %v1683 = vpop.f32.mrf.mxu0
        %v1684 = vadd.f32 0.0, %v1683
        %v1685 = vpop.f32.mrf.mxu0
        %1686 = vmatprep.mubr.f32.mxu0 0.0
        %1687 = vmatmul.mubr.f32.gmra.mxu0 %v1475
        %v1688 = vpop.f32.mrf.mxu0
        %v1689 = vadd.f32 0.0, %v1688
        %v1690 = vpop.f32.mrf.mxu0
        %1691 = vmatprep.mubr.f32.mxu0 0.0
        %1692 = vmatmul.mubr.f32.gmra.mxu0 %v1478
        %v1693 = vpop.f32.mrf.mxu0
        %v1694 = vadd.f32 0.0, %v1693
        %v1695 = vpop.f32.mrf.mxu0
        %1696 = vmatprep.mubr.f32.mxu0 0.0
        %1697 = vmatmul.mubr.f32.gmra.mxu0 %v1481
        %v1698 = vpop.f32.mrf.mxu0
        %v1699 = vadd.f32 0.0, %v1698
        %v1700 = vpop.f32.mrf.mxu0
        %1701 = vmatprep.mubr.f32.mxu0 0.0
        %1702 = vmatmul.mubr.f32.gmra.mxu0 %v1484
        %v1703 = vpop.f32.mrf.mxu0
        %v1704 = vadd.f32 0.0, %v1703
        %v1705 = vpop.f32.mrf.mxu0
        %1706 = vmatprep.mubr.f32.mxu0 0.0
        %1707 = vmatmul.mubr.f32.gmra.mxu0 %v1487
        %v1708 = vpop.f32.mrf.mxu0
        %v1709 = vadd.f32 0.0, %v1708
        %v1710 = vpop.f32.mrf.mxu0
        %1711 = vmatprep.mubr.f32.mxu0 0.0
        %1712 = vmatmul.mubr.f32.gmra.mxu0 %v1490
        %v1713 = vpop.f32.mrf.mxu0
        %v1714 = vadd.f32 0.0, %v1713
        %v1715 = vpop.f32.mrf.mxu0
        %1716 = vmatprep.mubr.f32.mxu0 0.0
        %1717 = vmatmul.mubr.f32.gmra.mxu0 %v1493
        %v1718 = vpop.f32.mrf.mxu0
        %v1719 = vadd.f32 0.0, %v1718
        %v1720 = vpop.f32.mrf.mxu0
        %1721 = vmatprep.mubr.f32.mxu0 0.0
        %1722 = vmatmul.mubr.f32.gmra.mxu0 %v1496
        %v1723 = vpop.f32.mrf.mxu0
        %v1724 = vadd.f32 0.0, %v1723
        %v1725 = vpop.f32.mrf.mxu0
        %1726 = vmatprep.mubr.f32.mxu0 0.0
        %1727 = vmatmul.mubr.f32.gmra.mxu0 %v1499
        %v1728 = vpop.f32.mrf.mxu0
        %v1729 = vadd.f32 0.0, %v1728
        %v1730 = vpop.f32.mrf.mxu0
        %1731 = vmatprep.mubr.f32.mxu0 0.0
        %1732 = vmatmul.mubr.f32.gmra.mxu0 %v1502
        %v1733 = vpop.f32.mrf.mxu0
        %v1734 = vadd.f32 0.0, %v1733
        %v1735 = vpop.f32.mrf.mxu0
        %1736 = vmatprep.mubr.f32.mxu0 0.0
        %1737 = vmatmul.mubr.f32.gmra.mxu0 %v1505
        %v1738 = vpop.f32.mrf.mxu0
        %v1739 = vadd.f32 0.0, %v1738
        %v1740 = vpop.f32.mrf.mxu0
        %1741 = vmatprep.mubr.f32.mxu0 0.0
        %1742 = vmatmul.mubr.f32.gmra.mxu0 %v1508
        %v1743 = vpop.f32.mrf.mxu0
        %v1744 = vadd.f32 0.0, %v1743
        %v1745 = vpop.f32.mrf.mxu0
        %1746 = vmatprep.mubr.f32.mxu0 0.0
        %1747 = vmatmul.mubr.f32.gmra.mxu0 %v1511
        %v1748 = vpop.f32.mrf.mxu0
        %v1749 = vadd.f32 0.0, %v1748
        %v1750 = vpop.f32.mrf.mxu0
        %1751 = vmatprep.mubr.f32.mxu0 0.0
        %1752 = vmatmul.mubr.f32.gmra.mxu0 %v1514
        %v1753 = vpop.f32.mrf.mxu0
        %v1754 = vadd.f32 0.0, %v1753
        %v1755 = vpop.f32.mrf.mxu0
        %1756 = vmatprep.mubr.f32.mxu0 0.0
        %1757 = vmatmul.mubr.f32.gmra.mxu0 %v1517
        %v1758 = vpop.f32.mrf.mxu0
        %v1759 = vadd.f32 0.0, %v1758
        %v1760 = vpop.f32.mrf.mxu0
        %1761 = vmatprep.mubr.f32.mxu0 0.0
        %1762 = vmatmul.mubr.f32.gmra.mxu0 %v1520
        %v1763 = vpop.f32.mrf.mxu0
        %v1764 = vadd.f32 0.0, %v1763
        %v1765 = vpop.f32.mrf.mxu0
        %1766 = vmatprep.mubr.f32.mxu0 0.0
        %1767 = vmatmul.mubr.f32.gmra.mxu0 %v1523
        %v1768 = vpop.f32.mrf.mxu0
        %v1769 = vadd.f32 0.0, %v1768
        %v1770 = vpop.f32.mrf.mxu0
        %1771 = vmatprep.mubr.f32.mxu0 0.0
        %1772 = vmatmul.mubr.f32.gmra.mxu0 %v1526
        %v1773 = vpop.f32.mrf.mxu0
        %v1774 = vadd.f32 0.0, %v1773
        %v1775 = vpop.f32.mrf.mxu0
        %1776 = vmatprep.mubr.f32.mxu0 0.0
        %1777 = vmatmul.mubr.f32.gmra.mxu0 %v1529
        %v1778 = vpop.f32.mrf.mxu0
        %v1779 = vadd.f32 0.0, %v1778
        %v1780 = vpop.f32.mrf.mxu0
        %1781 = vmatprep.mubr.f32.mxu0 0.0
        %1782 = vmatmul.mubr.f32.gmra.mxu0 %v1532
        %v1783 = vpop.f32.mrf.mxu0
        %v1784 = vadd.f32 0.0, %v1783
        %v1785 = vpop.f32.mrf.mxu0
        %1786 = vmatprep.mubr.f32.mxu0 0.0
        %1787 = vmatmul.mubr.f32.gmra.mxu0 %v1535
        %v1788 = vpop.f32.mrf.mxu0
        %v1789 = vadd.f32 0.0, %v1788
        %v1790 = vpop.f32.mrf.mxu0
        %1791 = vmatprep.mubr.f32.mxu0 0.0
        %1792 = vmatmul.mubr.f32.gmra.mxu0 %v1538
        %v1793 = vpop.f32.mrf.mxu0
        %v1794 = vadd.f32 0.0, %v1793
        %v1795 = vpop.f32.mrf.mxu0
        %1796 = vmatprep.mubr.f32.mxu0 0.0
        %1797 = vmatmul.mubr.f32.gmra.mxu0 %v1541
        %v1798 = vpop.f32.mrf.mxu0
        %v1799 = vadd.f32 0.0, %v1798
        %v1800 = vpop.f32.mrf.mxu0
        %1801 = vmatprep.mubr.f32.mxu0 0.0
        %1802 = vmatmul.mubr.f32.gmra.mxu0 %v1544
        %v1803 = vpop.f32.mrf.mxu0
        %v1804 = vadd.f32 0.0, %v1803
        %v1805 = vpop.f32.mrf.mxu0
        %1806 = vmatprep.mubr.f32.mxu0 0.0
        %1807 = vmatmul.mubr.f32.gmra.mxu0 %v1547
        %v1808 = vpop.f32.mrf.mxu0
        %v1809 = vadd.f32 0.0, %v1808
        %v1810 = vpop.f32.mrf.mxu0
        %1811 = vmatprep.mubr.f32.mxu0 0.0
        %1812 = vmatmul.mubr.f32.gmra.mxu0 %v1550
        %v1813 = vpop.f32.mrf.mxu0
        %v1814 = vadd.f32 0.0, %v1813
        %v1815 = vpop.f32.mrf.mxu0
        %1816 = vmatprep.mubr.f32.mxu0 0.0
        %1817 = vmatmul.mubr.f32.gmra.mxu0 %v1553
        %v1818 = vpop.f32.mrf.mxu0
        %v1819 = vadd.f32 0.0, %v1818
        %v1820 = vpop.f32.mrf.mxu0
        %1821 = vmatprep.mubr.f32.mxu0 0.0
        %1822 = vmatmul.mubr.f32.gmra.mxu0 %v1556
        %v1823 = vpop.f32.mrf.mxu0
        %v1824 = vadd.f32 0.0, %v1823
        %v1825 = vpop.f32.mrf.mxu0
        %1826 = vmatprep.mubr.f32.mxu0 0.0
        %1827 = vmatmul.mubr.f32.gmra.mxu0 %v1559
        %v1828 = vpop.f32.mrf.mxu0
        %v1829 = vadd.f32 0.0, %v1828
        %v1830 = vpop.f32.mrf.mxu0
        %1831 = vmatprep.mubr.f32.mxu0 0.0
        %1832 = vmatmul.mubr.f32.gmra.mxu0 %v1562
        %v1833 = vpop.f32.mrf.mxu0
        %v1834 = vadd.f32 0.0, %v1833
        %v1835 = vpop.f32.mrf.mxu0
        %1836 = vmatprep.mubr.f32.mxu0 0.0
        %1837 = vmatmul.mubr.f32.gmra.mxu0 %v1565
        %v1838 = vpop.f32.mrf.mxu0
        %v1839 = vadd.f32 0.0, %v1838
        %v1840 = vpop.f32.mrf.mxu0
        %1841 = vmatprep.mubr.f32.mxu0 0.0
        %1842 = vmatmul.mubr.f32.gmra.mxu0 %v1568
        %v1843 = vpop.f32.mrf.mxu0
        %v1844 = vadd.f32 0.0, %v1843
        %v1845 = vpop.f32.mrf.mxu0
        %1846 = vmatprep.mubr.f32.mxu0 0.0
        %1847 = vmatmul.mubr.f32.gmra.mxu0 %v1571
        %v1848 = vpop.f32.mrf.mxu0
        %v1849 = vadd.f32 0.0, %v1848
        %v1850 = vpop.f32.mrf.mxu0
        %1851 = vmatprep.mubr.f32.mxu0 0.0
        %1852 = vmatmul.mubr.f32.gmra.mxu0 %v1574
        %v1853 = vpop.f32.mrf.mxu0
        %v1854 = vadd.f32 0.0, %v1853
        %v1855 = vpop.f32.mrf.mxu0
        %1856 = vmatprep.mubr.f32.mxu0 0.0
        %1857 = vmatmul.mubr.f32.gmra.mxu0 %v1577
        %v1858 = vpop.f32.mrf.mxu0
        %v1859 = vadd.f32 0.0, %v1858
        %v1860 = vpop.f32.mrf.mxu0
        %1861 = vmatprep.mubr.f32.mxu0 0.0
        %1862 = vmatmul.mubr.f32.gmra.mxu0 %v1580
        %v1863 = vpop.f32.mrf.mxu0
        %v1864 = vadd.f32 0.0, %v1863
        %v1865 = vpop.f32.mrf.mxu0
        %1866 = vmatprep.mubr.f32.mxu0 0.0
        %1867 = vmatmul.mubr.f32.gmra.mxu0 %v1583
        %v1868 = vpop.f32.mrf.mxu0
        %v1869 = vadd.f32 0.0, %v1868
        %v1870 = vpop.f32.mrf.mxu0
        %1871 = vmatprep.mubr.f32.mxu0 0.0
        %1872 = vmatmul.mubr.f32.gmra.mxu0 %v1586
        %v1873 = vpop.f32.mrf.mxu0
        %v1874 = vadd.f32 0.0, %v1873
        %v1875 = vpop.f32.mrf.mxu0
        %1876 = vmatprep.mubr.f32.mxu0 0.0
        %1877 = vmatmul.mubr.f32.gmra.mxu0 %v1589
        %v1878 = vpop.f32.mrf.mxu0
        %v1879 = vadd.f32 0.0, %v1878
        %v1880 = vpop.f32.mrf.mxu0
        %1881 = vmatprep.mubr.f32.mxu0 0.0
        %1882 = vmatmul.mubr.f32.gmra.mxu0 %v1592
        %v1883 = vpop.f32.mrf.mxu0
        %v1884 = vadd.f32 0.0, %v1883
        %v1885 = vpop.f32.mrf.mxu0
        %1886 = vmatprep.mubr.f32.mxu0 0.0
        %1887 = vmatmul.mubr.f32.gmra.mxu0 %v1595
        %v1888 = vpop.f32.mrf.mxu0
        %v1889 = vadd.f32 0.0, %v1888
        %v1890 = vpop.f32.mrf.mxu0
        %1891 = vmatprep.mubr.f32.mxu0 0.0
        %1892 = vmatmul.mubr.f32.gmra.mxu0 %v1598
        %v1893 = vpop.f32.mrf.mxu0
        %v1894 = vadd.f32 0.0, %v1893
        %v1895 = vpop.f32.mrf.mxu0
        %1896 = vmatprep.mubr.f32.mxu0 0.0
        %1897 = vmatmul.mubr.f32.gmra.mxu0 %v1601
        %v1898 = vpop.f32.mrf.mxu0
        %v1899 = vadd.f32 0.0, %v1898
        %v1900 = vpop.f32.mrf.mxu0
        %1901 = vmatprep.mubr.f32.mxu0 0.0
        %1902 = vmatmul.mubr.f32.gmra.mxu0 %v1604
        %v1903 = vpop.f32.mrf.mxu0
        %v1904 = vadd.f32 0.0, %v1903
        %v1905 = vpop.f32.mrf.mxu0
        %1906 = vmatprep.mubr.f32.mxu0 0.0
        %1907 = vmatmul.mubr.f32.gmra.mxu0 %v1607
        %v1908 = vpop.f32.mrf.mxu0
        %v1909 = vadd.f32 0.0, %v1908
        %v1910 = vpop.f32.mrf.mxu0
        %1911 = vmatprep.mubr.f32.mxu0 0.0
        %1912 = vmatmul.mubr.f32.gmra.mxu0 %v1610
        %v1913 = vpop.f32.mrf.mxu0
        %v1914 = vadd.f32 0.0, %v1913
        %v1915 = vpop.f32.mrf.mxu0
        %1916 = vdwg.mxu0
        %v1917 = vadd.f32 %v1173, %v1679
        %v1918 = vadd.f32 %v1178, %v1684
        %v1919 = vadd.f32 %v1183, %v1689
        %v1920 = vadd.f32 %v1188, %v1694
        %v1921 = vadd.f32 %v1193, %v1699
        %v1922 = vadd.f32 %v1198, %v1704
        %v1923 = vadd.f32 %v1203, %v1709
        %v1924 = vadd.f32 %v1208, %v1714
        %v1925 = vadd.f32 %v1213, %v1719
        %v1926 = vadd.f32 %v1218, %v1724
        %v1927 = vadd.f32 %v1223, %v1729
        %v1928 = vadd.f32 %v1228, %v1734
        %v1929 = vadd.f32 %v1233, %v1739
        %v1930 = vadd.f32 %v1238, %v1744
        %v1931 = vadd.f32 %v1243, %v1749
        %v1932 = vadd.f32 %v1248, %v1754
        %v1933 = vadd.f32 %v1253, %v1759
        %v1934 = vadd.f32 %v1258, %v1764
        %v1935 = vadd.f32 %v1263, %v1769
        %v1936 = vadd.f32 %v1268, %v1774
        %v1937 = vadd.f32 %v1273, %v1779
        %v1938 = vadd.f32 %v1278, %v1784
        %v1939 = vadd.f32 %v1283, %v1789
        %v1940 = vadd.f32 %v1288, %v1794
        %v1941 = vadd.f32 %v1293, %v1799
        %v1942 = vadd.f32 %v1298, %v1804
        %v1943 = vadd.f32 %v1303, %v1809
        %v1944 = vadd.f32 %v1308, %v1814
        %v1945 = vadd.f32 %v1313, %v1819
        %v1946 = vadd.f32 %v1318, %v1824
        %v1947 = vadd.f32 %v1323, %v1829
        %v1948 = vadd.f32 %v1328, %v1834
        %v1949 = vadd.f32 %v1333, %v1839
        %v1950 = vadd.f32 %v1338, %v1844
        %v1951 = vadd.f32 %v1343, %v1849
        %v1952 = vadd.f32 %v1348, %v1854
        %v1953 = vadd.f32 %v1353, %v1859
        %v1954 = vadd.f32 %v1358, %v1864
        %v1955 = vadd.f32 %v1363, %v1869
        %v1956 = vadd.f32 %v1368, %v1874
        %v1957 = vadd.f32 %v1373, %v1879
        %v1958 = vadd.f32 %v1378, %v1884
        %v1959 = vadd.f32 %v1383, %v1889
        %v1960 = vadd.f32 %v1388, %v1894
        %v1961 = vadd.f32 %v1393, %v1899
        %v1962 = vadd.f32 %v1398, %v1904
        %v1963 = vadd.f32 %v1403, %v1909
        %v1964 = vadd.f32 %v1408, %v1914
        %v1965 = vld [vmem:[#allocation2 + $0x1f] sm:$0xff]
        %v1966 = vld [vmem:[#allocation2 + $0x27] sm:$0xff]
        %v1967 = vld [vmem:[#allocation2 + $0x2f] sm:$0xff]
        %v1968 = vld [vmem:[#allocation2 + $0x37] sm:$0xff]
        %v1969 = vld [vmem:[#allocation2 + $0x3f] sm:$0xff]
        %v1970 = vld [vmem:[#allocation2 + $0x47] sm:$0xff]
        %v1971 = vld [vmem:[#allocation2 + $0x4f] sm:$0xff]
        %v1972 = vld [vmem:[#allocation2 + $0x57] sm:$0xff]
        %v1973 = vld [vmem:[#allocation2 + $0x5f] sm:$0xff]
        %v1974 = vld [vmem:[#allocation2 + $0x67] sm:$0xff]
        %v1975 = vld [vmem:[#allocation2 + $0x6f] sm:$0xff]
        %v1976 = vld [vmem:[#allocation2 + $0x77] sm:$0xff]
        %v1977 = vld [vmem:[#allocation2 + $0x7f] sm:$0xff]
        %v1978 = vld [vmem:[#allocation2 + $0x87] sm:$0xff]
        %v1979 = vld [vmem:[#allocation2 + $0x8f] sm:$0xff]
        %v1980 = vld [vmem:[#allocation2 + $0x97] sm:$0xff]
        %v1981 = vld [vmem:[#allocation2 + $0x9f] sm:$0xff]
        %v1982 = vld [vmem:[#allocation2 + $0xa7] sm:$0xff]
        %v1983 = vld [vmem:[#allocation2 + $0xaf] sm:$0xff]
        %v1984 = vld [vmem:[#allocation2 + $0xb7] sm:$0xff]
        %v1985 = vld [vmem:[#allocation2 + $0xbf] sm:$0xff]
        %v1986 = vld [vmem:[#allocation2 + $0xc7] sm:$0xff]
        %v1987 = vld [vmem:[#allocation2 + $0xcf] sm:$0xff]
        %v1988 = vld [vmem:[#allocation2 + $0xd7] sm:$0xff]
        %v1989 = vld [vmem:[#allocation2 + $0xdf] sm:$0xff]
        %v1990 = vld [vmem:[#allocation2 + $0xe7] sm:$0xff]
        %v1991 = vld [vmem:[#allocation2 + $0xef] sm:$0xff]
        %v1992 = vld [vmem:[#allocation2 + $0xf7] sm:$0xff]
        %v1993 = vld [vmem:[#allocation2 + $0xff] sm:$0xff]
        %v1994 = vld [vmem:[#allocation2 + $0x107] sm:$0xff]
        %v1995 = vld [vmem:[#allocation2 + $0x10f] sm:$0xff]
        %v1996 = vld [vmem:[#allocation2 + $0x117] sm:$0xff]
        %v1997 = vld [vmem:[#allocation2 + $0x11f] sm:$0xff]
        %v1998 = vld [vmem:[#allocation2 + $0x127] sm:$0xff]
        %v1999 = vld [vmem:[#allocation2 + $0x12f] sm:$0xff]
        %v2000 = vld [vmem:[#allocation2 + $0x137] sm:$0xff]
        %v2001 = vld [vmem:[#allocation2 + $0x13f] sm:$0xff]
        %v2002 = vld [vmem:[#allocation2 + $0x147] sm:$0xff]
        %v2003 = vld [vmem:[#allocation2 + $0x14f] sm:$0xff]
        %v2004 = vld [vmem:[#allocation2 + $0x157] sm:$0xff]
        %v2005 = vld [vmem:[#allocation2 + $0x15f] sm:$0xff]
        %v2006 = vld [vmem:[#allocation2 + $0x167] sm:$0xff]
        %v2007 = vld [vmem:[#allocation2 + $0x16f] sm:$0xff]
        %v2008 = vld [vmem:[#allocation2 + $0x177] sm:$0xff]
        %v2009 = vld [vmem:[#allocation2 + $0x17f] sm:$0xff]
        %v2010 = vld [vmem:[#allocation2 + $0x187] sm:$0xff]
        %v2011 = vld [vmem:[#allocation2 + $0x18f] sm:$0xff]
        %v2012 = vld [vmem:[#allocation2 + $0x197] sm:$0xff]
        %s2013 = scalar_lea.vmem %s1, 192
        %v2014 = vld [vmem:[%s2013] sm:$0xff]
        %v2015 = vld [vmem:[%s2013 + $0x8] sm:$0xff]
        %v2016 = vld [vmem:[%s2013 + $0x10] sm:$0xff]
        %v2017 = vld [vmem:[%s2013 + $0x18] sm:$0xff]
        %v2018 = vld [vmem:[%s2013 + $0x20] sm:$0xff]
        %v2019 = vld [vmem:[%s2013 + $0x28] sm:$0xff]
        %v2020 = vld [vmem:[%s2013 + $0x30] sm:$0xff]
        %v2021 = vld [vmem:[%s2013 + $0x38] sm:$0xff]
        %v2023 = vsel %vm240, %v1965, 0
        %v2026 = vsel %vm240, %v1966, 0
        %v2029 = vsel %vm240, %v1967, 0
        %v2032 = vsel %vm240, %v1968, 0
        %v2035 = vsel %vm240, %v1969, 0
        %v2038 = vsel %vm240, %v1970, 0
        %v2041 = vsel %vm240, %v1971, 0
        %v2044 = vsel %vm240, %v1972, 0
        %v2047 = vsel %vm240, %v1973, 0
        %v2050 = vsel %vm240, %v1974, 0
        %v2053 = vsel %vm240, %v1975, 0
        %v2056 = vsel %vm240, %v1976, 0
        %v2059 = vsel %vm240, %v1977, 0
        %v2062 = vsel %vm240, %v1978, 0
        %v2065 = vsel %vm240, %v1979, 0
        %v2068 = vsel %vm240, %v1980, 0
        %v2071 = vsel %vm240, %v1981, 0
        %v2074 = vsel %vm240, %v1982, 0
        %v2077 = vsel %vm240, %v1983, 0
        %v2080 = vsel %vm240, %v1984, 0
        %v2083 = vsel %vm240, %v1985, 0
        %v2086 = vsel %vm240, %v1986, 0
        %v2089 = vsel %vm240, %v1987, 0
        %v2092 = vsel %vm240, %v1988, 0
        %v2095 = vsel %vm240, %v1989, 0
        %v2098 = vsel %vm240, %v1990, 0
        %v2101 = vsel %vm240, %v1991, 0
        %v2104 = vsel %vm240, %v1992, 0
        %v2107 = vsel %vm240, %v1993, 0
        %v2110 = vsel %vm240, %v1994, 0
        %v2113 = vsel %vm240, %v1995, 0
        %v2116 = vsel %vm240, %v1996, 0
        %v2119 = vsel %vm240, %v1997, 0
        %v2122 = vsel %vm240, %v1998, 0
        %v2125 = vsel %vm240, %v1999, 0
        %v2128 = vsel %vm240, %v2000, 0
        %v2131 = vsel %vm240, %v2001, 0
        %v2134 = vsel %vm240, %v2002, 0
        %v2137 = vsel %vm240, %v2003, 0
        %v2140 = vsel %vm240, %v2004, 0
        %v2143 = vsel %vm240, %v2005, 0
        %v2146 = vsel %vm240, %v2006, 0
        %v2149 = vsel %vm240, %v2007, 0
        %v2152 = vsel %vm240, %v2008, 0
        %v2155 = vsel %vm240, %v2009, 0
        %v2158 = vsel %vm240, %v2010, 0
        %v2161 = vsel %vm240, %v2011, 0
        %v2164 = vsel %vm240, %v2012, 0
        %2166 = vmatprep.subr.mxu0 0.0
        %2167 = vmatpush1.msra.mxu0 0.0
        %2168 = vmatprep.subr.mxu0 0.0
        %2169 = vmatpush1.msra.mxu0 0.0
        %2170 = vmatprep.subr.mxu0 0.0
        %2171 = vmatpush1.msra.mxu0 0.0
        %2172 = vmatprep.subr.mxu0 0.0
        %2173 = vmatpush1.msra.mxu0 0.0
        %2174 = vmatprep.subr.mxu0 0.0
        %2175 = vmatpush1.msra.mxu0 0.0
        %2176 = vmatprep.subr.mxu0 0.0
        %2177 = vmatpush1.msra.mxu0 0.0
        %2178 = vmatprep.subr.mxu0 0.0
        %2179 = vmatpush1.msra.mxu0 0.0
        %2180 = vmatprep.subr.mxu0 0.0
        %2181 = vmatpush1.msra.mxu0 0.0
        %2182 = vmatprep.subr.mxu0 0.0
        %2183 = vmatpush1.msra.mxu0 %v2021
        %2184 = vmatprep.subr.mxu0 0.0
        %2185 = vmatpush1.msra.mxu0 %v2020
        %2186 = vmatprep.subr.mxu0 0.0
        %2187 = vmatpush1.msra.mxu0 %v2019
        %2188 = vmatprep.subr.mxu0 0.0
        %2189 = vmatpush1.msra.mxu0 %v2018
        %2190 = vmatprep.subr.mxu0 0.0
        %2191 = vmatpush1.msra.mxu0 %v2017
        %2192 = vmatprep.subr.mxu0 0.0
        %2193 = vmatpush1.msra.mxu0 %v2016
        %2194 = vmatprep.subr.mxu0 0.0
        %2195 = vmatpush1.msra.mxu0 %v2015
        %2196 = vmatprep.subr.mxu0 0.0
        %2197 = vmatpush1.msra.mxu0 %v2014
        %2198 = vmatprep.subr.mxu0 0.0
        %2199 = vmatpush2.msra.mxu0 0.0
        %2200 = vmatprep.subr.mxu0 0.0
        %2201 = vmatpush2.msra.mxu0 0.0
        %2202 = vmatprep.subr.mxu0 0.0
        %2203 = vmatpush2.msra.mxu0 0.0
        %2204 = vmatprep.subr.mxu0 0.0
        %2205 = vmatpush2.msra.mxu0 0.0
        %2206 = vmatprep.subr.mxu0 0.0
        %2207 = vmatpush2.msra.mxu0 0.0
        %2208 = vmatprep.subr.mxu0 0.0
        %2209 = vmatpush2.msra.mxu0 0.0
        %2210 = vmatprep.subr.mxu0 0.0
        %2211 = vmatpush2.msra.mxu0 0.0
        %2212 = vmatprep.subr.mxu0 0.0
        %2213 = vmatpush2.msra.mxu0 0.0
        %2214 = vmatprep.subr.mxu0 0.0
        %2215 = vmatpush2.msra.mxu0 0.0
        %2216 = vmatprep.subr.mxu0 0.0
        %2217 = vmatpush2.msra.mxu0 0.0
        %2218 = vmatprep.subr.mxu0 0.0
        %2219 = vmatpush2.msra.mxu0 0.0
        %2220 = vmatprep.subr.mxu0 0.0
        %2221 = vmatpush2.msra.mxu0 0.0
        %2222 = vmatprep.subr.mxu0 0.0
        %2223 = vmatpush2.msra.mxu0 0.0
        %2224 = vmatprep.subr.mxu0 0.0
        %2225 = vmatpush2.msra.mxu0 0.0
        %2226 = vmatprep.subr.mxu0 0.0
        %2227 = vmatpush2.msra.mxu0 0.0
        %2228 = vmatprep.subr.mxu0 0.0
        %2229 = vmatpush2.msra.mxu0 0.0
        %2230 = vmatprep.mubr.f32.mxu0 0.0
        %2231 = vmatmul.mubr.f32.gmra.mxu0 %v2023
        %v2232 = vpop.f32.mrf.mxu0
        %v2233 = vadd.f32 0.0, %v2232
        %v2234 = vpop.f32.mrf.mxu0
        %2235 = vmatprep.mubr.f32.mxu0 0.0
        %2236 = vmatmul.mubr.f32.gmra.mxu0 %v2026
        %v2237 = vpop.f32.mrf.mxu0
        %v2238 = vadd.f32 0.0, %v2237
        %v2239 = vpop.f32.mrf.mxu0
        %2240 = vmatprep.mubr.f32.mxu0 0.0
        %2241 = vmatmul.mubr.f32.gmra.mxu0 %v2029
        %v2242 = vpop.f32.mrf.mxu0
        %v2243 = vadd.f32 0.0, %v2242
        %v2244 = vpop.f32.mrf.mxu0
        %2245 = vmatprep.mubr.f32.mxu0 0.0
        %2246 = vmatmul.mubr.f32.gmra.mxu0 %v2032
        %v2247 = vpop.f32.mrf.mxu0
        %v2248 = vadd.f32 0.0, %v2247
        %v2249 = vpop.f32.mrf.mxu0
        %2250 = vmatprep.mubr.f32.mxu0 0.0
        %2251 = vmatmul.mubr.f32.gmra.mxu0 %v2035
        %v2252 = vpop.f32.mrf.mxu0
        %v2253 = vadd.f32 0.0, %v2252
        %v2254 = vpop.f32.mrf.mxu0
        %2255 = vmatprep.mubr.f32.mxu0 0.0
        %2256 = vmatmul.mubr.f32.gmra.mxu0 %v2038
        %v2257 = vpop.f32.mrf.mxu0
        %v2258 = vadd.f32 0.0, %v2257
        %v2259 = vpop.f32.mrf.mxu0
        %2260 = vmatprep.mubr.f32.mxu0 0.0
        %2261 = vmatmul.mubr.f32.gmra.mxu0 %v2041
        %v2262 = vpop.f32.mrf.mxu0
        %v2263 = vadd.f32 0.0, %v2262
        %v2264 = vpop.f32.mrf.mxu0
        %2265 = vmatprep.mubr.f32.mxu0 0.0
        %2266 = vmatmul.mubr.f32.gmra.mxu0 %v2044
        %v2267 = vpop.f32.mrf.mxu0
        %v2268 = vadd.f32 0.0, %v2267
        %v2269 = vpop.f32.mrf.mxu0
        %2270 = vmatprep.mubr.f32.mxu0 0.0
        %2271 = vmatmul.mubr.f32.gmra.mxu0 %v2047
        %v2272 = vpop.f32.mrf.mxu0
        %v2273 = vadd.f32 0.0, %v2272
        %v2274 = vpop.f32.mrf.mxu0
        %2275 = vmatprep.mubr.f32.mxu0 0.0
        %2276 = vmatmul.mubr.f32.gmra.mxu0 %v2050
        %v2277 = vpop.f32.mrf.mxu0
        %v2278 = vadd.f32 0.0, %v2277
        %v2279 = vpop.f32.mrf.mxu0
        %2280 = vmatprep.mubr.f32.mxu0 0.0
        %2281 = vmatmul.mubr.f32.gmra.mxu0 %v2053
        %v2282 = vpop.f32.mrf.mxu0
        %v2283 = vadd.f32 0.0, %v2282
        %v2284 = vpop.f32.mrf.mxu0
        %2285 = vmatprep.mubr.f32.mxu0 0.0
        %2286 = vmatmul.mubr.f32.gmra.mxu0 %v2056
        %v2287 = vpop.f32.mrf.mxu0
        %v2288 = vadd.f32 0.0, %v2287
        %v2289 = vpop.f32.mrf.mxu0
        %2290 = vmatprep.mubr.f32.mxu0 0.0
        %2291 = vmatmul.mubr.f32.gmra.mxu0 %v2059
        %v2292 = vpop.f32.mrf.mxu0
        %v2293 = vadd.f32 0.0, %v2292
        %v2294 = vpop.f32.mrf.mxu0
        %2295 = vmatprep.mubr.f32.mxu0 0.0
        %2296 = vmatmul.mubr.f32.gmra.mxu0 %v2062
        %v2297 = vpop.f32.mrf.mxu0
        %v2298 = vadd.f32 0.0, %v2297
        %v2299 = vpop.f32.mrf.mxu0
        %2300 = vmatprep.mubr.f32.mxu0 0.0
        %2301 = vmatmul.mubr.f32.gmra.mxu0 %v2065
        %v2302 = vpop.f32.mrf.mxu0
        %v2303 = vadd.f32 0.0, %v2302
        %v2304 = vpop.f32.mrf.mxu0
        %2305 = vmatprep.mubr.f32.mxu0 0.0
        %2306 = vmatmul.mubr.f32.gmra.mxu0 %v2068
        %v2307 = vpop.f32.mrf.mxu0
        %v2308 = vadd.f32 0.0, %v2307
        %v2309 = vpop.f32.mrf.mxu0
        %2310 = vmatprep.mubr.f32.mxu0 0.0
        %2311 = vmatmul.mubr.f32.gmra.mxu0 %v2071
        %v2312 = vpop.f32.mrf.mxu0
        %v2313 = vadd.f32 0.0, %v2312
        %v2314 = vpop.f32.mrf.mxu0
        %2315 = vmatprep.mubr.f32.mxu0 0.0
        %2316 = vmatmul.mubr.f32.gmra.mxu0 %v2074
        %v2317 = vpop.f32.mrf.mxu0
        %v2318 = vadd.f32 0.0, %v2317
        %v2319 = vpop.f32.mrf.mxu0
        %2320 = vmatprep.mubr.f32.mxu0 0.0
        %2321 = vmatmul.mubr.f32.gmra.mxu0 %v2077
        %v2322 = vpop.f32.mrf.mxu0
        %v2323 = vadd.f32 0.0, %v2322
        %v2324 = vpop.f32.mrf.mxu0
        %2325 = vmatprep.mubr.f32.mxu0 0.0
        %2326 = vmatmul.mubr.f32.gmra.mxu0 %v2080
        %v2327 = vpop.f32.mrf.mxu0
        %v2328 = vadd.f32 0.0, %v2327
        %v2329 = vpop.f32.mrf.mxu0
        %2330 = vmatprep.mubr.f32.mxu0 0.0
        %2331 = vmatmul.mubr.f32.gmra.mxu0 %v2083
        %v2332 = vpop.f32.mrf.mxu0
        %v2333 = vadd.f32 0.0, %v2332
        %v2334 = vpop.f32.mrf.mxu0
        %2335 = vmatprep.mubr.f32.mxu0 0.0
        %2336 = vmatmul.mubr.f32.gmra.mxu0 %v2086
        %v2337 = vpop.f32.mrf.mxu0
        %v2338 = vadd.f32 0.0, %v2337
        %v2339 = vpop.f32.mrf.mxu0
        %2340 = vmatprep.mubr.f32.mxu0 0.0
        %2341 = vmatmul.mubr.f32.gmra.mxu0 %v2089
        %v2342 = vpop.f32.mrf.mxu0
        %v2343 = vadd.f32 0.0, %v2342
        %v2344 = vpop.f32.mrf.mxu0
        %2345 = vmatprep.mubr.f32.mxu0 0.0
        %2346 = vmatmul.mubr.f32.gmra.mxu0 %v2092
        %v2347 = vpop.f32.mrf.mxu0
        %v2348 = vadd.f32 0.0, %v2347
        %v2349 = vpop.f32.mrf.mxu0
        %2350 = vmatprep.mubr.f32.mxu0 0.0
        %2351 = vmatmul.mubr.f32.gmra.mxu0 %v2095
        %v2352 = vpop.f32.mrf.mxu0
        %v2353 = vadd.f32 0.0, %v2352
        %v2354 = vpop.f32.mrf.mxu0
        %2355 = vmatprep.mubr.f32.mxu0 0.0
        %2356 = vmatmul.mubr.f32.gmra.mxu0 %v2098
        %v2357 = vpop.f32.mrf.mxu0
        %v2358 = vadd.f32 0.0, %v2357
        %v2359 = vpop.f32.mrf.mxu0
        %2360 = vmatprep.mubr.f32.mxu0 0.0
        %2361 = vmatmul.mubr.f32.gmra.mxu0 %v2101
        %v2362 = vpop.f32.mrf.mxu0
        %v2363 = vadd.f32 0.0, %v2362
        %v2364 = vpop.f32.mrf.mxu0
        %2365 = vmatprep.mubr.f32.mxu0 0.0
        %2366 = vmatmul.mubr.f32.gmra.mxu0 %v2104
        %v2367 = vpop.f32.mrf.mxu0
        %v2368 = vadd.f32 0.0, %v2367
        %v2369 = vpop.f32.mrf.mxu0
        %2370 = vmatprep.mubr.f32.mxu0 0.0
        %2371 = vmatmul.mubr.f32.gmra.mxu0 %v2107
        %v2372 = vpop.f32.mrf.mxu0
        %v2373 = vadd.f32 0.0, %v2372
        %v2374 = vpop.f32.mrf.mxu0
        %2375 = vmatprep.mubr.f32.mxu0 0.0
        %2376 = vmatmul.mubr.f32.gmra.mxu0 %v2110
        %v2377 = vpop.f32.mrf.mxu0
        %v2378 = vadd.f32 0.0, %v2377
        %v2379 = vpop.f32.mrf.mxu0
        %2380 = vmatprep.mubr.f32.mxu0 0.0
        %2381 = vmatmul.mubr.f32.gmra.mxu0 %v2113
        %v2382 = vpop.f32.mrf.mxu0
        %v2383 = vadd.f32 0.0, %v2382
        %v2384 = vpop.f32.mrf.mxu0
        %2385 = vmatprep.mubr.f32.mxu0 0.0
        %2386 = vmatmul.mubr.f32.gmra.mxu0 %v2116
        %v2387 = vpop.f32.mrf.mxu0
        %v2388 = vadd.f32 0.0, %v2387
        %v2389 = vpop.f32.mrf.mxu0
        %2390 = vmatprep.mubr.f32.mxu0 0.0
        %2391 = vmatmul.mubr.f32.gmra.mxu0 %v2119
        %v2392 = vpop.f32.mrf.mxu0
        %v2393 = vadd.f32 0.0, %v2392
        %v2394 = vpop.f32.mrf.mxu0
        %2395 = vmatprep.mubr.f32.mxu0 0.0
        %2396 = vmatmul.mubr.f32.gmra.mxu0 %v2122
        %v2397 = vpop.f32.mrf.mxu0
        %v2398 = vadd.f32 0.0, %v2397
        %v2399 = vpop.f32.mrf.mxu0
        %2400 = vmatprep.mubr.f32.mxu0 0.0
        %2401 = vmatmul.mubr.f32.gmra.mxu0 %v2125
        %v2402 = vpop.f32.mrf.mxu0
        %v2403 = vadd.f32 0.0, %v2402
        %v2404 = vpop.f32.mrf.mxu0
        %2405 = vmatprep.mubr.f32.mxu0 0.0
        %2406 = vmatmul.mubr.f32.gmra.mxu0 %v2128
        %v2407 = vpop.f32.mrf.mxu0
        %v2408 = vadd.f32 0.0, %v2407
        %v2409 = vpop.f32.mrf.mxu0
        %2410 = vmatprep.mubr.f32.mxu0 0.0
        %2411 = vmatmul.mubr.f32.gmra.mxu0 %v2131
        %v2412 = vpop.f32.mrf.mxu0
        %v2413 = vadd.f32 0.0, %v2412
        %v2414 = vpop.f32.mrf.mxu0
        %2415 = vmatprep.mubr.f32.mxu0 0.0
        %2416 = vmatmul.mubr.f32.gmra.mxu0 %v2134
        %v2417 = vpop.f32.mrf.mxu0
        %v2418 = vadd.f32 0.0, %v2417
        %v2419 = vpop.f32.mrf.mxu0
        %2420 = vmatprep.mubr.f32.mxu0 0.0
        %2421 = vmatmul.mubr.f32.gmra.mxu0 %v2137
        %v2422 = vpop.f32.mrf.mxu0
        %v2423 = vadd.f32 0.0, %v2422
        %v2424 = vpop.f32.mrf.mxu0
        %2425 = vmatprep.mubr.f32.mxu0 0.0
        %2426 = vmatmul.mubr.f32.gmra.mxu0 %v2140
        %v2427 = vpop.f32.mrf.mxu0
        %v2428 = vadd.f32 0.0, %v2427
        %v2429 = vpop.f32.mrf.mxu0
        %2430 = vmatprep.mubr.f32.mxu0 0.0
        %2431 = vmatmul.mubr.f32.gmra.mxu0 %v2143
        %v2432 = vpop.f32.mrf.mxu0
        %v2433 = vadd.f32 0.0, %v2432
        %v2434 = vpop.f32.mrf.mxu0
        %2435 = vmatprep.mubr.f32.mxu0 0.0
        %2436 = vmatmul.mubr.f32.gmra.mxu0 %v2146
        %v2437 = vpop.f32.mrf.mxu0
        %v2438 = vadd.f32 0.0, %v2437
        %v2439 = vpop.f32.mrf.mxu0
        %2440 = vmatprep.mubr.f32.mxu0 0.0
        %2441 = vmatmul.mubr.f32.gmra.mxu0 %v2149
        %v2442 = vpop.f32.mrf.mxu0
        %v2443 = vadd.f32 0.0, %v2442
        %v2444 = vpop.f32.mrf.mxu0
        %2445 = vmatprep.mubr.f32.mxu0 0.0
        %2446 = vmatmul.mubr.f32.gmra.mxu0 %v2152
        %v2447 = vpop.f32.mrf.mxu0
        %v2448 = vadd.f32 0.0, %v2447
        %v2449 = vpop.f32.mrf.mxu0
        %2450 = vmatprep.mubr.f32.mxu0 0.0
        %2451 = vmatmul.mubr.f32.gmra.mxu0 %v2155
        %v2452 = vpop.f32.mrf.mxu0
        %v2453 = vadd.f32 0.0, %v2452
        %v2454 = vpop.f32.mrf.mxu0
        %2455 = vmatprep.mubr.f32.mxu0 0.0
        %2456 = vmatmul.mubr.f32.gmra.mxu0 %v2158
        %v2457 = vpop.f32.mrf.mxu0
        %v2458 = vadd.f32 0.0, %v2457
        %v2459 = vpop.f32.mrf.mxu0
        %2460 = vmatprep.mubr.f32.mxu0 0.0
        %2461 = vmatmul.mubr.f32.gmra.mxu0 %v2161
        %v2462 = vpop.f32.mrf.mxu0
        %v2463 = vadd.f32 0.0, %v2462
        %v2464 = vpop.f32.mrf.mxu0
        %2465 = vmatprep.mubr.f32.mxu0 0.0
        %2466 = vmatmul.mubr.f32.gmra.mxu0 %v2164
        %v2467 = vpop.f32.mrf.mxu0
        %v2468 = vadd.f32 0.0, %v2467
        %v2469 = vpop.f32.mrf.mxu0
        %2470 = vdwg.mxu0
        %v2471 = vadd.f32 %v1917, %v2233
        %v2472 = vadd.f32 %v1918, %v2238
        %v2473 = vadd.f32 %v1919, %v2243
        %v2474 = vadd.f32 %v1920, %v2248
        %v2475 = vadd.f32 %v1921, %v2253
        %v2476 = vadd.f32 %v1922, %v2258
        %v2477 = vadd.f32 %v1923, %v2263
        %v2478 = vadd.f32 %v1924, %v2268
        %v2479 = vadd.f32 %v1925, %v2273
        %v2480 = vadd.f32 %v1926, %v2278
        %v2481 = vadd.f32 %v1927, %v2283
        %v2482 = vadd.f32 %v1928, %v2288
        %v2483 = vadd.f32 %v1929, %v2293
        %v2484 = vadd.f32 %v1930, %v2298
        %v2485 = vadd.f32 %v1931, %v2303
        %v2486 = vadd.f32 %v1932, %v2308
        %v2487 = vadd.f32 %v1933, %v2313
        %v2488 = vadd.f32 %v1934, %v2318
        %v2489 = vadd.f32 %v1935, %v2323
        %v2490 = vadd.f32 %v1936, %v2328
        %v2491 = vadd.f32 %v1937, %v2333
        %v2492 = vadd.f32 %v1938, %v2338
        %v2493 = vadd.f32 %v1939, %v2343
        %v2494 = vadd.f32 %v1940, %v2348
        %v2495 = vadd.f32 %v1941, %v2353
        %v2496 = vadd.f32 %v1942, %v2358
        %v2497 = vadd.f32 %v1943, %v2363
        %v2498 = vadd.f32 %v1944, %v2368
        %v2499 = vadd.f32 %v1945, %v2373
        %v2500 = vadd.f32 %v1946, %v2378
        %v2501 = vadd.f32 %v1947, %v2383
        %v2502 = vadd.f32 %v1948, %v2388
        %v2503 = vadd.f32 %v1949, %v2393
        %v2504 = vadd.f32 %v1950, %v2398
        %v2505 = vadd.f32 %v1951, %v2403
        %v2506 = vadd.f32 %v1952, %v2408
        %v2507 = vadd.f32 %v1953, %v2413
        %v2508 = vadd.f32 %v1954, %v2418
        %v2509 = vadd.f32 %v1955, %v2423
        %v2510 = vadd.f32 %v1956, %v2428
        %v2511 = vadd.f32 %v1957, %v2433
        %v2512 = vadd.f32 %v1958, %v2438
        %v2513 = vadd.f32 %v1959, %v2443
        %v2514 = vadd.f32 %v1960, %v2448
        %v2515 = vadd.f32 %v1961, %v2453
        %v2516 = vadd.f32 %v1962, %v2458
        %v2517 = vadd.f32 %v1963, %v2463
        %v2518 = vadd.f32 %v1964, %v2468
        %v2519 = vld [vmem:[#allocation2 + $0x20] sm:$0xff]
        %v2520 = vld [vmem:[#allocation2 + $0x28] sm:$0xff]
        %v2521 = vld [vmem:[#allocation2 + $0x30] sm:$0xff]
        %v2522 = vld [vmem:[#allocation2 + $0x38] sm:$0xff]
        %v2523 = vld [vmem:[#allocation2 + $0x40] sm:$0xff]
        %v2524 = vld [vmem:[#allocation2 + $0x48] sm:$0xff]
        %v2525 = vld [vmem:[#allocation2 + $0x50] sm:$0xff]
        %v2526 = vld [vmem:[#allocation2 + $0x58] sm:$0xff]
        %v2527 = vld [vmem:[#allocation2 + $0x60] sm:$0xff]
        %v2528 = vld [vmem:[#allocation2 + $0x68] sm:$0xff]
        %v2529 = vld [vmem:[#allocation2 + $0x70] sm:$0xff]
        %v2530 = vld [vmem:[#allocation2 + $0x78] sm:$0xff]
        %v2531 = vld [vmem:[#allocation2 + $0x80] sm:$0xff]
        %v2532 = vld [vmem:[#allocation2 + $0x88] sm:$0xff]
        %v2533 = vld [vmem:[#allocation2 + $0x90] sm:$0xff]
        %v2534 = vld [vmem:[#allocation2 + $0x98] sm:$0xff]
        %v2535 = vld [vmem:[#allocation2 + $0xa0] sm:$0xff]
        %v2536 = vld [vmem:[#allocation2 + $0xa8] sm:$0xff]
        %v2537 = vld [vmem:[#allocation2 + $0xb0] sm:$0xff]
        %v2538 = vld [vmem:[#allocation2 + $0xb8] sm:$0xff]
        %v2539 = vld [vmem:[#allocation2 + $0xc0] sm:$0xff]
        %v2540 = vld [vmem:[#allocation2 + $0xc8] sm:$0xff]
        %v2541 = vld [vmem:[#allocation2 + $0xd0] sm:$0xff]
        %v2542 = vld [vmem:[#allocation2 + $0xd8] sm:$0xff]
        %v2543 = vld [vmem:[#allocation2 + $0xe0] sm:$0xff]
        %v2544 = vld [vmem:[#allocation2 + $0xe8] sm:$0xff]
        %v2545 = vld [vmem:[#allocation2 + $0xf0] sm:$0xff]
        %v2546 = vld [vmem:[#allocation2 + $0xf8] sm:$0xff]
        %v2547 = vld [vmem:[#allocation2 + $0x100] sm:$0xff]
        %v2548 = vld [vmem:[#allocation2 + $0x108] sm:$0xff]
        %v2549 = vld [vmem:[#allocation2 + $0x110] sm:$0xff]
        %v2550 = vld [vmem:[#allocation2 + $0x118] sm:$0xff]
        %v2551 = vld [vmem:[#allocation2 + $0x120] sm:$0xff]
        %v2552 = vld [vmem:[#allocation2 + $0x128] sm:$0xff]
        %v2553 = vld [vmem:[#allocation2 + $0x130] sm:$0xff]
        %v2554 = vld [vmem:[#allocation2 + $0x138] sm:$0xff]
        %v2555 = vld [vmem:[#allocation2 + $0x140] sm:$0xff]
        %v2556 = vld [vmem:[#allocation2 + $0x148] sm:$0xff]
        %v2557 = vld [vmem:[#allocation2 + $0x150] sm:$0xff]
        %v2558 = vld [vmem:[#allocation2 + $0x158] sm:$0xff]
        %v2559 = vld [vmem:[#allocation2 + $0x160] sm:$0xff]
        %v2560 = vld [vmem:[#allocation2 + $0x168] sm:$0xff]
        %v2561 = vld [vmem:[#allocation2 + $0x170] sm:$0xff]
        %v2562 = vld [vmem:[#allocation2 + $0x178] sm:$0xff]
        %v2563 = vld [vmem:[#allocation2 + $0x180] sm:$0xff]
        %v2564 = vld [vmem:[#allocation2 + $0x188] sm:$0xff]
        %v2565 = vld [vmem:[#allocation2 + $0x190] sm:$0xff]
        %v2566 = vld [vmem:[#allocation2 + $0x198] sm:$0xff]
        %s2567 = scalar_lea.vmem %s1, 256
        %v2568 = vld [vmem:[%s2567] sm:$0xff]
        %v2569 = vld [vmem:[%s2567 + $0x8] sm:$0xff]
        %v2570 = vld [vmem:[%s2567 + $0x10] sm:$0xff]
        %v2571 = vld [vmem:[%s2567 + $0x18] sm:$0xff]
        %v2572 = vld [vmem:[%s2567 + $0x20] sm:$0xff]
        %v2573 = vld [vmem:[%s2567 + $0x28] sm:$0xff]
        %v2574 = vld [vmem:[%s2567 + $0x30] sm:$0xff]
        %v2575 = vld [vmem:[%s2567 + $0x38] sm:$0xff]
        %v2577 = vsel %vm240, %v2519, 0
        %v2580 = vsel %vm240, %v2520, 0
        %v2583 = vsel %vm240, %v2521, 0
        %v2586 = vsel %vm240, %v2522, 0
        %v2589 = vsel %vm240, %v2523, 0
        %v2592 = vsel %vm240, %v2524, 0
        %v2595 = vsel %vm240, %v2525, 0
        %v2598 = vsel %vm240, %v2526, 0
        %v2601 = vsel %vm240, %v2527, 0
        %v2604 = vsel %vm240, %v2528, 0
        %v2607 = vsel %vm240, %v2529, 0
        %v2610 = vsel %vm240, %v2530, 0
        %v2613 = vsel %vm240, %v2531, 0
        %v2616 = vsel %vm240, %v2532, 0
        %v2619 = vsel %vm240, %v2533, 0
        %v2622 = vsel %vm240, %v2534, 0
        %v2625 = vsel %vm240, %v2535, 0
        %v2628 = vsel %vm240, %v2536, 0
        %v2631 = vsel %vm240, %v2537, 0
        %v2634 = vsel %vm240, %v2538, 0
        %v2637 = vsel %vm240, %v2539, 0
        %v2640 = vsel %vm240, %v2540, 0
        %v2643 = vsel %vm240, %v2541, 0
        %v2646 = vsel %vm240, %v2542, 0
        %v2649 = vsel %vm240, %v2543, 0
        %v2652 = vsel %vm240, %v2544, 0
        %v2655 = vsel %vm240, %v2545, 0
        %v2658 = vsel %vm240, %v2546, 0
        %v2661 = vsel %vm240, %v2547, 0
        %v2664 = vsel %vm240, %v2548, 0
        %v2667 = vsel %vm240, %v2549, 0
        %v2670 = vsel %vm240, %v2550, 0
        %v2673 = vsel %vm240, %v2551, 0
        %v2676 = vsel %vm240, %v2552, 0
        %v2679 = vsel %vm240, %v2553, 0
        %v2682 = vsel %vm240, %v2554, 0
        %v2685 = vsel %vm240, %v2555, 0
        %v2688 = vsel %vm240, %v2556, 0
        %v2691 = vsel %vm240, %v2557, 0
        %v2694 = vsel %vm240, %v2558, 0
        %v2697 = vsel %vm240, %v2559, 0
        %v2700 = vsel %vm240, %v2560, 0
        %v2703 = vsel %vm240, %v2561, 0
        %v2706 = vsel %vm240, %v2562, 0
        %v2709 = vsel %vm240, %v2563, 0
        %v2712 = vsel %vm240, %v2564, 0
        %v2715 = vsel %vm240, %v2565, 0
        %v2718 = vsel %vm240, %v2566, 0
        %2720 = vmatprep.subr.mxu0 0.0
        %2721 = vmatpush1.msra.mxu0 0.0
        %2722 = vmatprep.subr.mxu0 0.0
        %2723 = vmatpush1.msra.mxu0 0.0
        %2724 = vmatprep.subr.mxu0 0.0
        %2725 = vmatpush1.msra.mxu0 0.0
        %2726 = vmatprep.subr.mxu0 0.0
        %2727 = vmatpush1.msra.mxu0 0.0
        %2728 = vmatprep.subr.mxu0 0.0
        %2729 = vmatpush1.msra.mxu0 0.0
        %2730 = vmatprep.subr.mxu0 0.0
        %2731 = vmatpush1.msra.mxu0 0.0
        %2732 = vmatprep.subr.mxu0 0.0
        %2733 = vmatpush1.msra.mxu0 0.0
        %2734 = vmatprep.subr.mxu0 0.0
        %2735 = vmatpush1.msra.mxu0 0.0
        %2736 = vmatprep.subr.mxu0 0.0
        %2737 = vmatpush1.msra.mxu0 %v2575
        %2738 = vmatprep.subr.mxu0 0.0
        %2739 = vmatpush1.msra.mxu0 %v2574
        %2740 = vmatprep.subr.mxu0 0.0
        %2741 = vmatpush1.msra.mxu0 %v2573
        %2742 = vmatprep.subr.mxu0 0.0
        %2743 = vmatpush1.msra.mxu0 %v2572
        %2744 = vmatprep.subr.mxu0 0.0
        %2745 = vmatpush1.msra.mxu0 %v2571
        %2746 = vmatprep.subr.mxu0 0.0
        %2747 = vmatpush1.msra.mxu0 %v2570
        %2748 = vmatprep.subr.mxu0 0.0
        %2749 = vmatpush1.msra.mxu0 %v2569
        %2750 = vmatprep.subr.mxu0 0.0
        %2751 = vmatpush1.msra.mxu0 %v2568
        %2752 = vmatprep.subr.mxu0 0.0
        %2753 = vmatpush2.msra.mxu0 0.0
        %2754 = vmatprep.subr.mxu0 0.0
        %2755 = vmatpush2.msra.mxu0 0.0
        %2756 = vmatprep.subr.mxu0 0.0
        %2757 = vmatpush2.msra.mxu0 0.0
        %2758 = vmatprep.subr.mxu0 0.0
        %2759 = vmatpush2.msra.mxu0 0.0
        %2760 = vmatprep.subr.mxu0 0.0
        %2761 = vmatpush2.msra.mxu0 0.0
        %2762 = vmatprep.subr.mxu0 0.0
        %2763 = vmatpush2.msra.mxu0 0.0
        %2764 = vmatprep.subr.mxu0 0.0
        %2765 = vmatpush2.msra.mxu0 0.0
        %2766 = vmatprep.subr.mxu0 0.0
        %2767 = vmatpush2.msra.mxu0 0.0
        %2768 = vmatprep.subr.mxu0 0.0
        %2769 = vmatpush2.msra.mxu0 0.0
        %2770 = vmatprep.subr.mxu0 0.0
        %2771 = vmatpush2.msra.mxu0 0.0
        %2772 = vmatprep.subr.mxu0 0.0
        %2773 = vmatpush2.msra.mxu0 0.0
        %2774 = vmatprep.subr.mxu0 0.0
        %2775 = vmatpush2.msra.mxu0 0.0
        %2776 = vmatprep.subr.mxu0 0.0
        %2777 = vmatpush2.msra.mxu0 0.0
        %2778 = vmatprep.subr.mxu0 0.0
        %2779 = vmatpush2.msra.mxu0 0.0
        %2780 = vmatprep.subr.mxu0 0.0
        %2781 = vmatpush2.msra.mxu0 0.0
        %2782 = vmatprep.subr.mxu0 0.0
        %2783 = vmatpush2.msra.mxu0 0.0
        %2784 = vmatprep.mubr.f32.mxu0 0.0
        %2785 = vmatmul.mubr.f32.gmra.mxu0 %v2577
        %v2786 = vpop.f32.mrf.mxu0
        %v2787 = vadd.f32 0.0, %v2786
        %v2788 = vpop.f32.mrf.mxu0
        %2789 = vmatprep.mubr.f32.mxu0 0.0
        %2790 = vmatmul.mubr.f32.gmra.mxu0 %v2580
        %v2791 = vpop.f32.mrf.mxu0
        %v2792 = vadd.f32 0.0, %v2791
        %v2793 = vpop.f32.mrf.mxu0
        %2794 = vmatprep.mubr.f32.mxu0 0.0
        %2795 = vmatmul.mubr.f32.gmra.mxu0 %v2583
        %v2796 = vpop.f32.mrf.mxu0
        %v2797 = vadd.f32 0.0, %v2796
        %v2798 = vpop.f32.mrf.mxu0
        %2799 = vmatprep.mubr.f32.mxu0 0.0
        %2800 = vmatmul.mubr.f32.gmra.mxu0 %v2586
        %v2801 = vpop.f32.mrf.mxu0
        %v2802 = vadd.f32 0.0, %v2801
        %v2803 = vpop.f32.mrf.mxu0
        %2804 = vmatprep.mubr.f32.mxu0 0.0
        %2805 = vmatmul.mubr.f32.gmra.mxu0 %v2589
        %v2806 = vpop.f32.mrf.mxu0
        %v2807 = vadd.f32 0.0, %v2806
        %v2808 = vpop.f32.mrf.mxu0
        %2809 = vmatprep.mubr.f32.mxu0 0.0
        %2810 = vmatmul.mubr.f32.gmra.mxu0 %v2592
        %v2811 = vpop.f32.mrf.mxu0
        %v2812 = vadd.f32 0.0, %v2811
        %v2813 = vpop.f32.mrf.mxu0
        %2814 = vmatprep.mubr.f32.mxu0 0.0
        %2815 = vmatmul.mubr.f32.gmra.mxu0 %v2595
        %v2816 = vpop.f32.mrf.mxu0
        %v2817 = vadd.f32 0.0, %v2816
        %v2818 = vpop.f32.mrf.mxu0
        %2819 = vmatprep.mubr.f32.mxu0 0.0
        %2820 = vmatmul.mubr.f32.gmra.mxu0 %v2598
        %v2821 = vpop.f32.mrf.mxu0
        %v2822 = vadd.f32 0.0, %v2821
        %v2823 = vpop.f32.mrf.mxu0
        %2824 = vmatprep.mubr.f32.mxu0 0.0
        %2825 = vmatmul.mubr.f32.gmra.mxu0 %v2601
        %v2826 = vpop.f32.mrf.mxu0
        %v2827 = vadd.f32 0.0, %v2826
        %v2828 = vpop.f32.mrf.mxu0
        %2829 = vmatprep.mubr.f32.mxu0 0.0
        %2830 = vmatmul.mubr.f32.gmra.mxu0 %v2604
        %v2831 = vpop.f32.mrf.mxu0
        %v2832 = vadd.f32 0.0, %v2831
        %v2833 = vpop.f32.mrf.mxu0
        %2834 = vmatprep.mubr.f32.mxu0 0.0
        %2835 = vmatmul.mubr.f32.gmra.mxu0 %v2607
        %v2836 = vpop.f32.mrf.mxu0
        %v2837 = vadd.f32 0.0, %v2836
        %v2838 = vpop.f32.mrf.mxu0
        %2839 = vmatprep.mubr.f32.mxu0 0.0
        %2840 = vmatmul.mubr.f32.gmra.mxu0 %v2610
        %v2841 = vpop.f32.mrf.mxu0
        %v2842 = vadd.f32 0.0, %v2841
        %v2843 = vpop.f32.mrf.mxu0
        %2844 = vmatprep.mubr.f32.mxu0 0.0
        %2845 = vmatmul.mubr.f32.gmra.mxu0 %v2613
        %v2846 = vpop.f32.mrf.mxu0
        %v2847 = vadd.f32 0.0, %v2846
        %v2848 = vpop.f32.mrf.mxu0
        %2849 = vmatprep.mubr.f32.mxu0 0.0
        %2850 = vmatmul.mubr.f32.gmra.mxu0 %v2616
        %v2851 = vpop.f32.mrf.mxu0
        %v2852 = vadd.f32 0.0, %v2851
        %v2853 = vpop.f32.mrf.mxu0
        %2854 = vmatprep.mubr.f32.mxu0 0.0
        %2855 = vmatmul.mubr.f32.gmra.mxu0 %v2619
        %v2856 = vpop.f32.mrf.mxu0
        %v2857 = vadd.f32 0.0, %v2856
        %v2858 = vpop.f32.mrf.mxu0
        %2859 = vmatprep.mubr.f32.mxu0 0.0
        %2860 = vmatmul.mubr.f32.gmra.mxu0 %v2622
        %v2861 = vpop.f32.mrf.mxu0
        %v2862 = vadd.f32 0.0, %v2861
        %v2863 = vpop.f32.mrf.mxu0
        %2864 = vmatprep.mubr.f32.mxu0 0.0
        %2865 = vmatmul.mubr.f32.gmra.mxu0 %v2625
        %v2866 = vpop.f32.mrf.mxu0
        %v2867 = vadd.f32 0.0, %v2866
        %v2868 = vpop.f32.mrf.mxu0
        %2869 = vmatprep.mubr.f32.mxu0 0.0
        %2870 = vmatmul.mubr.f32.gmra.mxu0 %v2628
        %v2871 = vpop.f32.mrf.mxu0
        %v2872 = vadd.f32 0.0, %v2871
        %v2873 = vpop.f32.mrf.mxu0
        %2874 = vmatprep.mubr.f32.mxu0 0.0
        %2875 = vmatmul.mubr.f32.gmra.mxu0 %v2631
        %v2876 = vpop.f32.mrf.mxu0
        %v2877 = vadd.f32 0.0, %v2876
        %v2878 = vpop.f32.mrf.mxu0
        %2879 = vmatprep.mubr.f32.mxu0 0.0
        %2880 = vmatmul.mubr.f32.gmra.mxu0 %v2634
        %v2881 = vpop.f32.mrf.mxu0
        %v2882 = vadd.f32 0.0, %v2881
        %v2883 = vpop.f32.mrf.mxu0
        %2884 = vmatprep.mubr.f32.mxu0 0.0
        %2885 = vmatmul.mubr.f32.gmra.mxu0 %v2637
        %v2886 = vpop.f32.mrf.mxu0
        %v2887 = vadd.f32 0.0, %v2886
        %v2888 = vpop.f32.mrf.mxu0
        %2889 = vmatprep.mubr.f32.mxu0 0.0
        %2890 = vmatmul.mubr.f32.gmra.mxu0 %v2640
        %v2891 = vpop.f32.mrf.mxu0
        %v2892 = vadd.f32 0.0, %v2891
        %v2893 = vpop.f32.mrf.mxu0
        %2894 = vmatprep.mubr.f32.mxu0 0.0
        %2895 = vmatmul.mubr.f32.gmra.mxu0 %v2643
        %v2896 = vpop.f32.mrf.mxu0
        %v2897 = vadd.f32 0.0, %v2896
        %v2898 = vpop.f32.mrf.mxu0
        %2899 = vmatprep.mubr.f32.mxu0 0.0
        %2900 = vmatmul.mubr.f32.gmra.mxu0 %v2646
        %v2901 = vpop.f32.mrf.mxu0
        %v2902 = vadd.f32 0.0, %v2901
        %v2903 = vpop.f32.mrf.mxu0
        %2904 = vmatprep.mubr.f32.mxu0 0.0
        %2905 = vmatmul.mubr.f32.gmra.mxu0 %v2649
        %v2906 = vpop.f32.mrf.mxu0
        %v2907 = vadd.f32 0.0, %v2906
        %v2908 = vpop.f32.mrf.mxu0
        %2909 = vmatprep.mubr.f32.mxu0 0.0
        %2910 = vmatmul.mubr.f32.gmra.mxu0 %v2652
        %v2911 = vpop.f32.mrf.mxu0
        %v2912 = vadd.f32 0.0, %v2911
        %v2913 = vpop.f32.mrf.mxu0
        %2914 = vmatprep.mubr.f32.mxu0 0.0
        %2915 = vmatmul.mubr.f32.gmra.mxu0 %v2655
        %v2916 = vpop.f32.mrf.mxu0
        %v2917 = vadd.f32 0.0, %v2916
        %v2918 = vpop.f32.mrf.mxu0
        %2919 = vmatprep.mubr.f32.mxu0 0.0
        %2920 = vmatmul.mubr.f32.gmra.mxu0 %v2658
        %v2921 = vpop.f32.mrf.mxu0
        %v2922 = vadd.f32 0.0, %v2921
        %v2923 = vpop.f32.mrf.mxu0
        %2924 = vmatprep.mubr.f32.mxu0 0.0
        %2925 = vmatmul.mubr.f32.gmra.mxu0 %v2661
        %v2926 = vpop.f32.mrf.mxu0
        %v2927 = vadd.f32 0.0, %v2926
        %v2928 = vpop.f32.mrf.mxu0
        %2929 = vmatprep.mubr.f32.mxu0 0.0
        %2930 = vmatmul.mubr.f32.gmra.mxu0 %v2664
        %v2931 = vpop.f32.mrf.mxu0
        %v2932 = vadd.f32 0.0, %v2931
        %v2933 = vpop.f32.mrf.mxu0
        %2934 = vmatprep.mubr.f32.mxu0 0.0
        %2935 = vmatmul.mubr.f32.gmra.mxu0 %v2667
        %v2936 = vpop.f32.mrf.mxu0
        %v2937 = vadd.f32 0.0, %v2936
        %v2938 = vpop.f32.mrf.mxu0
        %2939 = vmatprep.mubr.f32.mxu0 0.0
        %2940 = vmatmul.mubr.f32.gmra.mxu0 %v2670
        %v2941 = vpop.f32.mrf.mxu0
        %v2942 = vadd.f32 0.0, %v2941
        %v2943 = vpop.f32.mrf.mxu0
        %2944 = vmatprep.mubr.f32.mxu0 0.0
        %2945 = vmatmul.mubr.f32.gmra.mxu0 %v2673
        %v2946 = vpop.f32.mrf.mxu0
        %v2947 = vadd.f32 0.0, %v2946
        %v2948 = vpop.f32.mrf.mxu0
        %2949 = vmatprep.mubr.f32.mxu0 0.0
        %2950 = vmatmul.mubr.f32.gmra.mxu0 %v2676
        %v2951 = vpop.f32.mrf.mxu0
        %v2952 = vadd.f32 0.0, %v2951
        %v2953 = vpop.f32.mrf.mxu0
        %2954 = vmatprep.mubr.f32.mxu0 0.0
        %2955 = vmatmul.mubr.f32.gmra.mxu0 %v2679
        %v2956 = vpop.f32.mrf.mxu0
        %v2957 = vadd.f32 0.0, %v2956
        %v2958 = vpop.f32.mrf.mxu0
        %2959 = vmatprep.mubr.f32.mxu0 0.0
        %2960 = vmatmul.mubr.f32.gmra.mxu0 %v2682
        %v2961 = vpop.f32.mrf.mxu0
        %v2962 = vadd.f32 0.0, %v2961
        %v2963 = vpop.f32.mrf.mxu0
        %2964 = vmatprep.mubr.f32.mxu0 0.0
        %2965 = vmatmul.mubr.f32.gmra.mxu0 %v2685
        %v2966 = vpop.f32.mrf.mxu0
        %v2967 = vadd.f32 0.0, %v2966
        %v2968 = vpop.f32.mrf.mxu0
        %2969 = vmatprep.mubr.f32.mxu0 0.0
        %2970 = vmatmul.mubr.f32.gmra.mxu0 %v2688
        %v2971 = vpop.f32.mrf.mxu0
        %v2972 = vadd.f32 0.0, %v2971
        %v2973 = vpop.f32.mrf.mxu0
        %2974 = vmatprep.mubr.f32.mxu0 0.0
        %2975 = vmatmul.mubr.f32.gmra.mxu0 %v2691
        %v2976 = vpop.f32.mrf.mxu0
        %v2977 = vadd.f32 0.0, %v2976
        %v2978 = vpop.f32.mrf.mxu0
        %2979 = vmatprep.mubr.f32.mxu0 0.0
        %2980 = vmatmul.mubr.f32.gmra.mxu0 %v2694
        %v2981 = vpop.f32.mrf.mxu0
        %v2982 = vadd.f32 0.0, %v2981
        %v2983 = vpop.f32.mrf.mxu0
        %2984 = vmatprep.mubr.f32.mxu0 0.0
        %2985 = vmatmul.mubr.f32.gmra.mxu0 %v2697
        %v2986 = vpop.f32.mrf.mxu0
        %v2987 = vadd.f32 0.0, %v2986
        %v2988 = vpop.f32.mrf.mxu0
        %2989 = vmatprep.mubr.f32.mxu0 0.0
        %2990 = vmatmul.mubr.f32.gmra.mxu0 %v2700
        %v2991 = vpop.f32.mrf.mxu0
        %v2992 = vadd.f32 0.0, %v2991
        %v2993 = vpop.f32.mrf.mxu0
        %2994 = vmatprep.mubr.f32.mxu0 0.0
        %2995 = vmatmul.mubr.f32.gmra.mxu0 %v2703
        %v2996 = vpop.f32.mrf.mxu0
        %v2997 = vadd.f32 0.0, %v2996
        %v2998 = vpop.f32.mrf.mxu0
        %2999 = vmatprep.mubr.f32.mxu0 0.0
        %3000 = vmatmul.mubr.f32.gmra.mxu0 %v2706
        %v3001 = vpop.f32.mrf.mxu0
        %v3002 = vadd.f32 0.0, %v3001
        %v3003 = vpop.f32.mrf.mxu0
        %3004 = vmatprep.mubr.f32.mxu0 0.0
        %3005 = vmatmul.mubr.f32.gmra.mxu0 %v2709
        %v3006 = vpop.f32.mrf.mxu0
        %v3007 = vadd.f32 0.0, %v3006
        %v3008 = vpop.f32.mrf.mxu0
        %3009 = vmatprep.mubr.f32.mxu0 0.0
        %3010 = vmatmul.mubr.f32.gmra.mxu0 %v2712
        %v3011 = vpop.f32.mrf.mxu0
        %v3012 = vadd.f32 0.0, %v3011
        %v3013 = vpop.f32.mrf.mxu0
        %3014 = vmatprep.mubr.f32.mxu0 0.0
        %3015 = vmatmul.mubr.f32.gmra.mxu0 %v2715
        %v3016 = vpop.f32.mrf.mxu0
        %v3017 = vadd.f32 0.0, %v3016
        %v3018 = vpop.f32.mrf.mxu0
        %3019 = vmatprep.mubr.f32.mxu0 0.0
        %3020 = vmatmul.mubr.f32.gmra.mxu0 %v2718
        %v3021 = vpop.f32.mrf.mxu0
        %v3022 = vadd.f32 0.0, %v3021
        %v3023 = vpop.f32.mrf.mxu0
        %3024 = vdwg.mxu0
        %v3025 = vadd.f32 %v2471, %v2787
        %v3026 = vadd.f32 %v2472, %v2792
        %v3027 = vadd.f32 %v2473, %v2797
        %v3028 = vadd.f32 %v2474, %v2802
        %v3029 = vadd.f32 %v2475, %v2807
        %v3030 = vadd.f32 %v2476, %v2812
        %v3031 = vadd.f32 %v2477, %v2817
        %v3032 = vadd.f32 %v2478, %v2822
        %v3033 = vadd.f32 %v2479, %v2827
        %v3034 = vadd.f32 %v2480, %v2832
        %v3035 = vadd.f32 %v2481, %v2837
        %v3036 = vadd.f32 %v2482, %v2842
        %v3037 = vadd.f32 %v2483, %v2847
        %v3038 = vadd.f32 %v2484, %v2852
        %v3039 = vadd.f32 %v2485, %v2857
        %v3040 = vadd.f32 %v2486, %v2862
        %v3041 = vadd.f32 %v2487, %v2867
        %v3042 = vadd.f32 %v2488, %v2872
        %v3043 = vadd.f32 %v2489, %v2877
        %v3044 = vadd.f32 %v2490, %v2882
        %v3045 = vadd.f32 %v2491, %v2887
        %v3046 = vadd.f32 %v2492, %v2892
        %v3047 = vadd.f32 %v2493, %v2897
        %v3048 = vadd.f32 %v2494, %v2902
        %v3049 = vadd.f32 %v2495, %v2907
        %v3050 = vadd.f32 %v2496, %v2912
        %v3051 = vadd.f32 %v2497, %v2917
        %v3052 = vadd.f32 %v2498, %v2922
        %v3053 = vadd.f32 %v2499, %v2927
        %v3054 = vadd.f32 %v2500, %v2932
        %v3055 = vadd.f32 %v2501, %v2937
        %v3056 = vadd.f32 %v2502, %v2942
        %v3057 = vadd.f32 %v2503, %v2947
        %v3058 = vadd.f32 %v2504, %v2952
        %v3059 = vadd.f32 %v2505, %v2957
        %v3060 = vadd.f32 %v2506, %v2962
        %v3061 = vadd.f32 %v2507, %v2967
        %v3062 = vadd.f32 %v2508, %v2972
        %v3063 = vadd.f32 %v2509, %v2977
        %v3064 = vadd.f32 %v2510, %v2982
        %v3065 = vadd.f32 %v2511, %v2987
        %v3066 = vadd.f32 %v2512, %v2992
        %v3067 = vadd.f32 %v2513, %v2997
        %v3068 = vadd.f32 %v2514, %v3002
        %v3069 = vadd.f32 %v2515, %v3007
        %v3070 = vadd.f32 %v2516, %v3012
        %v3071 = vadd.f32 %v2517, %v3017
        %v3072 = vadd.f32 %v2518, %v3022
        %v3073 = vld [vmem:[#allocation2 + $0x21] sm:$0xff]
        %v3074 = vld [vmem:[#allocation2 + $0x29] sm:$0xff]
        %v3075 = vld [vmem:[#allocation2 + $0x31] sm:$0xff]
        %v3076 = vld [vmem:[#allocation2 + $0x39] sm:$0xff]
        %v3077 = vld [vmem:[#allocation2 + $0x41] sm:$0xff]
        %v3078 = vld [vmem:[#allocation2 + $0x49] sm:$0xff]
        %v3079 = vld [vmem:[#allocation2 + $0x51] sm:$0xff]
        %v3080 = vld [vmem:[#allocation2 + $0x59] sm:$0xff]
        %v3081 = vld [vmem:[#allocation2 + $0x61] sm:$0xff]
        %v3082 = vld [vmem:[#allocation2 + $0x69] sm:$0xff]
        %v3083 = vld [vmem:[#allocation2 + $0x71] sm:$0xff]
        %v3084 = vld [vmem:[#allocation2 + $0x79] sm:$0xff]
        %v3085 = vld [vmem:[#allocation2 + $0x81] sm:$0xff]
        %v3086 = vld [vmem:[#allocation2 + $0x89] sm:$0xff]
        %v3087 = vld [vmem:[#allocation2 + $0x91] sm:$0xff]
        %v3088 = vld [vmem:[#allocation2 + $0x99] sm:$0xff]
        %v3089 = vld [vmem:[#allocation2 + $0xa1] sm:$0xff]
        %v3090 = vld [vmem:[#allocation2 + $0xa9] sm:$0xff]
        %v3091 = vld [vmem:[#allocation2 + $0xb1] sm:$0xff]
        %v3092 = vld [vmem:[#allocation2 + $0xb9] sm:$0xff]
        %v3093 = vld [vmem:[#allocation2 + $0xc1] sm:$0xff]
        %v3094 = vld [vmem:[#allocation2 + $0xc9] sm:$0xff]
        %v3095 = vld [vmem:[#allocation2 + $0xd1] sm:$0xff]
        %v3096 = vld [vmem:[#allocation2 + $0xd9] sm:$0xff]
        %v3097 = vld [vmem:[#allocation2 + $0xe1] sm:$0xff]
        %v3098 = vld [vmem:[#allocation2 + $0xe9] sm:$0xff]
        %v3099 = vld [vmem:[#allocation2 + $0xf1] sm:$0xff]
        %v3100 = vld [vmem:[#allocation2 + $0xf9] sm:$0xff]
        %v3101 = vld [vmem:[#allocation2 + $0x101] sm:$0xff]
        %v3102 = vld [vmem:[#allocation2 + $0x109] sm:$0xff]
        %v3103 = vld [vmem:[#allocation2 + $0x111] sm:$0xff]
        %v3104 = vld [vmem:[#allocation2 + $0x119] sm:$0xff]
        %v3105 = vld [vmem:[#allocation2 + $0x121] sm:$0xff]
        %v3106 = vld [vmem:[#allocation2 + $0x129] sm:$0xff]
        %v3107 = vld [vmem:[#allocation2 + $0x131] sm:$0xff]
        %v3108 = vld [vmem:[#allocation2 + $0x139] sm:$0xff]
        %v3109 = vld [vmem:[#allocation2 + $0x141] sm:$0xff]
        %v3110 = vld [vmem:[#allocation2 + $0x149] sm:$0xff]
        %v3111 = vld [vmem:[#allocation2 + $0x151] sm:$0xff]
        %v3112 = vld [vmem:[#allocation2 + $0x159] sm:$0xff]
        %v3113 = vld [vmem:[#allocation2 + $0x161] sm:$0xff]
        %v3114 = vld [vmem:[#allocation2 + $0x169] sm:$0xff]
        %v3115 = vld [vmem:[#allocation2 + $0x171] sm:$0xff]
        %v3116 = vld [vmem:[#allocation2 + $0x179] sm:$0xff]
        %v3117 = vld [vmem:[#allocation2 + $0x181] sm:$0xff]
        %v3118 = vld [vmem:[#allocation2 + $0x189] sm:$0xff]
        %v3119 = vld [vmem:[#allocation2 + $0x191] sm:$0xff]
        %v3120 = vld [vmem:[#allocation2 + $0x199] sm:$0xff]
        %s3121 = scalar_lea.vmem %s1, 320
        %v3122 = vld [vmem:[%s3121] sm:$0xff]
        %v3123 = vld [vmem:[%s3121 + $0x8] sm:$0xff]
        %v3124 = vld [vmem:[%s3121 + $0x10] sm:$0xff]
        %v3125 = vld [vmem:[%s3121 + $0x18] sm:$0xff]
        %v3126 = vld [vmem:[%s3121 + $0x20] sm:$0xff]
        %v3127 = vld [vmem:[%s3121 + $0x28] sm:$0xff]
        %v3128 = vld [vmem:[%s3121 + $0x30] sm:$0xff]
        %v3129 = vld [vmem:[%s3121 + $0x38] sm:$0xff]
        %v3131 = vsel %vm240, %v3073, 0
        %v3134 = vsel %vm240, %v3074, 0
        %v3137 = vsel %vm240, %v3075, 0
        %v3140 = vsel %vm240, %v3076, 0
        %v3143 = vsel %vm240, %v3077, 0
        %v3146 = vsel %vm240, %v3078, 0
        %v3149 = vsel %vm240, %v3079, 0
        %v3152 = vsel %vm240, %v3080, 0
        %v3155 = vsel %vm240, %v3081, 0
        %v3158 = vsel %vm240, %v3082, 0
        %v3161 = vsel %vm240, %v3083, 0
        %v3164 = vsel %vm240, %v3084, 0
        %v3167 = vsel %vm240, %v3085, 0
        %v3170 = vsel %vm240, %v3086, 0
        %v3173 = vsel %vm240, %v3087, 0
        %v3176 = vsel %vm240, %v3088, 0
        %v3179 = vsel %vm240, %v3089, 0
        %v3182 = vsel %vm240, %v3090, 0
        %v3185 = vsel %vm240, %v3091, 0
        %v3188 = vsel %vm240, %v3092, 0
        %v3191 = vsel %vm240, %v3093, 0
        %v3194 = vsel %vm240, %v3094, 0
        %v3197 = vsel %vm240, %v3095, 0
        %v3200 = vsel %vm240, %v3096, 0
        %v3203 = vsel %vm240, %v3097, 0
        %v3206 = vsel %vm240, %v3098, 0
        %v3209 = vsel %vm240, %v3099, 0
        %v3212 = vsel %vm240, %v3100, 0
        %v3215 = vsel %vm240, %v3101, 0
        %v3218 = vsel %vm240, %v3102, 0
        %v3221 = vsel %vm240, %v3103, 0
        %v3224 = vsel %vm240, %v3104, 0
        %v3227 = vsel %vm240, %v3105, 0
        %v3230 = vsel %vm240, %v3106, 0
        %v3233 = vsel %vm240, %v3107, 0
        %v3236 = vsel %vm240, %v3108, 0
        %v3239 = vsel %vm240, %v3109, 0
        %v3242 = vsel %vm240, %v3110, 0
        %v3245 = vsel %vm240, %v3111, 0
        %v3248 = vsel %vm240, %v3112, 0
        %v3251 = vsel %vm240, %v3113, 0
        %v3254 = vsel %vm240, %v3114, 0
        %v3257 = vsel %vm240, %v3115, 0
        %v3260 = vsel %vm240, %v3116, 0
        %v3263 = vsel %vm240, %v3117, 0
        %v3266 = vsel %vm240, %v3118, 0
        %v3269 = vsel %vm240, %v3119, 0
        %v3272 = vsel %vm240, %v3120, 0
        %3274 = vmatprep.subr.mxu0 0.0
        %3275 = vmatpush1.msra.mxu0 0.0
        %3276 = vmatprep.subr.mxu0 0.0
        %3277 = vmatpush1.msra.mxu0 0.0
        %3278 = vmatprep.subr.mxu0 0.0
        %3279 = vmatpush1.msra.mxu0 0.0
        %3280 = vmatprep.subr.mxu0 0.0
        %3281 = vmatpush1.msra.mxu0 0.0
        %3282 = vmatprep.subr.mxu0 0.0
        %3283 = vmatpush1.msra.mxu0 0.0
        %3284 = vmatprep.subr.mxu0 0.0
        %3285 = vmatpush1.msra.mxu0 0.0
        %3286 = vmatprep.subr.mxu0 0.0
        %3287 = vmatpush1.msra.mxu0 0.0
        %3288 = vmatprep.subr.mxu0 0.0
        %3289 = vmatpush1.msra.mxu0 0.0
        %3290 = vmatprep.subr.mxu0 0.0
        %3291 = vmatpush1.msra.mxu0 %v3129
        %3292 = vmatprep.subr.mxu0 0.0
        %3293 = vmatpush1.msra.mxu0 %v3128
        %3294 = vmatprep.subr.mxu0 0.0
        %3295 = vmatpush1.msra.mxu0 %v3127
        %3296 = vmatprep.subr.mxu0 0.0
        %3297 = vmatpush1.msra.mxu0 %v3126
        %3298 = vmatprep.subr.mxu0 0.0
        %3299 = vmatpush1.msra.mxu0 %v3125
        %3300 = vmatprep.subr.mxu0 0.0
        %3301 = vmatpush1.msra.mxu0 %v3124
        %3302 = vmatprep.subr.mxu0 0.0
        %3303 = vmatpush1.msra.mxu0 %v3123
        %3304 = vmatprep.subr.mxu0 0.0
        %3305 = vmatpush1.msra.mxu0 %v3122
        %3306 = vmatprep.subr.mxu0 0.0
        %3307 = vmatpush2.msra.mxu0 0.0
        %3308 = vmatprep.subr.mxu0 0.0
        %3309 = vmatpush2.msra.mxu0 0.0
        %3310 = vmatprep.subr.mxu0 0.0
        %3311 = vmatpush2.msra.mxu0 0.0
        %3312 = vmatprep.subr.mxu0 0.0
        %3313 = vmatpush2.msra.mxu0 0.0
        %3314 = vmatprep.subr.mxu0 0.0
        %3315 = vmatpush2.msra.mxu0 0.0
        %3316 = vmatprep.subr.mxu0 0.0
        %3317 = vmatpush2.msra.mxu0 0.0
        %3318 = vmatprep.subr.mxu0 0.0
        %3319 = vmatpush2.msra.mxu0 0.0
        %3320 = vmatprep.subr.mxu0 0.0
        %3321 = vmatpush2.msra.mxu0 0.0
        %3322 = vmatprep.subr.mxu0 0.0
        %3323 = vmatpush2.msra.mxu0 0.0
        %3324 = vmatprep.subr.mxu0 0.0
        %3325 = vmatpush2.msra.mxu0 0.0
        %3326 = vmatprep.subr.mxu0 0.0
        %3327 = vmatpush2.msra.mxu0 0.0
        %3328 = vmatprep.subr.mxu0 0.0
        %3329 = vmatpush2.msra.mxu0 0.0
        %3330 = vmatprep.subr.mxu0 0.0
        %3331 = vmatpush2.msra.mxu0 0.0
        %3332 = vmatprep.subr.mxu0 0.0
        %3333 = vmatpush2.msra.mxu0 0.0
        %3334 = vmatprep.subr.mxu0 0.0
        %3335 = vmatpush2.msra.mxu0 0.0
        %3336 = vmatprep.subr.mxu0 0.0
        %3337 = vmatpush2.msra.mxu0 0.0
        %3338 = vmatprep.mubr.f32.mxu0 0.0
        %3339 = vmatmul.mubr.f32.gmra.mxu0 %v3131
        %v3340 = vpop.f32.mrf.mxu0
        %v3341 = vadd.f32 0.0, %v3340
        %v3342 = vpop.f32.mrf.mxu0
        %3343 = vmatprep.mubr.f32.mxu0 0.0
        %3344 = vmatmul.mubr.f32.gmra.mxu0 %v3134
        %v3345 = vpop.f32.mrf.mxu0
        %v3346 = vadd.f32 0.0, %v3345
        %v3347 = vpop.f32.mrf.mxu0
        %3348 = vmatprep.mubr.f32.mxu0 0.0
        %3349 = vmatmul.mubr.f32.gmra.mxu0 %v3137
        %v3350 = vpop.f32.mrf.mxu0
        %v3351 = vadd.f32 0.0, %v3350
        %v3352 = vpop.f32.mrf.mxu0
        %3353 = vmatprep.mubr.f32.mxu0 0.0
        %3354 = vmatmul.mubr.f32.gmra.mxu0 %v3140
        %v3355 = vpop.f32.mrf.mxu0
        %v3356 = vadd.f32 0.0, %v3355
        %v3357 = vpop.f32.mrf.mxu0
        %3358 = vmatprep.mubr.f32.mxu0 0.0
        %3359 = vmatmul.mubr.f32.gmra.mxu0 %v3143
        %v3360 = vpop.f32.mrf.mxu0
        %v3361 = vadd.f32 0.0, %v3360
        %v3362 = vpop.f32.mrf.mxu0
        %3363 = vmatprep.mubr.f32.mxu0 0.0
        %3364 = vmatmul.mubr.f32.gmra.mxu0 %v3146
        %v3365 = vpop.f32.mrf.mxu0
        %v3366 = vadd.f32 0.0, %v3365
        %v3367 = vpop.f32.mrf.mxu0
        %3368 = vmatprep.mubr.f32.mxu0 0.0
        %3369 = vmatmul.mubr.f32.gmra.mxu0 %v3149
        %v3370 = vpop.f32.mrf.mxu0
        %v3371 = vadd.f32 0.0, %v3370
        %v3372 = vpop.f32.mrf.mxu0
        %3373 = vmatprep.mubr.f32.mxu0 0.0
        %3374 = vmatmul.mubr.f32.gmra.mxu0 %v3152
        %v3375 = vpop.f32.mrf.mxu0
        %v3376 = vadd.f32 0.0, %v3375
        %v3377 = vpop.f32.mrf.mxu0
        %3378 = vmatprep.mubr.f32.mxu0 0.0
        %3379 = vmatmul.mubr.f32.gmra.mxu0 %v3155
        %v3380 = vpop.f32.mrf.mxu0
        %v3381 = vadd.f32 0.0, %v3380
        %v3382 = vpop.f32.mrf.mxu0
        %3383 = vmatprep.mubr.f32.mxu0 0.0
        %3384 = vmatmul.mubr.f32.gmra.mxu0 %v3158
        %v3385 = vpop.f32.mrf.mxu0
        %v3386 = vadd.f32 0.0, %v3385
        %v3387 = vpop.f32.mrf.mxu0
        %3388 = vmatprep.mubr.f32.mxu0 0.0
        %3389 = vmatmul.mubr.f32.gmra.mxu0 %v3161
        %v3390 = vpop.f32.mrf.mxu0
        %v3391 = vadd.f32 0.0, %v3390
        %v3392 = vpop.f32.mrf.mxu0
        %3393 = vmatprep.mubr.f32.mxu0 0.0
        %3394 = vmatmul.mubr.f32.gmra.mxu0 %v3164
        %v3395 = vpop.f32.mrf.mxu0
        %v3396 = vadd.f32 0.0, %v3395
        %v3397 = vpop.f32.mrf.mxu0
        %3398 = vmatprep.mubr.f32.mxu0 0.0
        %3399 = vmatmul.mubr.f32.gmra.mxu0 %v3167
        %v3400 = vpop.f32.mrf.mxu0
        %v3401 = vadd.f32 0.0, %v3400
        %v3402 = vpop.f32.mrf.mxu0
        %3403 = vmatprep.mubr.f32.mxu0 0.0
        %3404 = vmatmul.mubr.f32.gmra.mxu0 %v3170
        %v3405 = vpop.f32.mrf.mxu0
        %v3406 = vadd.f32 0.0, %v3405
        %v3407 = vpop.f32.mrf.mxu0
        %3408 = vmatprep.mubr.f32.mxu0 0.0
        %3409 = vmatmul.mubr.f32.gmra.mxu0 %v3173
        %v3410 = vpop.f32.mrf.mxu0
        %v3411 = vadd.f32 0.0, %v3410
        %v3412 = vpop.f32.mrf.mxu0
        %3413 = vmatprep.mubr.f32.mxu0 0.0
        %3414 = vmatmul.mubr.f32.gmra.mxu0 %v3176
        %v3415 = vpop.f32.mrf.mxu0
        %v3416 = vadd.f32 0.0, %v3415
        %v3417 = vpop.f32.mrf.mxu0
        %3418 = vmatprep.mubr.f32.mxu0 0.0
        %3419 = vmatmul.mubr.f32.gmra.mxu0 %v3179
        %v3420 = vpop.f32.mrf.mxu0
        %v3421 = vadd.f32 0.0, %v3420
        %v3422 = vpop.f32.mrf.mxu0
        %3423 = vmatprep.mubr.f32.mxu0 0.0
        %3424 = vmatmul.mubr.f32.gmra.mxu0 %v3182
        %v3425 = vpop.f32.mrf.mxu0
        %v3426 = vadd.f32 0.0, %v3425
        %v3427 = vpop.f32.mrf.mxu0
        %3428 = vmatprep.mubr.f32.mxu0 0.0
        %3429 = vmatmul.mubr.f32.gmra.mxu0 %v3185
        %v3430 = vpop.f32.mrf.mxu0
        %v3431 = vadd.f32 0.0, %v3430
        %v3432 = vpop.f32.mrf.mxu0
        %3433 = vmatprep.mubr.f32.mxu0 0.0
        %3434 = vmatmul.mubr.f32.gmra.mxu0 %v3188
        %v3435 = vpop.f32.mrf.mxu0
        %v3436 = vadd.f32 0.0, %v3435
        %v3437 = vpop.f32.mrf.mxu0
        %3438 = vmatprep.mubr.f32.mxu0 0.0
        %3439 = vmatmul.mubr.f32.gmra.mxu0 %v3191
        %v3440 = vpop.f32.mrf.mxu0
        %v3441 = vadd.f32 0.0, %v3440
        %v3442 = vpop.f32.mrf.mxu0
        %3443 = vmatprep.mubr.f32.mxu0 0.0
        %3444 = vmatmul.mubr.f32.gmra.mxu0 %v3194
        %v3445 = vpop.f32.mrf.mxu0
        %v3446 = vadd.f32 0.0, %v3445
        %v3447 = vpop.f32.mrf.mxu0
        %3448 = vmatprep.mubr.f32.mxu0 0.0
        %3449 = vmatmul.mubr.f32.gmra.mxu0 %v3197
        %v3450 = vpop.f32.mrf.mxu0
        %v3451 = vadd.f32 0.0, %v3450
        %v3452 = vpop.f32.mrf.mxu0
        %3453 = vmatprep.mubr.f32.mxu0 0.0
        %3454 = vmatmul.mubr.f32.gmra.mxu0 %v3200
        %v3455 = vpop.f32.mrf.mxu0
        %v3456 = vadd.f32 0.0, %v3455
        %v3457 = vpop.f32.mrf.mxu0
        %3458 = vmatprep.mubr.f32.mxu0 0.0
        %3459 = vmatmul.mubr.f32.gmra.mxu0 %v3203
        %v3460 = vpop.f32.mrf.mxu0
        %v3461 = vadd.f32 0.0, %v3460
        %v3462 = vpop.f32.mrf.mxu0
        %3463 = vmatprep.mubr.f32.mxu0 0.0
        %3464 = vmatmul.mubr.f32.gmra.mxu0 %v3206
        %v3465 = vpop.f32.mrf.mxu0
        %v3466 = vadd.f32 0.0, %v3465
        %v3467 = vpop.f32.mrf.mxu0
        %3468 = vmatprep.mubr.f32.mxu0 0.0
        %3469 = vmatmul.mubr.f32.gmra.mxu0 %v3209
        %v3470 = vpop.f32.mrf.mxu0
        %v3471 = vadd.f32 0.0, %v3470
        %v3472 = vpop.f32.mrf.mxu0
        %3473 = vmatprep.mubr.f32.mxu0 0.0
        %3474 = vmatmul.mubr.f32.gmra.mxu0 %v3212
        %v3475 = vpop.f32.mrf.mxu0
        %v3476 = vadd.f32 0.0, %v3475
        %v3477 = vpop.f32.mrf.mxu0
        %3478 = vmatprep.mubr.f32.mxu0 0.0
        %3479 = vmatmul.mubr.f32.gmra.mxu0 %v3215
        %v3480 = vpop.f32.mrf.mxu0
        %v3481 = vadd.f32 0.0, %v3480
        %v3482 = vpop.f32.mrf.mxu0
        %3483 = vmatprep.mubr.f32.mxu0 0.0
        %3484 = vmatmul.mubr.f32.gmra.mxu0 %v3218
        %v3485 = vpop.f32.mrf.mxu0
        %v3486 = vadd.f32 0.0, %v3485
        %v3487 = vpop.f32.mrf.mxu0
        %3488 = vmatprep.mubr.f32.mxu0 0.0
        %3489 = vmatmul.mubr.f32.gmra.mxu0 %v3221
        %v3490 = vpop.f32.mrf.mxu0
        %v3491 = vadd.f32 0.0, %v3490
        %v3492 = vpop.f32.mrf.mxu0
        %3493 = vmatprep.mubr.f32.mxu0 0.0
        %3494 = vmatmul.mubr.f32.gmra.mxu0 %v3224
        %v3495 = vpop.f32.mrf.mxu0
        %v3496 = vadd.f32 0.0, %v3495
        %v3497 = vpop.f32.mrf.mxu0
        %3498 = vmatprep.mubr.f32.mxu0 0.0
        %3499 = vmatmul.mubr.f32.gmra.mxu0 %v3227
        %v3500 = vpop.f32.mrf.mxu0
        %v3501 = vadd.f32 0.0, %v3500
        %v3502 = vpop.f32.mrf.mxu0
        %3503 = vmatprep.mubr.f32.mxu0 0.0
        %3504 = vmatmul.mubr.f32.gmra.mxu0 %v3230
        %v3505 = vpop.f32.mrf.mxu0
        %v3506 = vadd.f32 0.0, %v3505
        %v3507 = vpop.f32.mrf.mxu0
        %3508 = vmatprep.mubr.f32.mxu0 0.0
        %3509 = vmatmul.mubr.f32.gmra.mxu0 %v3233
        %v3510 = vpop.f32.mrf.mxu0
        %v3511 = vadd.f32 0.0, %v3510
        %v3512 = vpop.f32.mrf.mxu0
        %3513 = vmatprep.mubr.f32.mxu0 0.0
        %3514 = vmatmul.mubr.f32.gmra.mxu0 %v3236
        %v3515 = vpop.f32.mrf.mxu0
        %v3516 = vadd.f32 0.0, %v3515
        %v3517 = vpop.f32.mrf.mxu0
        %3518 = vmatprep.mubr.f32.mxu0 0.0
        %3519 = vmatmul.mubr.f32.gmra.mxu0 %v3239
        %v3520 = vpop.f32.mrf.mxu0
        %v3521 = vadd.f32 0.0, %v3520
        %v3522 = vpop.f32.mrf.mxu0
        %3523 = vmatprep.mubr.f32.mxu0 0.0
        %3524 = vmatmul.mubr.f32.gmra.mxu0 %v3242
        %v3525 = vpop.f32.mrf.mxu0
        %v3526 = vadd.f32 0.0, %v3525
        %v3527 = vpop.f32.mrf.mxu0
        %3528 = vmatprep.mubr.f32.mxu0 0.0
        %3529 = vmatmul.mubr.f32.gmra.mxu0 %v3245
        %v3530 = vpop.f32.mrf.mxu0
        %v3531 = vadd.f32 0.0, %v3530
        %v3532 = vpop.f32.mrf.mxu0
        %3533 = vmatprep.mubr.f32.mxu0 0.0
        %3534 = vmatmul.mubr.f32.gmra.mxu0 %v3248
        %v3535 = vpop.f32.mrf.mxu0
        %v3536 = vadd.f32 0.0, %v3535
        %v3537 = vpop.f32.mrf.mxu0
        %3538 = vmatprep.mubr.f32.mxu0 0.0
        %3539 = vmatmul.mubr.f32.gmra.mxu0 %v3251
        %v3540 = vpop.f32.mrf.mxu0
        %v3541 = vadd.f32 0.0, %v3540
        %v3542 = vpop.f32.mrf.mxu0
        %3543 = vmatprep.mubr.f32.mxu0 0.0
        %3544 = vmatmul.mubr.f32.gmra.mxu0 %v3254
        %v3545 = vpop.f32.mrf.mxu0
        %v3546 = vadd.f32 0.0, %v3545
        %v3547 = vpop.f32.mrf.mxu0
        %3548 = vmatprep.mubr.f32.mxu0 0.0
        %3549 = vmatmul.mubr.f32.gmra.mxu0 %v3257
        %v3550 = vpop.f32.mrf.mxu0
        %v3551 = vadd.f32 0.0, %v3550
        %v3552 = vpop.f32.mrf.mxu0
        %3553 = vmatprep.mubr.f32.mxu0 0.0
        %3554 = vmatmul.mubr.f32.gmra.mxu0 %v3260
        %v3555 = vpop.f32.mrf.mxu0
        %v3556 = vadd.f32 0.0, %v3555
        %v3557 = vpop.f32.mrf.mxu0
        %3558 = vmatprep.mubr.f32.mxu0 0.0
        %3559 = vmatmul.mubr.f32.gmra.mxu0 %v3263
        %v3560 = vpop.f32.mrf.mxu0
        %v3561 = vadd.f32 0.0, %v3560
        %v3562 = vpop.f32.mrf.mxu0
        %3563 = vmatprep.mubr.f32.mxu0 0.0
        %3564 = vmatmul.mubr.f32.gmra.mxu0 %v3266
        %v3565 = vpop.f32.mrf.mxu0
        %v3566 = vadd.f32 0.0, %v3565
        %v3567 = vpop.f32.mrf.mxu0
        %3568 = vmatprep.mubr.f32.mxu0 0.0
        %3569 = vmatmul.mubr.f32.gmra.mxu0 %v3269
        %v3570 = vpop.f32.mrf.mxu0
        %v3571 = vadd.f32 0.0, %v3570
        %v3572 = vpop.f32.mrf.mxu0
        %3573 = vmatprep.mubr.f32.mxu0 0.0
        %3574 = vmatmul.mubr.f32.gmra.mxu0 %v3272
        %v3575 = vpop.f32.mrf.mxu0
        %v3576 = vadd.f32 0.0, %v3575
        %v3577 = vpop.f32.mrf.mxu0
        %3578 = vdwg.mxu0
        %v3579 = vadd.f32 %v3025, %v3341
        %v3580 = vadd.f32 %v3026, %v3346
        %v3581 = vadd.f32 %v3027, %v3351
        %v3582 = vadd.f32 %v3028, %v3356
        %v3583 = vadd.f32 %v3029, %v3361
        %v3584 = vadd.f32 %v3030, %v3366
        %v3585 = vadd.f32 %v3031, %v3371
        %v3586 = vadd.f32 %v3032, %v3376
        %v3587 = vadd.f32 %v3033, %v3381
        %v3588 = vadd.f32 %v3034, %v3386
        %v3589 = vadd.f32 %v3035, %v3391
        %v3590 = vadd.f32 %v3036, %v3396
        %v3591 = vadd.f32 %v3037, %v3401
        %v3592 = vadd.f32 %v3038, %v3406
        %v3593 = vadd.f32 %v3039, %v3411
        %v3594 = vadd.f32 %v3040, %v3416
        %v3595 = vadd.f32 %v3041, %v3421
        %v3596 = vadd.f32 %v3042, %v3426
        %v3597 = vadd.f32 %v3043, %v3431
        %v3598 = vadd.f32 %v3044, %v3436
        %v3599 = vadd.f32 %v3045, %v3441
        %v3600 = vadd.f32 %v3046, %v3446
        %v3601 = vadd.f32 %v3047, %v3451
        %v3602 = vadd.f32 %v3048, %v3456
        %v3603 = vadd.f32 %v3049, %v3461
        %v3604 = vadd.f32 %v3050, %v3466
        %v3605 = vadd.f32 %v3051, %v3471
        %v3606 = vadd.f32 %v3052, %v3476
        %v3607 = vadd.f32 %v3053, %v3481
        %v3608 = vadd.f32 %v3054, %v3486
        %v3609 = vadd.f32 %v3055, %v3491
        %v3610 = vadd.f32 %v3056, %v3496
        %v3611 = vadd.f32 %v3057, %v3501
        %v3612 = vadd.f32 %v3058, %v3506
        %v3613 = vadd.f32 %v3059, %v3511
        %v3614 = vadd.f32 %v3060, %v3516
        %v3615 = vadd.f32 %v3061, %v3521
        %v3616 = vadd.f32 %v3062, %v3526
        %v3617 = vadd.f32 %v3063, %v3531
        %v3618 = vadd.f32 %v3064, %v3536
        %v3619 = vadd.f32 %v3065, %v3541
        %v3620 = vadd.f32 %v3066, %v3546
        %v3621 = vadd.f32 %v3067, %v3551
        %v3622 = vadd.f32 %v3068, %v3556
        %v3623 = vadd.f32 %v3069, %v3561
        %v3624 = vadd.f32 %v3070, %v3566
        %v3625 = vadd.f32 %v3071, %v3571
        %v3626 = vadd.f32 %v3072, %v3576
        %v3627 = vld [vmem:[#allocation2 + $0x37] sm:$0xff]
        %v3628 = vld [vmem:[#allocation2 + $0x3f] sm:$0xff]
        %v3629 = vld [vmem:[#allocation2 + $0x47] sm:$0xff]
        %v3630 = vld [vmem:[#allocation2 + $0x4f] sm:$0xff]
        %v3631 = vld [vmem:[#allocation2 + $0x57] sm:$0xff]
        %v3632 = vld [vmem:[#allocation2 + $0x5f] sm:$0xff]
        %v3633 = vld [vmem:[#allocation2 + $0x67] sm:$0xff]
        %v3634 = vld [vmem:[#allocation2 + $0x6f] sm:$0xff]
        %v3635 = vld [vmem:[#allocation2 + $0x77] sm:$0xff]
        %v3636 = vld [vmem:[#allocation2 + $0x7f] sm:$0xff]
        %v3637 = vld [vmem:[#allocation2 + $0x87] sm:$0xff]
        %v3638 = vld [vmem:[#allocation2 + $0x8f] sm:$0xff]
        %v3639 = vld [vmem:[#allocation2 + $0x97] sm:$0xff]
        %v3640 = vld [vmem:[#allocation2 + $0x9f] sm:$0xff]
        %v3641 = vld [vmem:[#allocation2 + $0xa7] sm:$0xff]
        %v3642 = vld [vmem:[#allocation2 + $0xaf] sm:$0xff]
        %v3643 = vld [vmem:[#allocation2 + $0xb7] sm:$0xff]
        %v3644 = vld [vmem:[#allocation2 + $0xbf] sm:$0xff]
        %v3645 = vld [vmem:[#allocation2 + $0xc7] sm:$0xff]
        %v3646 = vld [vmem:[#allocation2 + $0xcf] sm:$0xff]
        %v3647 = vld [vmem:[#allocation2 + $0xd7] sm:$0xff]
        %v3648 = vld [vmem:[#allocation2 + $0xdf] sm:$0xff]
        %v3649 = vld [vmem:[#allocation2 + $0xe7] sm:$0xff]
        %v3650 = vld [vmem:[#allocation2 + $0xef] sm:$0xff]
        %v3651 = vld [vmem:[#allocation2 + $0xf7] sm:$0xff]
        %v3652 = vld [vmem:[#allocation2 + $0xff] sm:$0xff]
        %v3653 = vld [vmem:[#allocation2 + $0x107] sm:$0xff]
        %v3654 = vld [vmem:[#allocation2 + $0x10f] sm:$0xff]
        %v3655 = vld [vmem:[#allocation2 + $0x117] sm:$0xff]
        %v3656 = vld [vmem:[#allocation2 + $0x11f] sm:$0xff]
        %v3657 = vld [vmem:[#allocation2 + $0x127] sm:$0xff]
        %v3658 = vld [vmem:[#allocation2 + $0x12f] sm:$0xff]
        %v3659 = vld [vmem:[#allocation2 + $0x137] sm:$0xff]
        %v3660 = vld [vmem:[#allocation2 + $0x13f] sm:$0xff]
        %v3661 = vld [vmem:[#allocation2 + $0x147] sm:$0xff]
        %v3662 = vld [vmem:[#allocation2 + $0x14f] sm:$0xff]
        %v3663 = vld [vmem:[#allocation2 + $0x157] sm:$0xff]
        %v3664 = vld [vmem:[#allocation2 + $0x15f] sm:$0xff]
        %v3665 = vld [vmem:[#allocation2 + $0x167] sm:$0xff]
        %v3666 = vld [vmem:[#allocation2 + $0x16f] sm:$0xff]
        %v3667 = vld [vmem:[#allocation2 + $0x177] sm:$0xff]
        %v3668 = vld [vmem:[#allocation2 + $0x17f] sm:$0xff]
        %v3669 = vld [vmem:[#allocation2 + $0x187] sm:$0xff]
        %v3670 = vld [vmem:[#allocation2 + $0x18f] sm:$0xff]
        %v3671 = vld [vmem:[#allocation2 + $0x197] sm:$0xff]
        %v3672 = vld [vmem:[#allocation2 + $0x19f] sm:$0xff]
        %v3673 = vld [vmem:[#allocation2 + $0x1a7] sm:$0xff]
        %v3674 = vld [vmem:[#allocation2 + $0x1af] sm:$0xff]
        %s3675 = scalar_lea.vmem %s1, 384
        %v3676 = vld [vmem:[%s3675] sm:$0xff]
        %v3677 = vld [vmem:[%s3675 + $0x8] sm:$0xff]
        %v3678 = vld [vmem:[%s3675 + $0x10] sm:$0xff]
        %v3679 = vld [vmem:[%s3675 + $0x18] sm:$0xff]
        %v3680 = vld [vmem:[%s3675 + $0x20] sm:$0xff]
        %v3681 = vld [vmem:[%s3675 + $0x28] sm:$0xff]
        %v3682 = vld [vmem:[%s3675 + $0x30] sm:$0xff]
        %v3683 = vld [vmem:[%s3675 + $0x38] sm:$0xff]
        %v3685 = vsel %vm240, %v3627, 0
        %v3688 = vsel %vm240, %v3628, 0
        %v3691 = vsel %vm240, %v3629, 0
        %v3694 = vsel %vm240, %v3630, 0
        %v3697 = vsel %vm240, %v3631, 0
        %v3700 = vsel %vm240, %v3632, 0
        %v3703 = vsel %vm240, %v3633, 0
        %v3706 = vsel %vm240, %v3634, 0
        %v3709 = vsel %vm240, %v3635, 0
        %v3712 = vsel %vm240, %v3636, 0
        %v3715 = vsel %vm240, %v3637, 0
        %v3718 = vsel %vm240, %v3638, 0
        %v3721 = vsel %vm240, %v3639, 0
        %v3724 = vsel %vm240, %v3640, 0
        %v3727 = vsel %vm240, %v3641, 0
        %v3730 = vsel %vm240, %v3642, 0
        %v3733 = vsel %vm240, %v3643, 0
        %v3736 = vsel %vm240, %v3644, 0
        %v3739 = vsel %vm240, %v3645, 0
        %v3742 = vsel %vm240, %v3646, 0
        %v3745 = vsel %vm240, %v3647, 0
        %v3748 = vsel %vm240, %v3648, 0
        %v3751 = vsel %vm240, %v3649, 0
        %v3754 = vsel %vm240, %v3650, 0
        %v3757 = vsel %vm240, %v3651, 0
        %v3760 = vsel %vm240, %v3652, 0
        %v3763 = vsel %vm240, %v3653, 0
        %v3766 = vsel %vm240, %v3654, 0
        %v3769 = vsel %vm240, %v3655, 0
        %v3772 = vsel %vm240, %v3656, 0
        %v3775 = vsel %vm240, %v3657, 0
        %v3778 = vsel %vm240, %v3658, 0
        %v3781 = vsel %vm240, %v3659, 0
        %v3784 = vsel %vm240, %v3660, 0
        %v3787 = vsel %vm240, %v3661, 0
        %v3790 = vsel %vm240, %v3662, 0
        %v3793 = vsel %vm240, %v3663, 0
        %v3796 = vsel %vm240, %v3664, 0
        %v3799 = vsel %vm240, %v3665, 0
        %v3802 = vsel %vm240, %v3666, 0
        %v3805 = vsel %vm240, %v3667, 0
        %v3808 = vsel %vm240, %v3668, 0
        %v3811 = vsel %vm240, %v3669, 0
        %v3814 = vsel %vm240, %v3670, 0
        %v3817 = vsel %vm240, %v3671, 0
        %v3820 = vsel %vm240, %v3672, 0
        %v3823 = vsel %vm240, %v3673, 0
        %v3826 = vsel %vm240, %v3674, 0
        %3828 = vmatprep.subr.mxu0 0.0
        %3829 = vmatpush1.msra.mxu0 0.0
        %3830 = vmatprep.subr.mxu0 0.0
        %3831 = vmatpush1.msra.mxu0 0.0
        %3832 = vmatprep.subr.mxu0 0.0
        %3833 = vmatpush1.msra.mxu0 0.0
        %3834 = vmatprep.subr.mxu0 0.0
        %3835 = vmatpush1.msra.mxu0 0.0
        %3836 = vmatprep.subr.mxu0 0.0
        %3837 = vmatpush1.msra.mxu0 0.0
        %3838 = vmatprep.subr.mxu0 0.0
        %3839 = vmatpush1.msra.mxu0 0.0
        %3840 = vmatprep.subr.mxu0 0.0
        %3841 = vmatpush1.msra.mxu0 0.0
        %3842 = vmatprep.subr.mxu0 0.0
        %3843 = vmatpush1.msra.mxu0 0.0
        %3844 = vmatprep.subr.mxu0 0.0
        %3845 = vmatpush1.msra.mxu0 %v3683
        %3846 = vmatprep.subr.mxu0 0.0
        %3847 = vmatpush1.msra.mxu0 %v3682
        %3848 = vmatprep.subr.mxu0 0.0
        %3849 = vmatpush1.msra.mxu0 %v3681
        %3850 = vmatprep.subr.mxu0 0.0
        %3851 = vmatpush1.msra.mxu0 %v3680
        %3852 = vmatprep.subr.mxu0 0.0
        %3853 = vmatpush1.msra.mxu0 %v3679
        %3854 = vmatprep.subr.mxu0 0.0
        %3855 = vmatpush1.msra.mxu0 %v3678
        %3856 = vmatprep.subr.mxu0 0.0
        %3857 = vmatpush1.msra.mxu0 %v3677
        %3858 = vmatprep.subr.mxu0 0.0
        %3859 = vmatpush1.msra.mxu0 %v3676
        %3860 = vmatprep.subr.mxu0 0.0
        %3861 = vmatpush2.msra.mxu0 0.0
        %3862 = vmatprep.subr.mxu0 0.0
        %3863 = vmatpush2.msra.mxu0 0.0
        %3864 = vmatprep.subr.mxu0 0.0
        %3865 = vmatpush2.msra.mxu0 0.0
        %3866 = vmatprep.subr.mxu0 0.0
        %3867 = vmatpush2.msra.mxu0 0.0
        %3868 = vmatprep.subr.mxu0 0.0
        %3869 = vmatpush2.msra.mxu0 0.0
        %3870 = vmatprep.subr.mxu0 0.0
        %3871 = vmatpush2.msra.mxu0 0.0
        %3872 = vmatprep.subr.mxu0 0.0
        %3873 = vmatpush2.msra.mxu0 0.0
        %3874 = vmatprep.subr.mxu0 0.0
        %3875 = vmatpush2.msra.mxu0 0.0
        %3876 = vmatprep.subr.mxu0 0.0
        %3877 = vmatpush2.msra.mxu0 0.0
        %3878 = vmatprep.subr.mxu0 0.0
        %3879 = vmatpush2.msra.mxu0 0.0
        %3880 = vmatprep.subr.mxu0 0.0
        %3881 = vmatpush2.msra.mxu0 0.0
        %3882 = vmatprep.subr.mxu0 0.0
        %3883 = vmatpush2.msra.mxu0 0.0
        %3884 = vmatprep.subr.mxu0 0.0
        %3885 = vmatpush2.msra.mxu0 0.0
        %3886 = vmatprep.subr.mxu0 0.0
        %3887 = vmatpush2.msra.mxu0 0.0
        %3888 = vmatprep.subr.mxu0 0.0
        %3889 = vmatpush2.msra.mxu0 0.0
        %3890 = vmatprep.subr.mxu0 0.0
        %3891 = vmatpush2.msra.mxu0 0.0
        %3892 = vmatprep.mubr.f32.mxu0 0.0
        %3893 = vmatmul.mubr.f32.gmra.mxu0 %v3685
        %v3894 = vpop.f32.mrf.mxu0
        %v3895 = vadd.f32 0.0, %v3894
        %v3896 = vpop.f32.mrf.mxu0
        %3897 = vmatprep.mubr.f32.mxu0 0.0
        %3898 = vmatmul.mubr.f32.gmra.mxu0 %v3688
        %v3899 = vpop.f32.mrf.mxu0
        %v3900 = vadd.f32 0.0, %v3899
        %v3901 = vpop.f32.mrf.mxu0
        %3902 = vmatprep.mubr.f32.mxu0 0.0
        %3903 = vmatmul.mubr.f32.gmra.mxu0 %v3691
        %v3904 = vpop.f32.mrf.mxu0
        %v3905 = vadd.f32 0.0, %v3904
        %v3906 = vpop.f32.mrf.mxu0
        %3907 = vmatprep.mubr.f32.mxu0 0.0
        %3908 = vmatmul.mubr.f32.gmra.mxu0 %v3694
        %v3909 = vpop.f32.mrf.mxu0
        %v3910 = vadd.f32 0.0, %v3909
        %v3911 = vpop.f32.mrf.mxu0
        %3912 = vmatprep.mubr.f32.mxu0 0.0
        %3913 = vmatmul.mubr.f32.gmra.mxu0 %v3697
        %v3914 = vpop.f32.mrf.mxu0
        %v3915 = vadd.f32 0.0, %v3914
        %v3916 = vpop.f32.mrf.mxu0
        %3917 = vmatprep.mubr.f32.mxu0 0.0
        %3918 = vmatmul.mubr.f32.gmra.mxu0 %v3700
        %v3919 = vpop.f32.mrf.mxu0
        %v3920 = vadd.f32 0.0, %v3919
        %v3921 = vpop.f32.mrf.mxu0
        %3922 = vmatprep.mubr.f32.mxu0 0.0
        %3923 = vmatmul.mubr.f32.gmra.mxu0 %v3703
        %v3924 = vpop.f32.mrf.mxu0
        %v3925 = vadd.f32 0.0, %v3924
        %v3926 = vpop.f32.mrf.mxu0
        %3927 = vmatprep.mubr.f32.mxu0 0.0
        %3928 = vmatmul.mubr.f32.gmra.mxu0 %v3706
        %v3929 = vpop.f32.mrf.mxu0
        %v3930 = vadd.f32 0.0, %v3929
        %v3931 = vpop.f32.mrf.mxu0
        %3932 = vmatprep.mubr.f32.mxu0 0.0
        %3933 = vmatmul.mubr.f32.gmra.mxu0 %v3709
        %v3934 = vpop.f32.mrf.mxu0
        %v3935 = vadd.f32 0.0, %v3934
        %v3936 = vpop.f32.mrf.mxu0
        %3937 = vmatprep.mubr.f32.mxu0 0.0
        %3938 = vmatmul.mubr.f32.gmra.mxu0 %v3712
        %v3939 = vpop.f32.mrf.mxu0
        %v3940 = vadd.f32 0.0, %v3939
        %v3941 = vpop.f32.mrf.mxu0
        %3942 = vmatprep.mubr.f32.mxu0 0.0
        %3943 = vmatmul.mubr.f32.gmra.mxu0 %v3715
        %v3944 = vpop.f32.mrf.mxu0
        %v3945 = vadd.f32 0.0, %v3944
        %v3946 = vpop.f32.mrf.mxu0
        %3947 = vmatprep.mubr.f32.mxu0 0.0
        %3948 = vmatmul.mubr.f32.gmra.mxu0 %v3718
        %v3949 = vpop.f32.mrf.mxu0
        %v3950 = vadd.f32 0.0, %v3949
        %v3951 = vpop.f32.mrf.mxu0
        %3952 = vmatprep.mubr.f32.mxu0 0.0
        %3953 = vmatmul.mubr.f32.gmra.mxu0 %v3721
        %v3954 = vpop.f32.mrf.mxu0
        %v3955 = vadd.f32 0.0, %v3954
        %v3956 = vpop.f32.mrf.mxu0
        %3957 = vmatprep.mubr.f32.mxu0 0.0
        %3958 = vmatmul.mubr.f32.gmra.mxu0 %v3724
        %v3959 = vpop.f32.mrf.mxu0
        %v3960 = vadd.f32 0.0, %v3959
        %v3961 = vpop.f32.mrf.mxu0
        %3962 = vmatprep.mubr.f32.mxu0 0.0
        %3963 = vmatmul.mubr.f32.gmra.mxu0 %v3727
        %v3964 = vpop.f32.mrf.mxu0
        %v3965 = vadd.f32 0.0, %v3964
        %v3966 = vpop.f32.mrf.mxu0
        %3967 = vmatprep.mubr.f32.mxu0 0.0
        %3968 = vmatmul.mubr.f32.gmra.mxu0 %v3730
        %v3969 = vpop.f32.mrf.mxu0
        %v3970 = vadd.f32 0.0, %v3969
        %v3971 = vpop.f32.mrf.mxu0
        %3972 = vmatprep.mubr.f32.mxu0 0.0
        %3973 = vmatmul.mubr.f32.gmra.mxu0 %v3733
        %v3974 = vpop.f32.mrf.mxu0
        %v3975 = vadd.f32 0.0, %v3974
        %v3976 = vpop.f32.mrf.mxu0
        %3977 = vmatprep.mubr.f32.mxu0 0.0
        %3978 = vmatmul.mubr.f32.gmra.mxu0 %v3736
        %v3979 = vpop.f32.mrf.mxu0
        %v3980 = vadd.f32 0.0, %v3979
        %v3981 = vpop.f32.mrf.mxu0
        %3982 = vmatprep.mubr.f32.mxu0 0.0
        %3983 = vmatmul.mubr.f32.gmra.mxu0 %v3739
        %v3984 = vpop.f32.mrf.mxu0
        %v3985 = vadd.f32 0.0, %v3984
        %v3986 = vpop.f32.mrf.mxu0
        %3987 = vmatprep.mubr.f32.mxu0 0.0
        %3988 = vmatmul.mubr.f32.gmra.mxu0 %v3742
        %v3989 = vpop.f32.mrf.mxu0
        %v3990 = vadd.f32 0.0, %v3989
        %v3991 = vpop.f32.mrf.mxu0
        %3992 = vmatprep.mubr.f32.mxu0 0.0
        %3993 = vmatmul.mubr.f32.gmra.mxu0 %v3745
        %v3994 = vpop.f32.mrf.mxu0
        %v3995 = vadd.f32 0.0, %v3994
        %v3996 = vpop.f32.mrf.mxu0
        %3997 = vmatprep.mubr.f32.mxu0 0.0
        %3998 = vmatmul.mubr.f32.gmra.mxu0 %v3748
        %v3999 = vpop.f32.mrf.mxu0
        %v4000 = vadd.f32 0.0, %v3999
        %v4001 = vpop.f32.mrf.mxu0
        %4002 = vmatprep.mubr.f32.mxu0 0.0
        %4003 = vmatmul.mubr.f32.gmra.mxu0 %v3751
        %v4004 = vpop.f32.mrf.mxu0
        %v4005 = vadd.f32 0.0, %v4004
        %v4006 = vpop.f32.mrf.mxu0
        %4007 = vmatprep.mubr.f32.mxu0 0.0
        %4008 = vmatmul.mubr.f32.gmra.mxu0 %v3754
        %v4009 = vpop.f32.mrf.mxu0
        %v4010 = vadd.f32 0.0, %v4009
        %v4011 = vpop.f32.mrf.mxu0
        %4012 = vmatprep.mubr.f32.mxu0 0.0
        %4013 = vmatmul.mubr.f32.gmra.mxu0 %v3757
        %v4014 = vpop.f32.mrf.mxu0
        %v4015 = vadd.f32 0.0, %v4014
        %v4016 = vpop.f32.mrf.mxu0
        %4017 = vmatprep.mubr.f32.mxu0 0.0
        %4018 = vmatmul.mubr.f32.gmra.mxu0 %v3760
        %v4019 = vpop.f32.mrf.mxu0
        %v4020 = vadd.f32 0.0, %v4019
        %v4021 = vpop.f32.mrf.mxu0
        %4022 = vmatprep.mubr.f32.mxu0 0.0
        %4023 = vmatmul.mubr.f32.gmra.mxu0 %v3763
        %v4024 = vpop.f32.mrf.mxu0
        %v4025 = vadd.f32 0.0, %v4024
        %v4026 = vpop.f32.mrf.mxu0
        %4027 = vmatprep.mubr.f32.mxu0 0.0
        %4028 = vmatmul.mubr.f32.gmra.mxu0 %v3766
        %v4029 = vpop.f32.mrf.mxu0
        %v4030 = vadd.f32 0.0, %v4029
        %v4031 = vpop.f32.mrf.mxu0
        %4032 = vmatprep.mubr.f32.mxu0 0.0
        %4033 = vmatmul.mubr.f32.gmra.mxu0 %v3769
        %v4034 = vpop.f32.mrf.mxu0
        %v4035 = vadd.f32 0.0, %v4034
        %v4036 = vpop.f32.mrf.mxu0
        %4037 = vmatprep.mubr.f32.mxu0 0.0
        %4038 = vmatmul.mubr.f32.gmra.mxu0 %v3772
        %v4039 = vpop.f32.mrf.mxu0
        %v4040 = vadd.f32 0.0, %v4039
        %v4041 = vpop.f32.mrf.mxu0
        %4042 = vmatprep.mubr.f32.mxu0 0.0
        %4043 = vmatmul.mubr.f32.gmra.mxu0 %v3775
        %v4044 = vpop.f32.mrf.mxu0
        %v4045 = vadd.f32 0.0, %v4044
        %v4046 = vpop.f32.mrf.mxu0
        %4047 = vmatprep.mubr.f32.mxu0 0.0
        %4048 = vmatmul.mubr.f32.gmra.mxu0 %v3778
        %v4049 = vpop.f32.mrf.mxu0
        %v4050 = vadd.f32 0.0, %v4049
        %v4051 = vpop.f32.mrf.mxu0
        %4052 = vmatprep.mubr.f32.mxu0 0.0
        %4053 = vmatmul.mubr.f32.gmra.mxu0 %v3781
        %v4054 = vpop.f32.mrf.mxu0
        %v4055 = vadd.f32 0.0, %v4054
        %v4056 = vpop.f32.mrf.mxu0
        %4057 = vmatprep.mubr.f32.mxu0 0.0
        %4058 = vmatmul.mubr.f32.gmra.mxu0 %v3784
        %v4059 = vpop.f32.mrf.mxu0
        %v4060 = vadd.f32 0.0, %v4059
        %v4061 = vpop.f32.mrf.mxu0
        %4062 = vmatprep.mubr.f32.mxu0 0.0
        %4063 = vmatmul.mubr.f32.gmra.mxu0 %v3787
        %v4064 = vpop.f32.mrf.mxu0
        %v4065 = vadd.f32 0.0, %v4064
        %v4066 = vpop.f32.mrf.mxu0
        %4067 = vmatprep.mubr.f32.mxu0 0.0
        %4068 = vmatmul.mubr.f32.gmra.mxu0 %v3790
        %v4069 = vpop.f32.mrf.mxu0
        %v4070 = vadd.f32 0.0, %v4069
        %v4071 = vpop.f32.mrf.mxu0
        %4072 = vmatprep.mubr.f32.mxu0 0.0
        %4073 = vmatmul.mubr.f32.gmra.mxu0 %v3793
        %v4074 = vpop.f32.mrf.mxu0
        %v4075 = vadd.f32 0.0, %v4074
        %v4076 = vpop.f32.mrf.mxu0
        %4077 = vmatprep.mubr.f32.mxu0 0.0
        %4078 = vmatmul.mubr.f32.gmra.mxu0 %v3796
        %v4079 = vpop.f32.mrf.mxu0
        %v4080 = vadd.f32 0.0, %v4079
        %v4081 = vpop.f32.mrf.mxu0
        %4082 = vmatprep.mubr.f32.mxu0 0.0
        %4083 = vmatmul.mubr.f32.gmra.mxu0 %v3799
        %v4084 = vpop.f32.mrf.mxu0
        %v4085 = vadd.f32 0.0, %v4084
        %v4086 = vpop.f32.mrf.mxu0
        %4087 = vmatprep.mubr.f32.mxu0 0.0
        %4088 = vmatmul.mubr.f32.gmra.mxu0 %v3802
        %v4089 = vpop.f32.mrf.mxu0
        %v4090 = vadd.f32 0.0, %v4089
        %v4091 = vpop.f32.mrf.mxu0
        %4092 = vmatprep.mubr.f32.mxu0 0.0
        %4093 = vmatmul.mubr.f32.gmra.mxu0 %v3805
        %v4094 = vpop.f32.mrf.mxu0
        %v4095 = vadd.f32 0.0, %v4094
        %v4096 = vpop.f32.mrf.mxu0
        %4097 = vmatprep.mubr.f32.mxu0 0.0
        %4098 = vmatmul.mubr.f32.gmra.mxu0 %v3808
        %v4099 = vpop.f32.mrf.mxu0
        %v4100 = vadd.f32 0.0, %v4099
        %v4101 = vpop.f32.mrf.mxu0
        %4102 = vmatprep.mubr.f32.mxu0 0.0
        %4103 = vmatmul.mubr.f32.gmra.mxu0 %v3811
        %v4104 = vpop.f32.mrf.mxu0
        %v4105 = vadd.f32 0.0, %v4104
        %v4106 = vpop.f32.mrf.mxu0
        %4107 = vmatprep.mubr.f32.mxu0 0.0
        %4108 = vmatmul.mubr.f32.gmra.mxu0 %v3814
        %v4109 = vpop.f32.mrf.mxu0
        %v4110 = vadd.f32 0.0, %v4109
        %v4111 = vpop.f32.mrf.mxu0
        %4112 = vmatprep.mubr.f32.mxu0 0.0
        %4113 = vmatmul.mubr.f32.gmra.mxu0 %v3817
        %v4114 = vpop.f32.mrf.mxu0
        %v4115 = vadd.f32 0.0, %v4114
        %v4116 = vpop.f32.mrf.mxu0
        %4117 = vmatprep.mubr.f32.mxu0 0.0
        %4118 = vmatmul.mubr.f32.gmra.mxu0 %v3820
        %v4119 = vpop.f32.mrf.mxu0
        %v4120 = vadd.f32 0.0, %v4119
        %v4121 = vpop.f32.mrf.mxu0
        %4122 = vmatprep.mubr.f32.mxu0 0.0
        %4123 = vmatmul.mubr.f32.gmra.mxu0 %v3823
        %v4124 = vpop.f32.mrf.mxu0
        %v4125 = vadd.f32 0.0, %v4124
        %v4126 = vpop.f32.mrf.mxu0
        %4127 = vmatprep.mubr.f32.mxu0 0.0
        %4128 = vmatmul.mubr.f32.gmra.mxu0 %v3826
        %v4129 = vpop.f32.mrf.mxu0
        %v4130 = vadd.f32 0.0, %v4129
        %v4131 = vpop.f32.mrf.mxu0
        %4132 = vdwg.mxu0
        %v4133 = vadd.f32 %v3579, %v3895
        %v4134 = vadd.f32 %v3580, %v3900
        %v4135 = vadd.f32 %v3581, %v3905
        %v4136 = vadd.f32 %v3582, %v3910
        %v4137 = vadd.f32 %v3583, %v3915
        %v4138 = vadd.f32 %v3584, %v3920
        %v4139 = vadd.f32 %v3585, %v3925
        %v4140 = vadd.f32 %v3586, %v3930
        %v4141 = vadd.f32 %v3587, %v3935
        %v4142 = vadd.f32 %v3588, %v3940
        %v4143 = vadd.f32 %v3589, %v3945
        %v4144 = vadd.f32 %v3590, %v3950
        %v4145 = vadd.f32 %v3591, %v3955
        %v4146 = vadd.f32 %v3592, %v3960
        %v4147 = vadd.f32 %v3593, %v3965
        %v4148 = vadd.f32 %v3594, %v3970
        %v4149 = vadd.f32 %v3595, %v3975
        %v4150 = vadd.f32 %v3596, %v3980
        %v4151 = vadd.f32 %v3597, %v3985
        %v4152 = vadd.f32 %v3598, %v3990
        %v4153 = vadd.f32 %v3599, %v3995
        %v4154 = vadd.f32 %v3600, %v4000
        %v4155 = vadd.f32 %v3601, %v4005
        %v4156 = vadd.f32 %v3602, %v4010
        %v4157 = vadd.f32 %v3603, %v4015
        %v4158 = vadd.f32 %v3604, %v4020
        %v4159 = vadd.f32 %v3605, %v4025
        %v4160 = vadd.f32 %v3606, %v4030
        %v4161 = vadd.f32 %v3607, %v4035
        %v4162 = vadd.f32 %v3608, %v4040
        %v4163 = vadd.f32 %v3609, %v4045
        %v4164 = vadd.f32 %v3610, %v4050
        %v4165 = vadd.f32 %v3611, %v4055
        %v4166 = vadd.f32 %v3612, %v4060
        %v4167 = vadd.f32 %v3613, %v4065
        %v4168 = vadd.f32 %v3614, %v4070
        %v4169 = vadd.f32 %v3615, %v4075
        %v4170 = vadd.f32 %v3616, %v4080
        %v4171 = vadd.f32 %v3617, %v4085
        %v4172 = vadd.f32 %v3618, %v4090
        %v4173 = vadd.f32 %v3619, %v4095
        %v4174 = vadd.f32 %v3620, %v4100
        %v4175 = vadd.f32 %v3621, %v4105
        %v4176 = vadd.f32 %v3622, %v4110
        %v4177 = vadd.f32 %v3623, %v4115
        %v4178 = vadd.f32 %v3624, %v4120
        %v4179 = vadd.f32 %v3625, %v4125
        %v4180 = vadd.f32 %v3626, %v4130
        %v4181 = vld [vmem:[#allocation2 + $0x38] sm:$0xff]
        %v4182 = vld [vmem:[#allocation2 + $0x40] sm:$0xff]
        %v4183 = vld [vmem:[#allocation2 + $0x48] sm:$0xff]
        %v4184 = vld [vmem:[#allocation2 + $0x50] sm:$0xff]
        %v4185 = vld [vmem:[#allocation2 + $0x58] sm:$0xff]
        %v4186 = vld [vmem:[#allocation2 + $0x60] sm:$0xff]
        %v4187 = vld [vmem:[#allocation2 + $0x68] sm:$0xff]
        %v4188 = vld [vmem:[#allocation2 + $0x70] sm:$0xff]
        %v4189 = vld [vmem:[#allocation2 + $0x78] sm:$0xff]
        %v4190 = vld [vmem:[#allocation2 + $0x80] sm:$0xff]
        %v4191 = vld [vmem:[#allocation2 + $0x88] sm:$0xff]
        %v4192 = vld [vmem:[#allocation2 + $0x90] sm:$0xff]
        %v4193 = vld [vmem:[#allocation2 + $0x98] sm:$0xff]
        %v4194 = vld [vmem:[#allocation2 + $0xa0] sm:$0xff]
        %v4195 = vld [vmem:[#allocation2 + $0xa8] sm:$0xff]
        %v4196 = vld [vmem:[#allocation2 + $0xb0] sm:$0xff]
        %v4197 = vld [vmem:[#allocation2 + $0xb8] sm:$0xff]
        %v4198 = vld [vmem:[#allocation2 + $0xc0] sm:$0xff]
        %v4199 = vld [vmem:[#allocation2 + $0xc8] sm:$0xff]
        %v4200 = vld [vmem:[#allocation2 + $0xd0] sm:$0xff]
        %v4201 = vld [vmem:[#allocation2 + $0xd8] sm:$0xff]
        %v4202 = vld [vmem:[#allocation2 + $0xe0] sm:$0xff]
        %v4203 = vld [vmem:[#allocation2 + $0xe8] sm:$0xff]
        %v4204 = vld [vmem:[#allocation2 + $0xf0] sm:$0xff]
        %v4205 = vld [vmem:[#allocation2 + $0xf8] sm:$0xff]
        %v4206 = vld [vmem:[#allocation2 + $0x100] sm:$0xff]
        %v4207 = vld [vmem:[#allocation2 + $0x108] sm:$0xff]
        %v4208 = vld [vmem:[#allocation2 + $0x110] sm:$0xff]
        %v4209 = vld [vmem:[#allocation2 + $0x118] sm:$0xff]
        %v4210 = vld [vmem:[#allocation2 + $0x120] sm:$0xff]
        %v4211 = vld [vmem:[#allocation2 + $0x128] sm:$0xff]
        %v4212 = vld [vmem:[#allocation2 + $0x130] sm:$0xff]
        %v4213 = vld [vmem:[#allocation2 + $0x138] sm:$0xff]
        %v4214 = vld [vmem:[#allocation2 + $0x140] sm:$0xff]
        %v4215 = vld [vmem:[#allocation2 + $0x148] sm:$0xff]
        %v4216 = vld [vmem:[#allocation2 + $0x150] sm:$0xff]
        %v4217 = vld [vmem:[#allocation2 + $0x158] sm:$0xff]
        %v4218 = vld [vmem:[#allocation2 + $0x160] sm:$0xff]
        %v4219 = vld [vmem:[#allocation2 + $0x168] sm:$0xff]
        %v4220 = vld [vmem:[#allocation2 + $0x170] sm:$0xff]
        %v4221 = vld [vmem:[#allocation2 + $0x178] sm:$0xff]
        %v4222 = vld [vmem:[#allocation2 + $0x180] sm:$0xff]
        %v4223 = vld [vmem:[#allocation2 + $0x188] sm:$0xff]
        %v4224 = vld [vmem:[#allocation2 + $0x190] sm:$0xff]
        %v4225 = vld [vmem:[#allocation2 + $0x198] sm:$0xff]
        %v4226 = vld [vmem:[#allocation2 + $0x1a0] sm:$0xff]
        %v4227 = vld [vmem:[#allocation2 + $0x1a8] sm:$0xff]
        %v4228 = vld [vmem:[#allocation2 + $0x1b0] sm:$0xff]
        %s4229 = scalar_lea.vmem %s1, 448
        %v4230 = vld [vmem:[%s4229] sm:$0xff]
        %v4231 = vld [vmem:[%s4229 + $0x8] sm:$0xff]
        %v4232 = vld [vmem:[%s4229 + $0x10] sm:$0xff]
        %v4233 = vld [vmem:[%s4229 + $0x18] sm:$0xff]
        %v4234 = vld [vmem:[%s4229 + $0x20] sm:$0xff]
        %v4235 = vld [vmem:[%s4229 + $0x28] sm:$0xff]
        %v4236 = vld [vmem:[%s4229 + $0x30] sm:$0xff]
        %v4237 = vld [vmem:[%s4229 + $0x38] sm:$0xff]
        %v4239 = vsel %vm240, %v4181, 0
        %v4242 = vsel %vm240, %v4182, 0
        %v4245 = vsel %vm240, %v4183, 0
        %v4248 = vsel %vm240, %v4184, 0
        %v4251 = vsel %vm240, %v4185, 0
        %v4254 = vsel %vm240, %v4186, 0
        %v4257 = vsel %vm240, %v4187, 0
        %v4260 = vsel %vm240, %v4188, 0
        %v4263 = vsel %vm240, %v4189, 0
        %v4266 = vsel %vm240, %v4190, 0
        %v4269 = vsel %vm240, %v4191, 0
        %v4272 = vsel %vm240, %v4192, 0
        %v4275 = vsel %vm240, %v4193, 0
        %v4278 = vsel %vm240, %v4194, 0
        %v4281 = vsel %vm240, %v4195, 0
        %v4284 = vsel %vm240, %v4196, 0
        %v4287 = vsel %vm240, %v4197, 0
        %v4290 = vsel %vm240, %v4198, 0
        %v4293 = vsel %vm240, %v4199, 0
        %v4296 = vsel %vm240, %v4200, 0
        %v4299 = vsel %vm240, %v4201, 0
        %v4302 = vsel %vm240, %v4202, 0
        %v4305 = vsel %vm240, %v4203, 0
        %v4308 = vsel %vm240, %v4204, 0
        %v4311 = vsel %vm240, %v4205, 0
        %v4314 = vsel %vm240, %v4206, 0
        %v4317 = vsel %vm240, %v4207, 0
        %v4320 = vsel %vm240, %v4208, 0
        %v4323 = vsel %vm240, %v4209, 0
        %v4326 = vsel %vm240, %v4210, 0
        %v4329 = vsel %vm240, %v4211, 0
        %v4332 = vsel %vm240, %v4212, 0
        %v4335 = vsel %vm240, %v4213, 0
        %v4338 = vsel %vm240, %v4214, 0
        %v4341 = vsel %vm240, %v4215, 0
        %v4344 = vsel %vm240, %v4216, 0
        %v4347 = vsel %vm240, %v4217, 0
        %v4350 = vsel %vm240, %v4218, 0
        %v4353 = vsel %vm240, %v4219, 0
        %v4356 = vsel %vm240, %v4220, 0
        %v4359 = vsel %vm240, %v4221, 0
        %v4362 = vsel %vm240, %v4222, 0
        %v4365 = vsel %vm240, %v4223, 0
        %v4368 = vsel %vm240, %v4224, 0
        %v4371 = vsel %vm240, %v4225, 0
        %v4374 = vsel %vm240, %v4226, 0
        %v4377 = vsel %vm240, %v4227, 0
        %v4380 = vsel %vm240, %v4228, 0
        %4382 = vmatprep.subr.mxu0 0.0
        %4383 = vmatpush1.msra.mxu0 0.0
        %4384 = vmatprep.subr.mxu0 0.0
        %4385 = vmatpush1.msra.mxu0 0.0
        %4386 = vmatprep.subr.mxu0 0.0
        %4387 = vmatpush1.msra.mxu0 0.0
        %4388 = vmatprep.subr.mxu0 0.0
        %4389 = vmatpush1.msra.mxu0 0.0
        %4390 = vmatprep.subr.mxu0 0.0
        %4391 = vmatpush1.msra.mxu0 0.0
        %4392 = vmatprep.subr.mxu0 0.0
        %4393 = vmatpush1.msra.mxu0 0.0
        %4394 = vmatprep.subr.mxu0 0.0
        %4395 = vmatpush1.msra.mxu0 0.0
        %4396 = vmatprep.subr.mxu0 0.0
        %4397 = vmatpush1.msra.mxu0 0.0
        %4398 = vmatprep.subr.mxu0 0.0
        %4399 = vmatpush1.msra.mxu0 %v4237
        %4400 = vmatprep.subr.mxu0 0.0
        %4401 = vmatpush1.msra.mxu0 %v4236
        %4402 = vmatprep.subr.mxu0 0.0
        %4403 = vmatpush1.msra.mxu0 %v4235
        %4404 = vmatprep.subr.mxu0 0.0
        %4405 = vmatpush1.msra.mxu0 %v4234
        %4406 = vmatprep.subr.mxu0 0.0
        %4407 = vmatpush1.msra.mxu0 %v4233
        %4408 = vmatprep.subr.mxu0 0.0
        %4409 = vmatpush1.msra.mxu0 %v4232
        %4410 = vmatprep.subr.mxu0 0.0
        %4411 = vmatpush1.msra.mxu0 %v4231
        %4412 = vmatprep.subr.mxu0 0.0
        %4413 = vmatpush1.msra.mxu0 %v4230
        %4414 = vmatprep.subr.mxu0 0.0
        %4415 = vmatpush2.msra.mxu0 0.0
        %4416 = vmatprep.subr.mxu0 0.0
        %4417 = vmatpush2.msra.mxu0 0.0
        %4418 = vmatprep.subr.mxu0 0.0
        %4419 = vmatpush2.msra.mxu0 0.0
        %4420 = vmatprep.subr.mxu0 0.0
        %4421 = vmatpush2.msra.mxu0 0.0
        %4422 = vmatprep.subr.mxu0 0.0
        %4423 = vmatpush2.msra.mxu0 0.0
        %4424 = vmatprep.subr.mxu0 0.0
        %4425 = vmatpush2.msra.mxu0 0.0
        %4426 = vmatprep.subr.mxu0 0.0
        %4427 = vmatpush2.msra.mxu0 0.0
        %4428 = vmatprep.subr.mxu0 0.0
        %4429 = vmatpush2.msra.mxu0 0.0
        %4430 = vmatprep.subr.mxu0 0.0
        %4431 = vmatpush2.msra.mxu0 0.0
        %4432 = vmatprep.subr.mxu0 0.0
        %4433 = vmatpush2.msra.mxu0 0.0
        %4434 = vmatprep.subr.mxu0 0.0
        %4435 = vmatpush2.msra.mxu0 0.0
        %4436 = vmatprep.subr.mxu0 0.0
        %4437 = vmatpush2.msra.mxu0 0.0
        %4438 = vmatprep.subr.mxu0 0.0
        %4439 = vmatpush2.msra.mxu0 0.0
        %4440 = vmatprep.subr.mxu0 0.0
        %4441 = vmatpush2.msra.mxu0 0.0
        %4442 = vmatprep.subr.mxu0 0.0
        %4443 = vmatpush2.msra.mxu0 0.0
        %4444 = vmatprep.subr.mxu0 0.0
        %4445 = vmatpush2.msra.mxu0 0.0
        %4446 = vmatprep.mubr.f32.mxu0 0.0
        %4447 = vmatmul.mubr.f32.gmra.mxu0 %v4239
        %v4448 = vpop.f32.mrf.mxu0
        %v4449 = vadd.f32 0.0, %v4448
        %v4450 = vpop.f32.mrf.mxu0
        %4451 = vmatprep.mubr.f32.mxu0 0.0
        %4452 = vmatmul.mubr.f32.gmra.mxu0 %v4242
        %v4453 = vpop.f32.mrf.mxu0
        %v4454 = vadd.f32 0.0, %v4453
        %v4455 = vpop.f32.mrf.mxu0
        %4456 = vmatprep.mubr.f32.mxu0 0.0
        %4457 = vmatmul.mubr.f32.gmra.mxu0 %v4245
        %v4458 = vpop.f32.mrf.mxu0
        %v4459 = vadd.f32 0.0, %v4458
        %v4460 = vpop.f32.mrf.mxu0
        %4461 = vmatprep.mubr.f32.mxu0 0.0
        %4462 = vmatmul.mubr.f32.gmra.mxu0 %v4248
        %v4463 = vpop.f32.mrf.mxu0
        %v4464 = vadd.f32 0.0, %v4463
        %v4465 = vpop.f32.mrf.mxu0
        %4466 = vmatprep.mubr.f32.mxu0 0.0
        %4467 = vmatmul.mubr.f32.gmra.mxu0 %v4251
        %v4468 = vpop.f32.mrf.mxu0
        %v4469 = vadd.f32 0.0, %v4468
        %v4470 = vpop.f32.mrf.mxu0
        %4471 = vmatprep.mubr.f32.mxu0 0.0
        %4472 = vmatmul.mubr.f32.gmra.mxu0 %v4254
        %v4473 = vpop.f32.mrf.mxu0
        %v4474 = vadd.f32 0.0, %v4473
        %v4475 = vpop.f32.mrf.mxu0
        %4476 = vmatprep.mubr.f32.mxu0 0.0
        %4477 = vmatmul.mubr.f32.gmra.mxu0 %v4257
        %v4478 = vpop.f32.mrf.mxu0
        %v4479 = vadd.f32 0.0, %v4478
        %v4480 = vpop.f32.mrf.mxu0
        %4481 = vmatprep.mubr.f32.mxu0 0.0
        %4482 = vmatmul.mubr.f32.gmra.mxu0 %v4260
        %v4483 = vpop.f32.mrf.mxu0
        %v4484 = vadd.f32 0.0, %v4483
        %v4485 = vpop.f32.mrf.mxu0
        %4486 = vmatprep.mubr.f32.mxu0 0.0
        %4487 = vmatmul.mubr.f32.gmra.mxu0 %v4263
        %v4488 = vpop.f32.mrf.mxu0
        %v4489 = vadd.f32 0.0, %v4488
        %v4490 = vpop.f32.mrf.mxu0
        %4491 = vmatprep.mubr.f32.mxu0 0.0
        %4492 = vmatmul.mubr.f32.gmra.mxu0 %v4266
        %v4493 = vpop.f32.mrf.mxu0
        %v4494 = vadd.f32 0.0, %v4493
        %v4495 = vpop.f32.mrf.mxu0
        %4496 = vmatprep.mubr.f32.mxu0 0.0
        %4497 = vmatmul.mubr.f32.gmra.mxu0 %v4269
        %v4498 = vpop.f32.mrf.mxu0
        %v4499 = vadd.f32 0.0, %v4498
        %v4500 = vpop.f32.mrf.mxu0
        %4501 = vmatprep.mubr.f32.mxu0 0.0
        %4502 = vmatmul.mubr.f32.gmra.mxu0 %v4272
        %v4503 = vpop.f32.mrf.mxu0
        %v4504 = vadd.f32 0.0, %v4503
        %v4505 = vpop.f32.mrf.mxu0
        %4506 = vmatprep.mubr.f32.mxu0 0.0
        %4507 = vmatmul.mubr.f32.gmra.mxu0 %v4275
        %v4508 = vpop.f32.mrf.mxu0
        %v4509 = vadd.f32 0.0, %v4508
        %v4510 = vpop.f32.mrf.mxu0
        %4511 = vmatprep.mubr.f32.mxu0 0.0
        %4512 = vmatmul.mubr.f32.gmra.mxu0 %v4278
        %v4513 = vpop.f32.mrf.mxu0
        %v4514 = vadd.f32 0.0, %v4513
        %v4515 = vpop.f32.mrf.mxu0
        %4516 = vmatprep.mubr.f32.mxu0 0.0
        %4517 = vmatmul.mubr.f32.gmra.mxu0 %v4281
        %v4518 = vpop.f32.mrf.mxu0
        %v4519 = vadd.f32 0.0, %v4518
        %v4520 = vpop.f32.mrf.mxu0
        %4521 = vmatprep.mubr.f32.mxu0 0.0
        %4522 = vmatmul.mubr.f32.gmra.mxu0 %v4284
        %v4523 = vpop.f32.mrf.mxu0
        %v4524 = vadd.f32 0.0, %v4523
        %v4525 = vpop.f32.mrf.mxu0
        %4526 = vmatprep.mubr.f32.mxu0 0.0
        %4527 = vmatmul.mubr.f32.gmra.mxu0 %v4287
        %v4528 = vpop.f32.mrf.mxu0
        %v4529 = vadd.f32 0.0, %v4528
        %v4530 = vpop.f32.mrf.mxu0
        %4531 = vmatprep.mubr.f32.mxu0 0.0
        %4532 = vmatmul.mubr.f32.gmra.mxu0 %v4290
        %v4533 = vpop.f32.mrf.mxu0
        %v4534 = vadd.f32 0.0, %v4533
        %v4535 = vpop.f32.mrf.mxu0
        %4536 = vmatprep.mubr.f32.mxu0 0.0
        %4537 = vmatmul.mubr.f32.gmra.mxu0 %v4293
        %v4538 = vpop.f32.mrf.mxu0
        %v4539 = vadd.f32 0.0, %v4538
        %v4540 = vpop.f32.mrf.mxu0
        %4541 = vmatprep.mubr.f32.mxu0 0.0
        %4542 = vmatmul.mubr.f32.gmra.mxu0 %v4296
        %v4543 = vpop.f32.mrf.mxu0
        %v4544 = vadd.f32 0.0, %v4543
        %v4545 = vpop.f32.mrf.mxu0
        %4546 = vmatprep.mubr.f32.mxu0 0.0
        %4547 = vmatmul.mubr.f32.gmra.mxu0 %v4299
        %v4548 = vpop.f32.mrf.mxu0
        %v4549 = vadd.f32 0.0, %v4548
        %v4550 = vpop.f32.mrf.mxu0
        %4551 = vmatprep.mubr.f32.mxu0 0.0
        %4552 = vmatmul.mubr.f32.gmra.mxu0 %v4302
        %v4553 = vpop.f32.mrf.mxu0
        %v4554 = vadd.f32 0.0, %v4553
        %v4555 = vpop.f32.mrf.mxu0
        %4556 = vmatprep.mubr.f32.mxu0 0.0
        %4557 = vmatmul.mubr.f32.gmra.mxu0 %v4305
        %v4558 = vpop.f32.mrf.mxu0
        %v4559 = vadd.f32 0.0, %v4558
        %v4560 = vpop.f32.mrf.mxu0
        %4561 = vmatprep.mubr.f32.mxu0 0.0
        %4562 = vmatmul.mubr.f32.gmra.mxu0 %v4308
        %v4563 = vpop.f32.mrf.mxu0
        %v4564 = vadd.f32 0.0, %v4563
        %v4565 = vpop.f32.mrf.mxu0
        %4566 = vmatprep.mubr.f32.mxu0 0.0
        %4567 = vmatmul.mubr.f32.gmra.mxu0 %v4311
        %v4568 = vpop.f32.mrf.mxu0
        %v4569 = vadd.f32 0.0, %v4568
        %v4570 = vpop.f32.mrf.mxu0
        %4571 = vmatprep.mubr.f32.mxu0 0.0
        %4572 = vmatmul.mubr.f32.gmra.mxu0 %v4314
        %v4573 = vpop.f32.mrf.mxu0
        %v4574 = vadd.f32 0.0, %v4573
        %v4575 = vpop.f32.mrf.mxu0
        %4576 = vmatprep.mubr.f32.mxu0 0.0
        %4577 = vmatmul.mubr.f32.gmra.mxu0 %v4317
        %v4578 = vpop.f32.mrf.mxu0
        %v4579 = vadd.f32 0.0, %v4578
        %v4580 = vpop.f32.mrf.mxu0
        %4581 = vmatprep.mubr.f32.mxu0 0.0
        %4582 = vmatmul.mubr.f32.gmra.mxu0 %v4320
        %v4583 = vpop.f32.mrf.mxu0
        %v4584 = vadd.f32 0.0, %v4583
        %v4585 = vpop.f32.mrf.mxu0
        %4586 = vmatprep.mubr.f32.mxu0 0.0
        %4587 = vmatmul.mubr.f32.gmra.mxu0 %v4323
        %v4588 = vpop.f32.mrf.mxu0
        %v4589 = vadd.f32 0.0, %v4588
        %v4590 = vpop.f32.mrf.mxu0
        %4591 = vmatprep.mubr.f32.mxu0 0.0
        %4592 = vmatmul.mubr.f32.gmra.mxu0 %v4326
        %v4593 = vpop.f32.mrf.mxu0
        %v4594 = vadd.f32 0.0, %v4593
        %v4595 = vpop.f32.mrf.mxu0
        %4596 = vmatprep.mubr.f32.mxu0 0.0
        %4597 = vmatmul.mubr.f32.gmra.mxu0 %v4329
        %v4598 = vpop.f32.mrf.mxu0
        %v4599 = vadd.f32 0.0, %v4598
        %v4600 = vpop.f32.mrf.mxu0
        %4601 = vmatprep.mubr.f32.mxu0 0.0
        %4602 = vmatmul.mubr.f32.gmra.mxu0 %v4332
        %v4603 = vpop.f32.mrf.mxu0
        %v4604 = vadd.f32 0.0, %v4603
        %v4605 = vpop.f32.mrf.mxu0
        %4606 = vmatprep.mubr.f32.mxu0 0.0
        %4607 = vmatmul.mubr.f32.gmra.mxu0 %v4335
        %v4608 = vpop.f32.mrf.mxu0
        %v4609 = vadd.f32 0.0, %v4608
        %v4610 = vpop.f32.mrf.mxu0
        %4611 = vmatprep.mubr.f32.mxu0 0.0
        %4612 = vmatmul.mubr.f32.gmra.mxu0 %v4338
        %v4613 = vpop.f32.mrf.mxu0
        %v4614 = vadd.f32 0.0, %v4613
        %v4615 = vpop.f32.mrf.mxu0
        %4616 = vmatprep.mubr.f32.mxu0 0.0
        %4617 = vmatmul.mubr.f32.gmra.mxu0 %v4341
        %v4618 = vpop.f32.mrf.mxu0
        %v4619 = vadd.f32 0.0, %v4618
        %v4620 = vpop.f32.mrf.mxu0
        %4621 = vmatprep.mubr.f32.mxu0 0.0
        %4622 = vmatmul.mubr.f32.gmra.mxu0 %v4344
        %v4623 = vpop.f32.mrf.mxu0
        %v4624 = vadd.f32 0.0, %v4623
        %v4625 = vpop.f32.mrf.mxu0
        %4626 = vmatprep.mubr.f32.mxu0 0.0
        %4627 = vmatmul.mubr.f32.gmra.mxu0 %v4347
        %v4628 = vpop.f32.mrf.mxu0
        %v4629 = vadd.f32 0.0, %v4628
        %v4630 = vpop.f32.mrf.mxu0
        %4631 = vmatprep.mubr.f32.mxu0 0.0
        %4632 = vmatmul.mubr.f32.gmra.mxu0 %v4350
        %v4633 = vpop.f32.mrf.mxu0
        %v4634 = vadd.f32 0.0, %v4633
        %v4635 = vpop.f32.mrf.mxu0
        %4636 = vmatprep.mubr.f32.mxu0 0.0
        %4637 = vmatmul.mubr.f32.gmra.mxu0 %v4353
        %v4638 = vpop.f32.mrf.mxu0
        %v4639 = vadd.f32 0.0, %v4638
        %v4640 = vpop.f32.mrf.mxu0
        %4641 = vmatprep.mubr.f32.mxu0 0.0
        %4642 = vmatmul.mubr.f32.gmra.mxu0 %v4356
        %v4643 = vpop.f32.mrf.mxu0
        %v4644 = vadd.f32 0.0, %v4643
        %v4645 = vpop.f32.mrf.mxu0
        %4646 = vmatprep.mubr.f32.mxu0 0.0
        %4647 = vmatmul.mubr.f32.gmra.mxu0 %v4359
        %v4648 = vpop.f32.mrf.mxu0
        %v4649 = vadd.f32 0.0, %v4648
        %v4650 = vpop.f32.mrf.mxu0
        %4651 = vmatprep.mubr.f32.mxu0 0.0
        %4652 = vmatmul.mubr.f32.gmra.mxu0 %v4362
        %v4653 = vpop.f32.mrf.mxu0
        %v4654 = vadd.f32 0.0, %v4653
        %v4655 = vpop.f32.mrf.mxu0
        %4656 = vmatprep.mubr.f32.mxu0 0.0
        %4657 = vmatmul.mubr.f32.gmra.mxu0 %v4365
        %v4658 = vpop.f32.mrf.mxu0
        %v4659 = vadd.f32 0.0, %v4658
        %v4660 = vpop.f32.mrf.mxu0
        %4661 = vmatprep.mubr.f32.mxu0 0.0
        %4662 = vmatmul.mubr.f32.gmra.mxu0 %v4368
        %v4663 = vpop.f32.mrf.mxu0
        %v4664 = vadd.f32 0.0, %v4663
        %v4665 = vpop.f32.mrf.mxu0
        %4666 = vmatprep.mubr.f32.mxu0 0.0
        %4667 = vmatmul.mubr.f32.gmra.mxu0 %v4371
        %v4668 = vpop.f32.mrf.mxu0
        %v4669 = vadd.f32 0.0, %v4668
        %v4670 = vpop.f32.mrf.mxu0
        %4671 = vmatprep.mubr.f32.mxu0 0.0
        %4672 = vmatmul.mubr.f32.gmra.mxu0 %v4374
        %v4673 = vpop.f32.mrf.mxu0
        %v4674 = vadd.f32 0.0, %v4673
        %v4675 = vpop.f32.mrf.mxu0
        %4676 = vmatprep.mubr.f32.mxu0 0.0
        %4677 = vmatmul.mubr.f32.gmra.mxu0 %v4377
        %v4678 = vpop.f32.mrf.mxu0
        %v4679 = vadd.f32 0.0, %v4678
        %v4680 = vpop.f32.mrf.mxu0
        %4681 = vmatprep.mubr.f32.mxu0 0.0
        %4682 = vmatmul.mubr.f32.gmra.mxu0 %v4380
        %v4683 = vpop.f32.mrf.mxu0
        %v4684 = vadd.f32 0.0, %v4683
        %v4685 = vpop.f32.mrf.mxu0
        %4686 = vdwg.mxu0
        %v4687 = vadd.f32 %v4133, %v4449
        %v4688 = vadd.f32 %v4134, %v4454
        %v4689 = vadd.f32 %v4135, %v4459
        %v4690 = vadd.f32 %v4136, %v4464
        %v4691 = vadd.f32 %v4137, %v4469
        %v4692 = vadd.f32 %v4138, %v4474
        %v4693 = vadd.f32 %v4139, %v4479
        %v4694 = vadd.f32 %v4140, %v4484
        %v4695 = vadd.f32 %v4141, %v4489
        %v4696 = vadd.f32 %v4142, %v4494
        %v4697 = vadd.f32 %v4143, %v4499
        %v4698 = vadd.f32 %v4144, %v4504
        %v4699 = vadd.f32 %v4145, %v4509
        %v4700 = vadd.f32 %v4146, %v4514
        %v4701 = vadd.f32 %v4147, %v4519
        %v4702 = vadd.f32 %v4148, %v4524
        %v4703 = vadd.f32 %v4149, %v4529
        %v4704 = vadd.f32 %v4150, %v4534
        %v4705 = vadd.f32 %v4151, %v4539
        %v4706 = vadd.f32 %v4152, %v4544
        %v4707 = vadd.f32 %v4153, %v4549
        %v4708 = vadd.f32 %v4154, %v4554
        %v4709 = vadd.f32 %v4155, %v4559
        %v4710 = vadd.f32 %v4156, %v4564
        %v4711 = vadd.f32 %v4157, %v4569
        %v4712 = vadd.f32 %v4158, %v4574
        %v4713 = vadd.f32 %v4159, %v4579
        %v4714 = vadd.f32 %v4160, %v4584
        %v4715 = vadd.f32 %v4161, %v4589
        %v4716 = vadd.f32 %v4162, %v4594
        %v4717 = vadd.f32 %v4163, %v4599
        %v4718 = vadd.f32 %v4164, %v4604
        %v4719 = vadd.f32 %v4165, %v4609
        %v4720 = vadd.f32 %v4166, %v4614
        %v4721 = vadd.f32 %v4167, %v4619
        %v4722 = vadd.f32 %v4168, %v4624
        %v4723 = vadd.f32 %v4169, %v4629
        %v4724 = vadd.f32 %v4170, %v4634
        %v4725 = vadd.f32 %v4171, %v4639
        %v4726 = vadd.f32 %v4172, %v4644
        %v4727 = vadd.f32 %v4173, %v4649
        %v4728 = vadd.f32 %v4174, %v4654
        %v4729 = vadd.f32 %v4175, %v4659
        %v4730 = vadd.f32 %v4176, %v4664
        %v4731 = vadd.f32 %v4177, %v4669
        %v4732 = vadd.f32 %v4178, %v4674
        %v4733 = vadd.f32 %v4179, %v4679
        %v4734 = vadd.f32 %v4180, %v4684
        %v4735 = vld [vmem:[#allocation2 + $0x39] sm:$0xff]
        %v4736 = vld [vmem:[#allocation2 + $0x41] sm:$0xff]
        %v4737 = vld [vmem:[#allocation2 + $0x49] sm:$0xff]
        %v4738 = vld [vmem:[#allocation2 + $0x51] sm:$0xff]
        %v4739 = vld [vmem:[#allocation2 + $0x59] sm:$0xff]
        %v4740 = vld [vmem:[#allocation2 + $0x61] sm:$0xff]
        %v4741 = vld [vmem:[#allocation2 + $0x69] sm:$0xff]
        %v4742 = vld [vmem:[#allocation2 + $0x71] sm:$0xff]
        %v4743 = vld [vmem:[#allocation2 + $0x79] sm:$0xff]
        %v4744 = vld [vmem:[#allocation2 + $0x81] sm:$0xff]
        %v4745 = vld [vmem:[#allocation2 + $0x89] sm:$0xff]
        %v4746 = vld [vmem:[#allocation2 + $0x91] sm:$0xff]
        %v4747 = vld [vmem:[#allocation2 + $0x99] sm:$0xff]
        %v4748 = vld [vmem:[#allocation2 + $0xa1] sm:$0xff]
        %v4749 = vld [vmem:[#allocation2 + $0xa9] sm:$0xff]
        %v4750 = vld [vmem:[#allocation2 + $0xb1] sm:$0xff]
        %v4751 = vld [vmem:[#allocation2 + $0xb9] sm:$0xff]
        %v4752 = vld [vmem:[#allocation2 + $0xc1] sm:$0xff]
        %v4753 = vld [vmem:[#allocation2 + $0xc9] sm:$0xff]
        %v4754 = vld [vmem:[#allocation2 + $0xd1] sm:$0xff]
        %v4755 = vld [vmem:[#allocation2 + $0xd9] sm:$0xff]
        %v4756 = vld [vmem:[#allocation2 + $0xe1] sm:$0xff]
        %v4757 = vld [vmem:[#allocation2 + $0xe9] sm:$0xff]
        %v4758 = vld [vmem:[#allocation2 + $0xf1] sm:$0xff]
        %v4759 = vld [vmem:[#allocation2 + $0xf9] sm:$0xff]
        %v4760 = vld [vmem:[#allocation2 + $0x101] sm:$0xff]
        %v4761 = vld [vmem:[#allocation2 + $0x109] sm:$0xff]
        %v4762 = vld [vmem:[#allocation2 + $0x111] sm:$0xff]
        %v4763 = vld [vmem:[#allocation2 + $0x119] sm:$0xff]
        %v4764 = vld [vmem:[#allocation2 + $0x121] sm:$0xff]
        %v4765 = vld [vmem:[#allocation2 + $0x129] sm:$0xff]
        %v4766 = vld [vmem:[#allocation2 + $0x131] sm:$0xff]
        %v4767 = vld [vmem:[#allocation2 + $0x139] sm:$0xff]
        %v4768 = vld [vmem:[#allocation2 + $0x141] sm:$0xff]
        %v4769 = vld [vmem:[#allocation2 + $0x149] sm:$0xff]
        %v4770 = vld [vmem:[#allocation2 + $0x151] sm:$0xff]
        %v4771 = vld [vmem:[#allocation2 + $0x159] sm:$0xff]
        %v4772 = vld [vmem:[#allocation2 + $0x161] sm:$0xff]
        %v4773 = vld [vmem:[#allocation2 + $0x169] sm:$0xff]
        %v4774 = vld [vmem:[#allocation2 + $0x171] sm:$0xff]
        %v4775 = vld [vmem:[#allocation2 + $0x179] sm:$0xff]
        %v4776 = vld [vmem:[#allocation2 + $0x181] sm:$0xff]
        %v4777 = vld [vmem:[#allocation2 + $0x189] sm:$0xff]
        %v4778 = vld [vmem:[#allocation2 + $0x191] sm:$0xff]
        %v4779 = vld [vmem:[#allocation2 + $0x199] sm:$0xff]
        %v4780 = vld [vmem:[#allocation2 + $0x1a1] sm:$0xff]
        %v4781 = vld [vmem:[#allocation2 + $0x1a9] sm:$0xff]
        %v4782 = vld [vmem:[#allocation2 + $0x1b1] sm:$0xff]
        %s4783 = scalar_lea.vmem %s1, 512
        %v4784 = vld [vmem:[%s4783] sm:$0xff]
        %v4785 = vld [vmem:[%s4783 + $0x8] sm:$0xff]
        %v4786 = vld [vmem:[%s4783 + $0x10] sm:$0xff]
        %v4787 = vld [vmem:[%s4783 + $0x18] sm:$0xff]
        %v4788 = vld [vmem:[%s4783 + $0x20] sm:$0xff]
        %v4789 = vld [vmem:[%s4783 + $0x28] sm:$0xff]
        %v4790 = vld [vmem:[%s4783 + $0x30] sm:$0xff]
        %v4791 = vld [vmem:[%s4783 + $0x38] sm:$0xff]
        %v4793 = vsel %vm240, %v4735, 0
        %v4796 = vsel %vm240, %v4736, 0
        %v4799 = vsel %vm240, %v4737, 0
        %v4802 = vsel %vm240, %v4738, 0
        %v4805 = vsel %vm240, %v4739, 0
        %v4808 = vsel %vm240, %v4740, 0
        %v4811 = vsel %vm240, %v4741, 0
        %v4814 = vsel %vm240, %v4742, 0
        %v4817 = vsel %vm240, %v4743, 0
        %v4820 = vsel %vm240, %v4744, 0
        %v4823 = vsel %vm240, %v4745, 0
        %v4826 = vsel %vm240, %v4746, 0
        %v4829 = vsel %vm240, %v4747, 0
        %v4832 = vsel %vm240, %v4748, 0
        %v4835 = vsel %vm240, %v4749, 0
        %v4838 = vsel %vm240, %v4750, 0
        %v4841 = vsel %vm240, %v4751, 0
        %v4844 = vsel %vm240, %v4752, 0
        %v4847 = vsel %vm240, %v4753, 0
        %v4850 = vsel %vm240, %v4754, 0
        %v4853 = vsel %vm240, %v4755, 0
        %v4856 = vsel %vm240, %v4756, 0
        %v4859 = vsel %vm240, %v4757, 0
        %v4862 = vsel %vm240, %v4758, 0
        %v4865 = vsel %vm240, %v4759, 0
        %v4868 = vsel %vm240, %v4760, 0
        %v4871 = vsel %vm240, %v4761, 0
        %v4874 = vsel %vm240, %v4762, 0
        %v4877 = vsel %vm240, %v4763, 0
        %v4880 = vsel %vm240, %v4764, 0
        %v4883 = vsel %vm240, %v4765, 0
        %v4886 = vsel %vm240, %v4766, 0
        %v4889 = vsel %vm240, %v4767, 0
        %v4892 = vsel %vm240, %v4768, 0
        %v4895 = vsel %vm240, %v4769, 0
        %v4898 = vsel %vm240, %v4770, 0
        %v4901 = vsel %vm240, %v4771, 0
        %v4904 = vsel %vm240, %v4772, 0
        %v4907 = vsel %vm240, %v4773, 0
        %v4910 = vsel %vm240, %v4774, 0
        %v4913 = vsel %vm240, %v4775, 0
        %v4916 = vsel %vm240, %v4776, 0
        %v4919 = vsel %vm240, %v4777, 0
        %v4922 = vsel %vm240, %v4778, 0
        %v4925 = vsel %vm240, %v4779, 0
        %v4928 = vsel %vm240, %v4780, 0
        %v4931 = vsel %vm240, %v4781, 0
        %v4934 = vsel %vm240, %v4782, 0
        %4936 = vmatprep.subr.mxu0 0.0
        %4937 = vmatpush1.msra.mxu0 0.0
        %4938 = vmatprep.subr.mxu0 0.0
        %4939 = vmatpush1.msra.mxu0 0.0
        %4940 = vmatprep.subr.mxu0 0.0
        %4941 = vmatpush1.msra.mxu0 0.0
        %4942 = vmatprep.subr.mxu0 0.0
        %4943 = vmatpush1.msra.mxu0 0.0
        %4944 = vmatprep.subr.mxu0 0.0
        %4945 = vmatpush1.msra.mxu0 0.0
        %4946 = vmatprep.subr.mxu0 0.0
        %4947 = vmatpush1.msra.mxu0 0.0
        %4948 = vmatprep.subr.mxu0 0.0
        %4949 = vmatpush1.msra.mxu0 0.0
        %4950 = vmatprep.subr.mxu0 0.0
        %4951 = vmatpush1.msra.mxu0 0.0
        %4952 = vmatprep.subr.mxu0 0.0
        %4953 = vmatpush1.msra.mxu0 %v4791
        %4954 = vmatprep.subr.mxu0 0.0
        %4955 = vmatpush1.msra.mxu0 %v4790
        %4956 = vmatprep.subr.mxu0 0.0
        %4957 = vmatpush1.msra.mxu0 %v4789
        %4958 = vmatprep.subr.mxu0 0.0
        %4959 = vmatpush1.msra.mxu0 %v4788
        %4960 = vmatprep.subr.mxu0 0.0
        %4961 = vmatpush1.msra.mxu0 %v4787
        %4962 = vmatprep.subr.mxu0 0.0
        %4963 = vmatpush1.msra.mxu0 %v4786
        %4964 = vmatprep.subr.mxu0 0.0
        %4965 = vmatpush1.msra.mxu0 %v4785
        %4966 = vmatprep.subr.mxu0 0.0
        %4967 = vmatpush1.msra.mxu0 %v4784
        %4968 = vmatprep.subr.mxu0 0.0
        %4969 = vmatpush2.msra.mxu0 0.0
        %4970 = vmatprep.subr.mxu0 0.0
        %4971 = vmatpush2.msra.mxu0 0.0
        %4972 = vmatprep.subr.mxu0 0.0
        %4973 = vmatpush2.msra.mxu0 0.0
        %4974 = vmatprep.subr.mxu0 0.0
        %4975 = vmatpush2.msra.mxu0 0.0
        %4976 = vmatprep.subr.mxu0 0.0
        %4977 = vmatpush2.msra.mxu0 0.0
        %4978 = vmatprep.subr.mxu0 0.0
        %4979 = vmatpush2.msra.mxu0 0.0
        %4980 = vmatprep.subr.mxu0 0.0
        %4981 = vmatpush2.msra.mxu0 0.0
        %4982 = vmatprep.subr.mxu0 0.0
        %4983 = vmatpush2.msra.mxu0 0.0
        %4984 = vmatprep.subr.mxu0 0.0
        %4985 = vmatpush2.msra.mxu0 0.0
        %4986 = vmatprep.subr.mxu0 0.0
        %4987 = vmatpush2.msra.mxu0 0.0
        %4988 = vmatprep.subr.mxu0 0.0
        %4989 = vmatpush2.msra.mxu0 0.0
        %4990 = vmatprep.subr.mxu0 0.0
        %4991 = vmatpush2.msra.mxu0 0.0
        %4992 = vmatprep.subr.mxu0 0.0
        %4993 = vmatpush2.msra.mxu0 0.0
        %4994 = vmatprep.subr.mxu0 0.0
        %4995 = vmatpush2.msra.mxu0 0.0
        %4996 = vmatprep.subr.mxu0 0.0
        %4997 = vmatpush2.msra.mxu0 0.0
        %4998 = vmatprep.subr.mxu0 0.0
        %4999 = vmatpush2.msra.mxu0 0.0
        %5000 = vmatprep.mubr.f32.mxu0 0.0
        %5001 = vmatmul.mubr.f32.gmra.mxu0 %v4793
        %v5002 = vpop.f32.mrf.mxu0
        %v5003 = vadd.f32 0.0, %v5002
        %v5004 = vpop.f32.mrf.mxu0
        %5005 = vmatprep.mubr.f32.mxu0 0.0
        %5006 = vmatmul.mubr.f32.gmra.mxu0 %v4796
        %v5007 = vpop.f32.mrf.mxu0
        %v5008 = vadd.f32 0.0, %v5007
        %v5009 = vpop.f32.mrf.mxu0
        %5010 = vmatprep.mubr.f32.mxu0 0.0
        %5011 = vmatmul.mubr.f32.gmra.mxu0 %v4799
        %v5012 = vpop.f32.mrf.mxu0
        %v5013 = vadd.f32 0.0, %v5012
        %v5014 = vpop.f32.mrf.mxu0
        %5015 = vmatprep.mubr.f32.mxu0 0.0
        %5016 = vmatmul.mubr.f32.gmra.mxu0 %v4802
        %v5017 = vpop.f32.mrf.mxu0
        %v5018 = vadd.f32 0.0, %v5017
        %v5019 = vpop.f32.mrf.mxu0
        %5020 = vmatprep.mubr.f32.mxu0 0.0
        %5021 = vmatmul.mubr.f32.gmra.mxu0 %v4805
        %v5022 = vpop.f32.mrf.mxu0
        %v5023 = vadd.f32 0.0, %v5022
        %v5024 = vpop.f32.mrf.mxu0
        %5025 = vmatprep.mubr.f32.mxu0 0.0
        %5026 = vmatmul.mubr.f32.gmra.mxu0 %v4808
        %v5027 = vpop.f32.mrf.mxu0
        %v5028 = vadd.f32 0.0, %v5027
        %v5029 = vpop.f32.mrf.mxu0
        %5030 = vmatprep.mubr.f32.mxu0 0.0
        %5031 = vmatmul.mubr.f32.gmra.mxu0 %v4811
        %v5032 = vpop.f32.mrf.mxu0
        %v5033 = vadd.f32 0.0, %v5032
        %v5034 = vpop.f32.mrf.mxu0
        %5035 = vmatprep.mubr.f32.mxu0 0.0
        %5036 = vmatmul.mubr.f32.gmra.mxu0 %v4814
        %v5037 = vpop.f32.mrf.mxu0
        %v5038 = vadd.f32 0.0, %v5037
        %v5039 = vpop.f32.mrf.mxu0
        %5040 = vmatprep.mubr.f32.mxu0 0.0
        %5041 = vmatmul.mubr.f32.gmra.mxu0 %v4817
        %v5042 = vpop.f32.mrf.mxu0
        %v5043 = vadd.f32 0.0, %v5042
        %v5044 = vpop.f32.mrf.mxu0
        %5045 = vmatprep.mubr.f32.mxu0 0.0
        %5046 = vmatmul.mubr.f32.gmra.mxu0 %v4820
        %v5047 = vpop.f32.mrf.mxu0
        %v5048 = vadd.f32 0.0, %v5047
        %v5049 = vpop.f32.mrf.mxu0
        %5050 = vmatprep.mubr.f32.mxu0 0.0
        %5051 = vmatmul.mubr.f32.gmra.mxu0 %v4823
        %v5052 = vpop.f32.mrf.mxu0
        %v5053 = vadd.f32 0.0, %v5052
        %v5054 = vpop.f32.mrf.mxu0
        %5055 = vmatprep.mubr.f32.mxu0 0.0
        %5056 = vmatmul.mubr.f32.gmra.mxu0 %v4826
        %v5057 = vpop.f32.mrf.mxu0
        %v5058 = vadd.f32 0.0, %v5057
        %v5059 = vpop.f32.mrf.mxu0
        %5060 = vmatprep.mubr.f32.mxu0 0.0
        %5061 = vmatmul.mubr.f32.gmra.mxu0 %v4829
        %v5062 = vpop.f32.mrf.mxu0
        %v5063 = vadd.f32 0.0, %v5062
        %v5064 = vpop.f32.mrf.mxu0
        %5065 = vmatprep.mubr.f32.mxu0 0.0
        %5066 = vmatmul.mubr.f32.gmra.mxu0 %v4832
        %v5067 = vpop.f32.mrf.mxu0
        %v5068 = vadd.f32 0.0, %v5067
        %v5069 = vpop.f32.mrf.mxu0
        %5070 = vmatprep.mubr.f32.mxu0 0.0
        %5071 = vmatmul.mubr.f32.gmra.mxu0 %v4835
        %v5072 = vpop.f32.mrf.mxu0
        %v5073 = vadd.f32 0.0, %v5072
        %v5074 = vpop.f32.mrf.mxu0
        %5075 = vmatprep.mubr.f32.mxu0 0.0
        %5076 = vmatmul.mubr.f32.gmra.mxu0 %v4838
        %v5077 = vpop.f32.mrf.mxu0
        %v5078 = vadd.f32 0.0, %v5077
        %v5079 = vpop.f32.mrf.mxu0
        %5080 = vmatprep.mubr.f32.mxu0 0.0
        %5081 = vmatmul.mubr.f32.gmra.mxu0 %v4841
        %v5082 = vpop.f32.mrf.mxu0
        %v5083 = vadd.f32 0.0, %v5082
        %v5084 = vpop.f32.mrf.mxu0
        %5085 = vmatprep.mubr.f32.mxu0 0.0
        %5086 = vmatmul.mubr.f32.gmra.mxu0 %v4844
        %v5087 = vpop.f32.mrf.mxu0
        %v5088 = vadd.f32 0.0, %v5087
        %v5089 = vpop.f32.mrf.mxu0
        %5090 = vmatprep.mubr.f32.mxu0 0.0
        %5091 = vmatmul.mubr.f32.gmra.mxu0 %v4847
        %v5092 = vpop.f32.mrf.mxu0
        %v5093 = vadd.f32 0.0, %v5092
        %v5094 = vpop.f32.mrf.mxu0
        %5095 = vmatprep.mubr.f32.mxu0 0.0
        %5096 = vmatmul.mubr.f32.gmra.mxu0 %v4850
        %v5097 = vpop.f32.mrf.mxu0
        %v5098 = vadd.f32 0.0, %v5097
        %v5099 = vpop.f32.mrf.mxu0
        %5100 = vmatprep.mubr.f32.mxu0 0.0
        %5101 = vmatmul.mubr.f32.gmra.mxu0 %v4853
        %v5102 = vpop.f32.mrf.mxu0
        %v5103 = vadd.f32 0.0, %v5102
        %v5104 = vpop.f32.mrf.mxu0
        %5105 = vmatprep.mubr.f32.mxu0 0.0
        %5106 = vmatmul.mubr.f32.gmra.mxu0 %v4856
        %v5107 = vpop.f32.mrf.mxu0
        %v5108 = vadd.f32 0.0, %v5107
        %v5109 = vpop.f32.mrf.mxu0
        %5110 = vmatprep.mubr.f32.mxu0 0.0
        %5111 = vmatmul.mubr.f32.gmra.mxu0 %v4859
        %v5112 = vpop.f32.mrf.mxu0
        %v5113 = vadd.f32 0.0, %v5112
        %v5114 = vpop.f32.mrf.mxu0
        %5115 = vmatprep.mubr.f32.mxu0 0.0
        %5116 = vmatmul.mubr.f32.gmra.mxu0 %v4862
        %v5117 = vpop.f32.mrf.mxu0
        %v5118 = vadd.f32 0.0, %v5117
        %v5119 = vpop.f32.mrf.mxu0
        %5120 = vmatprep.mubr.f32.mxu0 0.0
        %5121 = vmatmul.mubr.f32.gmra.mxu0 %v4865
        %v5122 = vpop.f32.mrf.mxu0
        %v5123 = vadd.f32 0.0, %v5122
        %v5124 = vpop.f32.mrf.mxu0
        %5125 = vmatprep.mubr.f32.mxu0 0.0
        %5126 = vmatmul.mubr.f32.gmra.mxu0 %v4868
        %v5127 = vpop.f32.mrf.mxu0
        %v5128 = vadd.f32 0.0, %v5127
        %v5129 = vpop.f32.mrf.mxu0
        %5130 = vmatprep.mubr.f32.mxu0 0.0
        %5131 = vmatmul.mubr.f32.gmra.mxu0 %v4871
        %v5132 = vpop.f32.mrf.mxu0
        %v5133 = vadd.f32 0.0, %v5132
        %v5134 = vpop.f32.mrf.mxu0
        %5135 = vmatprep.mubr.f32.mxu0 0.0
        %5136 = vmatmul.mubr.f32.gmra.mxu0 %v4874
        %v5137 = vpop.f32.mrf.mxu0
        %v5138 = vadd.f32 0.0, %v5137
        %v5139 = vpop.f32.mrf.mxu0
        %5140 = vmatprep.mubr.f32.mxu0 0.0
        %5141 = vmatmul.mubr.f32.gmra.mxu0 %v4877
        %v5142 = vpop.f32.mrf.mxu0
        %v5143 = vadd.f32 0.0, %v5142
        %v5144 = vpop.f32.mrf.mxu0
        %5145 = vmatprep.mubr.f32.mxu0 0.0
        %5146 = vmatmul.mubr.f32.gmra.mxu0 %v4880
        %v5147 = vpop.f32.mrf.mxu0
        %v5148 = vadd.f32 0.0, %v5147
        %v5149 = vpop.f32.mrf.mxu0
        %5150 = vmatprep.mubr.f32.mxu0 0.0
        %5151 = vmatmul.mubr.f32.gmra.mxu0 %v4883
        %v5152 = vpop.f32.mrf.mxu0
        %v5153 = vadd.f32 0.0, %v5152
        %v5154 = vpop.f32.mrf.mxu0
        %5155 = vmatprep.mubr.f32.mxu0 0.0
        %5156 = vmatmul.mubr.f32.gmra.mxu0 %v4886
        %v5157 = vpop.f32.mrf.mxu0
        %v5158 = vadd.f32 0.0, %v5157
        %v5159 = vpop.f32.mrf.mxu0
        %5160 = vmatprep.mubr.f32.mxu0 0.0
        %5161 = vmatmul.mubr.f32.gmra.mxu0 %v4889
        %v5162 = vpop.f32.mrf.mxu0
        %v5163 = vadd.f32 0.0, %v5162
        %v5164 = vpop.f32.mrf.mxu0
        %5165 = vmatprep.mubr.f32.mxu0 0.0
        %5166 = vmatmul.mubr.f32.gmra.mxu0 %v4892
        %v5167 = vpop.f32.mrf.mxu0
        %v5168 = vadd.f32 0.0, %v5167
        %v5169 = vpop.f32.mrf.mxu0
        %5170 = vmatprep.mubr.f32.mxu0 0.0
        %5171 = vmatmul.mubr.f32.gmra.mxu0 %v4895
        %v5172 = vpop.f32.mrf.mxu0
        %v5173 = vadd.f32 0.0, %v5172
        %v5174 = vpop.f32.mrf.mxu0
        %5175 = vmatprep.mubr.f32.mxu0 0.0
        %5176 = vmatmul.mubr.f32.gmra.mxu0 %v4898
        %v5177 = vpop.f32.mrf.mxu0
        %v5178 = vadd.f32 0.0, %v5177
        %v5179 = vpop.f32.mrf.mxu0
        %5180 = vmatprep.mubr.f32.mxu0 0.0
        %5181 = vmatmul.mubr.f32.gmra.mxu0 %v4901
        %v5182 = vpop.f32.mrf.mxu0
        %v5183 = vadd.f32 0.0, %v5182
        %v5184 = vpop.f32.mrf.mxu0
        %5185 = vmatprep.mubr.f32.mxu0 0.0
        %5186 = vmatmul.mubr.f32.gmra.mxu0 %v4904
        %v5187 = vpop.f32.mrf.mxu0
        %v5188 = vadd.f32 0.0, %v5187
        %v5189 = vpop.f32.mrf.mxu0
        %5190 = vmatprep.mubr.f32.mxu0 0.0
        %5191 = vmatmul.mubr.f32.gmra.mxu0 %v4907
        %v5192 = vpop.f32.mrf.mxu0
        %v5193 = vadd.f32 0.0, %v5192
        %v5194 = vpop.f32.mrf.mxu0
        %5195 = vmatprep.mubr.f32.mxu0 0.0
        %5196 = vmatmul.mubr.f32.gmra.mxu0 %v4910
        %v5197 = vpop.f32.mrf.mxu0
        %v5198 = vadd.f32 0.0, %v5197
        %v5199 = vpop.f32.mrf.mxu0
        %5200 = vmatprep.mubr.f32.mxu0 0.0
        %5201 = vmatmul.mubr.f32.gmra.mxu0 %v4913
        %v5202 = vpop.f32.mrf.mxu0
        %v5203 = vadd.f32 0.0, %v5202
        %v5204 = vpop.f32.mrf.mxu0
        %5205 = vmatprep.mubr.f32.mxu0 0.0
        %5206 = vmatmul.mubr.f32.gmra.mxu0 %v4916
        %v5207 = vpop.f32.mrf.mxu0
        %v5208 = vadd.f32 0.0, %v5207
        %v5209 = vpop.f32.mrf.mxu0
        %5210 = vmatprep.mubr.f32.mxu0 0.0
        %5211 = vmatmul.mubr.f32.gmra.mxu0 %v4919
        %v5212 = vpop.f32.mrf.mxu0
        %v5213 = vadd.f32 0.0, %v5212
        %v5214 = vpop.f32.mrf.mxu0
        %5215 = vmatprep.mubr.f32.mxu0 0.0
        %5216 = vmatmul.mubr.f32.gmra.mxu0 %v4922
        %v5217 = vpop.f32.mrf.mxu0
        %v5218 = vadd.f32 0.0, %v5217
        %v5219 = vpop.f32.mrf.mxu0
        %5220 = vmatprep.mubr.f32.mxu0 0.0
        %5221 = vmatmul.mubr.f32.gmra.mxu0 %v4925
        %v5222 = vpop.f32.mrf.mxu0
        %v5223 = vadd.f32 0.0, %v5222
        %v5224 = vpop.f32.mrf.mxu0
        %5225 = vmatprep.mubr.f32.mxu0 0.0
        %5226 = vmatmul.mubr.f32.gmra.mxu0 %v4928
        %v5227 = vpop.f32.mrf.mxu0
        %v5228 = vadd.f32 0.0, %v5227
        %v5229 = vpop.f32.mrf.mxu0
        %5230 = vmatprep.mubr.f32.mxu0 0.0
        %5231 = vmatmul.mubr.f32.gmra.mxu0 %v4931
        %v5232 = vpop.f32.mrf.mxu0
        %v5233 = vadd.f32 0.0, %v5232
        %v5234 = vpop.f32.mrf.mxu0
        %5235 = vmatprep.mubr.f32.mxu0 0.0
        %5236 = vmatmul.mubr.f32.gmra.mxu0 %v4934
        %v5237 = vpop.f32.mrf.mxu0
        %v5238 = vadd.f32 0.0, %v5237
        %v5239 = vpop.f32.mrf.mxu0
        %5240 = vdwg.mxu0
        %v5241 = vadd.f32 %v4687, %v5003
        %v5242 = vadd.f32 %v4688, %v5008
        %v5243 = vadd.f32 %v4689, %v5013
        %v5244 = vadd.f32 %v4690, %v5018
        %v5245 = vadd.f32 %v4691, %v5023
        %v5246 = vadd.f32 %v4692, %v5028
        %v5247 = vadd.f32 %v4693, %v5033
        %v5248 = vadd.f32 %v4694, %v5038
        %v5249 = vadd.f32 %v4695, %v5043
        %v5250 = vadd.f32 %v4696, %v5048
        %v5251 = vadd.f32 %v4697, %v5053
        %v5252 = vadd.f32 %v4698, %v5058
        %v5253 = vadd.f32 %v4699, %v5063
        %v5254 = vadd.f32 %v4700, %v5068
        %v5255 = vadd.f32 %v4701, %v5073
        %v5256 = vadd.f32 %v4702, %v5078
        %v5257 = vadd.f32 %v4703, %v5083
        %v5258 = vadd.f32 %v4704, %v5088
        %v5259 = vadd.f32 %v4705, %v5093
        %v5260 = vadd.f32 %v4706, %v5098
        %v5261 = vadd.f32 %v4707, %v5103
        %v5262 = vadd.f32 %v4708, %v5108
        %v5263 = vadd.f32 %v4709, %v5113
        %v5264 = vadd.f32 %v4710, %v5118
        %v5265 = vadd.f32 %v4711, %v5123
        %v5266 = vadd.f32 %v4712, %v5128
        %v5267 = vadd.f32 %v4713, %v5133
        %v5268 = vadd.f32 %v4714, %v5138
        %v5269 = vadd.f32 %v4715, %v5143
        %v5270 = vadd.f32 %v4716, %v5148
        %v5271 = vadd.f32 %v4717, %v5153
        %v5272 = vadd.f32 %v4718, %v5158
        %v5273 = vadd.f32 %v4719, %v5163
        %v5274 = vadd.f32 %v4720, %v5168
        %v5275 = vadd.f32 %v4721, %v5173
        %v5276 = vadd.f32 %v4722, %v5178
        %v5277 = vadd.f32 %v4723, %v5183
        %v5278 = vadd.f32 %v4724, %v5188
        %v5279 = vadd.f32 %v4725, %v5193
        %v5280 = vadd.f32 %v4726, %v5198
        %v5281 = vadd.f32 %v4727, %v5203
        %v5282 = vadd.f32 %v4728, %v5208
        %v5283 = vadd.f32 %v4729, %v5213
        %v5284 = vadd.f32 %v4730, %v5218
        %v5285 = vadd.f32 %v4731, %v5223
        %v5286 = vadd.f32 %v4732, %v5228
        %v5287 = vadd.f32 %v4733, %v5233
        %v5288 = vadd.f32 %v4734, %v5238
        %v5290 = vlaneseq
        %v5291 = vshrl.u32 %v5290, 7
        %v5292 = vsub.s32 0, %v5291
        %v5293 = vrot.slane %v398, %v5292
        %v5295 = vadd.f32 %v5241, %v5293
        %v5296 = vadd.f32 %v5242, %v5293
        %v5297 = vadd.f32 %v5243, %v5293
        %v5298 = vadd.f32 %v5244, %v5293
        %v5299 = vadd.f32 %v5245, %v5293
        %v5300 = vadd.f32 %v5246, %v5293
        %v5301 = vadd.f32 %v5247, %v5293
        %v5302 = vadd.f32 %v5248, %v5293
        %v5303 = vadd.f32 %v5249, %v5293
        %v5304 = vadd.f32 %v5250, %v5293
        %v5305 = vadd.f32 %v5251, %v5293
        %v5306 = vadd.f32 %v5252, %v5293
        %v5307 = vadd.f32 %v5253, %v5293
        %v5308 = vadd.f32 %v5254, %v5293
        %v5309 = vadd.f32 %v5255, %v5293
        %v5310 = vadd.f32 %v5256, %v5293
        %v5311 = vadd.f32 %v5257, %v5293
        %v5312 = vadd.f32 %v5258, %v5293
        %v5313 = vadd.f32 %v5259, %v5293
        %v5314 = vadd.f32 %v5260, %v5293
        %v5315 = vadd.f32 %v5261, %v5293
        %v5316 = vadd.f32 %v5262, %v5293
        %v5317 = vadd.f32 %v5263, %v5293
        %v5318 = vadd.f32 %v5264, %v5293
        %v5319 = vadd.f32 %v5265, %v5293
        %v5320 = vadd.f32 %v5266, %v5293
        %v5321 = vadd.f32 %v5267, %v5293
        %v5322 = vadd.f32 %v5268, %v5293
        %v5323 = vadd.f32 %v5269, %v5293
        %v5324 = vadd.f32 %v5270, %v5293
        %v5325 = vadd.f32 %v5271, %v5293
        %v5326 = vadd.f32 %v5272, %v5293
        %v5327 = vadd.f32 %v5273, %v5293
        %v5328 = vadd.f32 %v5274, %v5293
        %v5329 = vadd.f32 %v5275, %v5293
        %v5330 = vadd.f32 %v5276, %v5293
        %v5331 = vadd.f32 %v5277, %v5293
        %v5332 = vadd.f32 %v5278, %v5293
        %v5333 = vadd.f32 %v5279, %v5293
        %v5334 = vadd.f32 %v5280, %v5293
        %v5335 = vadd.f32 %v5281, %v5293
        %v5336 = vadd.f32 %v5282, %v5293
        %v5337 = vadd.f32 %v5283, %v5293
        %v5338 = vadd.f32 %v5284, %v5293
        %v5339 = vadd.f32 %v5285, %v5293
        %v5340 = vadd.f32 %v5286, %v5293
        %v5341 = vadd.f32 %v5287, %v5293
        %v5342 = vadd.f32 %v5288, %v5293
        %v5343 = vmax.f32 %v5295, 0.0
        %v5344 = vmax.f32 %v5296, 0.0
        %v5345 = vmax.f32 %v5297, 0.0
        %v5346 = vmax.f32 %v5298, 0.0
        %v5347 = vmax.f32 %v5299, 0.0
        %v5348 = vmax.f32 %v5300, 0.0
        %v5349 = vmax.f32 %v5301, 0.0
        %v5350 = vmax.f32 %v5302, 0.0
        %v5351 = vmax.f32 %v5303, 0.0
        %v5352 = vmax.f32 %v5304, 0.0
        %v5353 = vmax.f32 %v5305, 0.0
        %v5354 = vmax.f32 %v5306, 0.0
        %v5355 = vmax.f32 %v5307, 0.0
        %v5356 = vmax.f32 %v5308, 0.0
        %v5357 = vmax.f32 %v5309, 0.0
        %v5358 = vmax.f32 %v5310, 0.0
        %v5359 = vmax.f32 %v5311, 0.0
        %v5360 = vmax.f32 %v5312, 0.0
        %v5361 = vmax.f32 %v5313, 0.0
        %v5362 = vmax.f32 %v5314, 0.0
        %v5363 = vmax.f32 %v5315, 0.0
        %v5364 = vmax.f32 %v5316, 0.0
        %v5365 = vmax.f32 %v5317, 0.0
        %v5366 = vmax.f32 %v5318, 0.0
        %v5367 = vmax.f32 %v5319, 0.0
        %v5368 = vmax.f32 %v5320, 0.0
        %v5369 = vmax.f32 %v5321, 0.0
        %v5370 = vmax.f32 %v5322, 0.0
        %v5371 = vmax.f32 %v5323, 0.0
        %v5372 = vmax.f32 %v5324, 0.0
        %v5373 = vmax.f32 %v5325, 0.0
        %v5374 = vmax.f32 %v5326, 0.0
        %v5375 = vmax.f32 %v5327, 0.0
        %v5376 = vmax.f32 %v5328, 0.0
        %v5377 = vmax.f32 %v5329, 0.0
        %v5378 = vmax.f32 %v5330, 0.0
        %v5379 = vmax.f32 %v5331, 0.0
        %v5380 = vmax.f32 %v5332, 0.0
        %v5381 = vmax.f32 %v5333, 0.0
        %v5382 = vmax.f32 %v5334, 0.0
        %v5383 = vmax.f32 %v5335, 0.0
        %v5384 = vmax.f32 %v5336, 0.0
        %v5385 = vmax.f32 %v5337, 0.0
        %v5386 = vmax.f32 %v5338, 0.0
        %v5387 = vmax.f32 %v5339, 0.0
        %v5388 = vmax.f32 %v5340, 0.0
        %v5389 = vmax.f32 %v5341, 0.0
        %v5390 = vmax.f32 %v5342, 0.0
        %v5391 = vmul.f32 %v5343, %v395
        %v5392 = vmul.f32 %v5344, %v396
        %v5393 = vmul.f32 %v5345, %v397
        %v5394 = vmul.f32 %v5346, %v395
        %v5395 = vmul.f32 %v5347, %v396
        %v5396 = vmul.f32 %v5348, %v397
        %v5397 = vmul.f32 %v5349, %v395
        %v5398 = vmul.f32 %v5350, %v396
        %v5399 = vmul.f32 %v5351, %v397
        %v5400 = vmul.f32 %v5352, %v395
        %v5401 = vmul.f32 %v5353, %v396
        %v5402 = vmul.f32 %v5354, %v397
        %v5403 = vmul.f32 %v5355, %v395
        %v5404 = vmul.f32 %v5356, %v396
        %v5405 = vmul.f32 %v5357, %v397
        %v5406 = vmul.f32 %v5358, %v395
        %v5407 = vmul.f32 %v5359, %v396
        %v5408 = vmul.f32 %v5360, %v397
        %v5409 = vmul.f32 %v5361, %v395
        %v5410 = vmul.f32 %v5362, %v396
        %v5411 = vmul.f32 %v5363, %v397
        %v5412 = vmul.f32 %v5364, %v395
        %v5413 = vmul.f32 %v5365, %v396
        %v5414 = vmul.f32 %v5366, %v397
        %v5415 = vmul.f32 %v5367, %v395
        %v5416 = vmul.f32 %v5368, %v396
        %v5417 = vmul.f32 %v5369, %v397
        %v5418 = vmul.f32 %v5370, %v395
        %v5419 = vmul.f32 %v5371, %v396
        %v5420 = vmul.f32 %v5372, %v397
        %v5421 = vmul.f32 %v5373, %v395
        %v5422 = vmul.f32 %v5374, %v396
        %v5423 = vmul.f32 %v5375, %v397
        %v5424 = vmul.f32 %v5376, %v395
        %v5425 = vmul.f32 %v5377, %v396
        %v5426 = vmul.f32 %v5378, %v397
        %v5427 = vmul.f32 %v5379, %v395
        %v5428 = vmul.f32 %v5380, %v396
        %v5429 = vmul.f32 %v5381, %v397
        %v5430 = vmul.f32 %v5382, %v395
        %v5431 = vmul.f32 %v5383, %v396
        %v5432 = vmul.f32 %v5384, %v397
        %v5433 = vmul.f32 %v5385, %v395
        %v5434 = vmul.f32 %v5386, %v396
        %v5435 = vmul.f32 %v5387, %v397
        %v5436 = vmul.f32 %v5388, %v395
        %v5437 = vmul.f32 %v5389, %v396
        %v5438 = vmul.f32 %v5390, %v397
        %5439 = vst.msk [vmem:[#allocation3 + $0x20] sm:$0xff] %vm240, %v5391
        %5440 = vst.msk [vmem:[#allocation3 + $0x28] sm:$0xff] %vm240, %v5392
        %5441 = vst.msk [vmem:[#allocation3 + $0x30] sm:$0xff] %vm240, %v5393
        %5442 = vst.msk [vmem:[#allocation3 + $0x38] sm:$0xff] %vm240, %v5394
        %5443 = vst.msk [vmem:[#allocation3 + $0x40] sm:$0xff] %vm240, %v5395
        %5444 = vst.msk [vmem:[#allocation3 + $0x48] sm:$0xff] %vm240, %v5396
        %5445 = vst.msk [vmem:[#allocation3 + $0x50] sm:$0xff] %vm240, %v5397
        %5446 = vst.msk [vmem:[#allocation3 + $0x58] sm:$0xff] %vm240, %v5398
        %5447 = vst.msk [vmem:[#allocation3 + $0x60] sm:$0xff] %vm240, %v5399
        %5448 = vst.msk [vmem:[#allocation3 + $0x68] sm:$0xff] %vm240, %v5400
        %5449 = vst.msk [vmem:[#allocation3 + $0x70] sm:$0xff] %vm240, %v5401
        %5450 = vst.msk [vmem:[#allocation3 + $0x78] sm:$0xff] %vm240, %v5402
        %5451 = vst.msk [vmem:[#allocation3 + $0x80] sm:$0xff] %vm240, %v5403
        %5452 = vst.msk [vmem:[#allocation3 + $0x88] sm:$0xff] %vm240, %v5404
        %5453 = vst.msk [vmem:[#allocation3 + $0x90] sm:$0xff] %vm240, %v5405
        %5454 = vst.msk [vmem:[#allocation3 + $0x98] sm:$0xff] %vm240, %v5406
        %5455 = vst.msk [vmem:[#allocation3 + $0xa0] sm:$0xff] %vm240, %v5407
        %5456 = vst.msk [vmem:[#allocation3 + $0xa8] sm:$0xff] %vm240, %v5408
        %5457 = vst.msk [vmem:[#allocation3 + $0xb0] sm:$0xff] %vm240, %v5409
        %5458 = vst.msk [vmem:[#allocation3 + $0xb8] sm:$0xff] %vm240, %v5410
        %5459 = vst.msk [vmem:[#allocation3 + $0xc0] sm:$0xff] %vm240, %v5411
        %5460 = vst.msk [vmem:[#allocation3 + $0xc8] sm:$0xff] %vm240, %v5412
        %5461 = vst.msk [vmem:[#allocation3 + $0xd0] sm:$0xff] %vm240, %v5413
        %5462 = vst.msk [vmem:[#allocation3 + $0xd8] sm:$0xff] %vm240, %v5414
        %5463 = vst.msk [vmem:[#allocation3 + $0xe0] sm:$0xff] %vm240, %v5415
        %5464 = vst.msk [vmem:[#allocation3 + $0xe8] sm:$0xff] %vm240, %v5416
        %5465 = vst.msk [vmem:[#allocation3 + $0xf0] sm:$0xff] %vm240, %v5417
        %5466 = vst.msk [vmem:[#allocation3 + $0xf8] sm:$0xff] %vm240, %v5418
        %5467 = vst.msk [vmem:[#allocation3 + $0x100] sm:$0xff] %vm240, %v5419
        %5468 = vst.msk [vmem:[#allocation3 + $0x108] sm:$0xff] %vm240, %v5420
        %5469 = vst.msk [vmem:[#allocation3 + $0x110] sm:$0xff] %vm240, %v5421
        %5470 = vst.msk [vmem:[#allocation3 + $0x118] sm:$0xff] %vm240, %v5422
        %5471 = vst.msk [vmem:[#allocation3 + $0x120] sm:$0xff] %vm240, %v5423
        %5472 = vst.msk [vmem:[#allocation3 + $0x128] sm:$0xff] %vm240, %v5424
        %5473 = vst.msk [vmem:[#allocation3 + $0x130] sm:$0xff] %vm240, %v5425
        %5474 = vst.msk [vmem:[#allocation3 + $0x138] sm:$0xff] %vm240, %v5426
        %5475 = vst.msk [vmem:[#allocation3 + $0x140] sm:$0xff] %vm240, %v5427
        %5476 = vst.msk [vmem:[#allocation3 + $0x148] sm:$0xff] %vm240, %v5428
        %5477 = vst.msk [vmem:[#allocation3 + $0x150] sm:$0xff] %vm240, %v5429
        %5478 = vst.msk [vmem:[#allocation3 + $0x158] sm:$0xff] %vm240, %v5430
        %5479 = vst.msk [vmem:[#allocation3 + $0x160] sm:$0xff] %vm240, %v5431
        %5480 = vst.msk [vmem:[#allocation3 + $0x168] sm:$0xff] %vm240, %v5432
        %5481 = vst.msk [vmem:[#allocation3 + $0x170] sm:$0xff] %vm240, %v5433
        %5482 = vst.msk [vmem:[#allocation3 + $0x178] sm:$0xff] %vm240, %v5434
        %5483 = vst.msk [vmem:[#allocation3 + $0x180] sm:$0xff] %vm240, %v5435
        %5484 = vst.msk [vmem:[#allocation3 + $0x188] sm:$0xff] %vm240, %v5436
        %5485 = vst.msk [vmem:[#allocation3 + $0x190] sm:$0xff] %vm240, %v5437
        %5486 = vst.msk [vmem:[#allocation3 + $0x198] sm:$0xff] %vm240, %v5438
        %v5487 = vld [vmem:[#allocation3 + $0x7] sm:$0xff]
        %v5488 = vld [vmem:[#allocation3 + $0xf] sm:$0xff]
        %v5489 = vld [vmem:[#allocation3 + $0x17] sm:$0xff]
        %v5490 = vld [vmem:[#allocation3 + $0x1f] sm:$0xff]
        %v5491 = vld [vmem:[#allocation3 + $0x27] sm:$0xff]
        %v5492 = vld [vmem:[#allocation3 + $0x2f] sm:$0xff]
        %v5493 = vld [vmem:[#allocation3 + $0x37] sm:$0xff]
        %v5494 = vld [vmem:[#allocation3 + $0x3f] sm:$0xff]
        %v5495 = vld [vmem:[#allocation3 + $0x47] sm:$0xff]
        %v5496 = vld [vmem:[#allocation3 + $0x4f] sm:$0xff]
        %v5497 = vld [vmem:[#allocation3 + $0x57] sm:$0xff]
        %v5498 = vld [vmem:[#allocation3 + $0x5f] sm:$0xff]
        %v5499 = vld [vmem:[#allocation3 + $0x67] sm:$0xff]
        %v5500 = vld [vmem:[#allocation3 + $0x6f] sm:$0xff]
        %v5501 = vld [vmem:[#allocation3 + $0x77] sm:$0xff]
        %v5502 = vld [vmem:[#allocation3 + $0x7f] sm:$0xff]
        %v5503 = vld [vmem:[#allocation3 + $0x87] sm:$0xff]
        %v5504 = vld [vmem:[#allocation3 + $0x8f] sm:$0xff]
        %v5505 = vld [vmem:[#allocation3 + $0x97] sm:$0xff]
        %v5506 = vld [vmem:[#allocation3 + $0x9f] sm:$0xff]
        %v5507 = vld [vmem:[#allocation3 + $0xa7] sm:$0xff]
        %v5508 = vld [vmem:[#allocation3 + $0xaf] sm:$0xff]
        %v5509 = vld [vmem:[#allocation3 + $0xb7] sm:$0xff]
        %v5510 = vld [vmem:[#allocation3 + $0xbf] sm:$0xff]
        %v5511 = vld [vmem:[#allocation3 + $0xc7] sm:$0xff]
        %v5512 = vld [vmem:[#allocation3 + $0xcf] sm:$0xff]
        %v5513 = vld [vmem:[#allocation3 + $0xd7] sm:$0xff]
        %v5514 = vld [vmem:[#allocation3 + $0xdf] sm:$0xff]
        %v5515 = vld [vmem:[#allocation3 + $0xe7] sm:$0xff]
        %v5516 = vld [vmem:[#allocation3 + $0xef] sm:$0xff]
        %v5517 = vld [vmem:[#allocation3 + $0xf7] sm:$0xff]
        %v5518 = vld [vmem:[#allocation3 + $0xff] sm:$0xff]
        %v5519 = vld [vmem:[#allocation3 + $0x107] sm:$0xff]
        %v5520 = vld [vmem:[#allocation3 + $0x10f] sm:$0xff]
        %v5521 = vld [vmem:[#allocation3 + $0x117] sm:$0xff]
        %v5522 = vld [vmem:[#allocation3 + $0x11f] sm:$0xff]
        %v5523 = vld [vmem:[#allocation3 + $0x127] sm:$0xff]
        %v5524 = vld [vmem:[#allocation3 + $0x12f] sm:$0xff]
        %v5525 = vld [vmem:[#allocation3 + $0x137] sm:$0xff]
        %v5526 = vld [vmem:[#allocation3 + $0x13f] sm:$0xff]
        %v5527 = vld [vmem:[#allocation3 + $0x147] sm:$0xff]
        %v5528 = vld [vmem:[#allocation3 + $0x14f] sm:$0xff]
        %v5529 = vld [vmem:[#allocation3 + $0x157] sm:$0xff]
        %v5530 = vld [vmem:[#allocation3 + $0x15f] sm:$0xff]
        %v5531 = vld [vmem:[#allocation3 + $0x167] sm:$0xff]
        %v5532 = vld [vmem:[#allocation3 + $0x16f] sm:$0xff]
        %v5533 = vld [vmem:[#allocation3 + $0x177] sm:$0xff]
        %v5534 = vld [vmem:[#allocation3 + $0x17f] sm:$0xff]
        %v5535 = vld [vmem:[#allocation4] sm:$0xff]
        %v5536 = vld [vmem:[#allocation4 + $0x8] sm:$0xff]
        %v5537 = vld [vmem:[#allocation4 + $0x10] sm:$0xff]
        %v5538 = vld [vmem:[#allocation4 + $0x18] sm:$0xff]
        %v5539 = vld [vmem:[#allocation4 + $0x20] sm:$0xff]
        %v5540 = vld [vmem:[#allocation4 + $0x28] sm:$0xff]
        %v5541 = vld [vmem:[#allocation4 + $0x30] sm:$0xff]
        %v5542 = vld [vmem:[#allocation4 + $0x38] sm:$0xff]
        %v5543 = vld [vmem:[#allocation3 + $0x8] sm:$0xff]
        %v5544 = vld [vmem:[#allocation3 + $0x10] sm:$0xff]
        %v5545 = vld [vmem:[#allocation3 + $0x18] sm:$0xff]
        %v5546 = vld [vmem:[#allocation3 + $0x20] sm:$0xff]
        %v5547 = vld [vmem:[#allocation3 + $0x28] sm:$0xff]
        %v5548 = vld [vmem:[#allocation3 + $0x30] sm:$0xff]
        %v5549 = vld [vmem:[#allocation3 + $0x38] sm:$0xff]
        %v5550 = vld [vmem:[#allocation3 + $0x40] sm:$0xff]
        %v5551 = vld [vmem:[#allocation3 + $0x48] sm:$0xff]
        %v5552 = vld [vmem:[#allocation3 + $0x50] sm:$0xff]
        %v5553 = vld [vmem:[#allocation3 + $0x58] sm:$0xff]
        %v5554 = vld [vmem:[#allocation3 + $0x60] sm:$0xff]
        %v5555 = vld [vmem:[#allocation3 + $0x68] sm:$0xff]
        %v5556 = vld [vmem:[#allocation3 + $0x70] sm:$0xff]
        %v5557 = vld [vmem:[#allocation3 + $0x78] sm:$0xff]
        %v5558 = vld [vmem:[#allocation3 + $0x80] sm:$0xff]
        %v5559 = vld [vmem:[#allocation3 + $0x88] sm:$0xff]
        %v5560 = vld [vmem:[#allocation3 + $0x90] sm:$0xff]
        %v5561 = vld [vmem:[#allocation3 + $0x98] sm:$0xff]
        %v5562 = vld [vmem:[#allocation3 + $0xa0] sm:$0xff]
        %v5563 = vld [vmem:[#allocation3 + $0xa8] sm:$0xff]
        %v5564 = vld [vmem:[#allocation3 + $0xb0] sm:$0xff]
        %v5565 = vld [vmem:[#allocation3 + $0xb8] sm:$0xff]
        %v5566 = vld [vmem:[#allocation3 + $0xc0] sm:$0xff]
        %v5567 = vld [vmem:[#allocation3 + $0xc8] sm:$0xff]
        %v5568 = vld [vmem:[#allocation3 + $0xd0] sm:$0xff]
        %v5569 = vld [vmem:[#allocation3 + $0xd8] sm:$0xff]
        %v5570 = vld [vmem:[#allocation3 + $0xe0] sm:$0xff]
        %v5571 = vld [vmem:[#allocation3 + $0xe8] sm:$0xff]
        %v5572 = vld [vmem:[#allocation3 + $0xf0] sm:$0xff]
        %v5573 = vld [vmem:[#allocation3 + $0xf8] sm:$0xff]
        %v5574 = vld [vmem:[#allocation3 + $0x100] sm:$0xff]
        %v5575 = vld [vmem:[#allocation3 + $0x108] sm:$0xff]
        %v5576 = vld [vmem:[#allocation3 + $0x110] sm:$0xff]
        %v5577 = vld [vmem:[#allocation3 + $0x118] sm:$0xff]
        %v5578 = vld [vmem:[#allocation3 + $0x120] sm:$0xff]
        %v5579 = vld [vmem:[#allocation3 + $0x128] sm:$0xff]
        %v5580 = vld [vmem:[#allocation3 + $0x130] sm:$0xff]
        %v5581 = vld [vmem:[#allocation3 + $0x138] sm:$0xff]
        %v5582 = vld [vmem:[#allocation3 + $0x140] sm:$0xff]
        %v5583 = vld [vmem:[#allocation3 + $0x148] sm:$0xff]
        %v5584 = vld [vmem:[#allocation3 + $0x150] sm:$0xff]
        %v5585 = vld [vmem:[#allocation3 + $0x158] sm:$0xff]
        %v5586 = vld [vmem:[#allocation3 + $0x160] sm:$0xff]
        %v5587 = vld [vmem:[#allocation3 + $0x168] sm:$0xff]
        %v5588 = vld [vmem:[#allocation3 + $0x170] sm:$0xff]
        %v5589 = vld [vmem:[#allocation3 + $0x178] sm:$0xff]
        %v5590 = vld [vmem:[#allocation3 + $0x180] sm:$0xff]
        %s5591 = scalar_lea.vmem [#allocation4], 64
        %v5592 = vld [vmem:[%s5591] sm:$0xff]
        %v5593 = vld [vmem:[%s5591 + $0x8] sm:$0xff]
        %v5594 = vld [vmem:[%s5591 + $0x10] sm:$0xff]
        %v5595 = vld [vmem:[%s5591 + $0x18] sm:$0xff]
        %v5596 = vld [vmem:[%s5591 + $0x20] sm:$0xff]
        %v5597 = vld [vmem:[%s5591 + $0x28] sm:$0xff]
        %v5598 = vld [vmem:[%s5591 + $0x30] sm:$0xff]
        %v5599 = vld [vmem:[%s5591 + $0x38] sm:$0xff]
        %v5601 = vsel %vm240, %v5543, 0
        %v5604 = vsel %vm240, %v5544, 0
        %v5607 = vsel %vm240, %v5545, 0
        %v5610 = vsel %vm240, %v5546, 0
        %v5613 = vsel %vm240, %v5547, 0
        %v5616 = vsel %vm240, %v5548, 0
        %v5619 = vsel %vm240, %v5549, 0
        %v5622 = vsel %vm240, %v5550, 0
        %v5625 = vsel %vm240, %v5551, 0
        %v5628 = vsel %vm240, %v5552, 0
        %v5631 = vsel %vm240, %v5553, 0
        %v5634 = vsel %vm240, %v5554, 0
        %v5637 = vsel %vm240, %v5555, 0
        %v5640 = vsel %vm240, %v5556, 0
        %v5643 = vsel %vm240, %v5557, 0
        %v5646 = vsel %vm240, %v5558, 0
        %v5649 = vsel %vm240, %v5559, 0
        %v5652 = vsel %vm240, %v5560, 0
        %v5655 = vsel %vm240, %v5561, 0
        %v5658 = vsel %vm240, %v5562, 0
        %v5661 = vsel %vm240, %v5563, 0
        %v5664 = vsel %vm240, %v5564, 0
        %v5667 = vsel %vm240, %v5565, 0
        %v5670 = vsel %vm240, %v5566, 0
        %v5673 = vsel %vm240, %v5567, 0
        %v5676 = vsel %vm240, %v5568, 0
        %v5679 = vsel %vm240, %v5569, 0
        %v5682 = vsel %vm240, %v5570, 0
        %v5685 = vsel %vm240, %v5571, 0
        %v5688 = vsel %vm240, %v5572, 0
        %v5691 = vsel %vm240, %v5573, 0
        %v5694 = vsel %vm240, %v5574, 0
        %v5697 = vsel %vm240, %v5575, 0
        %v5700 = vsel %vm240, %v5576, 0
        %v5703 = vsel %vm240, %v5577, 0
        %v5706 = vsel %vm240, %v5578, 0
        %v5709 = vsel %vm240, %v5579, 0
        %v5712 = vsel %vm240, %v5580, 0
        %v5715 = vsel %vm240, %v5581, 0
        %v5718 = vsel %vm240, %v5582, 0
        %v5721 = vsel %vm240, %v5583, 0
        %v5724 = vsel %vm240, %v5584, 0
        %v5727 = vsel %vm240, %v5585, 0
        %v5730 = vsel %vm240, %v5586, 0
        %v5733 = vsel %vm240, %v5587, 0
        %v5736 = vsel %vm240, %v5588, 0
        %v5739 = vsel %vm240, %v5589, 0
        %v5742 = vsel %vm240, %v5590, 0
        %5744 = vmatprep.subr.mxu0 0.0
        %5745 = vmatpush1.msra.mxu0 0.0
        %5746 = vmatprep.subr.mxu0 0.0
        %5747 = vmatpush1.msra.mxu0 0.0
        %5748 = vmatprep.subr.mxu0 0.0
        %5749 = vmatpush1.msra.mxu0 0.0
        %5750 = vmatprep.subr.mxu0 0.0
        %5751 = vmatpush1.msra.mxu0 0.0
        %5752 = vmatprep.subr.mxu0 0.0
        %5753 = vmatpush1.msra.mxu0 0.0
        %5754 = vmatprep.subr.mxu0 0.0
        %5755 = vmatpush1.msra.mxu0 0.0
        %5756 = vmatprep.subr.mxu0 0.0
        %5757 = vmatpush1.msra.mxu0 0.0
        %5758 = vmatprep.subr.mxu0 0.0
        %5759 = vmatpush1.msra.mxu0 0.0
        %5760 = vmatprep.subr.mxu0 0.0
        %5761 = vmatpush1.msra.mxu0 %v5599
        %5762 = vmatprep.subr.mxu0 0.0
        %5763 = vmatpush1.msra.mxu0 %v5598
        %5764 = vmatprep.subr.mxu0 0.0
        %5765 = vmatpush1.msra.mxu0 %v5597
        %5766 = vmatprep.subr.mxu0 0.0
        %5767 = vmatpush1.msra.mxu0 %v5596
        %5768 = vmatprep.subr.mxu0 0.0
        %5769 = vmatpush1.msra.mxu0 %v5595
        %5770 = vmatprep.subr.mxu0 0.0
        %5771 = vmatpush1.msra.mxu0 %v5594
        %5772 = vmatprep.subr.mxu0 0.0
        %5773 = vmatpush1.msra.mxu0 %v5593
        %5774 = vmatprep.subr.mxu0 0.0
        %5775 = vmatpush1.msra.mxu0 %v5592
        %5776 = vmatprep.subr.mxu0 0.0
        %5777 = vmatpush2.msra.mxu0 0.0
        %5778 = vmatprep.subr.mxu0 0.0
        %5779 = vmatpush2.msra.mxu0 0.0
        %5780 = vmatprep.subr.mxu0 0.0
        %5781 = vmatpush2.msra.mxu0 0.0
        %5782 = vmatprep.subr.mxu0 0.0
        %5783 = vmatpush2.msra.mxu0 0.0
        %5784 = vmatprep.subr.mxu0 0.0
        %5785 = vmatpush2.msra.mxu0 0.0
        %5786 = vmatprep.subr.mxu0 0.0
        %5787 = vmatpush2.msra.mxu0 0.0
        %5788 = vmatprep.subr.mxu0 0.0
        %5789 = vmatpush2.msra.mxu0 0.0
        %5790 = vmatprep.subr.mxu0 0.0
        %5791 = vmatpush2.msra.mxu0 0.0
        %5792 = vmatprep.subr.mxu0 0.0
        %5793 = vmatpush2.msra.mxu0 0.0
        %5794 = vmatprep.subr.mxu0 0.0
        %5795 = vmatpush2.msra.mxu0 0.0
        %5796 = vmatprep.subr.mxu0 0.0
        %5797 = vmatpush2.msra.mxu0 0.0
        %5798 = vmatprep.subr.mxu0 0.0
        %5799 = vmatpush2.msra.mxu0 0.0
        %5800 = vmatprep.subr.mxu0 0.0
        %5801 = vmatpush2.msra.mxu0 0.0
        %5802 = vmatprep.subr.mxu0 0.0
        %5803 = vmatpush2.msra.mxu0 0.0
        %5804 = vmatprep.subr.mxu0 0.0
        %5805 = vmatpush2.msra.mxu0 0.0
        %5806 = vmatprep.subr.mxu0 0.0
        %5807 = vmatpush2.msra.mxu0 0.0
        %5808 = vmatprep.mubr.f32.mxu0 0.0
        %5809 = vmatmul.mubr.f32.gmra.mxu0 %v5601
        %v5810 = vpop.f32.mrf.mxu0
        %v5811 = vadd.f32 0.0, %v5810
        %v5812 = vpop.f32.mrf.mxu0
        %5813 = vmatprep.mubr.f32.mxu0 0.0
        %5814 = vmatmul.mubr.f32.gmra.mxu0 %v5604
        %v5815 = vpop.f32.mrf.mxu0
        %v5816 = vadd.f32 0.0, %v5815
        %v5817 = vpop.f32.mrf.mxu0
        %5818 = vmatprep.mubr.f32.mxu0 0.0
        %5819 = vmatmul.mubr.f32.gmra.mxu0 %v5607
        %v5820 = vpop.f32.mrf.mxu0
        %v5821 = vpop.f32.mrf.mxu0
        %5822 = vmatprep.mubr.f32.mxu0 0.0
        %5823 = vmatmul.mubr.f32.gmra.mxu0 %v5610
        %v5824 = vpop.f32.mrf.mxu0
        %v5825 = vadd.f32 0.0, %v5824
        %v5826 = vpop.f32.mrf.mxu0
        %5827 = vmatprep.mubr.f32.mxu0 0.0
        %5828 = vmatmul.mubr.f32.gmra.mxu0 %v5613
        %v5829 = vpop.f32.mrf.mxu0
        %v5830 = vadd.f32 0.0, %v5829
        %v5831 = vpop.f32.mrf.mxu0
        %5832 = vmatprep.mubr.f32.mxu0 0.0
        %5833 = vmatmul.mubr.f32.gmra.mxu0 %v5616
        %v5834 = vpop.f32.mrf.mxu0
        %v5835 = vpop.f32.mrf.mxu0
        %5836 = vmatprep.mubr.f32.mxu0 0.0
        %5837 = vmatmul.mubr.f32.gmra.mxu0 %v5619
        %v5838 = vpop.f32.mrf.mxu0
        %v5839 = vadd.f32 0.0, %v5838
        %v5840 = vpop.f32.mrf.mxu0
        %5841 = vmatprep.mubr.f32.mxu0 0.0
        %5842 = vmatmul.mubr.f32.gmra.mxu0 %v5622
        %v5843 = vpop.f32.mrf.mxu0
        %v5844 = vadd.f32 0.0, %v5843
        %v5845 = vpop.f32.mrf.mxu0
        %5846 = vmatprep.mubr.f32.mxu0 0.0
        %5847 = vmatmul.mubr.f32.gmra.mxu0 %v5625
        %v5848 = vpop.f32.mrf.mxu0
        %v5849 = vpop.f32.mrf.mxu0
        %5850 = vmatprep.mubr.f32.mxu0 0.0
        %5851 = vmatmul.mubr.f32.gmra.mxu0 %v5628
        %v5852 = vpop.f32.mrf.mxu0
        %v5853 = vadd.f32 0.0, %v5852
        %v5854 = vpop.f32.mrf.mxu0
        %5855 = vmatprep.mubr.f32.mxu0 0.0
        %5856 = vmatmul.mubr.f32.gmra.mxu0 %v5631
        %v5857 = vpop.f32.mrf.mxu0
        %v5858 = vadd.f32 0.0, %v5857
        %v5859 = vpop.f32.mrf.mxu0
        %5860 = vmatprep.mubr.f32.mxu0 0.0
        %5861 = vmatmul.mubr.f32.gmra.mxu0 %v5634
        %v5862 = vpop.f32.mrf.mxu0
        %v5863 = vpop.f32.mrf.mxu0
        %5864 = vmatprep.mubr.f32.mxu0 0.0
        %5865 = vmatmul.mubr.f32.gmra.mxu0 %v5637
        %v5866 = vpop.f32.mrf.mxu0
        %v5867 = vadd.f32 0.0, %v5866
        %v5868 = vpop.f32.mrf.mxu0
        %5869 = vmatprep.mubr.f32.mxu0 0.0
        %5870 = vmatmul.mubr.f32.gmra.mxu0 %v5640
        %v5871 = vpop.f32.mrf.mxu0
        %v5872 = vadd.f32 0.0, %v5871
        %v5873 = vpop.f32.mrf.mxu0
        %5874 = vmatprep.mubr.f32.mxu0 0.0
        %5875 = vmatmul.mubr.f32.gmra.mxu0 %v5643
        %v5876 = vpop.f32.mrf.mxu0
        %v5877 = vpop.f32.mrf.mxu0
        %5878 = vmatprep.mubr.f32.mxu0 0.0
        %5879 = vmatmul.mubr.f32.gmra.mxu0 %v5646
        %v5880 = vpop.f32.mrf.mxu0
        %v5881 = vadd.f32 0.0, %v5880
        %v5882 = vpop.f32.mrf.mxu0
        %5883 = vmatprep.mubr.f32.mxu0 0.0
        %5884 = vmatmul.mubr.f32.gmra.mxu0 %v5649
        %v5885 = vpop.f32.mrf.mxu0
        %v5886 = vadd.f32 0.0, %v5885
        %v5887 = vpop.f32.mrf.mxu0
        %5888 = vmatprep.mubr.f32.mxu0 0.0
        %5889 = vmatmul.mubr.f32.gmra.mxu0 %v5652
        %v5890 = vpop.f32.mrf.mxu0
        %v5891 = vpop.f32.mrf.mxu0
        %5892 = vmatprep.mubr.f32.mxu0 0.0
        %5893 = vmatmul.mubr.f32.gmra.mxu0 %v5655
        %v5894 = vpop.f32.mrf.mxu0
        %v5895 = vadd.f32 0.0, %v5894
        %v5896 = vpop.f32.mrf.mxu0
        %5897 = vmatprep.mubr.f32.mxu0 0.0
        %5898 = vmatmul.mubr.f32.gmra.mxu0 %v5658
        %v5899 = vpop.f32.mrf.mxu0
        %v5900 = vadd.f32 0.0, %v5899
        %v5901 = vpop.f32.mrf.mxu0
        %5902 = vmatprep.mubr.f32.mxu0 0.0
        %5903 = vmatmul.mubr.f32.gmra.mxu0 %v5661
        %v5904 = vpop.f32.mrf.mxu0
        %v5905 = vpop.f32.mrf.mxu0
        %5906 = vmatprep.mubr.f32.mxu0 0.0
        %5907 = vmatmul.mubr.f32.gmra.mxu0 %v5664
        %v5908 = vpop.f32.mrf.mxu0
        %v5909 = vadd.f32 0.0, %v5908
        %v5910 = vpop.f32.mrf.mxu0
        %5911 = vmatprep.mubr.f32.mxu0 0.0
        %5912 = vmatmul.mubr.f32.gmra.mxu0 %v5667
        %v5913 = vpop.f32.mrf.mxu0
        %v5914 = vadd.f32 0.0, %v5913
        %v5915 = vpop.f32.mrf.mxu0
        %5916 = vmatprep.mubr.f32.mxu0 0.0
        %5917 = vmatmul.mubr.f32.gmra.mxu0 %v5670
        %v5918 = vpop.f32.mrf.mxu0
        %v5919 = vpop.f32.mrf.mxu0
        %5920 = vmatprep.mubr.f32.mxu0 0.0
        %5921 = vmatmul.mubr.f32.gmra.mxu0 %v5673
        %v5922 = vpop.f32.mrf.mxu0
        %v5923 = vadd.f32 0.0, %v5922
        %v5924 = vpop.f32.mrf.mxu0
        %5925 = vmatprep.mubr.f32.mxu0 0.0
        %5926 = vmatmul.mubr.f32.gmra.mxu0 %v5676
        %v5927 = vpop.f32.mrf.mxu0
        %v5928 = vadd.f32 0.0, %v5927
        %v5929 = vpop.f32.mrf.mxu0
        %5930 = vmatprep.mubr.f32.mxu0 0.0
        %5931 = vmatmul.mubr.f32.gmra.mxu0 %v5679
        %v5932 = vpop.f32.mrf.mxu0
        %v5933 = vpop.f32.mrf.mxu0
        %5934 = vmatprep.mubr.f32.mxu0 0.0
        %5935 = vmatmul.mubr.f32.gmra.mxu0 %v5682
        %v5936 = vpop.f32.mrf.mxu0
        %v5937 = vadd.f32 0.0, %v5936
        %v5938 = vpop.f32.mrf.mxu0
        %5939 = vmatprep.mubr.f32.mxu0 0.0
        %5940 = vmatmul.mubr.f32.gmra.mxu0 %v5685
        %v5941 = vpop.f32.mrf.mxu0
        %v5942 = vadd.f32 0.0, %v5941
        %v5943 = vpop.f32.mrf.mxu0
        %5944 = vmatprep.mubr.f32.mxu0 0.0
        %5945 = vmatmul.mubr.f32.gmra.mxu0 %v5688
        %v5946 = vpop.f32.mrf.mxu0
        %v5947 = vpop.f32.mrf.mxu0
        %5948 = vmatprep.mubr.f32.mxu0 0.0
        %5949 = vmatmul.mubr.f32.gmra.mxu0 %v5691
        %v5950 = vpop.f32.mrf.mxu0
        %v5951 = vadd.f32 0.0, %v5950
        %v5952 = vpop.f32.mrf.mxu0
        %5953 = vmatprep.mubr.f32.mxu0 0.0
        %5954 = vmatmul.mubr.f32.gmra.mxu0 %v5694
        %v5955 = vpop.f32.mrf.mxu0
        %v5956 = vadd.f32 0.0, %v5955
        %v5957 = vpop.f32.mrf.mxu0
        %5958 = vmatprep.mubr.f32.mxu0 0.0
        %5959 = vmatmul.mubr.f32.gmra.mxu0 %v5697
        %v5960 = vpop.f32.mrf.mxu0
        %v5961 = vpop.f32.mrf.mxu0
        %5962 = vmatprep.mubr.f32.mxu0 0.0
        %5963 = vmatmul.mubr.f32.gmra.mxu0 %v5700
        %v5964 = vpop.f32.mrf.mxu0
        %v5965 = vadd.f32 0.0, %v5964
        %v5966 = vpop.f32.mrf.mxu0
        %5967 = vmatprep.mubr.f32.mxu0 0.0
        %5968 = vmatmul.mubr.f32.gmra.mxu0 %v5703
        %v5969 = vpop.f32.mrf.mxu0
        %v5970 = vadd.f32 0.0, %v5969
        %v5971 = vpop.f32.mrf.mxu0
        %5972 = vmatprep.mubr.f32.mxu0 0.0
        %5973 = vmatmul.mubr.f32.gmra.mxu0 %v5706
        %v5974 = vpop.f32.mrf.mxu0
        %v5975 = vpop.f32.mrf.mxu0
        %5976 = vmatprep.mubr.f32.mxu0 0.0
        %5977 = vmatmul.mubr.f32.gmra.mxu0 %v5709
        %v5978 = vpop.f32.mrf.mxu0
        %v5979 = vadd.f32 0.0, %v5978
        %v5980 = vpop.f32.mrf.mxu0
        %5981 = vmatprep.mubr.f32.mxu0 0.0
        %5982 = vmatmul.mubr.f32.gmra.mxu0 %v5712
        %v5983 = vpop.f32.mrf.mxu0
        %v5984 = vadd.f32 0.0, %v5983
        %v5985 = vpop.f32.mrf.mxu0
        %5986 = vmatprep.mubr.f32.mxu0 0.0
        %5987 = vmatmul.mubr.f32.gmra.mxu0 %v5715
        %v5988 = vpop.f32.mrf.mxu0
        %v5989 = vpop.f32.mrf.mxu0
        %5990 = vmatprep.mubr.f32.mxu0 0.0
        %5991 = vmatmul.mubr.f32.gmra.mxu0 %v5718
        %v5992 = vpop.f32.mrf.mxu0
        %v5993 = vadd.f32 0.0, %v5992
        %v5994 = vpop.f32.mrf.mxu0
        %5995 = vmatprep.mubr.f32.mxu0 0.0
        %5996 = vmatmul.mubr.f32.gmra.mxu0 %v5721
        %v5997 = vpop.f32.mrf.mxu0
        %v5998 = vadd.f32 0.0, %v5997
        %v5999 = vpop.f32.mrf.mxu0
        %6000 = vmatprep.mubr.f32.mxu0 0.0
        %6001 = vmatmul.mubr.f32.gmra.mxu0 %v5724
        %v6002 = vpop.f32.mrf.mxu0
        %v6003 = vpop.f32.mrf.mxu0
        %6004 = vmatprep.mubr.f32.mxu0 0.0
        %6005 = vmatmul.mubr.f32.gmra.mxu0 %v5727
        %v6006 = vpop.f32.mrf.mxu0
        %v6007 = vadd.f32 0.0, %v6006
        %v6008 = vpop.f32.mrf.mxu0
        %6009 = vmatprep.mubr.f32.mxu0 0.0
        %6010 = vmatmul.mubr.f32.gmra.mxu0 %v5730
        %v6011 = vpop.f32.mrf.mxu0
        %v6012 = vadd.f32 0.0, %v6011
        %v6013 = vpop.f32.mrf.mxu0
        %6014 = vmatprep.mubr.f32.mxu0 0.0
        %6015 = vmatmul.mubr.f32.gmra.mxu0 %v5733
        %v6016 = vpop.f32.mrf.mxu0
        %v6017 = vpop.f32.mrf.mxu0
        %6018 = vmatprep.mubr.f32.mxu0 0.0
        %6019 = vmatmul.mubr.f32.gmra.mxu0 %v5736
        %v6020 = vpop.f32.mrf.mxu0
        %v6021 = vadd.f32 0.0, %v6020
        %v6022 = vpop.f32.mrf.mxu0
        %6023 = vmatprep.mubr.f32.mxu0 0.0
        %6024 = vmatmul.mubr.f32.gmra.mxu0 %v5739
        %v6025 = vpop.f32.mrf.mxu0
        %v6026 = vadd.f32 0.0, %v6025
        %v6027 = vpop.f32.mrf.mxu0
        %6028 = vmatprep.mubr.f32.mxu0 0.0
        %6029 = vmatmul.mubr.f32.gmra.mxu0 %v5742
        %v6030 = vpop.f32.mrf.mxu0
        %v6031 = vpop.f32.mrf.mxu0
        %6032 = vdwg.mxu0
        %v6034 = vsel %vm240, %v5487, 0
        %v6037 = vsel %vm240, %v5488, 0
        %v6040 = vsel %vm240, %v5489, 0
        %v6043 = vsel %vm240, %v5490, 0
        %v6046 = vsel %vm240, %v5491, 0
        %v6049 = vsel %vm240, %v5492, 0
        %v6052 = vsel %vm240, %v5493, 0
        %v6055 = vsel %vm240, %v5494, 0
        %v6058 = vsel %vm240, %v5495, 0
        %v6061 = vsel %vm240, %v5496, 0
        %v6064 = vsel %vm240, %v5497, 0
        %v6067 = vsel %vm240, %v5498, 0
        %v6070 = vsel %vm240, %v5499, 0
        %v6073 = vsel %vm240, %v5500, 0
        %v6076 = vsel %vm240, %v5501, 0
        %v6079 = vsel %vm240, %v5502, 0
        %v6082 = vsel %vm240, %v5503, 0
        %v6085 = vsel %vm240, %v5504, 0
        %v6088 = vsel %vm240, %v5505, 0
        %v6091 = vsel %vm240, %v5506, 0
        %v6094 = vsel %vm240, %v5507, 0
        %v6097 = vsel %vm240, %v5508, 0
        %v6100 = vsel %vm240, %v5509, 0
        %v6103 = vsel %vm240, %v5510, 0
        %v6106 = vsel %vm240, %v5511, 0
        %v6109 = vsel %vm240, %v5512, 0
        %v6112 = vsel %vm240, %v5513, 0
        %v6115 = vsel %vm240, %v5514, 0
        %v6118 = vsel %vm240, %v5515, 0
        %v6121 = vsel %vm240, %v5516, 0
        %v6124 = vsel %vm240, %v5517, 0
        %v6127 = vsel %vm240, %v5518, 0
        %v6130 = vsel %vm240, %v5519, 0
        %v6133 = vsel %vm240, %v5520, 0
        %v6136 = vsel %vm240, %v5521, 0
        %v6139 = vsel %vm240, %v5522, 0
        %v6142 = vsel %vm240, %v5523, 0
        %v6145 = vsel %vm240, %v5524, 0
        %v6148 = vsel %vm240, %v5525, 0
        %v6151 = vsel %vm240, %v5526, 0
        %v6154 = vsel %vm240, %v5527, 0
        %v6157 = vsel %vm240, %v5528, 0
        %v6160 = vsel %vm240, %v5529, 0
        %v6163 = vsel %vm240, %v5530, 0
        %v6166 = vsel %vm240, %v5531, 0
        %v6169 = vsel %vm240, %v5532, 0
        %v6172 = vsel %vm240, %v5533, 0
        %v6175 = vsel %vm240, %v5534, 0
        %6177 = vmatprep.subr.mxu0 0.0
        %6178 = vmatpush1.msra.mxu0 0.0
        %6179 = vmatprep.subr.mxu0 0.0
        %6180 = vmatpush1.msra.mxu0 0.0
        %6181 = vmatprep.subr.mxu0 0.0
        %6182 = vmatpush1.msra.mxu0 0.0
        %6183 = vmatprep.subr.mxu0 0.0
        %6184 = vmatpush1.msra.mxu0 0.0
        %6185 = vmatprep.subr.mxu0 0.0
        %6186 = vmatpush1.msra.mxu0 0.0
        %6187 = vmatprep.subr.mxu0 0.0
        %6188 = vmatpush1.msra.mxu0 0.0
        %6189 = vmatprep.subr.mxu0 0.0
        %6190 = vmatpush1.msra.mxu0 0.0
        %6191 = vmatprep.subr.mxu0 0.0
        %6192 = vmatpush1.msra.mxu0 0.0
        %6193 = vmatprep.subr.mxu0 0.0
        %6194 = vmatpush1.msra.mxu0 %v5542
        %6195 = vmatprep.subr.mxu0 0.0
        %6196 = vmatpush1.msra.mxu0 %v5541
        %6197 = vmatprep.subr.mxu0 0.0
        %6198 = vmatpush1.msra.mxu0 %v5540
        %6199 = vmatprep.subr.mxu0 0.0
        %6200 = vmatpush1.msra.mxu0 %v5539
        %6201 = vmatprep.subr.mxu0 0.0
        %6202 = vmatpush1.msra.mxu0 %v5538
        %6203 = vmatprep.subr.mxu0 0.0
        %6204 = vmatpush1.msra.mxu0 %v5537
        %6205 = vmatprep.subr.mxu0 0.0
        %6206 = vmatpush1.msra.mxu0 %v5536
        %6207 = vmatprep.subr.mxu0 0.0
        %6208 = vmatpush1.msra.mxu0 %v5535
        %6209 = vmatprep.subr.mxu0 0.0
        %6210 = vmatpush2.msra.mxu0 0.0
        %6211 = vmatprep.subr.mxu0 0.0
        %6212 = vmatpush2.msra.mxu0 0.0
        %6213 = vmatprep.subr.mxu0 0.0
        %6214 = vmatpush2.msra.mxu0 0.0
        %6215 = vmatprep.subr.mxu0 0.0
        %6216 = vmatpush2.msra.mxu0 0.0
        %6217 = vmatprep.subr.mxu0 0.0
        %6218 = vmatpush2.msra.mxu0 0.0
        %6219 = vmatprep.subr.mxu0 0.0
        %6220 = vmatpush2.msra.mxu0 0.0
        %6221 = vmatprep.subr.mxu0 0.0
        %6222 = vmatpush2.msra.mxu0 0.0
        %6223 = vmatprep.subr.mxu0 0.0
        %6224 = vmatpush2.msra.mxu0 0.0
        %6225 = vmatprep.subr.mxu0 0.0
        %6226 = vmatpush2.msra.mxu0 0.0
        %6227 = vmatprep.subr.mxu0 0.0
        %6228 = vmatpush2.msra.mxu0 0.0
        %6229 = vmatprep.subr.mxu0 0.0
        %6230 = vmatpush2.msra.mxu0 0.0
        %6231 = vmatprep.subr.mxu0 0.0
        %6232 = vmatpush2.msra.mxu0 0.0
        %6233 = vmatprep.subr.mxu0 0.0
        %6234 = vmatpush2.msra.mxu0 0.0
        %6235 = vmatprep.subr.mxu0 0.0
        %6236 = vmatpush2.msra.mxu0 0.0
        %6237 = vmatprep.subr.mxu0 0.0
        %6238 = vmatpush2.msra.mxu0 0.0
        %6239 = vmatprep.subr.mxu0 0.0
        %6240 = vmatpush2.msra.mxu0 0.0
        %6241 = vmatprep.mubr.f32.mxu0 0.0
        %6242 = vmatmul.mubr.f32.gmra.mxu0 %v6034
        %v6243 = vpop.f32.mrf.mxu0
        %v6244 = vadd.f32 %v5811, %v6243
        %v6245 = vpop.f32.mrf.mxu0
        %6246 = vmatprep.mubr.f32.mxu0 0.0
        %6247 = vmatmul.mubr.f32.gmra.mxu0 %v6037
        %v6248 = vpop.f32.mrf.mxu0
        %v6249 = vadd.f32 %v5816, %v6248
        %v6250 = vpop.f32.mrf.mxu0
        %6251 = vmatprep.mubr.f32.mxu0 0.0
        %6252 = vmatmul.mubr.f32.gmra.mxu0 %v6040
        %v6253 = vpop.f32.mrf.mxu0
        %v6254 = vpop.f32.mrf.mxu0
        %6255 = vmatprep.mubr.f32.mxu0 0.0
        %6256 = vmatmul.mubr.f32.gmra.mxu0 %v6043
        %v6257 = vpop.f32.mrf.mxu0
        %v6258 = vadd.f32 %v5825, %v6257
        %v6259 = vpop.f32.mrf.mxu0
        %6260 = vmatprep.mubr.f32.mxu0 0.0
        %6261 = vmatmul.mubr.f32.gmra.mxu0 %v6046
        %v6262 = vpop.f32.mrf.mxu0
        %v6263 = vadd.f32 %v5830, %v6262
        %v6264 = vpop.f32.mrf.mxu0
        %6265 = vmatprep.mubr.f32.mxu0 0.0
        %6266 = vmatmul.mubr.f32.gmra.mxu0 %v6049
        %v6267 = vpop.f32.mrf.mxu0
        %v6268 = vpop.f32.mrf.mxu0
        %6269 = vmatprep.mubr.f32.mxu0 0.0
        %6270 = vmatmul.mubr.f32.gmra.mxu0 %v6052
        %v6271 = vpop.f32.mrf.mxu0
        %v6272 = vadd.f32 %v5839, %v6271
        %v6273 = vpop.f32.mrf.mxu0
        %6274 = vmatprep.mubr.f32.mxu0 0.0
        %6275 = vmatmul.mubr.f32.gmra.mxu0 %v6055
        %v6276 = vpop.f32.mrf.mxu0
        %v6277 = vadd.f32 %v5844, %v6276
        %v6278 = vpop.f32.mrf.mxu0
        %6279 = vmatprep.mubr.f32.mxu0 0.0
        %6280 = vmatmul.mubr.f32.gmra.mxu0 %v6058
        %v6281 = vpop.f32.mrf.mxu0
        %v6282 = vpop.f32.mrf.mxu0
        %6283 = vmatprep.mubr.f32.mxu0 0.0
        %6284 = vmatmul.mubr.f32.gmra.mxu0 %v6061
        %v6285 = vpop.f32.mrf.mxu0
        %v6286 = vadd.f32 %v5853, %v6285
        %v6287 = vpop.f32.mrf.mxu0
        %6288 = vmatprep.mubr.f32.mxu0 0.0
        %6289 = vmatmul.mubr.f32.gmra.mxu0 %v6064
        %v6290 = vpop.f32.mrf.mxu0
        %v6291 = vadd.f32 %v5858, %v6290
        %v6292 = vpop.f32.mrf.mxu0
        %6293 = vmatprep.mubr.f32.mxu0 0.0
        %6294 = vmatmul.mubr.f32.gmra.mxu0 %v6067
        %v6295 = vpop.f32.mrf.mxu0
        %v6296 = vpop.f32.mrf.mxu0
        %6297 = vmatprep.mubr.f32.mxu0 0.0
        %6298 = vmatmul.mubr.f32.gmra.mxu0 %v6070
        %v6299 = vpop.f32.mrf.mxu0
        %v6300 = vadd.f32 %v5867, %v6299
        %v6301 = vpop.f32.mrf.mxu0
        %6302 = vmatprep.mubr.f32.mxu0 0.0
        %6303 = vmatmul.mubr.f32.gmra.mxu0 %v6073
        %v6304 = vpop.f32.mrf.mxu0
        %v6305 = vadd.f32 %v5872, %v6304
        %v6306 = vpop.f32.mrf.mxu0
        %6307 = vmatprep.mubr.f32.mxu0 0.0
        %6308 = vmatmul.mubr.f32.gmra.mxu0 %v6076
        %v6309 = vpop.f32.mrf.mxu0
        %v6310 = vpop.f32.mrf.mxu0
        %6311 = vmatprep.mubr.f32.mxu0 0.0
        %6312 = vmatmul.mubr.f32.gmra.mxu0 %v6079
        %v6313 = vpop.f32.mrf.mxu0
        %v6314 = vadd.f32 %v5881, %v6313
        %v6315 = vpop.f32.mrf.mxu0
        %6316 = vmatprep.mubr.f32.mxu0 0.0
        %6317 = vmatmul.mubr.f32.gmra.mxu0 %v6082
        %v6318 = vpop.f32.mrf.mxu0
        %v6319 = vadd.f32 %v5886, %v6318
        %v6320 = vpop.f32.mrf.mxu0
        %6321 = vmatprep.mubr.f32.mxu0 0.0
        %6322 = vmatmul.mubr.f32.gmra.mxu0 %v6085
        %v6323 = vpop.f32.mrf.mxu0
        %v6324 = vpop.f32.mrf.mxu0
        %6325 = vmatprep.mubr.f32.mxu0 0.0
        %6326 = vmatmul.mubr.f32.gmra.mxu0 %v6088
        %v6327 = vpop.f32.mrf.mxu0
        %v6328 = vadd.f32 %v5895, %v6327
        %v6329 = vpop.f32.mrf.mxu0
        %6330 = vmatprep.mubr.f32.mxu0 0.0
        %6331 = vmatmul.mubr.f32.gmra.mxu0 %v6091
        %v6332 = vpop.f32.mrf.mxu0
        %v6333 = vadd.f32 %v5900, %v6332
        %v6334 = vpop.f32.mrf.mxu0
        %6335 = vmatprep.mubr.f32.mxu0 0.0
        %6336 = vmatmul.mubr.f32.gmra.mxu0 %v6094
        %v6337 = vpop.f32.mrf.mxu0
        %v6338 = vpop.f32.mrf.mxu0
        %6339 = vmatprep.mubr.f32.mxu0 0.0
        %6340 = vmatmul.mubr.f32.gmra.mxu0 %v6097
        %v6341 = vpop.f32.mrf.mxu0
        %v6342 = vadd.f32 %v5909, %v6341
        %v6343 = vpop.f32.mrf.mxu0
        %6344 = vmatprep.mubr.f32.mxu0 0.0
        %6345 = vmatmul.mubr.f32.gmra.mxu0 %v6100
        %v6346 = vpop.f32.mrf.mxu0
        %v6347 = vadd.f32 %v5914, %v6346
        %v6348 = vpop.f32.mrf.mxu0
        %6349 = vmatprep.mubr.f32.mxu0 0.0
        %6350 = vmatmul.mubr.f32.gmra.mxu0 %v6103
        %v6351 = vpop.f32.mrf.mxu0
        %v6352 = vpop.f32.mrf.mxu0
        %6353 = vmatprep.mubr.f32.mxu0 0.0
        %6354 = vmatmul.mubr.f32.gmra.mxu0 %v6106
        %v6355 = vpop.f32.mrf.mxu0
        %v6356 = vadd.f32 %v5923, %v6355
        %v6357 = vpop.f32.mrf.mxu0
        %6358 = vmatprep.mubr.f32.mxu0 0.0
        %6359 = vmatmul.mubr.f32.gmra.mxu0 %v6109
        %v6360 = vpop.f32.mrf.mxu0
        %v6361 = vadd.f32 %v5928, %v6360
        %v6362 = vpop.f32.mrf.mxu0
        %6363 = vmatprep.mubr.f32.mxu0 0.0
        %6364 = vmatmul.mubr.f32.gmra.mxu0 %v6112
        %v6365 = vpop.f32.mrf.mxu0
        %v6366 = vpop.f32.mrf.mxu0
        %6367 = vmatprep.mubr.f32.mxu0 0.0
        %6368 = vmatmul.mubr.f32.gmra.mxu0 %v6115
        %v6369 = vpop.f32.mrf.mxu0
        %v6370 = vadd.f32 %v5937, %v6369
        %v6371 = vpop.f32.mrf.mxu0
        %6372 = vmatprep.mubr.f32.mxu0 0.0
        %6373 = vmatmul.mubr.f32.gmra.mxu0 %v6118
        %v6374 = vpop.f32.mrf.mxu0
        %v6375 = vadd.f32 %v5942, %v6374
        %v6376 = vpop.f32.mrf.mxu0
        %6377 = vmatprep.mubr.f32.mxu0 0.0
        %6378 = vmatmul.mubr.f32.gmra.mxu0 %v6121
        %v6379 = vpop.f32.mrf.mxu0
        %v6380 = vpop.f32.mrf.mxu0
        %6381 = vmatprep.mubr.f32.mxu0 0.0
        %6382 = vmatmul.mubr.f32.gmra.mxu0 %v6124
        %v6383 = vpop.f32.mrf.mxu0
        %v6384 = vadd.f32 %v5951, %v6383
        %v6385 = vpop.f32.mrf.mxu0
        %6386 = vmatprep.mubr.f32.mxu0 0.0
        %6387 = vmatmul.mubr.f32.gmra.mxu0 %v6127
        %v6388 = vpop.f32.mrf.mxu0
        %v6389 = vadd.f32 %v5956, %v6388
        %v6390 = vpop.f32.mrf.mxu0
        %6391 = vmatprep.mubr.f32.mxu0 0.0
        %6392 = vmatmul.mubr.f32.gmra.mxu0 %v6130
        %v6393 = vpop.f32.mrf.mxu0
        %v6394 = vpop.f32.mrf.mxu0
        %6395 = vmatprep.mubr.f32.mxu0 0.0
        %6396 = vmatmul.mubr.f32.gmra.mxu0 %v6133
        %v6397 = vpop.f32.mrf.mxu0
        %v6398 = vadd.f32 %v5965, %v6397
        %v6399 = vpop.f32.mrf.mxu0
        %6400 = vmatprep.mubr.f32.mxu0 0.0
        %6401 = vmatmul.mubr.f32.gmra.mxu0 %v6136
        %v6402 = vpop.f32.mrf.mxu0
        %v6403 = vadd.f32 %v5970, %v6402
        %v6404 = vpop.f32.mrf.mxu0
        %6405 = vmatprep.mubr.f32.mxu0 0.0
        %6406 = vmatmul.mubr.f32.gmra.mxu0 %v6139
        %v6407 = vpop.f32.mrf.mxu0
        %v6408 = vpop.f32.mrf.mxu0
        %6409 = vmatprep.mubr.f32.mxu0 0.0
        %6410 = vmatmul.mubr.f32.gmra.mxu0 %v6142
        %v6411 = vpop.f32.mrf.mxu0
        %v6412 = vadd.f32 %v5979, %v6411
        %v6413 = vpop.f32.mrf.mxu0
        %6414 = vmatprep.mubr.f32.mxu0 0.0
        %6415 = vmatmul.mubr.f32.gmra.mxu0 %v6145
        %v6416 = vpop.f32.mrf.mxu0
        %v6417 = vadd.f32 %v5984, %v6416
        %v6418 = vpop.f32.mrf.mxu0
        %6419 = vmatprep.mubr.f32.mxu0 0.0
        %6420 = vmatmul.mubr.f32.gmra.mxu0 %v6148
        %v6421 = vpop.f32.mrf.mxu0
        %v6422 = vpop.f32.mrf.mxu0
        %6423 = vmatprep.mubr.f32.mxu0 0.0
        %6424 = vmatmul.mubr.f32.gmra.mxu0 %v6151
        %v6425 = vpop.f32.mrf.mxu0
        %v6426 = vadd.f32 %v5993, %v6425
        %v6427 = vpop.f32.mrf.mxu0
        %6428 = vmatprep.mubr.f32.mxu0 0.0
        %6429 = vmatmul.mubr.f32.gmra.mxu0 %v6154
        %v6430 = vpop.f32.mrf.mxu0
        %v6431 = vadd.f32 %v5998, %v6430
        %v6432 = vpop.f32.mrf.mxu0
        %6433 = vmatprep.mubr.f32.mxu0 0.0
        %6434 = vmatmul.mubr.f32.gmra.mxu0 %v6157
        %v6435 = vpop.f32.mrf.mxu0
        %v6436 = vpop.f32.mrf.mxu0
        %6437 = vmatprep.mubr.f32.mxu0 0.0
        %6438 = vmatmul.mubr.f32.gmra.mxu0 %v6160
        %v6439 = vpop.f32.mrf.mxu0
        %v6440 = vadd.f32 %v6007, %v6439
        %v6441 = vpop.f32.mrf.mxu0
        %6442 = vmatprep.mubr.f32.mxu0 0.0
        %6443 = vmatmul.mubr.f32.gmra.mxu0 %v6163
        %v6444 = vpop.f32.mrf.mxu0
        %v6445 = vadd.f32 %v6012, %v6444
        %v6446 = vpop.f32.mrf.mxu0
        %6447 = vmatprep.mubr.f32.mxu0 0.0
        %6448 = vmatmul.mubr.f32.gmra.mxu0 %v6166
        %v6449 = vpop.f32.mrf.mxu0
        %v6450 = vpop.f32.mrf.mxu0
        %6451 = vmatprep.mubr.f32.mxu0 0.0
        %6452 = vmatmul.mubr.f32.gmra.mxu0 %v6169
        %v6453 = vpop.f32.mrf.mxu0
        %v6454 = vadd.f32 %v6021, %v6453
        %v6455 = vpop.f32.mrf.mxu0
        %6456 = vmatprep.mubr.f32.mxu0 0.0
        %6457 = vmatmul.mubr.f32.gmra.mxu0 %v6172
        %v6458 = vpop.f32.mrf.mxu0
        %v6459 = vadd.f32 %v6026, %v6458
        %v6460 = vpop.f32.mrf.mxu0
        %6461 = vmatprep.mubr.f32.mxu0 0.0
        %6462 = vmatmul.mubr.f32.gmra.mxu0 %v6175
        %v6463 = vpop.f32.mrf.mxu0
        %v6464 = vpop.f32.mrf.mxu0
        %6465 = vdwg.mxu0
        %v6466 = vld [vmem:[#allocation3 + $0x9] sm:$0xff]
        %v6467 = vld [vmem:[#allocation3 + $0x11] sm:$0xff]
        %v6468 = vld [vmem:[#allocation3 + $0x19] sm:$0xff]
        %v6469 = vld [vmem:[#allocation3 + $0x21] sm:$0xff]
        %v6470 = vld [vmem:[#allocation3 + $0x29] sm:$0xff]
        %v6471 = vld [vmem:[#allocation3 + $0x31] sm:$0xff]
        %v6472 = vld [vmem:[#allocation3 + $0x39] sm:$0xff]
        %v6473 = vld [vmem:[#allocation3 + $0x41] sm:$0xff]
        %v6474 = vld [vmem:[#allocation3 + $0x49] sm:$0xff]
        %v6475 = vld [vmem:[#allocation3 + $0x51] sm:$0xff]
        %v6476 = vld [vmem:[#allocation3 + $0x59] sm:$0xff]
        %v6477 = vld [vmem:[#allocation3 + $0x61] sm:$0xff]
        %v6478 = vld [vmem:[#allocation3 + $0x69] sm:$0xff]
        %v6479 = vld [vmem:[#allocation3 + $0x71] sm:$0xff]
        %v6480 = vld [vmem:[#allocation3 + $0x79] sm:$0xff]
        %v6481 = vld [vmem:[#allocation3 + $0x81] sm:$0xff]
        %v6482 = vld [vmem:[#allocation3 + $0x89] sm:$0xff]
        %v6483 = vld [vmem:[#allocation3 + $0x91] sm:$0xff]
        %v6484 = vld [vmem:[#allocation3 + $0x99] sm:$0xff]
        %v6485 = vld [vmem:[#allocation3 + $0xa1] sm:$0xff]
        %v6486 = vld [vmem:[#allocation3 + $0xa9] sm:$0xff]
        %v6487 = vld [vmem:[#allocation3 + $0xb1] sm:$0xff]
        %v6488 = vld [vmem:[#allocation3 + $0xb9] sm:$0xff]
        %v6489 = vld [vmem:[#allocation3 + $0xc1] sm:$0xff]
        %v6490 = vld [vmem:[#allocation3 + $0xc9] sm:$0xff]
        %v6491 = vld [vmem:[#allocation3 + $0xd1] sm:$0xff]
        %v6492 = vld [vmem:[#allocation3 + $0xd9] sm:$0xff]
        %v6493 = vld [vmem:[#allocation3 + $0xe1] sm:$0xff]
        %v6494 = vld [vmem:[#allocation3 + $0xe9] sm:$0xff]
        %v6495 = vld [vmem:[#allocation3 + $0xf1] sm:$0xff]
        %v6496 = vld [vmem:[#allocation3 + $0xf9] sm:$0xff]
        %v6497 = vld [vmem:[#allocation3 + $0x101] sm:$0xff]
        %v6498 = vld [vmem:[#allocation3 + $0x109] sm:$0xff]
        %v6499 = vld [vmem:[#allocation3 + $0x111] sm:$0xff]
        %v6500 = vld [vmem:[#allocation3 + $0x119] sm:$0xff]
        %v6501 = vld [vmem:[#allocation3 + $0x121] sm:$0xff]
        %v6502 = vld [vmem:[#allocation3 + $0x129] sm:$0xff]
        %v6503 = vld [vmem:[#allocation3 + $0x131] sm:$0xff]
        %v6504 = vld [vmem:[#allocation3 + $0x139] sm:$0xff]
        %v6505 = vld [vmem:[#allocation3 + $0x141] sm:$0xff]
        %v6506 = vld [vmem:[#allocation3 + $0x149] sm:$0xff]
        %v6507 = vld [vmem:[#allocation3 + $0x151] sm:$0xff]
        %v6508 = vld [vmem:[#allocation3 + $0x159] sm:$0xff]
        %v6509 = vld [vmem:[#allocation3 + $0x161] sm:$0xff]
        %v6510 = vld [vmem:[#allocation3 + $0x169] sm:$0xff]
        %v6511 = vld [vmem:[#allocation3 + $0x171] sm:$0xff]
        %v6512 = vld [vmem:[#allocation3 + $0x179] sm:$0xff]
        %v6513 = vld [vmem:[#allocation3 + $0x181] sm:$0xff]
        %s6514 = scalar_lea.vmem [#allocation4], 128
        %v6515 = vld [vmem:[%s6514] sm:$0xff]
        %v6516 = vld [vmem:[%s6514 + $0x8] sm:$0xff]
        %v6517 = vld [vmem:[%s6514 + $0x10] sm:$0xff]
        %v6518 = vld [vmem:[%s6514 + $0x18] sm:$0xff]
        %v6519 = vld [vmem:[%s6514 + $0x20] sm:$0xff]
        %v6520 = vld [vmem:[%s6514 + $0x28] sm:$0xff]
        %v6521 = vld [vmem:[%s6514 + $0x30] sm:$0xff]
        %v6522 = vld [vmem:[%s6514 + $0x38] sm:$0xff]
        %v6524 = vsel %vm240, %v6466, 0
        %v6527 = vsel %vm240, %v6467, 0
        %v6530 = vsel %vm240, %v6468, 0
        %v6533 = vsel %vm240, %v6469, 0
        %v6536 = vsel %vm240, %v6470, 0
        %v6539 = vsel %vm240, %v6471, 0
        %v6542 = vsel %vm240, %v6472, 0
        %v6545 = vsel %vm240, %v6473, 0
        %v6548 = vsel %vm240, %v6474, 0
        %v6551 = vsel %vm240, %v6475, 0
        %v6554 = vsel %vm240, %v6476, 0
        %v6557 = vsel %vm240, %v6477, 0
        %v6560 = vsel %vm240, %v6478, 0
        %v6563 = vsel %vm240, %v6479, 0
        %v6566 = vsel %vm240, %v6480, 0
        %v6569 = vsel %vm240, %v6481, 0
        %v6572 = vsel %vm240, %v6482, 0
        %v6575 = vsel %vm240, %v6483, 0
        %v6578 = vsel %vm240, %v6484, 0
        %v6581 = vsel %vm240, %v6485, 0
        %v6584 = vsel %vm240, %v6486, 0
        %v6587 = vsel %vm240, %v6487, 0
        %v6590 = vsel %vm240, %v6488, 0
        %v6593 = vsel %vm240, %v6489, 0
        %v6596 = vsel %vm240, %v6490, 0
        %v6599 = vsel %vm240, %v6491, 0
        %v6602 = vsel %vm240, %v6492, 0
        %v6605 = vsel %vm240, %v6493, 0
        %v6608 = vsel %vm240, %v6494, 0
        %v6611 = vsel %vm240, %v6495, 0
        %v6614 = vsel %vm240, %v6496, 0
        %v6617 = vsel %vm240, %v6497, 0
        %v6620 = vsel %vm240, %v6498, 0
        %v6623 = vsel %vm240, %v6499, 0
        %v6626 = vsel %vm240, %v6500, 0
        %v6629 = vsel %vm240, %v6501, 0
        %v6632 = vsel %vm240, %v6502, 0
        %v6635 = vsel %vm240, %v6503, 0
        %v6638 = vsel %vm240, %v6504, 0
        %v6641 = vsel %vm240, %v6505, 0
        %v6644 = vsel %vm240, %v6506, 0
        %v6647 = vsel %vm240, %v6507, 0
        %v6650 = vsel %vm240, %v6508, 0
        %v6653 = vsel %vm240, %v6509, 0
        %v6656 = vsel %vm240, %v6510, 0
        %v6659 = vsel %vm240, %v6511, 0
        %v6662 = vsel %vm240, %v6512, 0
        %v6665 = vsel %vm240, %v6513, 0
        %6667 = vmatprep.subr.mxu0 0.0
        %6668 = vmatpush1.msra.mxu0 0.0
        %6669 = vmatprep.subr.mxu0 0.0
        %6670 = vmatpush1.msra.mxu0 0.0
        %6671 = vmatprep.subr.mxu0 0.0
        %6672 = vmatpush1.msra.mxu0 0.0
        %6673 = vmatprep.subr.mxu0 0.0
        %6674 = vmatpush1.msra.mxu0 0.0
        %6675 = vmatprep.subr.mxu0 0.0
        %6676 = vmatpush1.msra.mxu0 0.0
        %6677 = vmatprep.subr.mxu0 0.0
        %6678 = vmatpush1.msra.mxu0 0.0
        %6679 = vmatprep.subr.mxu0 0.0
        %6680 = vmatpush1.msra.mxu0 0.0
        %6681 = vmatprep.subr.mxu0 0.0
        %6682 = vmatpush1.msra.mxu0 0.0
        %6683 = vmatprep.subr.mxu0 0.0
        %6684 = vmatpush1.msra.mxu0 %v6522
        %6685 = vmatprep.subr.mxu0 0.0
        %6686 = vmatpush1.msra.mxu0 %v6521
        %6687 = vmatprep.subr.mxu0 0.0
        %6688 = vmatpush1.msra.mxu0 %v6520
        %6689 = vmatprep.subr.mxu0 0.0
        %6690 = vmatpush1.msra.mxu0 %v6519
        %6691 = vmatprep.subr.mxu0 0.0
        %6692 = vmatpush1.msra.mxu0 %v6518
        %6693 = vmatprep.subr.mxu0 0.0
        %6694 = vmatpush1.msra.mxu0 %v6517
        %6695 = vmatprep.subr.mxu0 0.0
        %6696 = vmatpush1.msra.mxu0 %v6516
        %6697 = vmatprep.subr.mxu0 0.0
        %6698 = vmatpush1.msra.mxu0 %v6515
        %6699 = vmatprep.subr.mxu0 0.0
        %6700 = vmatpush2.msra.mxu0 0.0
        %6701 = vmatprep.subr.mxu0 0.0
        %6702 = vmatpush2.msra.mxu0 0.0
        %6703 = vmatprep.subr.mxu0 0.0
        %6704 = vmatpush2.msra.mxu0 0.0
        %6705 = vmatprep.subr.mxu0 0.0
        %6706 = vmatpush2.msra.mxu0 0.0
        %6707 = vmatprep.subr.mxu0 0.0
        %6708 = vmatpush2.msra.mxu0 0.0
        %6709 = vmatprep.subr.mxu0 0.0
        %6710 = vmatpush2.msra.mxu0 0.0
        %6711 = vmatprep.subr.mxu0 0.0
        %6712 = vmatpush2.msra.mxu0 0.0
        %6713 = vmatprep.subr.mxu0 0.0
        %6714 = vmatpush2.msra.mxu0 0.0
        %6715 = vmatprep.subr.mxu0 0.0
        %6716 = vmatpush2.msra.mxu0 0.0
        %6717 = vmatprep.subr.mxu0 0.0
        %6718 = vmatpush2.msra.mxu0 0.0
        %6719 = vmatprep.subr.mxu0 0.0
        %6720 = vmatpush2.msra.mxu0 0.0
        %6721 = vmatprep.subr.mxu0 0.0
        %6722 = vmatpush2.msra.mxu0 0.0
        %6723 = vmatprep.subr.mxu0 0.0
        %6724 = vmatpush2.msra.mxu0 0.0
        %6725 = vmatprep.subr.mxu0 0.0
        %6726 = vmatpush2.msra.mxu0 0.0
        %6727 = vmatprep.subr.mxu0 0.0
        %6728 = vmatpush2.msra.mxu0 0.0
        %6729 = vmatprep.subr.mxu0 0.0
        %6730 = vmatpush2.msra.mxu0 0.0
        %6731 = vmatprep.mubr.f32.mxu0 0.0
        %6732 = vmatmul.mubr.f32.gmra.mxu0 %v6524
        %v6733 = vpop.f32.mrf.mxu0
        %v6734 = vadd.f32 0.0, %v6733
        %v6735 = vpop.f32.mrf.mxu0
        %6736 = vmatprep.mubr.f32.mxu0 0.0
        %6737 = vmatmul.mubr.f32.gmra.mxu0 %v6527
        %v6738 = vpop.f32.mrf.mxu0
        %v6739 = vadd.f32 0.0, %v6738
        %v6740 = vpop.f32.mrf.mxu0
        %6741 = vmatprep.mubr.f32.mxu0 0.0
        %6742 = vmatmul.mubr.f32.gmra.mxu0 %v6530
        %v6743 = vpop.f32.mrf.mxu0
        %v6744 = vpop.f32.mrf.mxu0
        %6745 = vmatprep.mubr.f32.mxu0 0.0
        %6746 = vmatmul.mubr.f32.gmra.mxu0 %v6533
        %v6747 = vpop.f32.mrf.mxu0
        %v6748 = vadd.f32 0.0, %v6747
        %v6749 = vpop.f32.mrf.mxu0
        %6750 = vmatprep.mubr.f32.mxu0 0.0
        %6751 = vmatmul.mubr.f32.gmra.mxu0 %v6536
        %v6752 = vpop.f32.mrf.mxu0
        %v6753 = vadd.f32 0.0, %v6752
        %v6754 = vpop.f32.mrf.mxu0
        %6755 = vmatprep.mubr.f32.mxu0 0.0
        %6756 = vmatmul.mubr.f32.gmra.mxu0 %v6539
        %v6757 = vpop.f32.mrf.mxu0
        %v6758 = vpop.f32.mrf.mxu0
        %6759 = vmatprep.mubr.f32.mxu0 0.0
        %6760 = vmatmul.mubr.f32.gmra.mxu0 %v6542
        %v6761 = vpop.f32.mrf.mxu0
        %v6762 = vadd.f32 0.0, %v6761
        %v6763 = vpop.f32.mrf.mxu0
        %6764 = vmatprep.mubr.f32.mxu0 0.0
        %6765 = vmatmul.mubr.f32.gmra.mxu0 %v6545
        %v6766 = vpop.f32.mrf.mxu0
        %v6767 = vadd.f32 0.0, %v6766
        %v6768 = vpop.f32.mrf.mxu0
        %6769 = vmatprep.mubr.f32.mxu0 0.0
        %6770 = vmatmul.mubr.f32.gmra.mxu0 %v6548
        %v6771 = vpop.f32.mrf.mxu0
        %v6772 = vpop.f32.mrf.mxu0
        %6773 = vmatprep.mubr.f32.mxu0 0.0
        %6774 = vmatmul.mubr.f32.gmra.mxu0 %v6551
        %v6775 = vpop.f32.mrf.mxu0
        %v6776 = vadd.f32 0.0, %v6775
        %v6777 = vpop.f32.mrf.mxu0
        %6778 = vmatprep.mubr.f32.mxu0 0.0
        %6779 = vmatmul.mubr.f32.gmra.mxu0 %v6554
        %v6780 = vpop.f32.mrf.mxu0
        %v6781 = vadd.f32 0.0, %v6780
        %v6782 = vpop.f32.mrf.mxu0
        %6783 = vmatprep.mubr.f32.mxu0 0.0
        %6784 = vmatmul.mubr.f32.gmra.mxu0 %v6557
        %v6785 = vpop.f32.mrf.mxu0
        %v6786 = vpop.f32.mrf.mxu0
        %6787 = vmatprep.mubr.f32.mxu0 0.0
        %6788 = vmatmul.mubr.f32.gmra.mxu0 %v6560
        %v6789 = vpop.f32.mrf.mxu0
        %v6790 = vadd.f32 0.0, %v6789
        %v6791 = vpop.f32.mrf.mxu0
        %6792 = vmatprep.mubr.f32.mxu0 0.0
        %6793 = vmatmul.mubr.f32.gmra.mxu0 %v6563
        %v6794 = vpop.f32.mrf.mxu0
        %v6795 = vadd.f32 0.0, %v6794
        %v6796 = vpop.f32.mrf.mxu0
        %6797 = vmatprep.mubr.f32.mxu0 0.0
        %6798 = vmatmul.mubr.f32.gmra.mxu0 %v6566
        %v6799 = vpop.f32.mrf.mxu0
        %v6800 = vpop.f32.mrf.mxu0
        %6801 = vmatprep.mubr.f32.mxu0 0.0
        %6802 = vmatmul.mubr.f32.gmra.mxu0 %v6569
        %v6803 = vpop.f32.mrf.mxu0
        %v6804 = vadd.f32 0.0, %v6803
        %v6805 = vpop.f32.mrf.mxu0
        %6806 = vmatprep.mubr.f32.mxu0 0.0
        %6807 = vmatmul.mubr.f32.gmra.mxu0 %v6572
        %v6808 = vpop.f32.mrf.mxu0
        %v6809 = vadd.f32 0.0, %v6808
        %v6810 = vpop.f32.mrf.mxu0
        %6811 = vmatprep.mubr.f32.mxu0 0.0
        %6812 = vmatmul.mubr.f32.gmra.mxu0 %v6575
        %v6813 = vpop.f32.mrf.mxu0
        %v6814 = vpop.f32.mrf.mxu0
        %6815 = vmatprep.mubr.f32.mxu0 0.0
        %6816 = vmatmul.mubr.f32.gmra.mxu0 %v6578
        %v6817 = vpop.f32.mrf.mxu0
        %v6818 = vadd.f32 0.0, %v6817
        %v6819 = vpop.f32.mrf.mxu0
        %6820 = vmatprep.mubr.f32.mxu0 0.0
        %6821 = vmatmul.mubr.f32.gmra.mxu0 %v6581
        %v6822 = vpop.f32.mrf.mxu0
        %v6823 = vadd.f32 0.0, %v6822
        %v6824 = vpop.f32.mrf.mxu0
        %6825 = vmatprep.mubr.f32.mxu0 0.0
        %6826 = vmatmul.mubr.f32.gmra.mxu0 %v6584
        %v6827 = vpop.f32.mrf.mxu0
        %v6828 = vpop.f32.mrf.mxu0
        %6829 = vmatprep.mubr.f32.mxu0 0.0
        %6830 = vmatmul.mubr.f32.gmra.mxu0 %v6587
        %v6831 = vpop.f32.mrf.mxu0
        %v6832 = vadd.f32 0.0, %v6831
        %v6833 = vpop.f32.mrf.mxu0
        %6834 = vmatprep.mubr.f32.mxu0 0.0
        %6835 = vmatmul.mubr.f32.gmra.mxu0 %v6590
        %v6836 = vpop.f32.mrf.mxu0
        %v6837 = vadd.f32 0.0, %v6836
        %v6838 = vpop.f32.mrf.mxu0
        %6839 = vmatprep.mubr.f32.mxu0 0.0
        %6840 = vmatmul.mubr.f32.gmra.mxu0 %v6593
        %v6841 = vpop.f32.mrf.mxu0
        %v6842 = vpop.f32.mrf.mxu0
        %6843 = vmatprep.mubr.f32.mxu0 0.0
        %6844 = vmatmul.mubr.f32.gmra.mxu0 %v6596
        %v6845 = vpop.f32.mrf.mxu0
        %v6846 = vadd.f32 0.0, %v6845
        %v6847 = vpop.f32.mrf.mxu0
        %6848 = vmatprep.mubr.f32.mxu0 0.0
        %6849 = vmatmul.mubr.f32.gmra.mxu0 %v6599
        %v6850 = vpop.f32.mrf.mxu0
        %v6851 = vadd.f32 0.0, %v6850
        %v6852 = vpop.f32.mrf.mxu0
        %6853 = vmatprep.mubr.f32.mxu0 0.0
        %6854 = vmatmul.mubr.f32.gmra.mxu0 %v6602
        %v6855 = vpop.f32.mrf.mxu0
        %v6856 = vpop.f32.mrf.mxu0
        %6857 = vmatprep.mubr.f32.mxu0 0.0
        %6858 = vmatmul.mubr.f32.gmra.mxu0 %v6605
        %v6859 = vpop.f32.mrf.mxu0
        %v6860 = vadd.f32 0.0, %v6859
        %v6861 = vpop.f32.mrf.mxu0
        %6862 = vmatprep.mubr.f32.mxu0 0.0
        %6863 = vmatmul.mubr.f32.gmra.mxu0 %v6608
        %v6864 = vpop.f32.mrf.mxu0
        %v6865 = vadd.f32 0.0, %v6864
        %v6866 = vpop.f32.mrf.mxu0
        %6867 = vmatprep.mubr.f32.mxu0 0.0
        %6868 = vmatmul.mubr.f32.gmra.mxu0 %v6611
        %v6869 = vpop.f32.mrf.mxu0
        %v6870 = vpop.f32.mrf.mxu0
        %6871 = vmatprep.mubr.f32.mxu0 0.0
        %6872 = vmatmul.mubr.f32.gmra.mxu0 %v6614
        %v6873 = vpop.f32.mrf.mxu0
        %v6874 = vadd.f32 0.0, %v6873
        %v6875 = vpop.f32.mrf.mxu0
        %6876 = vmatprep.mubr.f32.mxu0 0.0
        %6877 = vmatmul.mubr.f32.gmra.mxu0 %v6617
        %v6878 = vpop.f32.mrf.mxu0
        %v6879 = vadd.f32 0.0, %v6878
        %v6880 = vpop.f32.mrf.mxu0
        %6881 = vmatprep.mubr.f32.mxu0 0.0
        %6882 = vmatmul.mubr.f32.gmra.mxu0 %v6620
        %v6883 = vpop.f32.mrf.mxu0
        %v6884 = vpop.f32.mrf.mxu0
        %6885 = vmatprep.mubr.f32.mxu0 0.0
        %6886 = vmatmul.mubr.f32.gmra.mxu0 %v6623
        %v6887 = vpop.f32.mrf.mxu0
        %v6888 = vadd.f32 0.0, %v6887
        %v6889 = vpop.f32.mrf.mxu0
        %6890 = vmatprep.mubr.f32.mxu0 0.0
        %6891 = vmatmul.mubr.f32.gmra.mxu0 %v6626
        %v6892 = vpop.f32.mrf.mxu0
        %v6893 = vadd.f32 0.0, %v6892
        %v6894 = vpop.f32.mrf.mxu0
        %6895 = vmatprep.mubr.f32.mxu0 0.0
        %6896 = vmatmul.mubr.f32.gmra.mxu0 %v6629
        %v6897 = vpop.f32.mrf.mxu0
        %v6898 = vpop.f32.mrf.mxu0
        %6899 = vmatprep.mubr.f32.mxu0 0.0
        %6900 = vmatmul.mubr.f32.gmra.mxu0 %v6632
        %v6901 = vpop.f32.mrf.mxu0
        %v6902 = vadd.f32 0.0, %v6901
        %v6903 = vpop.f32.mrf.mxu0
        %6904 = vmatprep.mubr.f32.mxu0 0.0
        %6905 = vmatmul.mubr.f32.gmra.mxu0 %v6635
        %v6906 = vpop.f32.mrf.mxu0
        %v6907 = vadd.f32 0.0, %v6906
        %v6908 = vpop.f32.mrf.mxu0
        %6909 = vmatprep.mubr.f32.mxu0 0.0
        %6910 = vmatmul.mubr.f32.gmra.mxu0 %v6638
        %v6911 = vpop.f32.mrf.mxu0
        %v6912 = vpop.f32.mrf.mxu0
        %6913 = vmatprep.mubr.f32.mxu0 0.0
        %6914 = vmatmul.mubr.f32.gmra.mxu0 %v6641
        %v6915 = vpop.f32.mrf.mxu0
        %v6916 = vadd.f32 0.0, %v6915
        %v6917 = vpop.f32.mrf.mxu0
        %6918 = vmatprep.mubr.f32.mxu0 0.0
        %6919 = vmatmul.mubr.f32.gmra.mxu0 %v6644
        %v6920 = vpop.f32.mrf.mxu0
        %v6921 = vadd.f32 0.0, %v6920
        %v6922 = vpop.f32.mrf.mxu0
        %6923 = vmatprep.mubr.f32.mxu0 0.0
        %6924 = vmatmul.mubr.f32.gmra.mxu0 %v6647
        %v6925 = vpop.f32.mrf.mxu0
        %v6926 = vpop.f32.mrf.mxu0
        %6927 = vmatprep.mubr.f32.mxu0 0.0
        %6928 = vmatmul.mubr.f32.gmra.mxu0 %v6650
        %v6929 = vpop.f32.mrf.mxu0
        %v6930 = vadd.f32 0.0, %v6929
        %v6931 = vpop.f32.mrf.mxu0
        %6932 = vmatprep.mubr.f32.mxu0 0.0
        %6933 = vmatmul.mubr.f32.gmra.mxu0 %v6653
        %v6934 = vpop.f32.mrf.mxu0
        %v6935 = vadd.f32 0.0, %v6934
        %v6936 = vpop.f32.mrf.mxu0
        %6937 = vmatprep.mubr.f32.mxu0 0.0
        %6938 = vmatmul.mubr.f32.gmra.mxu0 %v6656
        %v6939 = vpop.f32.mrf.mxu0
        %v6940 = vpop.f32.mrf.mxu0
        %6941 = vmatprep.mubr.f32.mxu0 0.0
        %6942 = vmatmul.mubr.f32.gmra.mxu0 %v6659
        %v6943 = vpop.f32.mrf.mxu0
        %v6944 = vadd.f32 0.0, %v6943
        %v6945 = vpop.f32.mrf.mxu0
        %6946 = vmatprep.mubr.f32.mxu0 0.0
        %6947 = vmatmul.mubr.f32.gmra.mxu0 %v6662
        %v6948 = vpop.f32.mrf.mxu0
        %v6949 = vadd.f32 0.0, %v6948
        %v6950 = vpop.f32.mrf.mxu0
        %6951 = vmatprep.mubr.f32.mxu0 0.0
        %6952 = vmatmul.mubr.f32.gmra.mxu0 %v6665
        %v6953 = vpop.f32.mrf.mxu0
        %v6954 = vpop.f32.mrf.mxu0
        %6955 = vdwg.mxu0
        %v6956 = vadd.f32 %v6244, %v6734
        %v6957 = vadd.f32 %v6249, %v6739
        %v6958 = vadd.f32 %v6258, %v6748
        %v6959 = vadd.f32 %v6263, %v6753
        %v6960 = vadd.f32 %v6272, %v6762
        %v6961 = vadd.f32 %v6277, %v6767
        %v6962 = vadd.f32 %v6286, %v6776
        %v6963 = vadd.f32 %v6291, %v6781
        %v6964 = vadd.f32 %v6300, %v6790
        %v6965 = vadd.f32 %v6305, %v6795
        %v6966 = vadd.f32 %v6314, %v6804
        %v6967 = vadd.f32 %v6319, %v6809
        %v6968 = vadd.f32 %v6328, %v6818
        %v6969 = vadd.f32 %v6333, %v6823
        %v6970 = vadd.f32 %v6342, %v6832
        %v6971 = vadd.f32 %v6347, %v6837
        %v6972 = vadd.f32 %v6356, %v6846
        %v6973 = vadd.f32 %v6361, %v6851
        %v6974 = vadd.f32 %v6370, %v6860
        %v6975 = vadd.f32 %v6375, %v6865
        %v6976 = vadd.f32 %v6384, %v6874
        %v6977 = vadd.f32 %v6389, %v6879
        %v6978 = vadd.f32 %v6398, %v6888
        %v6979 = vadd.f32 %v6403, %v6893
        %v6980 = vadd.f32 %v6412, %v6902
        %v6981 = vadd.f32 %v6417, %v6907
        %v6982 = vadd.f32 %v6426, %v6916
        %v6983 = vadd.f32 %v6431, %v6921
        %v6984 = vadd.f32 %v6440, %v6930
        %v6985 = vadd.f32 %v6445, %v6935
        %v6986 = vadd.f32 %v6454, %v6944
        %v6987 = vadd.f32 %v6459, %v6949
        %v6988 = vld [vmem:[#allocation3 + $0x1f] sm:$0xff]
        %v6989 = vld [vmem:[#allocation3 + $0x27] sm:$0xff]
        %v6990 = vld [vmem:[#allocation3 + $0x2f] sm:$0xff]
        %v6991 = vld [vmem:[#allocation3 + $0x37] sm:$0xff]
        %v6992 = vld [vmem:[#allocation3 + $0x3f] sm:$0xff]
        %v6993 = vld [vmem:[#allocation3 + $0x47] sm:$0xff]
        %v6994 = vld [vmem:[#allocation3 + $0x4f] sm:$0xff]
        %v6995 = vld [vmem:[#allocation3 + $0x57] sm:$0xff]
        %v6996 = vld [vmem:[#allocation3 + $0x5f] sm:$0xff]
        %v6997 = vld [vmem:[#allocation3 + $0x67] sm:$0xff]
        %v6998 = vld [vmem:[#allocation3 + $0x6f] sm:$0xff]
        %v6999 = vld [vmem:[#allocation3 + $0x77] sm:$0xff]
        %v7000 = vld [vmem:[#allocation3 + $0x7f] sm:$0xff]
        %v7001 = vld [vmem:[#allocation3 + $0x87] sm:$0xff]
        %v7002 = vld [vmem:[#allocation3 + $0x8f] sm:$0xff]
        %v7003 = vld [vmem:[#allocation3 + $0x97] sm:$0xff]
        %v7004 = vld [vmem:[#allocation3 + $0x9f] sm:$0xff]
        %v7005 = vld [vmem:[#allocation3 + $0xa7] sm:$0xff]
        %v7006 = vld [vmem:[#allocation3 + $0xaf] sm:$0xff]
        %v7007 = vld [vmem:[#allocation3 + $0xb7] sm:$0xff]
        %v7008 = vld [vmem:[#allocation3 + $0xbf] sm:$0xff]
        %v7009 = vld [vmem:[#allocation3 + $0xc7] sm:$0xff]
        %v7010 = vld [vmem:[#allocation3 + $0xcf] sm:$0xff]
        %v7011 = vld [vmem:[#allocation3 + $0xd7] sm:$0xff]
        %v7012 = vld [vmem:[#allocation3 + $0xdf] sm:$0xff]
        %v7013 = vld [vmem:[#allocation3 + $0xe7] sm:$0xff]
        %v7014 = vld [vmem:[#allocation3 + $0xef] sm:$0xff]
        %v7015 = vld [vmem:[#allocation3 + $0xf7] sm:$0xff]
        %v7016 = vld [vmem:[#allocation3 + $0xff] sm:$0xff]
        %v7017 = vld [vmem:[#allocation3 + $0x107] sm:$0xff]
        %v7018 = vld [vmem:[#allocation3 + $0x10f] sm:$0xff]
        %v7019 = vld [vmem:[#allocation3 + $0x117] sm:$0xff]
        %v7020 = vld [vmem:[#allocation3 + $0x11f] sm:$0xff]
        %v7021 = vld [vmem:[#allocation3 + $0x127] sm:$0xff]
        %v7022 = vld [vmem:[#allocation3 + $0x12f] sm:$0xff]
        %v7023 = vld [vmem:[#allocation3 + $0x137] sm:$0xff]
        %v7024 = vld [vmem:[#allocation3 + $0x13f] sm:$0xff]
        %v7025 = vld [vmem:[#allocation3 + $0x147] sm:$0xff]
        %v7026 = vld [vmem:[#allocation3 + $0x14f] sm:$0xff]
        %v7027 = vld [vmem:[#allocation3 + $0x157] sm:$0xff]
        %v7028 = vld [vmem:[#allocation3 + $0x15f] sm:$0xff]
        %v7029 = vld [vmem:[#allocation3 + $0x167] sm:$0xff]
        %v7030 = vld [vmem:[#allocation3 + $0x16f] sm:$0xff]
        %v7031 = vld [vmem:[#allocation3 + $0x177] sm:$0xff]
        %v7032 = vld [vmem:[#allocation3 + $0x17f] sm:$0xff]
        %v7033 = vld [vmem:[#allocation3 + $0x187] sm:$0xff]
        %v7034 = vld [vmem:[#allocation3 + $0x18f] sm:$0xff]
        %v7035 = vld [vmem:[#allocation3 + $0x197] sm:$0xff]
        %s7036 = scalar_lea.vmem [#allocation4], 192
        %v7037 = vld [vmem:[%s7036] sm:$0xff]
        %v7038 = vld [vmem:[%s7036 + $0x8] sm:$0xff]
        %v7039 = vld [vmem:[%s7036 + $0x10] sm:$0xff]
        %v7040 = vld [vmem:[%s7036 + $0x18] sm:$0xff]
        %v7041 = vld [vmem:[%s7036 + $0x20] sm:$0xff]
        %v7042 = vld [vmem:[%s7036 + $0x28] sm:$0xff]
        %v7043 = vld [vmem:[%s7036 + $0x30] sm:$0xff]
        %v7044 = vld [vmem:[%s7036 + $0x38] sm:$0xff]
        %v7046 = vsel %vm240, %v6988, 0
        %v7049 = vsel %vm240, %v6989, 0
        %v7052 = vsel %vm240, %v6990, 0
        %v7055 = vsel %vm240, %v6991, 0
        %v7058 = vsel %vm240, %v6992, 0
        %v7061 = vsel %vm240, %v6993, 0
        %v7064 = vsel %vm240, %v6994, 0
        %v7067 = vsel %vm240, %v6995, 0
        %v7070 = vsel %vm240, %v6996, 0
        %v7073 = vsel %vm240, %v6997, 0
        %v7076 = vsel %vm240, %v6998, 0
        %v7079 = vsel %vm240, %v6999, 0
        %v7082 = vsel %vm240, %v7000, 0
        %v7085 = vsel %vm240, %v7001, 0
        %v7088 = vsel %vm240, %v7002, 0
        %v7091 = vsel %vm240, %v7003, 0
        %v7094 = vsel %vm240, %v7004, 0
        %v7097 = vsel %vm240, %v7005, 0
        %v7100 = vsel %vm240, %v7006, 0
        %v7103 = vsel %vm240, %v7007, 0
        %v7106 = vsel %vm240, %v7008, 0
        %v7109 = vsel %vm240, %v7009, 0
        %v7112 = vsel %vm240, %v7010, 0
        %v7115 = vsel %vm240, %v7011, 0
        %v7118 = vsel %vm240, %v7012, 0
        %v7121 = vsel %vm240, %v7013, 0
        %v7124 = vsel %vm240, %v7014, 0
        %v7127 = vsel %vm240, %v7015, 0
        %v7130 = vsel %vm240, %v7016, 0
        %v7133 = vsel %vm240, %v7017, 0
        %v7136 = vsel %vm240, %v7018, 0
        %v7139 = vsel %vm240, %v7019, 0
        %v7142 = vsel %vm240, %v7020, 0
        %v7145 = vsel %vm240, %v7021, 0
        %v7148 = vsel %vm240, %v7022, 0
        %v7151 = vsel %vm240, %v7023, 0
        %v7154 = vsel %vm240, %v7024, 0
        %v7157 = vsel %vm240, %v7025, 0
        %v7160 = vsel %vm240, %v7026, 0
        %v7163 = vsel %vm240, %v7027, 0
        %v7166 = vsel %vm240, %v7028, 0
        %v7169 = vsel %vm240, %v7029, 0
        %v7172 = vsel %vm240, %v7030, 0
        %v7175 = vsel %vm240, %v7031, 0
        %v7178 = vsel %vm240, %v7032, 0
        %v7181 = vsel %vm240, %v7033, 0
        %v7184 = vsel %vm240, %v7034, 0
        %v7187 = vsel %vm240, %v7035, 0
        %7189 = vmatprep.subr.mxu0 0.0
        %7190 = vmatpush1.msra.mxu0 0.0
        %7191 = vmatprep.subr.mxu0 0.0
        %7192 = vmatpush1.msra.mxu0 0.0
        %7193 = vmatprep.subr.mxu0 0.0
        %7194 = vmatpush1.msra.mxu0 0.0
        %7195 = vmatprep.subr.mxu0 0.0
        %7196 = vmatpush1.msra.mxu0 0.0
        %7197 = vmatprep.subr.mxu0 0.0
        %7198 = vmatpush1.msra.mxu0 0.0
        %7199 = vmatprep.subr.mxu0 0.0
        %7200 = vmatpush1.msra.mxu0 0.0
        %7201 = vmatprep.subr.mxu0 0.0
        %7202 = vmatpush1.msra.mxu0 0.0
        %7203 = vmatprep.subr.mxu0 0.0
        %7204 = vmatpush1.msra.mxu0 0.0
        %7205 = vmatprep.subr.mxu0 0.0
        %7206 = vmatpush1.msra.mxu0 %v7044
        %7207 = vmatprep.subr.mxu0 0.0
        %7208 = vmatpush1.msra.mxu0 %v7043
        %7209 = vmatprep.subr.mxu0 0.0
        %7210 = vmatpush1.msra.mxu0 %v7042
        %7211 = vmatprep.subr.mxu0 0.0
        %7212 = vmatpush1.msra.mxu0 %v7041
        %7213 = vmatprep.subr.mxu0 0.0
        %7214 = vmatpush1.msra.mxu0 %v7040
        %7215 = vmatprep.subr.mxu0 0.0
        %7216 = vmatpush1.msra.mxu0 %v7039
        %7217 = vmatprep.subr.mxu0 0.0
        %7218 = vmatpush1.msra.mxu0 %v7038
        %7219 = vmatprep.subr.mxu0 0.0
        %7220 = vmatpush1.msra.mxu0 %v7037
        %7221 = vmatprep.subr.mxu0 0.0
        %7222 = vmatpush2.msra.mxu0 0.0
        %7223 = vmatprep.subr.mxu0 0.0
        %7224 = vmatpush2.msra.mxu0 0.0
        %7225 = vmatprep.subr.mxu0 0.0
        %7226 = vmatpush2.msra.mxu0 0.0
        %7227 = vmatprep.subr.mxu0 0.0
        %7228 = vmatpush2.msra.mxu0 0.0
        %7229 = vmatprep.subr.mxu0 0.0
        %7230 = vmatpush2.msra.mxu0 0.0
        %7231 = vmatprep.subr.mxu0 0.0
        %7232 = vmatpush2.msra.mxu0 0.0
        %7233 = vmatprep.subr.mxu0 0.0
        %7234 = vmatpush2.msra.mxu0 0.0
        %7235 = vmatprep.subr.mxu0 0.0
        %7236 = vmatpush2.msra.mxu0 0.0
        %7237 = vmatprep.subr.mxu0 0.0
        %7238 = vmatpush2.msra.mxu0 0.0
        %7239 = vmatprep.subr.mxu0 0.0
        %7240 = vmatpush2.msra.mxu0 0.0
        %7241 = vmatprep.subr.mxu0 0.0
        %7242 = vmatpush2.msra.mxu0 0.0
        %7243 = vmatprep.subr.mxu0 0.0
        %7244 = vmatpush2.msra.mxu0 0.0
        %7245 = vmatprep.subr.mxu0 0.0
        %7246 = vmatpush2.msra.mxu0 0.0
        %7247 = vmatprep.subr.mxu0 0.0
        %7248 = vmatpush2.msra.mxu0 0.0
        %7249 = vmatprep.subr.mxu0 0.0
        %7250 = vmatpush2.msra.mxu0 0.0
        %7251 = vmatprep.subr.mxu0 0.0
        %7252 = vmatpush2.msra.mxu0 0.0
        %7253 = vmatprep.mubr.f32.mxu0 0.0
        %7254 = vmatmul.mubr.f32.gmra.mxu0 %v7046
        %v7255 = vpop.f32.mrf.mxu0
        %v7256 = vadd.f32 0.0, %v7255
        %v7257 = vpop.f32.mrf.mxu0
        %7258 = vmatprep.mubr.f32.mxu0 0.0
        %7259 = vmatmul.mubr.f32.gmra.mxu0 %v7049
        %v7260 = vpop.f32.mrf.mxu0
        %v7261 = vadd.f32 0.0, %v7260
        %v7262 = vpop.f32.mrf.mxu0
        %7263 = vmatprep.mubr.f32.mxu0 0.0
        %7264 = vmatmul.mubr.f32.gmra.mxu0 %v7052
        %v7265 = vpop.f32.mrf.mxu0
        %v7266 = vpop.f32.mrf.mxu0
        %7267 = vmatprep.mubr.f32.mxu0 0.0
        %7268 = vmatmul.mubr.f32.gmra.mxu0 %v7055
        %v7269 = vpop.f32.mrf.mxu0
        %v7270 = vadd.f32 0.0, %v7269
        %v7271 = vpop.f32.mrf.mxu0
        %7272 = vmatprep.mubr.f32.mxu0 0.0
        %7273 = vmatmul.mubr.f32.gmra.mxu0 %v7058
        %v7274 = vpop.f32.mrf.mxu0
        %v7275 = vadd.f32 0.0, %v7274
        %v7276 = vpop.f32.mrf.mxu0
        %7277 = vmatprep.mubr.f32.mxu0 0.0
        %7278 = vmatmul.mubr.f32.gmra.mxu0 %v7061
        %v7279 = vpop.f32.mrf.mxu0
        %v7280 = vpop.f32.mrf.mxu0
        %7281 = vmatprep.mubr.f32.mxu0 0.0
        %7282 = vmatmul.mubr.f32.gmra.mxu0 %v7064
        %v7283 = vpop.f32.mrf.mxu0
        %v7284 = vadd.f32 0.0, %v7283
        %v7285 = vpop.f32.mrf.mxu0
        %7286 = vmatprep.mubr.f32.mxu0 0.0
        %7287 = vmatmul.mubr.f32.gmra.mxu0 %v7067
        %v7288 = vpop.f32.mrf.mxu0
        %v7289 = vadd.f32 0.0, %v7288
        %v7290 = vpop.f32.mrf.mxu0
        %7291 = vmatprep.mubr.f32.mxu0 0.0
        %7292 = vmatmul.mubr.f32.gmra.mxu0 %v7070
        %v7293 = vpop.f32.mrf.mxu0
        %v7294 = vpop.f32.mrf.mxu0
        %7295 = vmatprep.mubr.f32.mxu0 0.0
        %7296 = vmatmul.mubr.f32.gmra.mxu0 %v7073
        %v7297 = vpop.f32.mrf.mxu0
        %v7298 = vadd.f32 0.0, %v7297
        %v7299 = vpop.f32.mrf.mxu0
        %7300 = vmatprep.mubr.f32.mxu0 0.0
        %7301 = vmatmul.mubr.f32.gmra.mxu0 %v7076
        %v7302 = vpop.f32.mrf.mxu0
        %v7303 = vadd.f32 0.0, %v7302
        %v7304 = vpop.f32.mrf.mxu0
        %7305 = vmatprep.mubr.f32.mxu0 0.0
        %7306 = vmatmul.mubr.f32.gmra.mxu0 %v7079
        %v7307 = vpop.f32.mrf.mxu0
        %v7308 = vpop.f32.mrf.mxu0
        %7309 = vmatprep.mubr.f32.mxu0 0.0
        %7310 = vmatmul.mubr.f32.gmra.mxu0 %v7082
        %v7311 = vpop.f32.mrf.mxu0
        %v7312 = vadd.f32 0.0, %v7311
        %v7313 = vpop.f32.mrf.mxu0
        %7314 = vmatprep.mubr.f32.mxu0 0.0
        %7315 = vmatmul.mubr.f32.gmra.mxu0 %v7085
        %v7316 = vpop.f32.mrf.mxu0
        %v7317 = vadd.f32 0.0, %v7316
        %v7318 = vpop.f32.mrf.mxu0
        %7319 = vmatprep.mubr.f32.mxu0 0.0
        %7320 = vmatmul.mubr.f32.gmra.mxu0 %v7088
        %v7321 = vpop.f32.mrf.mxu0
        %v7322 = vpop.f32.mrf.mxu0
        %7323 = vmatprep.mubr.f32.mxu0 0.0
        %7324 = vmatmul.mubr.f32.gmra.mxu0 %v7091
        %v7325 = vpop.f32.mrf.mxu0
        %v7326 = vadd.f32 0.0, %v7325
        %v7327 = vpop.f32.mrf.mxu0
        %7328 = vmatprep.mubr.f32.mxu0 0.0
        %7329 = vmatmul.mubr.f32.gmra.mxu0 %v7094
        %v7330 = vpop.f32.mrf.mxu0
        %v7331 = vadd.f32 0.0, %v7330
        %v7332 = vpop.f32.mrf.mxu0
        %7333 = vmatprep.mubr.f32.mxu0 0.0
        %7334 = vmatmul.mubr.f32.gmra.mxu0 %v7097
        %v7335 = vpop.f32.mrf.mxu0
        %v7336 = vpop.f32.mrf.mxu0
        %7337 = vmatprep.mubr.f32.mxu0 0.0
        %7338 = vmatmul.mubr.f32.gmra.mxu0 %v7100
        %v7339 = vpop.f32.mrf.mxu0
        %v7340 = vadd.f32 0.0, %v7339
        %v7341 = vpop.f32.mrf.mxu0
        %7342 = vmatprep.mubr.f32.mxu0 0.0
        %7343 = vmatmul.mubr.f32.gmra.mxu0 %v7103
        %v7344 = vpop.f32.mrf.mxu0
        %v7345 = vadd.f32 0.0, %v7344
        %v7346 = vpop.f32.mrf.mxu0
        %7347 = vmatprep.mubr.f32.mxu0 0.0
        %7348 = vmatmul.mubr.f32.gmra.mxu0 %v7106
        %v7349 = vpop.f32.mrf.mxu0
        %v7350 = vpop.f32.mrf.mxu0
        %7351 = vmatprep.mubr.f32.mxu0 0.0
        %7352 = vmatmul.mubr.f32.gmra.mxu0 %v7109
        %v7353 = vpop.f32.mrf.mxu0
        %v7354 = vadd.f32 0.0, %v7353
        %v7355 = vpop.f32.mrf.mxu0
        %7356 = vmatprep.mubr.f32.mxu0 0.0
        %7357 = vmatmul.mubr.f32.gmra.mxu0 %v7112
        %v7358 = vpop.f32.mrf.mxu0
        %v7359 = vadd.f32 0.0, %v7358
        %v7360 = vpop.f32.mrf.mxu0
        %7361 = vmatprep.mubr.f32.mxu0 0.0
        %7362 = vmatmul.mubr.f32.gmra.mxu0 %v7115
        %v7363 = vpop.f32.mrf.mxu0
        %v7364 = vpop.f32.mrf.mxu0
        %7365 = vmatprep.mubr.f32.mxu0 0.0
        %7366 = vmatmul.mubr.f32.gmra.mxu0 %v7118
        %v7367 = vpop.f32.mrf.mxu0
        %v7368 = vadd.f32 0.0, %v7367
        %v7369 = vpop.f32.mrf.mxu0
        %7370 = vmatprep.mubr.f32.mxu0 0.0
        %7371 = vmatmul.mubr.f32.gmra.mxu0 %v7121
        %v7372 = vpop.f32.mrf.mxu0
        %v7373 = vadd.f32 0.0, %v7372
        %v7374 = vpop.f32.mrf.mxu0
        %7375 = vmatprep.mubr.f32.mxu0 0.0
        %7376 = vmatmul.mubr.f32.gmra.mxu0 %v7124
        %v7377 = vpop.f32.mrf.mxu0
        %v7378 = vpop.f32.mrf.mxu0
        %7379 = vmatprep.mubr.f32.mxu0 0.0
        %7380 = vmatmul.mubr.f32.gmra.mxu0 %v7127
        %v7381 = vpop.f32.mrf.mxu0
        %v7382 = vadd.f32 0.0, %v7381
        %v7383 = vpop.f32.mrf.mxu0
        %7384 = vmatprep.mubr.f32.mxu0 0.0
        %7385 = vmatmul.mubr.f32.gmra.mxu0 %v7130
        %v7386 = vpop.f32.mrf.mxu0
        %v7387 = vadd.f32 0.0, %v7386
        %v7388 = vpop.f32.mrf.mxu0
        %7389 = vmatprep.mubr.f32.mxu0 0.0
        %7390 = vmatmul.mubr.f32.gmra.mxu0 %v7133
        %v7391 = vpop.f32.mrf.mxu0
        %v7392 = vpop.f32.mrf.mxu0
        %7393 = vmatprep.mubr.f32.mxu0 0.0
        %7394 = vmatmul.mubr.f32.gmra.mxu0 %v7136
        %v7395 = vpop.f32.mrf.mxu0
        %v7396 = vadd.f32 0.0, %v7395
        %v7397 = vpop.f32.mrf.mxu0
        %7398 = vmatprep.mubr.f32.mxu0 0.0
        %7399 = vmatmul.mubr.f32.gmra.mxu0 %v7139
        %v7400 = vpop.f32.mrf.mxu0
        %v7401 = vadd.f32 0.0, %v7400
        %v7402 = vpop.f32.mrf.mxu0
        %7403 = vmatprep.mubr.f32.mxu0 0.0
        %7404 = vmatmul.mubr.f32.gmra.mxu0 %v7142
        %v7405 = vpop.f32.mrf.mxu0
        %v7406 = vpop.f32.mrf.mxu0
        %7407 = vmatprep.mubr.f32.mxu0 0.0
        %7408 = vmatmul.mubr.f32.gmra.mxu0 %v7145
        %v7409 = vpop.f32.mrf.mxu0
        %v7410 = vadd.f32 0.0, %v7409
        %v7411 = vpop.f32.mrf.mxu0
        %7412 = vmatprep.mubr.f32.mxu0 0.0
        %7413 = vmatmul.mubr.f32.gmra.mxu0 %v7148
        %v7414 = vpop.f32.mrf.mxu0
        %v7415 = vadd.f32 0.0, %v7414
        %v7416 = vpop.f32.mrf.mxu0
        %7417 = vmatprep.mubr.f32.mxu0 0.0
        %7418 = vmatmul.mubr.f32.gmra.mxu0 %v7151
        %v7419 = vpop.f32.mrf.mxu0
        %v7420 = vpop.f32.mrf.mxu0
        %7421 = vmatprep.mubr.f32.mxu0 0.0
        %7422 = vmatmul.mubr.f32.gmra.mxu0 %v7154
        %v7423 = vpop.f32.mrf.mxu0
        %v7424 = vadd.f32 0.0, %v7423
        %v7425 = vpop.f32.mrf.mxu0
        %7426 = vmatprep.mubr.f32.mxu0 0.0
        %7427 = vmatmul.mubr.f32.gmra.mxu0 %v7157
        %v7428 = vpop.f32.mrf.mxu0
        %v7429 = vadd.f32 0.0, %v7428
        %v7430 = vpop.f32.mrf.mxu0
        %7431 = vmatprep.mubr.f32.mxu0 0.0
        %7432 = vmatmul.mubr.f32.gmra.mxu0 %v7160
        %v7433 = vpop.f32.mrf.mxu0
        %v7434 = vpop.f32.mrf.mxu0
        %7435 = vmatprep.mubr.f32.mxu0 0.0
        %7436 = vmatmul.mubr.f32.gmra.mxu0 %v7163
        %v7437 = vpop.f32.mrf.mxu0
        %v7438 = vadd.f32 0.0, %v7437
        %v7439 = vpop.f32.mrf.mxu0
        %7440 = vmatprep.mubr.f32.mxu0 0.0
        %7441 = vmatmul.mubr.f32.gmra.mxu0 %v7166
        %v7442 = vpop.f32.mrf.mxu0
        %v7443 = vadd.f32 0.0, %v7442
        %v7444 = vpop.f32.mrf.mxu0
        %7445 = vmatprep.mubr.f32.mxu0 0.0
        %7446 = vmatmul.mubr.f32.gmra.mxu0 %v7169
        %v7447 = vpop.f32.mrf.mxu0
        %v7448 = vpop.f32.mrf.mxu0
        %7449 = vmatprep.mubr.f32.mxu0 0.0
        %7450 = vmatmul.mubr.f32.gmra.mxu0 %v7172
        %v7451 = vpop.f32.mrf.mxu0
        %v7452 = vadd.f32 0.0, %v7451
        %v7453 = vpop.f32.mrf.mxu0
        %7454 = vmatprep.mubr.f32.mxu0 0.0
        %7455 = vmatmul.mubr.f32.gmra.mxu0 %v7175
        %v7456 = vpop.f32.mrf.mxu0
        %v7457 = vadd.f32 0.0, %v7456
        %v7458 = vpop.f32.mrf.mxu0
        %7459 = vmatprep.mubr.f32.mxu0 0.0
        %7460 = vmatmul.mubr.f32.gmra.mxu0 %v7178
        %v7461 = vpop.f32.mrf.mxu0
        %v7462 = vpop.f32.mrf.mxu0
        %7463 = vmatprep.mubr.f32.mxu0 0.0
        %7464 = vmatmul.mubr.f32.gmra.mxu0 %v7181
        %v7465 = vpop.f32.mrf.mxu0
        %v7466 = vadd.f32 0.0, %v7465
        %v7467 = vpop.f32.mrf.mxu0
        %7468 = vmatprep.mubr.f32.mxu0 0.0
        %7469 = vmatmul.mubr.f32.gmra.mxu0 %v7184
        %v7470 = vpop.f32.mrf.mxu0
        %v7471 = vadd.f32 0.0, %v7470
        %v7472 = vpop.f32.mrf.mxu0
        %7473 = vmatprep.mubr.f32.mxu0 0.0
        %7474 = vmatmul.mubr.f32.gmra.mxu0 %v7187
        %v7475 = vpop.f32.mrf.mxu0
        %v7476 = vpop.f32.mrf.mxu0
        %7477 = vdwg.mxu0
        %v7478 = vadd.f32 %v6956, %v7256
        %v7479 = vadd.f32 %v6957, %v7261
        %v7480 = vadd.f32 %v6958, %v7270
        %v7481 = vadd.f32 %v6959, %v7275
        %v7482 = vadd.f32 %v6960, %v7284
        %v7483 = vadd.f32 %v6961, %v7289
        %v7484 = vadd.f32 %v6962, %v7298
        %v7485 = vadd.f32 %v6963, %v7303
        %v7486 = vadd.f32 %v6964, %v7312
        %v7487 = vadd.f32 %v6965, %v7317
        %v7488 = vadd.f32 %v6966, %v7326
        %v7489 = vadd.f32 %v6967, %v7331
        %v7490 = vadd.f32 %v6968, %v7340
        %v7491 = vadd.f32 %v6969, %v7345
        %v7492 = vadd.f32 %v6970, %v7354
        %v7493 = vadd.f32 %v6971, %v7359
        %v7494 = vadd.f32 %v6972, %v7368
        %v7495 = vadd.f32 %v6973, %v7373
        %v7496 = vadd.f32 %v6974, %v7382
        %v7497 = vadd.f32 %v6975, %v7387
        %v7498 = vadd.f32 %v6976, %v7396
        %v7499 = vadd.f32 %v6977, %v7401
        %v7500 = vadd.f32 %v6978, %v7410
        %v7501 = vadd.f32 %v6979, %v7415
        %v7502 = vadd.f32 %v6980, %v7424
        %v7503 = vadd.f32 %v6981, %v7429
        %v7504 = vadd.f32 %v6982, %v7438
        %v7505 = vadd.f32 %v6983, %v7443
        %v7506 = vadd.f32 %v6984, %v7452
        %v7507 = vadd.f32 %v6985, %v7457
        %v7508 = vadd.f32 %v6986, %v7466
        %v7509 = vadd.f32 %v6987, %v7471
        %v7510 = vld [vmem:[#allocation3 + $0x20] sm:$0xff]
        %v7511 = vld [vmem:[#allocation3 + $0x28] sm:$0xff]
        %v7512 = vld [vmem:[#allocation3 + $0x30] sm:$0xff]
        %v7513 = vld [vmem:[#allocation3 + $0x38] sm:$0xff]
        %v7514 = vld [vmem:[#allocation3 + $0x40] sm:$0xff]
        %v7515 = vld [vmem:[#allocation3 + $0x48] sm:$0xff]
        %v7516 = vld [vmem:[#allocation3 + $0x50] sm:$0xff]
        %v7517 = vld [vmem:[#allocation3 + $0x58] sm:$0xff]
        %v7518 = vld [vmem:[#allocation3 + $0x60] sm:$0xff]
        %v7519 = vld [vmem:[#allocation3 + $0x68] sm:$0xff]
        %v7520 = vld [vmem:[#allocation3 + $0x70] sm:$0xff]
        %v7521 = vld [vmem:[#allocation3 + $0x78] sm:$0xff]
        %v7522 = vld [vmem:[#allocation3 + $0x80] sm:$0xff]
        %v7523 = vld [vmem:[#allocation3 + $0x88] sm:$0xff]
        %v7524 = vld [vmem:[#allocation3 + $0x90] sm:$0xff]
        %v7525 = vld [vmem:[#allocation3 + $0x98] sm:$0xff]
        %v7526 = vld [vmem:[#allocation3 + $0xa0] sm:$0xff]
        %v7527 = vld [vmem:[#allocation3 + $0xa8] sm:$0xff]
        %v7528 = vld [vmem:[#allocation3 + $0xb0] sm:$0xff]
        %v7529 = vld [vmem:[#allocation3 + $0xb8] sm:$0xff]
        %v7530 = vld [vmem:[#allocation3 + $0xc0] sm:$0xff]
        %v7531 = vld [vmem:[#allocation3 + $0xc8] sm:$0xff]
        %v7532 = vld [vmem:[#allocation3 + $0xd0] sm:$0xff]
        %v7533 = vld [vmem:[#allocation3 + $0xd8] sm:$0xff]
        %v7534 = vld [vmem:[#allocation3 + $0xe0] sm:$0xff]
        %v7535 = vld [vmem:[#allocation3 + $0xe8] sm:$0xff]
        %v7536 = vld [vmem:[#allocation3 + $0xf0] sm:$0xff]
        %v7537 = vld [vmem:[#allocation3 + $0xf8] sm:$0xff]
        %v7538 = vld [vmem:[#allocation3 + $0x100] sm:$0xff]
        %v7539 = vld [vmem:[#allocation3 + $0x108] sm:$0xff]
        %v7540 = vld [vmem:[#allocation3 + $0x110] sm:$0xff]
        %v7541 = vld [vmem:[#allocation3 + $0x118] sm:$0xff]
        %v7542 = vld [vmem:[#allocation3 + $0x120] sm:$0xff]
        %v7543 = vld [vmem:[#allocation3 + $0x128] sm:$0xff]
        %v7544 = vld [vmem:[#allocation3 + $0x130] sm:$0xff]
        %v7545 = vld [vmem:[#allocation3 + $0x138] sm:$0xff]
        %v7546 = vld [vmem:[#allocation3 + $0x140] sm:$0xff]
        %v7547 = vld [vmem:[#allocation3 + $0x148] sm:$0xff]
        %v7548 = vld [vmem:[#allocation3 + $0x150] sm:$0xff]
        %v7549 = vld [vmem:[#allocation3 + $0x158] sm:$0xff]
        %v7550 = vld [vmem:[#allocation3 + $0x160] sm:$0xff]
        %v7551 = vld [vmem:[#allocation3 + $0x168] sm:$0xff]
        %v7552 = vld [vmem:[#allocation3 + $0x170] sm:$0xff]
        %v7553 = vld [vmem:[#allocation3 + $0x178] sm:$0xff]
        %v7554 = vld [vmem:[#allocation3 + $0x180] sm:$0xff]
        %v7555 = vld [vmem:[#allocation3 + $0x188] sm:$0xff]
        %v7556 = vld [vmem:[#allocation3 + $0x190] sm:$0xff]
        %v7557 = vld [vmem:[#allocation3 + $0x198] sm:$0xff]
        %s7558 = scalar_lea.vmem [#allocation4], 256
        %v7559 = vld [vmem:[%s7558] sm:$0xff]
        %v7560 = vld [vmem:[%s7558 + $0x8] sm:$0xff]
        %v7561 = vld [vmem:[%s7558 + $0x10] sm:$0xff]
        %v7562 = vld [vmem:[%s7558 + $0x18] sm:$0xff]
        %v7563 = vld [vmem:[%s7558 + $0x20] sm:$0xff]
        %v7564 = vld [vmem:[%s7558 + $0x28] sm:$0xff]
        %v7565 = vld [vmem:[%s7558 + $0x30] sm:$0xff]
        %v7566 = vld [vmem:[%s7558 + $0x38] sm:$0xff]
        %v7568 = vsel %vm240, %v7510, 0
        %v7571 = vsel %vm240, %v7511, 0
        %v7574 = vsel %vm240, %v7512, 0
        %v7577 = vsel %vm240, %v7513, 0
        %v7580 = vsel %vm240, %v7514, 0
        %v7583 = vsel %vm240, %v7515, 0
        %v7586 = vsel %vm240, %v7516, 0
        %v7589 = vsel %vm240, %v7517, 0
        %v7592 = vsel %vm240, %v7518, 0
        %v7595 = vsel %vm240, %v7519, 0
        %v7598 = vsel %vm240, %v7520, 0
        %v7601 = vsel %vm240, %v7521, 0
        %v7604 = vsel %vm240, %v7522, 0
        %v7607 = vsel %vm240, %v7523, 0
        %v7610 = vsel %vm240, %v7524, 0
        %v7613 = vsel %vm240, %v7525, 0
        %v7616 = vsel %vm240, %v7526, 0
        %v7619 = vsel %vm240, %v7527, 0
        %v7622 = vsel %vm240, %v7528, 0
        %v7625 = vsel %vm240, %v7529, 0
        %v7628 = vsel %vm240, %v7530, 0
        %v7631 = vsel %vm240, %v7531, 0
        %v7634 = vsel %vm240, %v7532, 0
        %v7637 = vsel %vm240, %v7533, 0
        %v7640 = vsel %vm240, %v7534, 0
        %v7643 = vsel %vm240, %v7535, 0
        %v7646 = vsel %vm240, %v7536, 0
        %v7649 = vsel %vm240, %v7537, 0
        %v7652 = vsel %vm240, %v7538, 0
        %v7655 = vsel %vm240, %v7539, 0
        %v7658 = vsel %vm240, %v7540, 0
        %v7661 = vsel %vm240, %v7541, 0
        %v7664 = vsel %vm240, %v7542, 0
        %v7667 = vsel %vm240, %v7543, 0
        %v7670 = vsel %vm240, %v7544, 0
        %v7673 = vsel %vm240, %v7545, 0
        %v7676 = vsel %vm240, %v7546, 0
        %v7679 = vsel %vm240, %v7547, 0
        %v7682 = vsel %vm240, %v7548, 0
        %v7685 = vsel %vm240, %v7549, 0
        %v7688 = vsel %vm240, %v7550, 0
        %v7691 = vsel %vm240, %v7551, 0
        %v7694 = vsel %vm240, %v7552, 0
        %v7697 = vsel %vm240, %v7553, 0
        %v7700 = vsel %vm240, %v7554, 0
        %v7703 = vsel %vm240, %v7555, 0
        %v7706 = vsel %vm240, %v7556, 0
        %v7709 = vsel %vm240, %v7557, 0
        %7711 = vmatprep.subr.mxu0 0.0
        %7712 = vmatpush1.msra.mxu0 0.0
        %7713 = vmatprep.subr.mxu0 0.0
        %7714 = vmatpush1.msra.mxu0 0.0
        %7715 = vmatprep.subr.mxu0 0.0
        %7716 = vmatpush1.msra.mxu0 0.0
        %7717 = vmatprep.subr.mxu0 0.0
        %7718 = vmatpush1.msra.mxu0 0.0
        %7719 = vmatprep.subr.mxu0 0.0
        %7720 = vmatpush1.msra.mxu0 0.0
        %7721 = vmatprep.subr.mxu0 0.0
        %7722 = vmatpush1.msra.mxu0 0.0
        %7723 = vmatprep.subr.mxu0 0.0
        %7724 = vmatpush1.msra.mxu0 0.0
        %7725 = vmatprep.subr.mxu0 0.0
        %7726 = vmatpush1.msra.mxu0 0.0
        %7727 = vmatprep.subr.mxu0 0.0
        %7728 = vmatpush1.msra.mxu0 %v7566
        %7729 = vmatprep.subr.mxu0 0.0
        %7730 = vmatpush1.msra.mxu0 %v7565
        %7731 = vmatprep.subr.mxu0 0.0
        %7732 = vmatpush1.msra.mxu0 %v7564
        %7733 = vmatprep.subr.mxu0 0.0
        %7734 = vmatpush1.msra.mxu0 %v7563
        %7735 = vmatprep.subr.mxu0 0.0
        %7736 = vmatpush1.msra.mxu0 %v7562
        %7737 = vmatprep.subr.mxu0 0.0
        %7738 = vmatpush1.msra.mxu0 %v7561
        %7739 = vmatprep.subr.mxu0 0.0
        %7740 = vmatpush1.msra.mxu0 %v7560
        %7741 = vmatprep.subr.mxu0 0.0
        %7742 = vmatpush1.msra.mxu0 %v7559
        %7743 = vmatprep.subr.mxu0 0.0
        %7744 = vmatpush2.msra.mxu0 0.0
        %7745 = vmatprep.subr.mxu0 0.0
        %7746 = vmatpush2.msra.mxu0 0.0
        %7747 = vmatprep.subr.mxu0 0.0
        %7748 = vmatpush2.msra.mxu0 0.0
        %7749 = vmatprep.subr.mxu0 0.0
        %7750 = vmatpush2.msra.mxu0 0.0
        %7751 = vmatprep.subr.mxu0 0.0
        %7752 = vmatpush2.msra.mxu0 0.0
        %7753 = vmatprep.subr.mxu0 0.0
        %7754 = vmatpush2.msra.mxu0 0.0
        %7755 = vmatprep.subr.mxu0 0.0
        %7756 = vmatpush2.msra.mxu0 0.0
        %7757 = vmatprep.subr.mxu0 0.0
        %7758 = vmatpush2.msra.mxu0 0.0
        %7759 = vmatprep.subr.mxu0 0.0
        %7760 = vmatpush2.msra.mxu0 0.0
        %7761 = vmatprep.subr.mxu0 0.0
        %7762 = vmatpush2.msra.mxu0 0.0
        %7763 = vmatprep.subr.mxu0 0.0
        %7764 = vmatpush2.msra.mxu0 0.0
        %7765 = vmatprep.subr.mxu0 0.0
        %7766 = vmatpush2.msra.mxu0 0.0
        %7767 = vmatprep.subr.mxu0 0.0
        %7768 = vmatpush2.msra.mxu0 0.0
        %7769 = vmatprep.subr.mxu0 0.0
        %7770 = vmatpush2.msra.mxu0 0.0
        %7771 = vmatprep.subr.mxu0 0.0
        %7772 = vmatpush2.msra.mxu0 0.0
        %7773 = vmatprep.subr.mxu0 0.0
        %7774 = vmatpush2.msra.mxu0 0.0
        %7775 = vmatprep.mubr.f32.mxu0 0.0
        %7776 = vmatmul.mubr.f32.gmra.mxu0 %v7568
        %v7777 = vpop.f32.mrf.mxu0
        %v7778 = vadd.f32 0.0, %v7777
        %v7779 = vpop.f32.mrf.mxu0
        %7780 = vmatprep.mubr.f32.mxu0 0.0
        %7781 = vmatmul.mubr.f32.gmra.mxu0 %v7571
        %v7782 = vpop.f32.mrf.mxu0
        %v7783 = vadd.f32 0.0, %v7782
        %v7784 = vpop.f32.mrf.mxu0
        %7785 = vmatprep.mubr.f32.mxu0 0.0
        %7786 = vmatmul.mubr.f32.gmra.mxu0 %v7574
        %v7787 = vpop.f32.mrf.mxu0
        %v7788 = vpop.f32.mrf.mxu0
        %7789 = vmatprep.mubr.f32.mxu0 0.0
        %7790 = vmatmul.mubr.f32.gmra.mxu0 %v7577
        %v7791 = vpop.f32.mrf.mxu0
        %v7792 = vadd.f32 0.0, %v7791
        %v7793 = vpop.f32.mrf.mxu0
        %7794 = vmatprep.mubr.f32.mxu0 0.0
        %7795 = vmatmul.mubr.f32.gmra.mxu0 %v7580
        %v7796 = vpop.f32.mrf.mxu0
        %v7797 = vadd.f32 0.0, %v7796
        %v7798 = vpop.f32.mrf.mxu0
        %7799 = vmatprep.mubr.f32.mxu0 0.0
        %7800 = vmatmul.mubr.f32.gmra.mxu0 %v7583
        %v7801 = vpop.f32.mrf.mxu0
        %v7802 = vpop.f32.mrf.mxu0
        %7803 = vmatprep.mubr.f32.mxu0 0.0
        %7804 = vmatmul.mubr.f32.gmra.mxu0 %v7586
        %v7805 = vpop.f32.mrf.mxu0
        %v7806 = vadd.f32 0.0, %v7805
        %v7807 = vpop.f32.mrf.mxu0
        %7808 = vmatprep.mubr.f32.mxu0 0.0
        %7809 = vmatmul.mubr.f32.gmra.mxu0 %v7589
        %v7810 = vpop.f32.mrf.mxu0
        %v7811 = vadd.f32 0.0, %v7810
        %v7812 = vpop.f32.mrf.mxu0
        %7813 = vmatprep.mubr.f32.mxu0 0.0
        %7814 = vmatmul.mubr.f32.gmra.mxu0 %v7592
        %v7815 = vpop.f32.mrf.mxu0
        %v7816 = vpop.f32.mrf.mxu0
        %7817 = vmatprep.mubr.f32.mxu0 0.0
        %7818 = vmatmul.mubr.f32.gmra.mxu0 %v7595
        %v7819 = vpop.f32.mrf.mxu0
        %v7820 = vadd.f32 0.0, %v7819
        %v7821 = vpop.f32.mrf.mxu0
        %7822 = vmatprep.mubr.f32.mxu0 0.0
        %7823 = vmatmul.mubr.f32.gmra.mxu0 %v7598
        %v7824 = vpop.f32.mrf.mxu0
        %v7825 = vadd.f32 0.0, %v7824
        %v7826 = vpop.f32.mrf.mxu0
        %7827 = vmatprep.mubr.f32.mxu0 0.0
        %7828 = vmatmul.mubr.f32.gmra.mxu0 %v7601
        %v7829 = vpop.f32.mrf.mxu0
        %v7830 = vpop.f32.mrf.mxu0
        %7831 = vmatprep.mubr.f32.mxu0 0.0
        %7832 = vmatmul.mubr.f32.gmra.mxu0 %v7604
        %v7833 = vpop.f32.mrf.mxu0
        %v7834 = vadd.f32 0.0, %v7833
        %v7835 = vpop.f32.mrf.mxu0
        %7836 = vmatprep.mubr.f32.mxu0 0.0
        %7837 = vmatmul.mubr.f32.gmra.mxu0 %v7607
        %v7838 = vpop.f32.mrf.mxu0
        %v7839 = vadd.f32 0.0, %v7838
        %v7840 = vpop.f32.mrf.mxu0
        %7841 = vmatprep.mubr.f32.mxu0 0.0
        %7842 = vmatmul.mubr.f32.gmra.mxu0 %v7610
        %v7843 = vpop.f32.mrf.mxu0
        %v7844 = vpop.f32.mrf.mxu0
        %7845 = vmatprep.mubr.f32.mxu0 0.0
        %7846 = vmatmul.mubr.f32.gmra.mxu0 %v7613
        %v7847 = vpop.f32.mrf.mxu0
        %v7848 = vadd.f32 0.0, %v7847
        %v7849 = vpop.f32.mrf.mxu0
        %7850 = vmatprep.mubr.f32.mxu0 0.0
        %7851 = vmatmul.mubr.f32.gmra.mxu0 %v7616
        %v7852 = vpop.f32.mrf.mxu0
        %v7853 = vadd.f32 0.0, %v7852
        %v7854 = vpop.f32.mrf.mxu0
        %7855 = vmatprep.mubr.f32.mxu0 0.0
        %7856 = vmatmul.mubr.f32.gmra.mxu0 %v7619
        %v7857 = vpop.f32.mrf.mxu0
        %v7858 = vpop.f32.mrf.mxu0
        %7859 = vmatprep.mubr.f32.mxu0 0.0
        %7860 = vmatmul.mubr.f32.gmra.mxu0 %v7622
        %v7861 = vpop.f32.mrf.mxu0
        %v7862 = vadd.f32 0.0, %v7861
        %v7863 = vpop.f32.mrf.mxu0
        %7864 = vmatprep.mubr.f32.mxu0 0.0
        %7865 = vmatmul.mubr.f32.gmra.mxu0 %v7625
        %v7866 = vpop.f32.mrf.mxu0
        %v7867 = vadd.f32 0.0, %v7866
        %v7868 = vpop.f32.mrf.mxu0
        %7869 = vmatprep.mubr.f32.mxu0 0.0
        %7870 = vmatmul.mubr.f32.gmra.mxu0 %v7628
        %v7871 = vpop.f32.mrf.mxu0
        %v7872 = vpop.f32.mrf.mxu0
        %7873 = vmatprep.mubr.f32.mxu0 0.0
        %7874 = vmatmul.mubr.f32.gmra.mxu0 %v7631
        %v7875 = vpop.f32.mrf.mxu0
        %v7876 = vadd.f32 0.0, %v7875
        %v7877 = vpop.f32.mrf.mxu0
        %7878 = vmatprep.mubr.f32.mxu0 0.0
        %7879 = vmatmul.mubr.f32.gmra.mxu0 %v7634
        %v7880 = vpop.f32.mrf.mxu0
        %v7881 = vadd.f32 0.0, %v7880
        %v7882 = vpop.f32.mrf.mxu0
        %7883 = vmatprep.mubr.f32.mxu0 0.0
        %7884 = vmatmul.mubr.f32.gmra.mxu0 %v7637
        %v7885 = vpop.f32.mrf.mxu0
        %v7886 = vpop.f32.mrf.mxu0
        %7887 = vmatprep.mubr.f32.mxu0 0.0
        %7888 = vmatmul.mubr.f32.gmra.mxu0 %v7640
        %v7889 = vpop.f32.mrf.mxu0
        %v7890 = vadd.f32 0.0, %v7889
        %v7891 = vpop.f32.mrf.mxu0
        %7892 = vmatprep.mubr.f32.mxu0 0.0
        %7893 = vmatmul.mubr.f32.gmra.mxu0 %v7643
        %v7894 = vpop.f32.mrf.mxu0
        %v7895 = vadd.f32 0.0, %v7894
        %v7896 = vpop.f32.mrf.mxu0
        %7897 = vmatprep.mubr.f32.mxu0 0.0
        %7898 = vmatmul.mubr.f32.gmra.mxu0 %v7646
        %v7899 = vpop.f32.mrf.mxu0
        %v7900 = vpop.f32.mrf.mxu0
        %7901 = vmatprep.mubr.f32.mxu0 0.0
        %7902 = vmatmul.mubr.f32.gmra.mxu0 %v7649
        %v7903 = vpop.f32.mrf.mxu0
        %v7904 = vadd.f32 0.0, %v7903
        %v7905 = vpop.f32.mrf.mxu0
        %7906 = vmatprep.mubr.f32.mxu0 0.0
        %7907 = vmatmul.mubr.f32.gmra.mxu0 %v7652
        %v7908 = vpop.f32.mrf.mxu0
        %v7909 = vadd.f32 0.0, %v7908
        %v7910 = vpop.f32.mrf.mxu0
        %7911 = vmatprep.mubr.f32.mxu0 0.0
        %7912 = vmatmul.mubr.f32.gmra.mxu0 %v7655
        %v7913 = vpop.f32.mrf.mxu0
        %v7914 = vpop.f32.mrf.mxu0
        %7915 = vmatprep.mubr.f32.mxu0 0.0
        %7916 = vmatmul.mubr.f32.gmra.mxu0 %v7658
        %v7917 = vpop.f32.mrf.mxu0
        %v7918 = vadd.f32 0.0, %v7917
        %v7919 = vpop.f32.mrf.mxu0
        %7920 = vmatprep.mubr.f32.mxu0 0.0
        %7921 = vmatmul.mubr.f32.gmra.mxu0 %v7661
        %v7922 = vpop.f32.mrf.mxu0
        %v7923 = vadd.f32 0.0, %v7922
        %v7924 = vpop.f32.mrf.mxu0
        %7925 = vmatprep.mubr.f32.mxu0 0.0
        %7926 = vmatmul.mubr.f32.gmra.mxu0 %v7664
        %v7927 = vpop.f32.mrf.mxu0
        %v7928 = vpop.f32.mrf.mxu0
        %7929 = vmatprep.mubr.f32.mxu0 0.0
        %7930 = vmatmul.mubr.f32.gmra.mxu0 %v7667
        %v7931 = vpop.f32.mrf.mxu0
        %v7932 = vadd.f32 0.0, %v7931
        %v7933 = vpop.f32.mrf.mxu0
        %7934 = vmatprep.mubr.f32.mxu0 0.0
        %7935 = vmatmul.mubr.f32.gmra.mxu0 %v7670
        %v7936 = vpop.f32.mrf.mxu0
        %v7937 = vadd.f32 0.0, %v7936
        %v7938 = vpop.f32.mrf.mxu0
        %7939 = vmatprep.mubr.f32.mxu0 0.0
        %7940 = vmatmul.mubr.f32.gmra.mxu0 %v7673
        %v7941 = vpop.f32.mrf.mxu0
        %v7942 = vpop.f32.mrf.mxu0
        %7943 = vmatprep.mubr.f32.mxu0 0.0
        %7944 = vmatmul.mubr.f32.gmra.mxu0 %v7676
        %v7945 = vpop.f32.mrf.mxu0
        %v7946 = vadd.f32 0.0, %v7945
        %v7947 = vpop.f32.mrf.mxu0
        %7948 = vmatprep.mubr.f32.mxu0 0.0
        %7949 = vmatmul.mubr.f32.gmra.mxu0 %v7679
        %v7950 = vpop.f32.mrf.mxu0
        %v7951 = vadd.f32 0.0, %v7950
        %v7952 = vpop.f32.mrf.mxu0
        %7953 = vmatprep.mubr.f32.mxu0 0.0
        %7954 = vmatmul.mubr.f32.gmra.mxu0 %v7682
        %v7955 = vpop.f32.mrf.mxu0
        %v7956 = vpop.f32.mrf.mxu0
        %7957 = vmatprep.mubr.f32.mxu0 0.0
        %7958 = vmatmul.mubr.f32.gmra.mxu0 %v7685
        %v7959 = vpop.f32.mrf.mxu0
        %v7960 = vadd.f32 0.0, %v7959
        %v7961 = vpop.f32.mrf.mxu0
        %7962 = vmatprep.mubr.f32.mxu0 0.0
        %7963 = vmatmul.mubr.f32.gmra.mxu0 %v7688
        %v7964 = vpop.f32.mrf.mxu0
        %v7965 = vadd.f32 0.0, %v7964
        %v7966 = vpop.f32.mrf.mxu0
        %7967 = vmatprep.mubr.f32.mxu0 0.0
        %7968 = vmatmul.mubr.f32.gmra.mxu0 %v7691
        %v7969 = vpop.f32.mrf.mxu0
        %v7970 = vpop.f32.mrf.mxu0
        %7971 = vmatprep.mubr.f32.mxu0 0.0
        %7972 = vmatmul.mubr.f32.gmra.mxu0 %v7694
        %v7973 = vpop.f32.mrf.mxu0
        %v7974 = vadd.f32 0.0, %v7973
        %v7975 = vpop.f32.mrf.mxu0
        %7976 = vmatprep.mubr.f32.mxu0 0.0
        %7977 = vmatmul.mubr.f32.gmra.mxu0 %v7697
        %v7978 = vpop.f32.mrf.mxu0
        %v7979 = vadd.f32 0.0, %v7978
        %v7980 = vpop.f32.mrf.mxu0
        %7981 = vmatprep.mubr.f32.mxu0 0.0
        %7982 = vmatmul.mubr.f32.gmra.mxu0 %v7700
        %v7983 = vpop.f32.mrf.mxu0
        %v7984 = vpop.f32.mrf.mxu0
        %7985 = vmatprep.mubr.f32.mxu0 0.0
        %7986 = vmatmul.mubr.f32.gmra.mxu0 %v7703
        %v7987 = vpop.f32.mrf.mxu0
        %v7988 = vadd.f32 0.0, %v7987
        %v7989 = vpop.f32.mrf.mxu0
        %7990 = vmatprep.mubr.f32.mxu0 0.0
        %7991 = vmatmul.mubr.f32.gmra.mxu0 %v7706
        %v7992 = vpop.f32.mrf.mxu0
        %v7993 = vadd.f32 0.0, %v7992
        %v7994 = vpop.f32.mrf.mxu0
        %7995 = vmatprep.mubr.f32.mxu0 0.0
        %7996 = vmatmul.mubr.f32.gmra.mxu0 %v7709
        %v7997 = vpop.f32.mrf.mxu0
        %v7998 = vpop.f32.mrf.mxu0
        %7999 = vdwg.mxu0
        %v8000 = vadd.f32 %v7478, %v7778
        %v8001 = vadd.f32 %v7479, %v7783
        %v8002 = vadd.f32 %v7480, %v7792
        %v8003 = vadd.f32 %v7481, %v7797
        %v8004 = vadd.f32 %v7482, %v7806
        %v8005 = vadd.f32 %v7483, %v7811
        %v8006 = vadd.f32 %v7484, %v7820
        %v8007 = vadd.f32 %v7485, %v7825
        %v8008 = vadd.f32 %v7486, %v7834
        %v8009 = vadd.f32 %v7487, %v7839
        %v8010 = vadd.f32 %v7488, %v7848
        %v8011 = vadd.f32 %v7489, %v7853
        %v8012 = vadd.f32 %v7490, %v7862
        %v8013 = vadd.f32 %v7491, %v7867
        %v8014 = vadd.f32 %v7492, %v7876
        %v8015 = vadd.f32 %v7493, %v7881
        %v8016 = vadd.f32 %v7494, %v7890
        %v8017 = vadd.f32 %v7495, %v7895
        %v8018 = vadd.f32 %v7496, %v7904
        %v8019 = vadd.f32 %v7497, %v7909
        %v8020 = vadd.f32 %v7498, %v7918
        %v8021 = vadd.f32 %v7499, %v7923
        %v8022 = vadd.f32 %v7500, %v7932
        %v8023 = vadd.f32 %v7501, %v7937
        %v8024 = vadd.f32 %v7502, %v7946
        %v8025 = vadd.f32 %v7503, %v7951
        %v8026 = vadd.f32 %v7504, %v7960
        %v8027 = vadd.f32 %v7505, %v7965
        %v8028 = vadd.f32 %v7506, %v7974
        %v8029 = vadd.f32 %v7507, %v7979
        %v8030 = vadd.f32 %v7508, %v7988
        %v8031 = vadd.f32 %v7509, %v7993
        %v8032 = vld [vmem:[#allocation3 + $0x21] sm:$0xff]
        %v8033 = vld [vmem:[#allocation3 + $0x29] sm:$0xff]
        %v8034 = vld [vmem:[#allocation3 + $0x31] sm:$0xff]
        %v8035 = vld [vmem:[#allocation3 + $0x39] sm:$0xff]
        %v8036 = vld [vmem:[#allocation3 + $0x41] sm:$0xff]
        %v8037 = vld [vmem:[#allocation3 + $0x49] sm:$0xff]
        %v8038 = vld [vmem:[#allocation3 + $0x51] sm:$0xff]
        %v8039 = vld [vmem:[#allocation3 + $0x59] sm:$0xff]
        %v8040 = vld [vmem:[#allocation3 + $0x61] sm:$0xff]
        %v8041 = vld [vmem:[#allocation3 + $0x69] sm:$0xff]
        %v8042 = vld [vmem:[#allocation3 + $0x71] sm:$0xff]
        %v8043 = vld [vmem:[#allocation3 + $0x79] sm:$0xff]
        %v8044 = vld [vmem:[#allocation3 + $0x81] sm:$0xff]
        %v8045 = vld [vmem:[#allocation3 + $0x89] sm:$0xff]
        %v8046 = vld [vmem:[#allocation3 + $0x91] sm:$0xff]
        %v8047 = vld [vmem:[#allocation3 + $0x99] sm:$0xff]
        %v8048 = vld [vmem:[#allocation3 + $0xa1] sm:$0xff]
        %v8049 = vld [vmem:[#allocation3 + $0xa9] sm:$0xff]
        %v8050 = vld [vmem:[#allocation3 + $0xb1] sm:$0xff]
        %v8051 = vld [vmem:[#allocation3 + $0xb9] sm:$0xff]
        %v8052 = vld [vmem:[#allocation3 + $0xc1] sm:$0xff]
        %v8053 = vld [vmem:[#allocation3 + $0xc9] sm:$0xff]
        %v8054 = vld [vmem:[#allocation3 + $0xd1] sm:$0xff]
        %v8055 = vld [vmem:[#allocation3 + $0xd9] sm:$0xff]
        %v8056 = vld [vmem:[#allocation3 + $0xe1] sm:$0xff]
        %v8057 = vld [vmem:[#allocation3 + $0xe9] sm:$0xff]
        %v8058 = vld [vmem:[#allocation3 + $0xf1] sm:$0xff]
        %v8059 = vld [vmem:[#allocation3 + $0xf9] sm:$0xff]
        %v8060 = vld [vmem:[#allocation3 + $0x101] sm:$0xff]
        %v8061 = vld [vmem:[#allocation3 + $0x109] sm:$0xff]
        %v8062 = vld [vmem:[#allocation3 + $0x111] sm:$0xff]
        %v8063 = vld [vmem:[#allocation3 + $0x119] sm:$0xff]
        %v8064 = vld [vmem:[#allocation3 + $0x121] sm:$0xff]
        %v8065 = vld [vmem:[#allocation3 + $0x129] sm:$0xff]
        %v8066 = vld [vmem:[#allocation3 + $0x131] sm:$0xff]
        %v8067 = vld [vmem:[#allocation3 + $0x139] sm:$0xff]
        %v8068 = vld [vmem:[#allocation3 + $0x141] sm:$0xff]
        %v8069 = vld [vmem:[#allocation3 + $0x149] sm:$0xff]
        %v8070 = vld [vmem:[#allocation3 + $0x151] sm:$0xff]
        %v8071 = vld [vmem:[#allocation3 + $0x159] sm:$0xff]
        %v8072 = vld [vmem:[#allocation3 + $0x161] sm:$0xff]
        %v8073 = vld [vmem:[#allocation3 + $0x169] sm:$0xff]
        %v8074 = vld [vmem:[#allocation3 + $0x171] sm:$0xff]
        %v8075 = vld [vmem:[#allocation3 + $0x179] sm:$0xff]
        %v8076 = vld [vmem:[#allocation3 + $0x181] sm:$0xff]
        %v8077 = vld [vmem:[#allocation3 + $0x189] sm:$0xff]
        %v8078 = vld [vmem:[#allocation3 + $0x191] sm:$0xff]
        %v8079 = vld [vmem:[#allocation3 + $0x199] sm:$0xff]
        %s8080 = scalar_lea.vmem [#allocation4], 320
        %v8081 = vld [vmem:[%s8080] sm:$0xff]
        %v8082 = vld [vmem:[%s8080 + $0x8] sm:$0xff]
        %v8083 = vld [vmem:[%s8080 + $0x10] sm:$0xff]
        %v8084 = vld [vmem:[%s8080 + $0x18] sm:$0xff]
        %v8085 = vld [vmem:[%s8080 + $0x20] sm:$0xff]
        %v8086 = vld [vmem:[%s8080 + $0x28] sm:$0xff]
        %v8087 = vld [vmem:[%s8080 + $0x30] sm:$0xff]
        %v8088 = vld [vmem:[%s8080 + $0x38] sm:$0xff]
        %v8090 = vsel %vm240, %v8032, 0
        %v8093 = vsel %vm240, %v8033, 0
        %v8096 = vsel %vm240, %v8034, 0
        %v8099 = vsel %vm240, %v8035, 0
        %v8102 = vsel %vm240, %v8036, 0
        %v8105 = vsel %vm240, %v8037, 0
        %v8108 = vsel %vm240, %v8038, 0
        %v8111 = vsel %vm240, %v8039, 0
        %v8114 = vsel %vm240, %v8040, 0
        %v8117 = vsel %vm240, %v8041, 0
        %v8120 = vsel %vm240, %v8042, 0
        %v8123 = vsel %vm240, %v8043, 0
        %v8126 = vsel %vm240, %v8044, 0
        %v8129 = vsel %vm240, %v8045, 0
        %v8132 = vsel %vm240, %v8046, 0
        %v8135 = vsel %vm240, %v8047, 0
        %v8138 = vsel %vm240, %v8048, 0
        %v8141 = vsel %vm240, %v8049, 0
        %v8144 = vsel %vm240, %v8050, 0
        %v8147 = vsel %vm240, %v8051, 0
        %v8150 = vsel %vm240, %v8052, 0
        %v8153 = vsel %vm240, %v8053, 0
        %v8156 = vsel %vm240, %v8054, 0
        %v8159 = vsel %vm240, %v8055, 0
        %v8162 = vsel %vm240, %v8056, 0
        %v8165 = vsel %vm240, %v8057, 0
        %v8168 = vsel %vm240, %v8058, 0
        %v8171 = vsel %vm240, %v8059, 0
        %v8174 = vsel %vm240, %v8060, 0
        %v8177 = vsel %vm240, %v8061, 0
        %v8180 = vsel %vm240, %v8062, 0
        %v8183 = vsel %vm240, %v8063, 0
        %v8186 = vsel %vm240, %v8064, 0
        %v8189 = vsel %vm240, %v8065, 0
        %v8192 = vsel %vm240, %v8066, 0
        %v8195 = vsel %vm240, %v8067, 0
        %v8198 = vsel %vm240, %v8068, 0
        %v8201 = vsel %vm240, %v8069, 0
        %v8204 = vsel %vm240, %v8070, 0
        %v8207 = vsel %vm240, %v8071, 0
        %v8210 = vsel %vm240, %v8072, 0
        %v8213 = vsel %vm240, %v8073, 0
        %v8216 = vsel %vm240, %v8074, 0
        %v8219 = vsel %vm240, %v8075, 0
        %v8222 = vsel %vm240, %v8076, 0
        %v8225 = vsel %vm240, %v8077, 0
        %v8228 = vsel %vm240, %v8078, 0
        %v8231 = vsel %vm240, %v8079, 0
        %8233 = vmatprep.subr.mxu0 0.0
        %8234 = vmatpush1.msra.mxu0 0.0
        %8235 = vmatprep.subr.mxu0 0.0
        %8236 = vmatpush1.msra.mxu0 0.0
        %8237 = vmatprep.subr.mxu0 0.0
        %8238 = vmatpush1.msra.mxu0 0.0
        %8239 = vmatprep.subr.mxu0 0.0
        %8240 = vmatpush1.msra.mxu0 0.0
        %8241 = vmatprep.subr.mxu0 0.0
        %8242 = vmatpush1.msra.mxu0 0.0
        %8243 = vmatprep.subr.mxu0 0.0
        %8244 = vmatpush1.msra.mxu0 0.0
        %8245 = vmatprep.subr.mxu0 0.0
        %8246 = vmatpush1.msra.mxu0 0.0
        %8247 = vmatprep.subr.mxu0 0.0
        %8248 = vmatpush1.msra.mxu0 0.0
        %8249 = vmatprep.subr.mxu0 0.0
        %8250 = vmatpush1.msra.mxu0 %v8088
        %8251 = vmatprep.subr.mxu0 0.0
        %8252 = vmatpush1.msra.mxu0 %v8087
        %8253 = vmatprep.subr.mxu0 0.0
        %8254 = vmatpush1.msra.mxu0 %v8086
        %8255 = vmatprep.subr.mxu0 0.0
        %8256 = vmatpush1.msra.mxu0 %v8085
        %8257 = vmatprep.subr.mxu0 0.0
        %8258 = vmatpush1.msra.mxu0 %v8084
        %8259 = vmatprep.subr.mxu0 0.0
        %8260 = vmatpush1.msra.mxu0 %v8083
        %8261 = vmatprep.subr.mxu0 0.0
        %8262 = vmatpush1.msra.mxu0 %v8082
        %8263 = vmatprep.subr.mxu0 0.0
        %8264 = vmatpush1.msra.mxu0 %v8081
        %8265 = vmatprep.subr.mxu0 0.0
        %8266 = vmatpush2.msra.mxu0 0.0
        %8267 = vmatprep.subr.mxu0 0.0
        %8268 = vmatpush2.msra.mxu0 0.0
        %8269 = vmatprep.subr.mxu0 0.0
        %8270 = vmatpush2.msra.mxu0 0.0
        %8271 = vmatprep.subr.mxu0 0.0
        %8272 = vmatpush2.msra.mxu0 0.0
        %8273 = vmatprep.subr.mxu0 0.0
        %8274 = vmatpush2.msra.mxu0 0.0
        %8275 = vmatprep.subr.mxu0 0.0
        %8276 = vmatpush2.msra.mxu0 0.0
        %8277 = vmatprep.subr.mxu0 0.0
        %8278 = vmatpush2.msra.mxu0 0.0
        %8279 = vmatprep.subr.mxu0 0.0
        %8280 = vmatpush2.msra.mxu0 0.0
        %8281 = vmatprep.subr.mxu0 0.0
        %8282 = vmatpush2.msra.mxu0 0.0
        %8283 = vmatprep.subr.mxu0 0.0
        %8284 = vmatpush2.msra.mxu0 0.0
        %8285 = vmatprep.subr.mxu0 0.0
        %8286 = vmatpush2.msra.mxu0 0.0
        %8287 = vmatprep.subr.mxu0 0.0
        %8288 = vmatpush2.msra.mxu0 0.0
        %8289 = vmatprep.subr.mxu0 0.0
        %8290 = vmatpush2.msra.mxu0 0.0
        %8291 = vmatprep.subr.mxu0 0.0
        %8292 = vmatpush2.msra.mxu0 0.0
        %8293 = vmatprep.subr.mxu0 0.0
        %8294 = vmatpush2.msra.mxu0 0.0
        %8295 = vmatprep.subr.mxu0 0.0
        %8296 = vmatpush2.msra.mxu0 0.0
        %8297 = vmatprep.mubr.f32.mxu0 0.0
        %8298 = vmatmul.mubr.f32.gmra.mxu0 %v8090
        %v8299 = vpop.f32.mrf.mxu0
        %v8300 = vadd.f32 0.0, %v8299
        %v8301 = vpop.f32.mrf.mxu0
        %8302 = vmatprep.mubr.f32.mxu0 0.0
        %8303 = vmatmul.mubr.f32.gmra.mxu0 %v8093
        %v8304 = vpop.f32.mrf.mxu0
        %v8305 = vadd.f32 0.0, %v8304
        %v8306 = vpop.f32.mrf.mxu0
        %8307 = vmatprep.mubr.f32.mxu0 0.0
        %8308 = vmatmul.mubr.f32.gmra.mxu0 %v8096
        %v8309 = vpop.f32.mrf.mxu0
        %v8310 = vpop.f32.mrf.mxu0
        %8311 = vmatprep.mubr.f32.mxu0 0.0
        %8312 = vmatmul.mubr.f32.gmra.mxu0 %v8099
        %v8313 = vpop.f32.mrf.mxu0
        %v8314 = vadd.f32 0.0, %v8313
        %v8315 = vpop.f32.mrf.mxu0
        %8316 = vmatprep.mubr.f32.mxu0 0.0
        %8317 = vmatmul.mubr.f32.gmra.mxu0 %v8102
        %v8318 = vpop.f32.mrf.mxu0
        %v8319 = vadd.f32 0.0, %v8318
        %v8320 = vpop.f32.mrf.mxu0
        %8321 = vmatprep.mubr.f32.mxu0 0.0
        %8322 = vmatmul.mubr.f32.gmra.mxu0 %v8105
        %v8323 = vpop.f32.mrf.mxu0
        %v8324 = vpop.f32.mrf.mxu0
        %8325 = vmatprep.mubr.f32.mxu0 0.0
        %8326 = vmatmul.mubr.f32.gmra.mxu0 %v8108
        %v8327 = vpop.f32.mrf.mxu0
        %v8328 = vadd.f32 0.0, %v8327
        %v8329 = vpop.f32.mrf.mxu0
        %8330 = vmatprep.mubr.f32.mxu0 0.0
        %8331 = vmatmul.mubr.f32.gmra.mxu0 %v8111
        %v8332 = vpop.f32.mrf.mxu0
        %v8333 = vadd.f32 0.0, %v8332
        %v8334 = vpop.f32.mrf.mxu0
        %8335 = vmatprep.mubr.f32.mxu0 0.0
        %8336 = vmatmul.mubr.f32.gmra.mxu0 %v8114
        %v8337 = vpop.f32.mrf.mxu0
        %v8338 = vpop.f32.mrf.mxu0
        %8339 = vmatprep.mubr.f32.mxu0 0.0
        %8340 = vmatmul.mubr.f32.gmra.mxu0 %v8117
        %v8341 = vpop.f32.mrf.mxu0
        %v8342 = vadd.f32 0.0, %v8341
        %v8343 = vpop.f32.mrf.mxu0
        %8344 = vmatprep.mubr.f32.mxu0 0.0
        %8345 = vmatmul.mubr.f32.gmra.mxu0 %v8120
        %v8346 = vpop.f32.mrf.mxu0
        %v8347 = vadd.f32 0.0, %v8346
        %v8348 = vpop.f32.mrf.mxu0
        %8349 = vmatprep.mubr.f32.mxu0 0.0
        %8350 = vmatmul.mubr.f32.gmra.mxu0 %v8123
        %v8351 = vpop.f32.mrf.mxu0
        %v8352 = vpop.f32.mrf.mxu0
        %8353 = vmatprep.mubr.f32.mxu0 0.0
        %8354 = vmatmul.mubr.f32.gmra.mxu0 %v8126
        %v8355 = vpop.f32.mrf.mxu0
        %v8356 = vadd.f32 0.0, %v8355
        %v8357 = vpop.f32.mrf.mxu0
        %8358 = vmatprep.mubr.f32.mxu0 0.0
        %8359 = vmatmul.mubr.f32.gmra.mxu0 %v8129
        %v8360 = vpop.f32.mrf.mxu0
        %v8361 = vadd.f32 0.0, %v8360
        %v8362 = vpop.f32.mrf.mxu0
        %8363 = vmatprep.mubr.f32.mxu0 0.0
        %8364 = vmatmul.mubr.f32.gmra.mxu0 %v8132
        %v8365 = vpop.f32.mrf.mxu0
        %v8366 = vpop.f32.mrf.mxu0
        %8367 = vmatprep.mubr.f32.mxu0 0.0
        %8368 = vmatmul.mubr.f32.gmra.mxu0 %v8135
        %v8369 = vpop.f32.mrf.mxu0
        %v8370 = vadd.f32 0.0, %v8369
        %v8371 = vpop.f32.mrf.mxu0
        %8372 = vmatprep.mubr.f32.mxu0 0.0
        %8373 = vmatmul.mubr.f32.gmra.mxu0 %v8138
        %v8374 = vpop.f32.mrf.mxu0
        %v8375 = vadd.f32 0.0, %v8374
        %v8376 = vpop.f32.mrf.mxu0
        %8377 = vmatprep.mubr.f32.mxu0 0.0
        %8378 = vmatmul.mubr.f32.gmra.mxu0 %v8141
        %v8379 = vpop.f32.mrf.mxu0
        %v8380 = vpop.f32.mrf.mxu0
        %8381 = vmatprep.mubr.f32.mxu0 0.0
        %8382 = vmatmul.mubr.f32.gmra.mxu0 %v8144
        %v8383 = vpop.f32.mrf.mxu0
        %v8384 = vadd.f32 0.0, %v8383
        %v8385 = vpop.f32.mrf.mxu0
        %8386 = vmatprep.mubr.f32.mxu0 0.0
        %8387 = vmatmul.mubr.f32.gmra.mxu0 %v8147
        %v8388 = vpop.f32.mrf.mxu0
        %v8389 = vadd.f32 0.0, %v8388
        %v8390 = vpop.f32.mrf.mxu0
        %8391 = vmatprep.mubr.f32.mxu0 0.0
        %8392 = vmatmul.mubr.f32.gmra.mxu0 %v8150
        %v8393 = vpop.f32.mrf.mxu0
        %v8394 = vpop.f32.mrf.mxu0
        %8395 = vmatprep.mubr.f32.mxu0 0.0
        %8396 = vmatmul.mubr.f32.gmra.mxu0 %v8153
        %v8397 = vpop.f32.mrf.mxu0
        %v8398 = vadd.f32 0.0, %v8397
        %v8399 = vpop.f32.mrf.mxu0
        %8400 = vmatprep.mubr.f32.mxu0 0.0
        %8401 = vmatmul.mubr.f32.gmra.mxu0 %v8156
        %v8402 = vpop.f32.mrf.mxu0
        %v8403 = vadd.f32 0.0, %v8402
        %v8404 = vpop.f32.mrf.mxu0
        %8405 = vmatprep.mubr.f32.mxu0 0.0
        %8406 = vmatmul.mubr.f32.gmra.mxu0 %v8159
        %v8407 = vpop.f32.mrf.mxu0
        %v8408 = vpop.f32.mrf.mxu0
        %8409 = vmatprep.mubr.f32.mxu0 0.0
        %8410 = vmatmul.mubr.f32.gmra.mxu0 %v8162
        %v8411 = vpop.f32.mrf.mxu0
        %v8412 = vadd.f32 0.0, %v8411
        %v8413 = vpop.f32.mrf.mxu0
        %8414 = vmatprep.mubr.f32.mxu0 0.0
        %8415 = vmatmul.mubr.f32.gmra.mxu0 %v8165
        %v8416 = vpop.f32.mrf.mxu0
        %v8417 = vadd.f32 0.0, %v8416
        %v8418 = vpop.f32.mrf.mxu0
        %8419 = vmatprep.mubr.f32.mxu0 0.0
        %8420 = vmatmul.mubr.f32.gmra.mxu0 %v8168
        %v8421 = vpop.f32.mrf.mxu0
        %v8422 = vpop.f32.mrf.mxu0
        %8423 = vmatprep.mubr.f32.mxu0 0.0
        %8424 = vmatmul.mubr.f32.gmra.mxu0 %v8171
        %v8425 = vpop.f32.mrf.mxu0
        %v8426 = vadd.f32 0.0, %v8425
        %v8427 = vpop.f32.mrf.mxu0
        %8428 = vmatprep.mubr.f32.mxu0 0.0
        %8429 = vmatmul.mubr.f32.gmra.mxu0 %v8174
        %v8430 = vpop.f32.mrf.mxu0
        %v8431 = vadd.f32 0.0, %v8430
        %v8432 = vpop.f32.mrf.mxu0
        %8433 = vmatprep.mubr.f32.mxu0 0.0
        %8434 = vmatmul.mubr.f32.gmra.mxu0 %v8177
        %v8435 = vpop.f32.mrf.mxu0
        %v8436 = vpop.f32.mrf.mxu0
        %8437 = vmatprep.mubr.f32.mxu0 0.0
        %8438 = vmatmul.mubr.f32.gmra.mxu0 %v8180
        %v8439 = vpop.f32.mrf.mxu0
        %v8440 = vadd.f32 0.0, %v8439
        %v8441 = vpop.f32.mrf.mxu0
        %8442 = vmatprep.mubr.f32.mxu0 0.0
        %8443 = vmatmul.mubr.f32.gmra.mxu0 %v8183
        %v8444 = vpop.f32.mrf.mxu0
        %v8445 = vadd.f32 0.0, %v8444
        %v8446 = vpop.f32.mrf.mxu0
        %8447 = vmatprep.mubr.f32.mxu0 0.0
        %8448 = vmatmul.mubr.f32.gmra.mxu0 %v8186
        %v8449 = vpop.f32.mrf.mxu0
        %v8450 = vpop.f32.mrf.mxu0
        %8451 = vmatprep.mubr.f32.mxu0 0.0
        %8452 = vmatmul.mubr.f32.gmra.mxu0 %v8189
        %v8453 = vpop.f32.mrf.mxu0
        %v8454 = vadd.f32 0.0, %v8453
        %v8455 = vpop.f32.mrf.mxu0
        %8456 = vmatprep.mubr.f32.mxu0 0.0
        %8457 = vmatmul.mubr.f32.gmra.mxu0 %v8192
        %v8458 = vpop.f32.mrf.mxu0
        %v8459 = vadd.f32 0.0, %v8458
        %v8460 = vpop.f32.mrf.mxu0
        %8461 = vmatprep.mubr.f32.mxu0 0.0
        %8462 = vmatmul.mubr.f32.gmra.mxu0 %v8195
        %v8463 = vpop.f32.mrf.mxu0
        %v8464 = vpop.f32.mrf.mxu0
        %8465 = vmatprep.mubr.f32.mxu0 0.0
        %8466 = vmatmul.mubr.f32.gmra.mxu0 %v8198
        %v8467 = vpop.f32.mrf.mxu0
        %v8468 = vadd.f32 0.0, %v8467
        %v8469 = vpop.f32.mrf.mxu0
        %8470 = vmatprep.mubr.f32.mxu0 0.0
        %8471 = vmatmul.mubr.f32.gmra.mxu0 %v8201
        %v8472 = vpop.f32.mrf.mxu0
        %v8473 = vadd.f32 0.0, %v8472
        %v8474 = vpop.f32.mrf.mxu0
        %8475 = vmatprep.mubr.f32.mxu0 0.0
        %8476 = vmatmul.mubr.f32.gmra.mxu0 %v8204
        %v8477 = vpop.f32.mrf.mxu0
        %v8478 = vpop.f32.mrf.mxu0
        %8479 = vmatprep.mubr.f32.mxu0 0.0
        %8480 = vmatmul.mubr.f32.gmra.mxu0 %v8207
        %v8481 = vpop.f32.mrf.mxu0
        %v8482 = vadd.f32 0.0, %v8481
        %v8483 = vpop.f32.mrf.mxu0
        %8484 = vmatprep.mubr.f32.mxu0 0.0
        %8485 = vmatmul.mubr.f32.gmra.mxu0 %v8210
        %v8486 = vpop.f32.mrf.mxu0
        %v8487 = vadd.f32 0.0, %v8486
        %v8488 = vpop.f32.mrf.mxu0
        %8489 = vmatprep.mubr.f32.mxu0 0.0
        %8490 = vmatmul.mubr.f32.gmra.mxu0 %v8213
        %v8491 = vpop.f32.mrf.mxu0
        %v8492 = vpop.f32.mrf.mxu0
        %8493 = vmatprep.mubr.f32.mxu0 0.0
        %8494 = vmatmul.mubr.f32.gmra.mxu0 %v8216
        %v8495 = vpop.f32.mrf.mxu0
        %v8496 = vadd.f32 0.0, %v8495
        %v8497 = vpop.f32.mrf.mxu0
        %8498 = vmatprep.mubr.f32.mxu0 0.0
        %8499 = vmatmul.mubr.f32.gmra.mxu0 %v8219
        %v8500 = vpop.f32.mrf.mxu0
        %v8501 = vadd.f32 0.0, %v8500
        %v8502 = vpop.f32.mrf.mxu0
        %8503 = vmatprep.mubr.f32.mxu0 0.0
        %8504 = vmatmul.mubr.f32.gmra.mxu0 %v8222
        %v8505 = vpop.f32.mrf.mxu0
        %v8506 = vpop.f32.mrf.mxu0
        %8507 = vmatprep.mubr.f32.mxu0 0.0
        %8508 = vmatmul.mubr.f32.gmra.mxu0 %v8225
        %v8509 = vpop.f32.mrf.mxu0
        %v8510 = vadd.f32 0.0, %v8509
        %v8511 = vpop.f32.mrf.mxu0
        %8512 = vmatprep.mubr.f32.mxu0 0.0
        %8513 = vmatmul.mubr.f32.gmra.mxu0 %v8228
        %v8514 = vpop.f32.mrf.mxu0
        %v8515 = vadd.f32 0.0, %v8514
        %v8516 = vpop.f32.mrf.mxu0
        %8517 = vmatprep.mubr.f32.mxu0 0.0
        %8518 = vmatmul.mubr.f32.gmra.mxu0 %v8231
        %v8519 = vpop.f32.mrf.mxu0
        %v8520 = vpop.f32.mrf.mxu0
        %8521 = vdwg.mxu0
        %v8522 = vadd.f32 %v8000, %v8300
        %v8523 = vadd.f32 %v8001, %v8305
        %v8524 = vadd.f32 %v8002, %v8314
        %v8525 = vadd.f32 %v8003, %v8319
        %v8526 = vadd.f32 %v8004, %v8328
        %v8527 = vadd.f32 %v8005, %v8333
        %v8528 = vadd.f32 %v8006, %v8342
        %v8529 = vadd.f32 %v8007, %v8347
        %v8530 = vadd.f32 %v8008, %v8356
        %v8531 = vadd.f32 %v8009, %v8361
        %v8532 = vadd.f32 %v8010, %v8370
        %v8533 = vadd.f32 %v8011, %v8375
        %v8534 = vadd.f32 %v8012, %v8384
        %v8535 = vadd.f32 %v8013, %v8389
        %v8536 = vadd.f32 %v8014, %v8398
        %v8537 = vadd.f32 %v8015, %v8403
        %v8538 = vadd.f32 %v8016, %v8412
        %v8539 = vadd.f32 %v8017, %v8417
        %v8540 = vadd.f32 %v8018, %v8426
        %v8541 = vadd.f32 %v8019, %v8431
        %v8542 = vadd.f32 %v8020, %v8440
        %v8543 = vadd.f32 %v8021, %v8445
        %v8544 = vadd.f32 %v8022, %v8454
        %v8545 = vadd.f32 %v8023, %v8459
        %v8546 = vadd.f32 %v8024, %v8468
        %v8547 = vadd.f32 %v8025, %v8473
        %v8548 = vadd.f32 %v8026, %v8482
        %v8549 = vadd.f32 %v8027, %v8487
        %v8550 = vadd.f32 %v8028, %v8496
        %v8551 = vadd.f32 %v8029, %v8501
        %v8552 = vadd.f32 %v8030, %v8510
        %v8553 = vadd.f32 %v8031, %v8515
        %v8554 = vld [vmem:[#allocation3 + $0x37] sm:$0xff]
        %v8555 = vld [vmem:[#allocation3 + $0x3f] sm:$0xff]
        %v8556 = vld [vmem:[#allocation3 + $0x47] sm:$0xff]
        %v8557 = vld [vmem:[#allocation3 + $0x4f] sm:$0xff]
        %v8558 = vld [vmem:[#allocation3 + $0x57] sm:$0xff]
        %v8559 = vld [vmem:[#allocation3 + $0x5f] sm:$0xff]
        %v8560 = vld [vmem:[#allocation3 + $0x67] sm:$0xff]
        %v8561 = vld [vmem:[#allocation3 + $0x6f] sm:$0xff]
        %v8562 = vld [vmem:[#allocation3 + $0x77] sm:$0xff]
        %v8563 = vld [vmem:[#allocation3 + $0x7f] sm:$0xff]
        %v8564 = vld [vmem:[#allocation3 + $0x87] sm:$0xff]
        %v8565 = vld [vmem:[#allocation3 + $0x8f] sm:$0xff]
        %v8566 = vld [vmem:[#allocation3 + $0x97] sm:$0xff]
        %v8567 = vld [vmem:[#allocation3 + $0x9f] sm:$0xff]
        %v8568 = vld [vmem:[#allocation3 + $0xa7] sm:$0xff]
        %v8569 = vld [vmem:[#allocation3 + $0xaf] sm:$0xff]
        %v8570 = vld [vmem:[#allocation3 + $0xb7] sm:$0xff]
        %v8571 = vld [vmem:[#allocation3 + $0xbf] sm:$0xff]
        %v8572 = vld [vmem:[#allocation3 + $0xc7] sm:$0xff]
        %v8573 = vld [vmem:[#allocation3 + $0xcf] sm:$0xff]
        %v8574 = vld [vmem:[#allocation3 + $0xd7] sm:$0xff]
        %v8575 = vld [vmem:[#allocation3 + $0xdf] sm:$0xff]
        %v8576 = vld [vmem:[#allocation3 + $0xe7] sm:$0xff]
        %v8577 = vld [vmem:[#allocation3 + $0xef] sm:$0xff]
        %v8578 = vld [vmem:[#allocation3 + $0xf7] sm:$0xff]
        %v8579 = vld [vmem:[#allocation3 + $0xff] sm:$0xff]
        %v8580 = vld [vmem:[#allocation3 + $0x107] sm:$0xff]
        %v8581 = vld [vmem:[#allocation3 + $0x10f] sm:$0xff]
        %v8582 = vld [vmem:[#allocation3 + $0x117] sm:$0xff]
        %v8583 = vld [vmem:[#allocation3 + $0x11f] sm:$0xff]
        %v8584 = vld [vmem:[#allocation3 + $0x127] sm:$0xff]
        %v8585 = vld [vmem:[#allocation3 + $0x12f] sm:$0xff]
        %v8586 = vld [vmem:[#allocation3 + $0x137] sm:$0xff]
        %v8587 = vld [vmem:[#allocation3 + $0x13f] sm:$0xff]
        %v8588 = vld [vmem:[#allocation3 + $0x147] sm:$0xff]
        %v8589 = vld [vmem:[#allocation3 + $0x14f] sm:$0xff]
        %v8590 = vld [vmem:[#allocation3 + $0x157] sm:$0xff]
        %v8591 = vld [vmem:[#allocation3 + $0x15f] sm:$0xff]
        %v8592 = vld [vmem:[#allocation3 + $0x167] sm:$0xff]
        %v8593 = vld [vmem:[#allocation3 + $0x16f] sm:$0xff]
        %v8594 = vld [vmem:[#allocation3 + $0x177] sm:$0xff]
        %v8595 = vld [vmem:[#allocation3 + $0x17f] sm:$0xff]
        %v8596 = vld [vmem:[#allocation3 + $0x187] sm:$0xff]
        %v8597 = vld [vmem:[#allocation3 + $0x18f] sm:$0xff]
        %v8598 = vld [vmem:[#allocation3 + $0x197] sm:$0xff]
        %v8599 = vld [vmem:[#allocation3 + $0x19f] sm:$0xff]
        %v8600 = vld [vmem:[#allocation3 + $0x1a7] sm:$0xff]
        %v8601 = vld [vmem:[#allocation3 + $0x1af] sm:$0xff]
        %s8602 = scalar_lea.vmem [#allocation4], 384
        %v8603 = vld [vmem:[%s8602] sm:$0xff]
        %v8604 = vld [vmem:[%s8602 + $0x8] sm:$0xff]
        %v8605 = vld [vmem:[%s8602 + $0x10] sm:$0xff]
        %v8606 = vld [vmem:[%s8602 + $0x18] sm:$0xff]
        %v8607 = vld [vmem:[%s8602 + $0x20] sm:$0xff]
        %v8608 = vld [vmem:[%s8602 + $0x28] sm:$0xff]
        %v8609 = vld [vmem:[%s8602 + $0x30] sm:$0xff]
        %v8610 = vld [vmem:[%s8602 + $0x38] sm:$0xff]
        %v8612 = vsel %vm240, %v8554, 0
        %v8615 = vsel %vm240, %v8555, 0
        %v8618 = vsel %vm240, %v8556, 0
        %v8621 = vsel %vm240, %v8557, 0
        %v8624 = vsel %vm240, %v8558, 0
        %v8627 = vsel %vm240, %v8559, 0
        %v8630 = vsel %vm240, %v8560, 0
        %v8633 = vsel %vm240, %v8561, 0
        %v8636 = vsel %vm240, %v8562, 0
        %v8639 = vsel %vm240, %v8563, 0
        %v8642 = vsel %vm240, %v8564, 0
        %v8645 = vsel %vm240, %v8565, 0
        %v8648 = vsel %vm240, %v8566, 0
        %v8651 = vsel %vm240, %v8567, 0
        %v8654 = vsel %vm240, %v8568, 0
        %v8657 = vsel %vm240, %v8569, 0
        %v8660 = vsel %vm240, %v8570, 0
        %v8663 = vsel %vm240, %v8571, 0
        %v8666 = vsel %vm240, %v8572, 0
        %v8669 = vsel %vm240, %v8573, 0
        %v8672 = vsel %vm240, %v8574, 0
        %v8675 = vsel %vm240, %v8575, 0
        %v8678 = vsel %vm240, %v8576, 0
        %v8681 = vsel %vm240, %v8577, 0
        %v8684 = vsel %vm240, %v8578, 0
        %v8687 = vsel %vm240, %v8579, 0
        %v8690 = vsel %vm240, %v8580, 0
        %v8693 = vsel %vm240, %v8581, 0
        %v8696 = vsel %vm240, %v8582, 0
        %v8699 = vsel %vm240, %v8583, 0
        %v8702 = vsel %vm240, %v8584, 0
        %v8705 = vsel %vm240, %v8585, 0
        %v8708 = vsel %vm240, %v8586, 0
        %v8711 = vsel %vm240, %v8587, 0
        %v8714 = vsel %vm240, %v8588, 0
        %v8717 = vsel %vm240, %v8589, 0
        %v8720 = vsel %vm240, %v8590, 0
        %v8723 = vsel %vm240, %v8591, 0
        %v8726 = vsel %vm240, %v8592, 0
        %v8729 = vsel %vm240, %v8593, 0
        %v8732 = vsel %vm240, %v8594, 0
        %v8735 = vsel %vm240, %v8595, 0
        %v8738 = vsel %vm240, %v8596, 0
        %v8741 = vsel %vm240, %v8597, 0
        %v8744 = vsel %vm240, %v8598, 0
        %v8747 = vsel %vm240, %v8599, 0
        %v8750 = vsel %vm240, %v8600, 0
        %v8753 = vsel %vm240, %v8601, 0
        %8755 = vmatprep.subr.mxu0 0.0
        %8756 = vmatpush1.msra.mxu0 0.0
        %8757 = vmatprep.subr.mxu0 0.0
        %8758 = vmatpush1.msra.mxu0 0.0
        %8759 = vmatprep.subr.mxu0 0.0
        %8760 = vmatpush1.msra.mxu0 0.0
        %8761 = vmatprep.subr.mxu0 0.0
        %8762 = vmatpush1.msra.mxu0 0.0
        %8763 = vmatprep.subr.mxu0 0.0
        %8764 = vmatpush1.msra.mxu0 0.0
        %8765 = vmatprep.subr.mxu0 0.0
        %8766 = vmatpush1.msra.mxu0 0.0
        %8767 = vmatprep.subr.mxu0 0.0
        %8768 = vmatpush1.msra.mxu0 0.0
        %8769 = vmatprep.subr.mxu0 0.0
        %8770 = vmatpush1.msra.mxu0 0.0
        %8771 = vmatprep.subr.mxu0 0.0
        %8772 = vmatpush1.msra.mxu0 %v8610
        %8773 = vmatprep.subr.mxu0 0.0
        %8774 = vmatpush1.msra.mxu0 %v8609
        %8775 = vmatprep.subr.mxu0 0.0
        %8776 = vmatpush1.msra.mxu0 %v8608
        %8777 = vmatprep.subr.mxu0 0.0
        %8778 = vmatpush1.msra.mxu0 %v8607
        %8779 = vmatprep.subr.mxu0 0.0
        %8780 = vmatpush1.msra.mxu0 %v8606
        %8781 = vmatprep.subr.mxu0 0.0
        %8782 = vmatpush1.msra.mxu0 %v8605
        %8783 = vmatprep.subr.mxu0 0.0
        %8784 = vmatpush1.msra.mxu0 %v8604
        %8785 = vmatprep.subr.mxu0 0.0
        %8786 = vmatpush1.msra.mxu0 %v8603
        %8787 = vmatprep.subr.mxu0 0.0
        %8788 = vmatpush2.msra.mxu0 0.0
        %8789 = vmatprep.subr.mxu0 0.0
        %8790 = vmatpush2.msra.mxu0 0.0
        %8791 = vmatprep.subr.mxu0 0.0
        %8792 = vmatpush2.msra.mxu0 0.0
        %8793 = vmatprep.subr.mxu0 0.0
        %8794 = vmatpush2.msra.mxu0 0.0
        %8795 = vmatprep.subr.mxu0 0.0
        %8796 = vmatpush2.msra.mxu0 0.0
        %8797 = vmatprep.subr.mxu0 0.0
        %8798 = vmatpush2.msra.mxu0 0.0
        %8799 = vmatprep.subr.mxu0 0.0
        %8800 = vmatpush2.msra.mxu0 0.0
        %8801 = vmatprep.subr.mxu0 0.0
        %8802 = vmatpush2.msra.mxu0 0.0
        %8803 = vmatprep.subr.mxu0 0.0
        %8804 = vmatpush2.msra.mxu0 0.0
        %8805 = vmatprep.subr.mxu0 0.0
        %8806 = vmatpush2.msra.mxu0 0.0
        %8807 = vmatprep.subr.mxu0 0.0
        %8808 = vmatpush2.msra.mxu0 0.0
        %8809 = vmatprep.subr.mxu0 0.0
        %8810 = vmatpush2.msra.mxu0 0.0
        %8811 = vmatprep.subr.mxu0 0.0
        %8812 = vmatpush2.msra.mxu0 0.0
        %8813 = vmatprep.subr.mxu0 0.0
        %8814 = vmatpush2.msra.mxu0 0.0
        %8815 = vmatprep.subr.mxu0 0.0
        %8816 = vmatpush2.msra.mxu0 0.0
        %8817 = vmatprep.subr.mxu0 0.0
        %8818 = vmatpush2.msra.mxu0 0.0
        %8819 = vmatprep.mubr.f32.mxu0 0.0
        %8820 = vmatmul.mubr.f32.gmra.mxu0 %v8612
        %v8821 = vpop.f32.mrf.mxu0
        %v8822 = vadd.f32 0.0, %v8821
        %v8823 = vpop.f32.mrf.mxu0
        %8824 = vmatprep.mubr.f32.mxu0 0.0
        %8825 = vmatmul.mubr.f32.gmra.mxu0 %v8615
        %v8826 = vpop.f32.mrf.mxu0
        %v8827 = vadd.f32 0.0, %v8826
        %v8828 = vpop.f32.mrf.mxu0
        %8829 = vmatprep.mubr.f32.mxu0 0.0
        %8830 = vmatmul.mubr.f32.gmra.mxu0 %v8618
        %v8831 = vpop.f32.mrf.mxu0
        %v8832 = vpop.f32.mrf.mxu0
        %8833 = vmatprep.mubr.f32.mxu0 0.0
        %8834 = vmatmul.mubr.f32.gmra.mxu0 %v8621
        %v8835 = vpop.f32.mrf.mxu0
        %v8836 = vadd.f32 0.0, %v8835
        %v8837 = vpop.f32.mrf.mxu0
        %8838 = vmatprep.mubr.f32.mxu0 0.0
        %8839 = vmatmul.mubr.f32.gmra.mxu0 %v8624
        %v8840 = vpop.f32.mrf.mxu0
        %v8841 = vadd.f32 0.0, %v8840
        %v8842 = vpop.f32.mrf.mxu0
        %8843 = vmatprep.mubr.f32.mxu0 0.0
        %8844 = vmatmul.mubr.f32.gmra.mxu0 %v8627
        %v8845 = vpop.f32.mrf.mxu0
        %v8846 = vpop.f32.mrf.mxu0
        %8847 = vmatprep.mubr.f32.mxu0 0.0
        %8848 = vmatmul.mubr.f32.gmra.mxu0 %v8630
        %v8849 = vpop.f32.mrf.mxu0
        %v8850 = vadd.f32 0.0, %v8849
        %v8851 = vpop.f32.mrf.mxu0
        %8852 = vmatprep.mubr.f32.mxu0 0.0
        %8853 = vmatmul.mubr.f32.gmra.mxu0 %v8633
        %v8854 = vpop.f32.mrf.mxu0
        %v8855 = vadd.f32 0.0, %v8854
        %v8856 = vpop.f32.mrf.mxu0
        %8857 = vmatprep.mubr.f32.mxu0 0.0
        %8858 = vmatmul.mubr.f32.gmra.mxu0 %v8636
        %v8859 = vpop.f32.mrf.mxu0
        %v8860 = vpop.f32.mrf.mxu0
        %8861 = vmatprep.mubr.f32.mxu0 0.0
        %8862 = vmatmul.mubr.f32.gmra.mxu0 %v8639
        %v8863 = vpop.f32.mrf.mxu0
        %v8864 = vadd.f32 0.0, %v8863
        %v8865 = vpop.f32.mrf.mxu0
        %8866 = vmatprep.mubr.f32.mxu0 0.0
        %8867 = vmatmul.mubr.f32.gmra.mxu0 %v8642
        %v8868 = vpop.f32.mrf.mxu0
        %v8869 = vadd.f32 0.0, %v8868
        %v8870 = vpop.f32.mrf.mxu0
        %8871 = vmatprep.mubr.f32.mxu0 0.0
        %8872 = vmatmul.mubr.f32.gmra.mxu0 %v8645
        %v8873 = vpop.f32.mrf.mxu0
        %v8874 = vpop.f32.mrf.mxu0
        %8875 = vmatprep.mubr.f32.mxu0 0.0
        %8876 = vmatmul.mubr.f32.gmra.mxu0 %v8648
        %v8877 = vpop.f32.mrf.mxu0
        %v8878 = vadd.f32 0.0, %v8877
        %v8879 = vpop.f32.mrf.mxu0
        %8880 = vmatprep.mubr.f32.mxu0 0.0
        %8881 = vmatmul.mubr.f32.gmra.mxu0 %v8651
        %v8882 = vpop.f32.mrf.mxu0
        %v8883 = vadd.f32 0.0, %v8882
        %v8884 = vpop.f32.mrf.mxu0
        %8885 = vmatprep.mubr.f32.mxu0 0.0
        %8886 = vmatmul.mubr.f32.gmra.mxu0 %v8654
        %v8887 = vpop.f32.mrf.mxu0
        %v8888 = vpop.f32.mrf.mxu0
        %8889 = vmatprep.mubr.f32.mxu0 0.0
        %8890 = vmatmul.mubr.f32.gmra.mxu0 %v8657
        %v8891 = vpop.f32.mrf.mxu0
        %v8892 = vadd.f32 0.0, %v8891
        %v8893 = vpop.f32.mrf.mxu0
        %8894 = vmatprep.mubr.f32.mxu0 0.0
        %8895 = vmatmul.mubr.f32.gmra.mxu0 %v8660
        %v8896 = vpop.f32.mrf.mxu0
        %v8897 = vadd.f32 0.0, %v8896
        %v8898 = vpop.f32.mrf.mxu0
        %8899 = vmatprep.mubr.f32.mxu0 0.0
        %8900 = vmatmul.mubr.f32.gmra.mxu0 %v8663
        %v8901 = vpop.f32.mrf.mxu0
        %v8902 = vpop.f32.mrf.mxu0
        %8903 = vmatprep.mubr.f32.mxu0 0.0
        %8904 = vmatmul.mubr.f32.gmra.mxu0 %v8666
        %v8905 = vpop.f32.mrf.mxu0
        %v8906 = vadd.f32 0.0, %v8905
        %v8907 = vpop.f32.mrf.mxu0
        %8908 = vmatprep.mubr.f32.mxu0 0.0
        %8909 = vmatmul.mubr.f32.gmra.mxu0 %v8669
        %v8910 = vpop.f32.mrf.mxu0
        %v8911 = vadd.f32 0.0, %v8910
        %v8912 = vpop.f32.mrf.mxu0
        %8913 = vmatprep.mubr.f32.mxu0 0.0
        %8914 = vmatmul.mubr.f32.gmra.mxu0 %v8672
        %v8915 = vpop.f32.mrf.mxu0
        %v8916 = vpop.f32.mrf.mxu0
        %8917 = vmatprep.mubr.f32.mxu0 0.0
        %8918 = vmatmul.mubr.f32.gmra.mxu0 %v8675
        %v8919 = vpop.f32.mrf.mxu0
        %v8920 = vadd.f32 0.0, %v8919
        %v8921 = vpop.f32.mrf.mxu0
        %8922 = vmatprep.mubr.f32.mxu0 0.0
        %8923 = vmatmul.mubr.f32.gmra.mxu0 %v8678
        %v8924 = vpop.f32.mrf.mxu0
        %v8925 = vadd.f32 0.0, %v8924
        %v8926 = vpop.f32.mrf.mxu0
        %8927 = vmatprep.mubr.f32.mxu0 0.0
        %8928 = vmatmul.mubr.f32.gmra.mxu0 %v8681
        %v8929 = vpop.f32.mrf.mxu0
        %v8930 = vpop.f32.mrf.mxu0
        %8931 = vmatprep.mubr.f32.mxu0 0.0
        %8932 = vmatmul.mubr.f32.gmra.mxu0 %v8684
        %v8933 = vpop.f32.mrf.mxu0
        %v8934 = vadd.f32 0.0, %v8933
        %v8935 = vpop.f32.mrf.mxu0
        %8936 = vmatprep.mubr.f32.mxu0 0.0
        %8937 = vmatmul.mubr.f32.gmra.mxu0 %v8687
        %v8938 = vpop.f32.mrf.mxu0
        %v8939 = vadd.f32 0.0, %v8938
        %v8940 = vpop.f32.mrf.mxu0
        %8941 = vmatprep.mubr.f32.mxu0 0.0
        %8942 = vmatmul.mubr.f32.gmra.mxu0 %v8690
        %v8943 = vpop.f32.mrf.mxu0
        %v8944 = vpop.f32.mrf.mxu0
        %8945 = vmatprep.mubr.f32.mxu0 0.0
        %8946 = vmatmul.mubr.f32.gmra.mxu0 %v8693
        %v8947 = vpop.f32.mrf.mxu0
        %v8948 = vadd.f32 0.0, %v8947
        %v8949 = vpop.f32.mrf.mxu0
        %8950 = vmatprep.mubr.f32.mxu0 0.0
        %8951 = vmatmul.mubr.f32.gmra.mxu0 %v8696
        %v8952 = vpop.f32.mrf.mxu0
        %v8953 = vadd.f32 0.0, %v8952
        %v8954 = vpop.f32.mrf.mxu0
        %8955 = vmatprep.mubr.f32.mxu0 0.0
        %8956 = vmatmul.mubr.f32.gmra.mxu0 %v8699
        %v8957 = vpop.f32.mrf.mxu0
        %v8958 = vpop.f32.mrf.mxu0
        %8959 = vmatprep.mubr.f32.mxu0 0.0
        %8960 = vmatmul.mubr.f32.gmra.mxu0 %v8702
        %v8961 = vpop.f32.mrf.mxu0
        %v8962 = vadd.f32 0.0, %v8961
        %v8963 = vpop.f32.mrf.mxu0
        %8964 = vmatprep.mubr.f32.mxu0 0.0
        %8965 = vmatmul.mubr.f32.gmra.mxu0 %v8705
        %v8966 = vpop.f32.mrf.mxu0
        %v8967 = vadd.f32 0.0, %v8966
        %v8968 = vpop.f32.mrf.mxu0
        %8969 = vmatprep.mubr.f32.mxu0 0.0
        %8970 = vmatmul.mubr.f32.gmra.mxu0 %v8708
        %v8971 = vpop.f32.mrf.mxu0
        %v8972 = vpop.f32.mrf.mxu0
        %8973 = vmatprep.mubr.f32.mxu0 0.0
        %8974 = vmatmul.mubr.f32.gmra.mxu0 %v8711
        %v8975 = vpop.f32.mrf.mxu0
        %v8976 = vadd.f32 0.0, %v8975
        %v8977 = vpop.f32.mrf.mxu0
        %8978 = vmatprep.mubr.f32.mxu0 0.0
        %8979 = vmatmul.mubr.f32.gmra.mxu0 %v8714
        %v8980 = vpop.f32.mrf.mxu0
        %v8981 = vadd.f32 0.0, %v8980
        %v8982 = vpop.f32.mrf.mxu0
        %8983 = vmatprep.mubr.f32.mxu0 0.0
        %8984 = vmatmul.mubr.f32.gmra.mxu0 %v8717
        %v8985 = vpop.f32.mrf.mxu0
        %v8986 = vpop.f32.mrf.mxu0
        %8987 = vmatprep.mubr.f32.mxu0 0.0
        %8988 = vmatmul.mubr.f32.gmra.mxu0 %v8720
        %v8989 = vpop.f32.mrf.mxu0
        %v8990 = vadd.f32 0.0, %v8989
        %v8991 = vpop.f32.mrf.mxu0
        %8992 = vmatprep.mubr.f32.mxu0 0.0
        %8993 = vmatmul.mubr.f32.gmra.mxu0 %v8723
        %v8994 = vpop.f32.mrf.mxu0
        %v8995 = vadd.f32 0.0, %v8994
        %v8996 = vpop.f32.mrf.mxu0
        %8997 = vmatprep.mubr.f32.mxu0 0.0
        %8998 = vmatmul.mubr.f32.gmra.mxu0 %v8726
        %v8999 = vpop.f32.mrf.mxu0
        %v9000 = vpop.f32.mrf.mxu0
        %9001 = vmatprep.mubr.f32.mxu0 0.0
        %9002 = vmatmul.mubr.f32.gmra.mxu0 %v8729
        %v9003 = vpop.f32.mrf.mxu0
        %v9004 = vadd.f32 0.0, %v9003
        %v9005 = vpop.f32.mrf.mxu0
        %9006 = vmatprep.mubr.f32.mxu0 0.0
        %9007 = vmatmul.mubr.f32.gmra.mxu0 %v8732
        %v9008 = vpop.f32.mrf.mxu0
        %v9009 = vadd.f32 0.0, %v9008
        %v9010 = vpop.f32.mrf.mxu0
        %9011 = vmatprep.mubr.f32.mxu0 0.0
        %9012 = vmatmul.mubr.f32.gmra.mxu0 %v8735
        %v9013 = vpop.f32.mrf.mxu0
        %v9014 = vpop.f32.mrf.mxu0
        %9015 = vmatprep.mubr.f32.mxu0 0.0
        %9016 = vmatmul.mubr.f32.gmra.mxu0 %v8738
        %v9017 = vpop.f32.mrf.mxu0
        %v9018 = vadd.f32 0.0, %v9017
        %v9019 = vpop.f32.mrf.mxu0
        %9020 = vmatprep.mubr.f32.mxu0 0.0
        %9021 = vmatmul.mubr.f32.gmra.mxu0 %v8741
        %v9022 = vpop.f32.mrf.mxu0
        %v9023 = vadd.f32 0.0, %v9022
        %v9024 = vpop.f32.mrf.mxu0
        %9025 = vmatprep.mubr.f32.mxu0 0.0
        %9026 = vmatmul.mubr.f32.gmra.mxu0 %v8744
        %v9027 = vpop.f32.mrf.mxu0
        %v9028 = vpop.f32.mrf.mxu0
        %9029 = vmatprep.mubr.f32.mxu0 0.0
        %9030 = vmatmul.mubr.f32.gmra.mxu0 %v8747
        %v9031 = vpop.f32.mrf.mxu0
        %v9032 = vadd.f32 0.0, %v9031
        %v9033 = vpop.f32.mrf.mxu0
        %9034 = vmatprep.mubr.f32.mxu0 0.0
        %9035 = vmatmul.mubr.f32.gmra.mxu0 %v8750
        %v9036 = vpop.f32.mrf.mxu0
        %v9037 = vadd.f32 0.0, %v9036
        %v9038 = vpop.f32.mrf.mxu0
        %9039 = vmatprep.mubr.f32.mxu0 0.0
        %9040 = vmatmul.mubr.f32.gmra.mxu0 %v8753
        %v9041 = vpop.f32.mrf.mxu0
        %v9042 = vpop.f32.mrf.mxu0
        %9043 = vdwg.mxu0
        %v9044 = vadd.f32 %v8522, %v8822
        %v9045 = vadd.f32 %v8523, %v8827
        %v9046 = vadd.f32 %v8524, %v8836
        %v9047 = vadd.f32 %v8525, %v8841
        %v9048 = vadd.f32 %v8526, %v8850
        %v9049 = vadd.f32 %v8527, %v8855
        %v9050 = vadd.f32 %v8528, %v8864
        %v9051 = vadd.f32 %v8529, %v8869
        %v9052 = vadd.f32 %v8530, %v8878
        %v9053 = vadd.f32 %v8531, %v8883
        %v9054 = vadd.f32 %v8532, %v8892
        %v9055 = vadd.f32 %v8533, %v8897
        %v9056 = vadd.f32 %v8534, %v8906
        %v9057 = vadd.f32 %v8535, %v8911
        %v9058 = vadd.f32 %v8536, %v8920
        %v9059 = vadd.f32 %v8537, %v8925
        %v9060 = vadd.f32 %v8538, %v8934
        %v9061 = vadd.f32 %v8539, %v8939
        %v9062 = vadd.f32 %v8540, %v8948
        %v9063 = vadd.f32 %v8541, %v8953
        %v9064 = vadd.f32 %v8542, %v8962
        %v9065 = vadd.f32 %v8543, %v8967
        %v9066 = vadd.f32 %v8544, %v8976
        %v9067 = vadd.f32 %v8545, %v8981
        %v9068 = vadd.f32 %v8546, %v8990
        %v9069 = vadd.f32 %v8547, %v8995
        %v9070 = vadd.f32 %v8548, %v9004
        %v9071 = vadd.f32 %v8549, %v9009
        %v9072 = vadd.f32 %v8550, %v9018
        %v9073 = vadd.f32 %v8551, %v9023
        %v9074 = vadd.f32 %v8552, %v9032
        %v9075 = vadd.f32 %v8553, %v9037
        %v9076 = vld [vmem:[#allocation3 + $0x38] sm:$0xff]
        %v9077 = vld [vmem:[#allocation3 + $0x40] sm:$0xff]
        %v9078 = vld [vmem:[#allocation3 + $0x48] sm:$0xff]
        %v9079 = vld [vmem:[#allocation3 + $0x50] sm:$0xff]
        %v9080 = vld [vmem:[#allocation3 + $0x58] sm:$0xff]
        %v9081 = vld [vmem:[#allocation3 + $0x60] sm:$0xff]
        %v9082 = vld [vmem:[#allocation3 + $0x68] sm:$0xff]
        %v9083 = vld [vmem:[#allocation3 + $0x70] sm:$0xff]
        %v9084 = vld [vmem:[#allocation3 + $0x78] sm:$0xff]
        %v9085 = vld [vmem:[#allocation3 + $0x80] sm:$0xff]
        %v9086 = vld [vmem:[#allocation3 + $0x88] sm:$0xff]
        %v9087 = vld [vmem:[#allocation3 + $0x90] sm:$0xff]
        %v9088 = vld [vmem:[#allocation3 + $0x98] sm:$0xff]
        %v9089 = vld [vmem:[#allocation3 + $0xa0] sm:$0xff]
        %v9090 = vld [vmem:[#allocation3 + $0xa8] sm:$0xff]
        %v9091 = vld [vmem:[#allocation3 + $0xb0] sm:$0xff]
        %v9092 = vld [vmem:[#allocation3 + $0xb8] sm:$0xff]
        %v9093 = vld [vmem:[#allocation3 + $0xc0] sm:$0xff]
        %v9094 = vld [vmem:[#allocation3 + $0xc8] sm:$0xff]
        %v9095 = vld [vmem:[#allocation3 + $0xd0] sm:$0xff]
        %v9096 = vld [vmem:[#allocation3 + $0xd8] sm:$0xff]
        %v9097 = vld [vmem:[#allocation3 + $0xe0] sm:$0xff]
        %v9098 = vld [vmem:[#allocation3 + $0xe8] sm:$0xff]
        %v9099 = vld [vmem:[#allocation3 + $0xf0] sm:$0xff]
        %v9100 = vld [vmem:[#allocation3 + $0xf8] sm:$0xff]
        %v9101 = vld [vmem:[#allocation3 + $0x100] sm:$0xff]
        %v9102 = vld [vmem:[#allocation3 + $0x108] sm:$0xff]
        %v9103 = vld [vmem:[#allocation3 + $0x110] sm:$0xff]
        %v9104 = vld [vmem:[#allocation3 + $0x118] sm:$0xff]
        %v9105 = vld [vmem:[#allocation3 + $0x120] sm:$0xff]
        %v9106 = vld [vmem:[#allocation3 + $0x128] sm:$0xff]
        %v9107 = vld [vmem:[#allocation3 + $0x130] sm:$0xff]
        %v9108 = vld [vmem:[#allocation3 + $0x138] sm:$0xff]
        %v9109 = vld [vmem:[#allocation3 + $0x140] sm:$0xff]
        %v9110 = vld [vmem:[#allocation3 + $0x148] sm:$0xff]
        %v9111 = vld [vmem:[#allocation3 + $0x150] sm:$0xff]
        %v9112 = vld [vmem:[#allocation3 + $0x158] sm:$0xff]
        %v9113 = vld [vmem:[#allocation3 + $0x160] sm:$0xff]
        %v9114 = vld [vmem:[#allocation3 + $0x168] sm:$0xff]
        %v9115 = vld [vmem:[#allocation3 + $0x170] sm:$0xff]
        %v9116 = vld [vmem:[#allocation3 + $0x178] sm:$0xff]
        %v9117 = vld [vmem:[#allocation3 + $0x180] sm:$0xff]
        %v9118 = vld [vmem:[#allocation3 + $0x188] sm:$0xff]
        %v9119 = vld [vmem:[#allocation3 + $0x190] sm:$0xff]
        %v9120 = vld [vmem:[#allocation3 + $0x198] sm:$0xff]
        %v9121 = vld [vmem:[#allocation3 + $0x1a0] sm:$0xff]
        %v9122 = vld [vmem:[#allocation3 + $0x1a8] sm:$0xff]
        %v9123 = vld [vmem:[#allocation3 + $0x1b0] sm:$0xff]
        %s9124 = scalar_lea.vmem [#allocation4], 448
        %v9125 = vld [vmem:[%s9124] sm:$0xff]
        %v9126 = vld [vmem:[%s9124 + $0x8] sm:$0xff]
        %v9127 = vld [vmem:[%s9124 + $0x10] sm:$0xff]
        %v9128 = vld [vmem:[%s9124 + $0x18] sm:$0xff]
        %v9129 = vld [vmem:[%s9124 + $0x20] sm:$0xff]
        %v9130 = vld [vmem:[%s9124 + $0x28] sm:$0xff]
        %v9131 = vld [vmem:[%s9124 + $0x30] sm:$0xff]
        %v9132 = vld [vmem:[%s9124 + $0x38] sm:$0xff]
        %v9134 = vsel %vm240, %v9076, 0
        %v9137 = vsel %vm240, %v9077, 0
        %v9140 = vsel %vm240, %v9078, 0
        %v9143 = vsel %vm240, %v9079, 0
        %v9146 = vsel %vm240, %v9080, 0
        %v9149 = vsel %vm240, %v9081, 0
        %v9152 = vsel %vm240, %v9082, 0
        %v9155 = vsel %vm240, %v9083, 0
        %v9158 = vsel %vm240, %v9084, 0
        %v9161 = vsel %vm240, %v9085, 0
        %v9164 = vsel %vm240, %v9086, 0
        %v9167 = vsel %vm240, %v9087, 0
        %v9170 = vsel %vm240, %v9088, 0
        %v9173 = vsel %vm240, %v9089, 0
        %v9176 = vsel %vm240, %v9090, 0
        %v9179 = vsel %vm240, %v9091, 0
        %v9182 = vsel %vm240, %v9092, 0
        %v9185 = vsel %vm240, %v9093, 0
        %v9188 = vsel %vm240, %v9094, 0
        %v9191 = vsel %vm240, %v9095, 0
        %v9194 = vsel %vm240, %v9096, 0
        %v9197 = vsel %vm240, %v9097, 0
        %v9200 = vsel %vm240, %v9098, 0
        %v9203 = vsel %vm240, %v9099, 0
        %v9206 = vsel %vm240, %v9100, 0
        %v9209 = vsel %vm240, %v9101, 0
        %v9212 = vsel %vm240, %v9102, 0
        %v9215 = vsel %vm240, %v9103, 0
        %v9218 = vsel %vm240, %v9104, 0
        %v9221 = vsel %vm240, %v9105, 0
        %v9224 = vsel %vm240, %v9106, 0
        %v9227 = vsel %vm240, %v9107, 0
        %v9230 = vsel %vm240, %v9108, 0
        %v9233 = vsel %vm240, %v9109, 0
        %v9236 = vsel %vm240, %v9110, 0
        %v9239 = vsel %vm240, %v9111, 0
        %v9242 = vsel %vm240, %v9112, 0
        %v9245 = vsel %vm240, %v9113, 0
        %v9248 = vsel %vm240, %v9114, 0
        %v9251 = vsel %vm240, %v9115, 0
        %v9254 = vsel %vm240, %v9116, 0
        %v9257 = vsel %vm240, %v9117, 0
        %v9260 = vsel %vm240, %v9118, 0
        %v9263 = vsel %vm240, %v9119, 0
        %v9266 = vsel %vm240, %v9120, 0
        %v9269 = vsel %vm240, %v9121, 0
        %v9272 = vsel %vm240, %v9122, 0
        %v9275 = vsel %vm240, %v9123, 0
        %9277 = vmatprep.subr.mxu0 0.0
        %9278 = vmatpush1.msra.mxu0 0.0
        %9279 = vmatprep.subr.mxu0 0.0
        %9280 = vmatpush1.msra.mxu0 0.0
        %9281 = vmatprep.subr.mxu0 0.0
        %9282 = vmatpush1.msra.mxu0 0.0
        %9283 = vmatprep.subr.mxu0 0.0
        %9284 = vmatpush1.msra.mxu0 0.0
        %9285 = vmatprep.subr.mxu0 0.0
        %9286 = vmatpush1.msra.mxu0 0.0
        %9287 = vmatprep.subr.mxu0 0.0
        %9288 = vmatpush1.msra.mxu0 0.0
        %9289 = vmatprep.subr.mxu0 0.0
        %9290 = vmatpush1.msra.mxu0 0.0
        %9291 = vmatprep.subr.mxu0 0.0
        %9292 = vmatpush1.msra.mxu0 0.0
        %9293 = vmatprep.subr.mxu0 0.0
        %9294 = vmatpush1.msra.mxu0 %v9132
        %9295 = vmatprep.subr.mxu0 0.0
        %9296 = vmatpush1.msra.mxu0 %v9131
        %9297 = vmatprep.subr.mxu0 0.0
        %9298 = vmatpush1.msra.mxu0 %v9130
        %9299 = vmatprep.subr.mxu0 0.0
        %9300 = vmatpush1.msra.mxu0 %v9129
        %9301 = vmatprep.subr.mxu0 0.0
        %9302 = vmatpush1.msra.mxu0 %v9128
        %9303 = vmatprep.subr.mxu0 0.0
        %9304 = vmatpush1.msra.mxu0 %v9127
        %9305 = vmatprep.subr.mxu0 0.0
        %9306 = vmatpush1.msra.mxu0 %v9126
        %9307 = vmatprep.subr.mxu0 0.0
        %9308 = vmatpush1.msra.mxu0 %v9125
        %9309 = vmatprep.subr.mxu0 0.0
        %9310 = vmatpush2.msra.mxu0 0.0
        %9311 = vmatprep.subr.mxu0 0.0
        %9312 = vmatpush2.msra.mxu0 0.0
        %9313 = vmatprep.subr.mxu0 0.0
        %9314 = vmatpush2.msra.mxu0 0.0
        %9315 = vmatprep.subr.mxu0 0.0
        %9316 = vmatpush2.msra.mxu0 0.0
        %9317 = vmatprep.subr.mxu0 0.0
        %9318 = vmatpush2.msra.mxu0 0.0
        %9319 = vmatprep.subr.mxu0 0.0
        %9320 = vmatpush2.msra.mxu0 0.0
        %9321 = vmatprep.subr.mxu0 0.0
        %9322 = vmatpush2.msra.mxu0 0.0
        %9323 = vmatprep.subr.mxu0 0.0
        %9324 = vmatpush2.msra.mxu0 0.0
        %9325 = vmatprep.subr.mxu0 0.0
        %9326 = vmatpush2.msra.mxu0 0.0
        %9327 = vmatprep.subr.mxu0 0.0
        %9328 = vmatpush2.msra.mxu0 0.0
        %9329 = vmatprep.subr.mxu0 0.0
        %9330 = vmatpush2.msra.mxu0 0.0
        %9331 = vmatprep.subr.mxu0 0.0
        %9332 = vmatpush2.msra.mxu0 0.0
        %9333 = vmatprep.subr.mxu0 0.0
        %9334 = vmatpush2.msra.mxu0 0.0
        %9335 = vmatprep.subr.mxu0 0.0
        %9336 = vmatpush2.msra.mxu0 0.0
        %9337 = vmatprep.subr.mxu0 0.0
        %9338 = vmatpush2.msra.mxu0 0.0
        %9339 = vmatprep.subr.mxu0 0.0
        %9340 = vmatpush2.msra.mxu0 0.0
        %9341 = vmatprep.mubr.f32.mxu0 0.0
        %9342 = vmatmul.mubr.f32.gmra.mxu0 %v9134
        %v9343 = vpop.f32.mrf.mxu0
        %v9344 = vadd.f32 0.0, %v9343
        %v9345 = vpop.f32.mrf.mxu0
        %9346 = vmatprep.mubr.f32.mxu0 0.0
        %9347 = vmatmul.mubr.f32.gmra.mxu0 %v9137
        %v9348 = vpop.f32.mrf.mxu0
        %v9349 = vadd.f32 0.0, %v9348
        %v9350 = vpop.f32.mrf.mxu0
        %9351 = vmatprep.mubr.f32.mxu0 0.0
        %9352 = vmatmul.mubr.f32.gmra.mxu0 %v9140
        %v9353 = vpop.f32.mrf.mxu0
        %v9354 = vpop.f32.mrf.mxu0
        %9355 = vmatprep.mubr.f32.mxu0 0.0
        %9356 = vmatmul.mubr.f32.gmra.mxu0 %v9143
        %v9357 = vpop.f32.mrf.mxu0
        %v9358 = vadd.f32 0.0, %v9357
        %v9359 = vpop.f32.mrf.mxu0
        %9360 = vmatprep.mubr.f32.mxu0 0.0
        %9361 = vmatmul.mubr.f32.gmra.mxu0 %v9146
        %v9362 = vpop.f32.mrf.mxu0
        %v9363 = vadd.f32 0.0, %v9362
        %v9364 = vpop.f32.mrf.mxu0
        %9365 = vmatprep.mubr.f32.mxu0 0.0
        %9366 = vmatmul.mubr.f32.gmra.mxu0 %v9149
        %v9367 = vpop.f32.mrf.mxu0
        %v9368 = vpop.f32.mrf.mxu0
        %9369 = vmatprep.mubr.f32.mxu0 0.0
        %9370 = vmatmul.mubr.f32.gmra.mxu0 %v9152
        %v9371 = vpop.f32.mrf.mxu0
        %v9372 = vadd.f32 0.0, %v9371
        %v9373 = vpop.f32.mrf.mxu0
        %9374 = vmatprep.mubr.f32.mxu0 0.0
        %9375 = vmatmul.mubr.f32.gmra.mxu0 %v9155
        %v9376 = vpop.f32.mrf.mxu0
        %v9377 = vadd.f32 0.0, %v9376
        %v9378 = vpop.f32.mrf.mxu0
        %9379 = vmatprep.mubr.f32.mxu0 0.0
        %9380 = vmatmul.mubr.f32.gmra.mxu0 %v9158
        %v9381 = vpop.f32.mrf.mxu0
        %v9382 = vpop.f32.mrf.mxu0
        %9383 = vmatprep.mubr.f32.mxu0 0.0
        %9384 = vmatmul.mubr.f32.gmra.mxu0 %v9161
        %v9385 = vpop.f32.mrf.mxu0
        %v9386 = vadd.f32 0.0, %v9385
        %v9387 = vpop.f32.mrf.mxu0
        %9388 = vmatprep.mubr.f32.mxu0 0.0
        %9389 = vmatmul.mubr.f32.gmra.mxu0 %v9164
        %v9390 = vpop.f32.mrf.mxu0
        %v9391 = vadd.f32 0.0, %v9390
        %v9392 = vpop.f32.mrf.mxu0
        %9393 = vmatprep.mubr.f32.mxu0 0.0
        %9394 = vmatmul.mubr.f32.gmra.mxu0 %v9167
        %v9395 = vpop.f32.mrf.mxu0
        %v9396 = vpop.f32.mrf.mxu0
        %9397 = vmatprep.mubr.f32.mxu0 0.0
        %9398 = vmatmul.mubr.f32.gmra.mxu0 %v9170
        %v9399 = vpop.f32.mrf.mxu0
        %v9400 = vadd.f32 0.0, %v9399
        %v9401 = vpop.f32.mrf.mxu0
        %9402 = vmatprep.mubr.f32.mxu0 0.0
        %9403 = vmatmul.mubr.f32.gmra.mxu0 %v9173
        %v9404 = vpop.f32.mrf.mxu0
        %v9405 = vadd.f32 0.0, %v9404
        %v9406 = vpop.f32.mrf.mxu0
        %9407 = vmatprep.mubr.f32.mxu0 0.0
        %9408 = vmatmul.mubr.f32.gmra.mxu0 %v9176
        %v9409 = vpop.f32.mrf.mxu0
        %v9410 = vpop.f32.mrf.mxu0
        %9411 = vmatprep.mubr.f32.mxu0 0.0
        %9412 = vmatmul.mubr.f32.gmra.mxu0 %v9179
        %v9413 = vpop.f32.mrf.mxu0
        %v9414 = vadd.f32 0.0, %v9413
        %v9415 = vpop.f32.mrf.mxu0
        %9416 = vmatprep.mubr.f32.mxu0 0.0
        %9417 = vmatmul.mubr.f32.gmra.mxu0 %v9182
        %v9418 = vpop.f32.mrf.mxu0
        %v9419 = vadd.f32 0.0, %v9418
        %v9420 = vpop.f32.mrf.mxu0
        %9421 = vmatprep.mubr.f32.mxu0 0.0
        %9422 = vmatmul.mubr.f32.gmra.mxu0 %v9185
        %v9423 = vpop.f32.mrf.mxu0
        %v9424 = vpop.f32.mrf.mxu0
        %9425 = vmatprep.mubr.f32.mxu0 0.0
        %9426 = vmatmul.mubr.f32.gmra.mxu0 %v9188
        %v9427 = vpop.f32.mrf.mxu0
        %v9428 = vadd.f32 0.0, %v9427
        %v9429 = vpop.f32.mrf.mxu0
        %9430 = vmatprep.mubr.f32.mxu0 0.0
        %9431 = vmatmul.mubr.f32.gmra.mxu0 %v9191
        %v9432 = vpop.f32.mrf.mxu0
        %v9433 = vadd.f32 0.0, %v9432
        %v9434 = vpop.f32.mrf.mxu0
        %9435 = vmatprep.mubr.f32.mxu0 0.0
        %9436 = vmatmul.mubr.f32.gmra.mxu0 %v9194
        %v9437 = vpop.f32.mrf.mxu0
        %v9438 = vpop.f32.mrf.mxu0
        %9439 = vmatprep.mubr.f32.mxu0 0.0
        %9440 = vmatmul.mubr.f32.gmra.mxu0 %v9197
        %v9441 = vpop.f32.mrf.mxu0
        %v9442 = vadd.f32 0.0, %v9441
        %v9443 = vpop.f32.mrf.mxu0
        %9444 = vmatprep.mubr.f32.mxu0 0.0
        %9445 = vmatmul.mubr.f32.gmra.mxu0 %v9200
        %v9446 = vpop.f32.mrf.mxu0
        %v9447 = vadd.f32 0.0, %v9446
        %v9448 = vpop.f32.mrf.mxu0
        %9449 = vmatprep.mubr.f32.mxu0 0.0
        %9450 = vmatmul.mubr.f32.gmra.mxu0 %v9203
        %v9451 = vpop.f32.mrf.mxu0
        %v9452 = vpop.f32.mrf.mxu0
        %9453 = vmatprep.mubr.f32.mxu0 0.0
        %9454 = vmatmul.mubr.f32.gmra.mxu0 %v9206
        %v9455 = vpop.f32.mrf.mxu0
        %v9456 = vadd.f32 0.0, %v9455
        %v9457 = vpop.f32.mrf.mxu0
        %9458 = vmatprep.mubr.f32.mxu0 0.0
        %9459 = vmatmul.mubr.f32.gmra.mxu0 %v9209
        %v9460 = vpop.f32.mrf.mxu0
        %v9461 = vadd.f32 0.0, %v9460
        %v9462 = vpop.f32.mrf.mxu0
        %9463 = vmatprep.mubr.f32.mxu0 0.0
        %9464 = vmatmul.mubr.f32.gmra.mxu0 %v9212
        %v9465 = vpop.f32.mrf.mxu0
        %v9466 = vpop.f32.mrf.mxu0
        %9467 = vmatprep.mubr.f32.mxu0 0.0
        %9468 = vmatmul.mubr.f32.gmra.mxu0 %v9215
        %v9469 = vpop.f32.mrf.mxu0
        %v9470 = vadd.f32 0.0, %v9469
        %v9471 = vpop.f32.mrf.mxu0
        %9472 = vmatprep.mubr.f32.mxu0 0.0
        %9473 = vmatmul.mubr.f32.gmra.mxu0 %v9218
        %v9474 = vpop.f32.mrf.mxu0
        %v9475 = vadd.f32 0.0, %v9474
        %v9476 = vpop.f32.mrf.mxu0
        %9477 = vmatprep.mubr.f32.mxu0 0.0
        %9478 = vmatmul.mubr.f32.gmra.mxu0 %v9221
        %v9479 = vpop.f32.mrf.mxu0
        %v9480 = vpop.f32.mrf.mxu0
        %9481 = vmatprep.mubr.f32.mxu0 0.0
        %9482 = vmatmul.mubr.f32.gmra.mxu0 %v9224
        %v9483 = vpop.f32.mrf.mxu0
        %v9484 = vadd.f32 0.0, %v9483
        %v9485 = vpop.f32.mrf.mxu0
        %9486 = vmatprep.mubr.f32.mxu0 0.0
        %9487 = vmatmul.mubr.f32.gmra.mxu0 %v9227
        %v9488 = vpop.f32.mrf.mxu0
        %v9489 = vadd.f32 0.0, %v9488
        %v9490 = vpop.f32.mrf.mxu0
        %9491 = vmatprep.mubr.f32.mxu0 0.0
        %9492 = vmatmul.mubr.f32.gmra.mxu0 %v9230
        %v9493 = vpop.f32.mrf.mxu0
        %v9494 = vpop.f32.mrf.mxu0
        %9495 = vmatprep.mubr.f32.mxu0 0.0
        %9496 = vmatmul.mubr.f32.gmra.mxu0 %v9233
        %v9497 = vpop.f32.mrf.mxu0
        %v9498 = vadd.f32 0.0, %v9497
        %v9499 = vpop.f32.mrf.mxu0
        %9500 = vmatprep.mubr.f32.mxu0 0.0
        %9501 = vmatmul.mubr.f32.gmra.mxu0 %v9236
        %v9502 = vpop.f32.mrf.mxu0
        %v9503 = vadd.f32 0.0, %v9502
        %v9504 = vpop.f32.mrf.mxu0
        %9505 = vmatprep.mubr.f32.mxu0 0.0
        %9506 = vmatmul.mubr.f32.gmra.mxu0 %v9239
        %v9507 = vpop.f32.mrf.mxu0
        %v9508 = vpop.f32.mrf.mxu0
        %9509 = vmatprep.mubr.f32.mxu0 0.0
        %9510 = vmatmul.mubr.f32.gmra.mxu0 %v9242
        %v9511 = vpop.f32.mrf.mxu0
        %v9512 = vadd.f32 0.0, %v9511
        %v9513 = vpop.f32.mrf.mxu0
        %9514 = vmatprep.mubr.f32.mxu0 0.0
        %9515 = vmatmul.mubr.f32.gmra.mxu0 %v9245
        %v9516 = vpop.f32.mrf.mxu0
        %v9517 = vadd.f32 0.0, %v9516
        %v9518 = vpop.f32.mrf.mxu0
        %9519 = vmatprep.mubr.f32.mxu0 0.0
        %9520 = vmatmul.mubr.f32.gmra.mxu0 %v9248
        %v9521 = vpop.f32.mrf.mxu0
        %v9522 = vpop.f32.mrf.mxu0
        %9523 = vmatprep.mubr.f32.mxu0 0.0
        %9524 = vmatmul.mubr.f32.gmra.mxu0 %v9251
        %v9525 = vpop.f32.mrf.mxu0
        %v9526 = vadd.f32 0.0, %v9525
        %v9527 = vpop.f32.mrf.mxu0
        %9528 = vmatprep.mubr.f32.mxu0 0.0
        %9529 = vmatmul.mubr.f32.gmra.mxu0 %v9254
        %v9530 = vpop.f32.mrf.mxu0
        %v9531 = vadd.f32 0.0, %v9530
        %v9532 = vpop.f32.mrf.mxu0
        %9533 = vmatprep.mubr.f32.mxu0 0.0
        %9534 = vmatmul.mubr.f32.gmra.mxu0 %v9257
        %v9535 = vpop.f32.mrf.mxu0
        %v9536 = vpop.f32.mrf.mxu0
        %9537 = vmatprep.mubr.f32.mxu0 0.0
        %9538 = vmatmul.mubr.f32.gmra.mxu0 %v9260
        %v9539 = vpop.f32.mrf.mxu0
        %v9540 = vadd.f32 0.0, %v9539
        %v9541 = vpop.f32.mrf.mxu0
        %9542 = vmatprep.mubr.f32.mxu0 0.0
        %9543 = vmatmul.mubr.f32.gmra.mxu0 %v9263
        %v9544 = vpop.f32.mrf.mxu0
        %v9545 = vadd.f32 0.0, %v9544
        %v9546 = vpop.f32.mrf.mxu0
        %9547 = vmatprep.mubr.f32.mxu0 0.0
        %9548 = vmatmul.mubr.f32.gmra.mxu0 %v9266
        %v9549 = vpop.f32.mrf.mxu0
        %v9550 = vpop.f32.mrf.mxu0
        %9551 = vmatprep.mubr.f32.mxu0 0.0
        %9552 = vmatmul.mubr.f32.gmra.mxu0 %v9269
        %v9553 = vpop.f32.mrf.mxu0
        %v9554 = vadd.f32 0.0, %v9553
        %v9555 = vpop.f32.mrf.mxu0
        %9556 = vmatprep.mubr.f32.mxu0 0.0
        %9557 = vmatmul.mubr.f32.gmra.mxu0 %v9272
        %v9558 = vpop.f32.mrf.mxu0
        %v9559 = vadd.f32 0.0, %v9558
        %v9560 = vpop.f32.mrf.mxu0
        %9561 = vmatprep.mubr.f32.mxu0 0.0
        %9562 = vmatmul.mubr.f32.gmra.mxu0 %v9275
        %v9563 = vpop.f32.mrf.mxu0
        %v9564 = vpop.f32.mrf.mxu0
        %9565 = vdwg.mxu0
        %v9566 = vadd.f32 %v9044, %v9344
        %v9567 = vadd.f32 %v9045, %v9349
        %v9568 = vadd.f32 %v9046, %v9358
        %v9569 = vadd.f32 %v9047, %v9363
        %v9570 = vadd.f32 %v9048, %v9372
        %v9571 = vadd.f32 %v9049, %v9377
        %v9572 = vadd.f32 %v9050, %v9386
        %v9573 = vadd.f32 %v9051, %v9391
        %v9574 = vadd.f32 %v9052, %v9400
        %v9575 = vadd.f32 %v9053, %v9405
        %v9576 = vadd.f32 %v9054, %v9414
        %v9577 = vadd.f32 %v9055, %v9419
        %v9578 = vadd.f32 %v9056, %v9428
        %v9579 = vadd.f32 %v9057, %v9433
        %v9580 = vadd.f32 %v9058, %v9442
        %v9581 = vadd.f32 %v9059, %v9447
        %v9582 = vadd.f32 %v9060, %v9456
        %v9583 = vadd.f32 %v9061, %v9461
        %v9584 = vadd.f32 %v9062, %v9470
        %v9585 = vadd.f32 %v9063, %v9475
        %v9586 = vadd.f32 %v9064, %v9484
        %v9587 = vadd.f32 %v9065, %v9489
        %v9588 = vadd.f32 %v9066, %v9498
        %v9589 = vadd.f32 %v9067, %v9503
        %v9590 = vadd.f32 %v9068, %v9512
        %v9591 = vadd.f32 %v9069, %v9517
        %v9592 = vadd.f32 %v9070, %v9526
        %v9593 = vadd.f32 %v9071, %v9531
        %v9594 = vadd.f32 %v9072, %v9540
        %v9595 = vadd.f32 %v9073, %v9545
        %v9596 = vadd.f32 %v9074, %v9554
        %v9597 = vadd.f32 %v9075, %v9559
        %v9598 = vld [vmem:[#allocation3 + $0x39] sm:$0xff]
        %v9599 = vld [vmem:[#allocation3 + $0x41] sm:$0xff]
        %v9600 = vld [vmem:[#allocation3 + $0x49] sm:$0xff]
        %v9601 = vld [vmem:[#allocation3 + $0x51] sm:$0xff]
        %v9602 = vld [vmem:[#allocation3 + $0x59] sm:$0xff]
        %v9603 = vld [vmem:[#allocation3 + $0x61] sm:$0xff]
        %v9604 = vld [vmem:[#allocation3 + $0x69] sm:$0xff]
        %v9605 = vld [vmem:[#allocation3 + $0x71] sm:$0xff]
        %v9606 = vld [vmem:[#allocation3 + $0x79] sm:$0xff]
        %v9607 = vld [vmem:[#allocation3 + $0x81] sm:$0xff]
        %v9608 = vld [vmem:[#allocation3 + $0x89] sm:$0xff]
        %v9609 = vld [vmem:[#allocation3 + $0x91] sm:$0xff]
        %v9610 = vld [vmem:[#allocation3 + $0x99] sm:$0xff]
        %v9611 = vld [vmem:[#allocation3 + $0xa1] sm:$0xff]
        %v9612 = vld [vmem:[#allocation3 + $0xa9] sm:$0xff]
        %v9613 = vld [vmem:[#allocation3 + $0xb1] sm:$0xff]
        %v9614 = vld [vmem:[#allocation3 + $0xb9] sm:$0xff]
        %v9615 = vld [vmem:[#allocation3 + $0xc1] sm:$0xff]
        %v9616 = vld [vmem:[#allocation3 + $0xc9] sm:$0xff]
        %v9617 = vld [vmem:[#allocation3 + $0xd1] sm:$0xff]
        %v9618 = vld [vmem:[#allocation3 + $0xd9] sm:$0xff]
        %v9619 = vld [vmem:[#allocation3 + $0xe1] sm:$0xff]
        %v9620 = vld [vmem:[#allocation3 + $0xe9] sm:$0xff]
        %v9621 = vld [vmem:[#allocation3 + $0xf1] sm:$0xff]
        %v9622 = vld [vmem:[#allocation3 + $0xf9] sm:$0xff]
        %v9623 = vld [vmem:[#allocation3 + $0x101] sm:$0xff]
        %v9624 = vld [vmem:[#allocation3 + $0x109] sm:$0xff]
        %v9625 = vld [vmem:[#allocation3 + $0x111] sm:$0xff]
        %v9626 = vld [vmem:[#allocation3 + $0x119] sm:$0xff]
        %v9627 = vld [vmem:[#allocation3 + $0x121] sm:$0xff]
        %v9628 = vld [vmem:[#allocation3 + $0x129] sm:$0xff]
        %v9629 = vld [vmem:[#allocation3 + $0x131] sm:$0xff]
        %v9630 = vld [vmem:[#allocation3 + $0x139] sm:$0xff]
        %v9631 = vld [vmem:[#allocation3 + $0x141] sm:$0xff]
        %v9632 = vld [vmem:[#allocation3 + $0x149] sm:$0xff]
        %v9633 = vld [vmem:[#allocation3 + $0x151] sm:$0xff]
        %v9634 = vld [vmem:[#allocation3 + $0x159] sm:$0xff]
        %v9635 = vld [vmem:[#allocation3 + $0x161] sm:$0xff]
        %v9636 = vld [vmem:[#allocation3 + $0x169] sm:$0xff]
        %v9637 = vld [vmem:[#allocation3 + $0x171] sm:$0xff]
        %v9638 = vld [vmem:[#allocation3 + $0x179] sm:$0xff]
        %v9639 = vld [vmem:[#allocation3 + $0x181] sm:$0xff]
        %v9640 = vld [vmem:[#allocation3 + $0x189] sm:$0xff]
        %v9641 = vld [vmem:[#allocation3 + $0x191] sm:$0xff]
        %v9642 = vld [vmem:[#allocation3 + $0x199] sm:$0xff]
        %v9643 = vld [vmem:[#allocation3 + $0x1a1] sm:$0xff]
        %v9644 = vld [vmem:[#allocation3 + $0x1a9] sm:$0xff]
        %v9645 = vld [vmem:[#allocation3 + $0x1b1] sm:$0xff]
        %s9646 = scalar_lea.vmem [#allocation4], 512
        %v9647 = vld [vmem:[%s9646] sm:$0xff]
        %v9648 = vld [vmem:[%s9646 + $0x8] sm:$0xff]
        %v9649 = vld [vmem:[%s9646 + $0x10] sm:$0xff]
        %v9650 = vld [vmem:[%s9646 + $0x18] sm:$0xff]
        %v9651 = vld [vmem:[%s9646 + $0x20] sm:$0xff]
        %v9652 = vld [vmem:[%s9646 + $0x28] sm:$0xff]
        %v9653 = vld [vmem:[%s9646 + $0x30] sm:$0xff]
        %v9654 = vld [vmem:[%s9646 + $0x38] sm:$0xff]
        %v9656 = vsel %vm240, %v9598, 0
        %v9659 = vsel %vm240, %v9599, 0
        %v9662 = vsel %vm240, %v9600, 0
        %v9665 = vsel %vm240, %v9601, 0
        %v9668 = vsel %vm240, %v9602, 0
        %v9671 = vsel %vm240, %v9603, 0
        %v9674 = vsel %vm240, %v9604, 0
        %v9677 = vsel %vm240, %v9605, 0
        %v9680 = vsel %vm240, %v9606, 0
        %v9683 = vsel %vm240, %v9607, 0
        %v9686 = vsel %vm240, %v9608, 0
        %v9689 = vsel %vm240, %v9609, 0
        %v9692 = vsel %vm240, %v9610, 0
        %v9695 = vsel %vm240, %v9611, 0
        %v9698 = vsel %vm240, %v9612, 0
        %v9701 = vsel %vm240, %v9613, 0
        %v9704 = vsel %vm240, %v9614, 0
        %v9707 = vsel %vm240, %v9615, 0
        %v9710 = vsel %vm240, %v9616, 0
        %v9713 = vsel %vm240, %v9617, 0
        %v9716 = vsel %vm240, %v9618, 0
        %v9719 = vsel %vm240, %v9619, 0
        %v9722 = vsel %vm240, %v9620, 0
        %v9725 = vsel %vm240, %v9621, 0
        %v9728 = vsel %vm240, %v9622, 0
        %v9731 = vsel %vm240, %v9623, 0
        %v9734 = vsel %vm240, %v9624, 0
        %v9737 = vsel %vm240, %v9625, 0
        %v9740 = vsel %vm240, %v9626, 0
        %v9743 = vsel %vm240, %v9627, 0
        %v9746 = vsel %vm240, %v9628, 0
        %v9749 = vsel %vm240, %v9629, 0
        %v9752 = vsel %vm240, %v9630, 0
        %v9755 = vsel %vm240, %v9631, 0
        %v9758 = vsel %vm240, %v9632, 0
        %v9761 = vsel %vm240, %v9633, 0
        %v9764 = vsel %vm240, %v9634, 0
        %v9767 = vsel %vm240, %v9635, 0
        %v9770 = vsel %vm240, %v9636, 0
        %v9773 = vsel %vm240, %v9637, 0
        %v9776 = vsel %vm240, %v9638, 0
        %v9779 = vsel %vm240, %v9639, 0
        %v9782 = vsel %vm240, %v9640, 0
        %v9785 = vsel %vm240, %v9641, 0
        %v9788 = vsel %vm240, %v9642, 0
        %v9791 = vsel %vm240, %v9643, 0
        %v9794 = vsel %vm240, %v9644, 0
        %v9797 = vsel %vm240, %v9645, 0
        %9799 = vmatprep.subr.mxu0 0.0
        %9800 = vmatpush1.msra.mxu0 0.0
        %9801 = vmatprep.subr.mxu0 0.0
        %9802 = vmatpush1.msra.mxu0 0.0
        %9803 = vmatprep.subr.mxu0 0.0
        %9804 = vmatpush1.msra.mxu0 0.0
        %9805 = vmatprep.subr.mxu0 0.0
        %9806 = vmatpush1.msra.mxu0 0.0
        %9807 = vmatprep.subr.mxu0 0.0
        %9808 = vmatpush1.msra.mxu0 0.0
        %9809 = vmatprep.subr.mxu0 0.0
        %9810 = vmatpush1.msra.mxu0 0.0
        %9811 = vmatprep.subr.mxu0 0.0
        %9812 = vmatpush1.msra.mxu0 0.0
        %9813 = vmatprep.subr.mxu0 0.0
        %9814 = vmatpush1.msra.mxu0 0.0
        %9815 = vmatprep.subr.mxu0 0.0
        %9816 = vmatpush1.msra.mxu0 %v9654
        %9817 = vmatprep.subr.mxu0 0.0
        %9818 = vmatpush1.msra.mxu0 %v9653
        %9819 = vmatprep.subr.mxu0 0.0
        %9820 = vmatpush1.msra.mxu0 %v9652
        %9821 = vmatprep.subr.mxu0 0.0
        %9822 = vmatpush1.msra.mxu0 %v9651
        %9823 = vmatprep.subr.mxu0 0.0
        %9824 = vmatpush1.msra.mxu0 %v9650
        %9825 = vmatprep.subr.mxu0 0.0
        %9826 = vmatpush1.msra.mxu0 %v9649
        %9827 = vmatprep.subr.mxu0 0.0
        %9828 = vmatpush1.msra.mxu0 %v9648
        %9829 = vmatprep.subr.mxu0 0.0
        %9830 = vmatpush1.msra.mxu0 %v9647
        %9831 = vmatprep.subr.mxu0 0.0
        %9832 = vmatpush2.msra.mxu0 0.0
        %9833 = vmatprep.subr.mxu0 0.0
        %9834 = vmatpush2.msra.mxu0 0.0
        %9835 = vmatprep.subr.mxu0 0.0
        %9836 = vmatpush2.msra.mxu0 0.0
        %9837 = vmatprep.subr.mxu0 0.0
        %9838 = vmatpush2.msra.mxu0 0.0
        %9839 = vmatprep.subr.mxu0 0.0
        %9840 = vmatpush2.msra.mxu0 0.0
        %9841 = vmatprep.subr.mxu0 0.0
        %9842 = vmatpush2.msra.mxu0 0.0
        %9843 = vmatprep.subr.mxu0 0.0
        %9844 = vmatpush2.msra.mxu0 0.0
        %9845 = vmatprep.subr.mxu0 0.0
        %9846 = vmatpush2.msra.mxu0 0.0
        %9847 = vmatprep.subr.mxu0 0.0
        %9848 = vmatpush2.msra.mxu0 0.0
        %9849 = vmatprep.subr.mxu0 0.0
        %9850 = vmatpush2.msra.mxu0 0.0
        %9851 = vmatprep.subr.mxu0 0.0
        %9852 = vmatpush2.msra.mxu0 0.0
        %9853 = vmatprep.subr.mxu0 0.0
        %9854 = vmatpush2.msra.mxu0 0.0
        %9855 = vmatprep.subr.mxu0 0.0
        %9856 = vmatpush2.msra.mxu0 0.0
        %9857 = vmatprep.subr.mxu0 0.0
        %9858 = vmatpush2.msra.mxu0 0.0
        %9859 = vmatprep.subr.mxu0 0.0
        %9860 = vmatpush2.msra.mxu0 0.0
        %9861 = vmatprep.subr.mxu0 0.0
        %9862 = vmatpush2.msra.mxu0 0.0
        %9863 = vmatprep.mubr.f32.mxu0 0.0
        %9864 = vmatmul.mubr.f32.gmra.mxu0 %v9656
        %v9865 = vpop.f32.mrf.mxu0
        %v9866 = vadd.f32 0.0, %v9865
        %v9867 = vpop.f32.mrf.mxu0
        %9868 = vmatprep.mubr.f32.mxu0 0.0
        %9869 = vmatmul.mubr.f32.gmra.mxu0 %v9659
        %v9870 = vpop.f32.mrf.mxu0
        %v9871 = vadd.f32 0.0, %v9870
        %v9872 = vpop.f32.mrf.mxu0
        %9873 = vmatprep.mubr.f32.mxu0 0.0
        %9874 = vmatmul.mubr.f32.gmra.mxu0 %v9662
        %v9875 = vpop.f32.mrf.mxu0
        %v9876 = vpop.f32.mrf.mxu0
        %9877 = vmatprep.mubr.f32.mxu0 0.0
        %9878 = vmatmul.mubr.f32.gmra.mxu0 %v9665
        %v9879 = vpop.f32.mrf.mxu0
        %v9880 = vadd.f32 0.0, %v9879
        %v9881 = vpop.f32.mrf.mxu0
        %9882 = vmatprep.mubr.f32.mxu0 0.0
        %9883 = vmatmul.mubr.f32.gmra.mxu0 %v9668
        %v9884 = vpop.f32.mrf.mxu0
        %v9885 = vadd.f32 0.0, %v9884
        %v9886 = vpop.f32.mrf.mxu0
        %9887 = vmatprep.mubr.f32.mxu0 0.0
        %9888 = vmatmul.mubr.f32.gmra.mxu0 %v9671
        %v9889 = vpop.f32.mrf.mxu0
        %v9890 = vpop.f32.mrf.mxu0
        %9891 = vmatprep.mubr.f32.mxu0 0.0
        %9892 = vmatmul.mubr.f32.gmra.mxu0 %v9674
        %v9893 = vpop.f32.mrf.mxu0
        %v9894 = vadd.f32 0.0, %v9893
        %v9895 = vpop.f32.mrf.mxu0
        %9896 = vmatprep.mubr.f32.mxu0 0.0
        %9897 = vmatmul.mubr.f32.gmra.mxu0 %v9677
        %v9898 = vpop.f32.mrf.mxu0
        %v9899 = vadd.f32 0.0, %v9898
        %v9900 = vpop.f32.mrf.mxu0
        %9901 = vmatprep.mubr.f32.mxu0 0.0
        %9902 = vmatmul.mubr.f32.gmra.mxu0 %v9680
        %v9903 = vpop.f32.mrf.mxu0
        %v9904 = vpop.f32.mrf.mxu0
        %9905 = vmatprep.mubr.f32.mxu0 0.0
        %9906 = vmatmul.mubr.f32.gmra.mxu0 %v9683
        %v9907 = vpop.f32.mrf.mxu0
        %v9908 = vadd.f32 0.0, %v9907
        %v9909 = vpop.f32.mrf.mxu0
        %9910 = vmatprep.mubr.f32.mxu0 0.0
        %9911 = vmatmul.mubr.f32.gmra.mxu0 %v9686
        %v9912 = vpop.f32.mrf.mxu0
        %v9913 = vadd.f32 0.0, %v9912
        %v9914 = vpop.f32.mrf.mxu0
        %9915 = vmatprep.mubr.f32.mxu0 0.0
        %9916 = vmatmul.mubr.f32.gmra.mxu0 %v9689
        %v9917 = vpop.f32.mrf.mxu0
        %v9918 = vpop.f32.mrf.mxu0
        %9919 = vmatprep.mubr.f32.mxu0 0.0
        %9920 = vmatmul.mubr.f32.gmra.mxu0 %v9692
        %v9921 = vpop.f32.mrf.mxu0
        %v9922 = vadd.f32 0.0, %v9921
        %v9923 = vpop.f32.mrf.mxu0
        %9924 = vmatprep.mubr.f32.mxu0 0.0
        %9925 = vmatmul.mubr.f32.gmra.mxu0 %v9695
        %v9926 = vpop.f32.mrf.mxu0
        %v9927 = vadd.f32 0.0, %v9926
        %v9928 = vpop.f32.mrf.mxu0
        %9929 = vmatprep.mubr.f32.mxu0 0.0
        %9930 = vmatmul.mubr.f32.gmra.mxu0 %v9698
        %v9931 = vpop.f32.mrf.mxu0
        %v9932 = vpop.f32.mrf.mxu0
        %9933 = vmatprep.mubr.f32.mxu0 0.0
        %9934 = vmatmul.mubr.f32.gmra.mxu0 %v9701
        %v9935 = vpop.f32.mrf.mxu0
        %v9936 = vadd.f32 0.0, %v9935
        %v9937 = vpop.f32.mrf.mxu0
        %9938 = vmatprep.mubr.f32.mxu0 0.0
        %9939 = vmatmul.mubr.f32.gmra.mxu0 %v9704
        %v9940 = vpop.f32.mrf.mxu0
        %v9941 = vadd.f32 0.0, %v9940
        %v9942 = vpop.f32.mrf.mxu0
        %9943 = vmatprep.mubr.f32.mxu0 0.0
        %9944 = vmatmul.mubr.f32.gmra.mxu0 %v9707
        %v9945 = vpop.f32.mrf.mxu0
        %v9946 = vpop.f32.mrf.mxu0
        %9947 = vmatprep.mubr.f32.mxu0 0.0
        %9948 = vmatmul.mubr.f32.gmra.mxu0 %v9710
        %v9949 = vpop.f32.mrf.mxu0
        %v9950 = vadd.f32 0.0, %v9949
        %v9951 = vpop.f32.mrf.mxu0
        %9952 = vmatprep.mubr.f32.mxu0 0.0
        %9953 = vmatmul.mubr.f32.gmra.mxu0 %v9713
        %v9954 = vpop.f32.mrf.mxu0
        %v9955 = vadd.f32 0.0, %v9954
        %v9956 = vpop.f32.mrf.mxu0
        %9957 = vmatprep.mubr.f32.mxu0 0.0
        %9958 = vmatmul.mubr.f32.gmra.mxu0 %v9716
        %v9959 = vpop.f32.mrf.mxu0
        %v9960 = vpop.f32.mrf.mxu0
        %9961 = vmatprep.mubr.f32.mxu0 0.0
        %9962 = vmatmul.mubr.f32.gmra.mxu0 %v9719
        %v9963 = vpop.f32.mrf.mxu0
        %v9964 = vadd.f32 0.0, %v9963
        %v9965 = vpop.f32.mrf.mxu0
        %9966 = vmatprep.mubr.f32.mxu0 0.0
        %9967 = vmatmul.mubr.f32.gmra.mxu0 %v9722
        %v9968 = vpop.f32.mrf.mxu0
        %v9969 = vadd.f32 0.0, %v9968
        %v9970 = vpop.f32.mrf.mxu0
        %9971 = vmatprep.mubr.f32.mxu0 0.0
        %9972 = vmatmul.mubr.f32.gmra.mxu0 %v9725
        %v9973 = vpop.f32.mrf.mxu0
        %v9974 = vpop.f32.mrf.mxu0
        %9975 = vmatprep.mubr.f32.mxu0 0.0
        %9976 = vmatmul.mubr.f32.gmra.mxu0 %v9728
        %v9977 = vpop.f32.mrf.mxu0
        %v9978 = vadd.f32 0.0, %v9977
        %v9979 = vpop.f32.mrf.mxu0
        %9980 = vmatprep.mubr.f32.mxu0 0.0
        %9981 = vmatmul.mubr.f32.gmra.mxu0 %v9731
        %v9982 = vpop.f32.mrf.mxu0
        %v9983 = vadd.f32 0.0, %v9982
        %v9984 = vpop.f32.mrf.mxu0
        %9985 = vmatprep.mubr.f32.mxu0 0.0
        %9986 = vmatmul.mubr.f32.gmra.mxu0 %v9734
        %v9987 = vpop.f32.mrf.mxu0
        %v9988 = vpop.f32.mrf.mxu0
        %9989 = vmatprep.mubr.f32.mxu0 0.0
        %9990 = vmatmul.mubr.f32.gmra.mxu0 %v9737
        %v9991 = vpop.f32.mrf.mxu0
        %v9992 = vadd.f32 0.0, %v9991
        %v9993 = vpop.f32.mrf.mxu0
        %9994 = vmatprep.mubr.f32.mxu0 0.0
        %9995 = vmatmul.mubr.f32.gmra.mxu0 %v9740
        %v9996 = vpop.f32.mrf.mxu0
        %v9997 = vadd.f32 0.0, %v9996
        %v9998 = vpop.f32.mrf.mxu0
        %9999 = vmatprep.mubr.f32.mxu0 0.0
        %10000 = vmatmul.mubr.f32.gmra.mxu0 %v9743
        %v10001 = vpop.f32.mrf.mxu0
        %v10002 = vpop.f32.mrf.mxu0
        %10003 = vmatprep.mubr.f32.mxu0 0.0
        %10004 = vmatmul.mubr.f32.gmra.mxu0 %v9746
        %v10005 = vpop.f32.mrf.mxu0
        %v10006 = vadd.f32 0.0, %v10005
        %v10007 = vpop.f32.mrf.mxu0
        %10008 = vmatprep.mubr.f32.mxu0 0.0
        %10009 = vmatmul.mubr.f32.gmra.mxu0 %v9749
        %v10010 = vpop.f32.mrf.mxu0
        %v10011 = vadd.f32 0.0, %v10010
        %v10012 = vpop.f32.mrf.mxu0
        %10013 = vmatprep.mubr.f32.mxu0 0.0
        %10014 = vmatmul.mubr.f32.gmra.mxu0 %v9752
        %v10015 = vpop.f32.mrf.mxu0
        %v10016 = vpop.f32.mrf.mxu0
        %10017 = vmatprep.mubr.f32.mxu0 0.0
        %10018 = vmatmul.mubr.f32.gmra.mxu0 %v9755
        %v10019 = vpop.f32.mrf.mxu0
        %v10020 = vadd.f32 0.0, %v10019
        %v10021 = vpop.f32.mrf.mxu0
        %10022 = vmatprep.mubr.f32.mxu0 0.0
        %10023 = vmatmul.mubr.f32.gmra.mxu0 %v9758
        %v10024 = vpop.f32.mrf.mxu0
        %v10025 = vadd.f32 0.0, %v10024
        %v10026 = vpop.f32.mrf.mxu0
        %10027 = vmatprep.mubr.f32.mxu0 0.0
        %10028 = vmatmul.mubr.f32.gmra.mxu0 %v9761
        %v10029 = vpop.f32.mrf.mxu0
        %v10030 = vpop.f32.mrf.mxu0
        %10031 = vmatprep.mubr.f32.mxu0 0.0
        %10032 = vmatmul.mubr.f32.gmra.mxu0 %v9764
        %v10033 = vpop.f32.mrf.mxu0
        %v10034 = vadd.f32 0.0, %v10033
        %v10035 = vpop.f32.mrf.mxu0
        %10036 = vmatprep.mubr.f32.mxu0 0.0
        %10037 = vmatmul.mubr.f32.gmra.mxu0 %v9767
        %v10038 = vpop.f32.mrf.mxu0
        %v10039 = vadd.f32 0.0, %v10038
        %v10040 = vpop.f32.mrf.mxu0
        %10041 = vmatprep.mubr.f32.mxu0 0.0
        %10042 = vmatmul.mubr.f32.gmra.mxu0 %v9770
        %v10043 = vpop.f32.mrf.mxu0
        %v10044 = vpop.f32.mrf.mxu0
        %10045 = vmatprep.mubr.f32.mxu0 0.0
        %10046 = vmatmul.mubr.f32.gmra.mxu0 %v9773
        %v10047 = vpop.f32.mrf.mxu0
        %v10048 = vadd.f32 0.0, %v10047
        %v10049 = vpop.f32.mrf.mxu0
        %10050 = vmatprep.mubr.f32.mxu0 0.0
        %10051 = vmatmul.mubr.f32.gmra.mxu0 %v9776
        %v10052 = vpop.f32.mrf.mxu0
        %v10053 = vadd.f32 0.0, %v10052
        %v10054 = vpop.f32.mrf.mxu0
        %10055 = vmatprep.mubr.f32.mxu0 0.0
        %10056 = vmatmul.mubr.f32.gmra.mxu0 %v9779
        %v10057 = vpop.f32.mrf.mxu0
        %v10058 = vpop.f32.mrf.mxu0
        %10059 = vmatprep.mubr.f32.mxu0 0.0
        %10060 = vmatmul.mubr.f32.gmra.mxu0 %v9782
        %v10061 = vpop.f32.mrf.mxu0
        %v10062 = vadd.f32 0.0, %v10061
        %v10063 = vpop.f32.mrf.mxu0
        %10064 = vmatprep.mubr.f32.mxu0 0.0
        %10065 = vmatmul.mubr.f32.gmra.mxu0 %v9785
        %v10066 = vpop.f32.mrf.mxu0
        %v10067 = vadd.f32 0.0, %v10066
        %v10068 = vpop.f32.mrf.mxu0
        %10069 = vmatprep.mubr.f32.mxu0 0.0
        %10070 = vmatmul.mubr.f32.gmra.mxu0 %v9788
        %v10071 = vpop.f32.mrf.mxu0
        %v10072 = vpop.f32.mrf.mxu0
        %10073 = vmatprep.mubr.f32.mxu0 0.0
        %10074 = vmatmul.mubr.f32.gmra.mxu0 %v9791
        %v10075 = vpop.f32.mrf.mxu0
        %v10076 = vadd.f32 0.0, %v10075
        %v10077 = vpop.f32.mrf.mxu0
        %10078 = vmatprep.mubr.f32.mxu0 0.0
        %10079 = vmatmul.mubr.f32.gmra.mxu0 %v9794
        %v10080 = vpop.f32.mrf.mxu0
        %v10081 = vadd.f32 0.0, %v10080
        %v10082 = vpop.f32.mrf.mxu0
        %10083 = vmatprep.mubr.f32.mxu0 0.0
        %10084 = vmatmul.mubr.f32.gmra.mxu0 %v9797
        %v10085 = vpop.f32.mrf.mxu0
        %v10086 = vpop.f32.mrf.mxu0
        %10087 = vdwg.mxu0
        %v10088 = vadd.f32 %v9566, %v9866
        %v10089 = vadd.f32 %v9567, %v9871
        %v10090 = vadd.f32 %v9568, %v9880
        %v10091 = vadd.f32 %v9569, %v9885
        %v10092 = vadd.f32 %v9570, %v9894
        %v10093 = vadd.f32 %v9571, %v9899
        %v10094 = vadd.f32 %v9572, %v9908
        %v10095 = vadd.f32 %v9573, %v9913
        %v10096 = vadd.f32 %v9574, %v9922
        %v10097 = vadd.f32 %v9575, %v9927
        %v10098 = vadd.f32 %v9576, %v9936
        %v10099 = vadd.f32 %v9577, %v9941
        %v10100 = vadd.f32 %v9578, %v9950
        %v10101 = vadd.f32 %v9579, %v9955
        %v10102 = vadd.f32 %v9580, %v9964
        %v10103 = vadd.f32 %v9581, %v9969
        %v10104 = vadd.f32 %v9582, %v9978
        %v10105 = vadd.f32 %v9583, %v9983
        %v10106 = vadd.f32 %v9584, %v9992
        %v10107 = vadd.f32 %v9585, %v9997
        %v10108 = vadd.f32 %v9586, %v10006
        %v10109 = vadd.f32 %v9587, %v10011
        %v10110 = vadd.f32 %v9588, %v10020
        %v10111 = vadd.f32 %v9589, %v10025
        %v10112 = vadd.f32 %v9590, %v10034
        %v10113 = vadd.f32 %v9591, %v10039
        %v10114 = vadd.f32 %v9592, %v10048
        %v10115 = vadd.f32 %v9593, %v10053
        %v10116 = vadd.f32 %v9594, %v10062
        %v10117 = vadd.f32 %v9595, %v10067
        %v10118 = vadd.f32 %v9596, %v10076
        %v10119 = vadd.f32 %v9597, %v10081
        %v10121 = vlaneseq
        %v10122 = vshrl.u32 %v10121, 7
        %v10123 = vsub.s32 0, %v10122
        %v10124 = vrot.slane %v399, %v10123
        %v10126 = vadd.f32 %v10088, %v10124
        %v10127 = vadd.f32 %v10089, %v10124
        %v10128 = vadd.f32 %v10090, %v10124
        %v10129 = vadd.f32 %v10091, %v10124
        %v10130 = vadd.f32 %v10092, %v10124
        %v10131 = vadd.f32 %v10093, %v10124
        %v10132 = vadd.f32 %v10094, %v10124
        %v10133 = vadd.f32 %v10095, %v10124
        %v10134 = vadd.f32 %v10096, %v10124
        %v10135 = vadd.f32 %v10097, %v10124
        %v10136 = vadd.f32 %v10098, %v10124
        %v10137 = vadd.f32 %v10099, %v10124
        %v10138 = vadd.f32 %v10100, %v10124
        %v10139 = vadd.f32 %v10101, %v10124
        %v10140 = vadd.f32 %v10102, %v10124
        %v10141 = vadd.f32 %v10103, %v10124
        %v10142 = vadd.f32 %v10104, %v10124
        %v10143 = vadd.f32 %v10105, %v10124
        %v10144 = vadd.f32 %v10106, %v10124
        %v10145 = vadd.f32 %v10107, %v10124
        %v10146 = vadd.f32 %v10108, %v10124
        %v10147 = vadd.f32 %v10109, %v10124
        %v10148 = vadd.f32 %v10110, %v10124
        %v10149 = vadd.f32 %v10111, %v10124
        %v10150 = vadd.f32 %v10112, %v10124
        %v10151 = vadd.f32 %v10113, %v10124
        %v10152 = vadd.f32 %v10114, %v10124
        %v10153 = vadd.f32 %v10115, %v10124
        %v10154 = vadd.f32 %v10116, %v10124
        %v10155 = vadd.f32 %v10117, %v10124
        %v10156 = vadd.f32 %v10118, %v10124
        %v10157 = vadd.f32 %v10119, %v10124
        %v10158 = vld [vmem:[#allocation2 + $0x20] sm:$0xff]
        %v10159 = vld [vmem:[#allocation2 + $0x28] sm:$0xff]
        %v10160 = vld [vmem:[#allocation2 + $0x38] sm:$0xff]
        %v10161 = vld [vmem:[#allocation2 + $0x40] sm:$0xff]
        %v10162 = vld [vmem:[#allocation2 + $0x50] sm:$0xff]
        %v10163 = vld [vmem:[#allocation2 + $0x58] sm:$0xff]
        %v10164 = vld [vmem:[#allocation2 + $0x68] sm:$0xff]
        %v10165 = vld [vmem:[#allocation2 + $0x70] sm:$0xff]
        %v10166 = vld [vmem:[#allocation2 + $0x80] sm:$0xff]
        %v10167 = vld [vmem:[#allocation2 + $0x88] sm:$0xff]
        %v10168 = vld [vmem:[#allocation2 + $0x98] sm:$0xff]
        %v10169 = vld [vmem:[#allocation2 + $0xa0] sm:$0xff]
        %v10170 = vld [vmem:[#allocation2 + $0xb0] sm:$0xff]
        %v10171 = vld [vmem:[#allocation2 + $0xb8] sm:$0xff]
        %v10172 = vld [vmem:[#allocation2 + $0xc8] sm:$0xff]
        %v10173 = vld [vmem:[#allocation2 + $0xd0] sm:$0xff]
        %v10174 = vld [vmem:[#allocation2 + $0xe0] sm:$0xff]
        %v10175 = vld [vmem:[#allocation2 + $0xe8] sm:$0xff]
        %v10176 = vld [vmem:[#allocation2 + $0xf8] sm:$0xff]
        %v10177 = vld [vmem:[#allocation2 + $0x100] sm:$0xff]
        %v10178 = vld [vmem:[#allocation2 + $0x110] sm:$0xff]
        %v10179 = vld [vmem:[#allocation2 + $0x118] sm:$0xff]
        %v10180 = vld [vmem:[#allocation2 + $0x128] sm:$0xff]
        %v10181 = vld [vmem:[#allocation2 + $0x130] sm:$0xff]
        %v10182 = vld [vmem:[#allocation2 + $0x140] sm:$0xff]
        %v10183 = vld [vmem:[#allocation2 + $0x148] sm:$0xff]
        %v10184 = vld [vmem:[#allocation2 + $0x158] sm:$0xff]
        %v10185 = vld [vmem:[#allocation2 + $0x160] sm:$0xff]
        %v10186 = vld [vmem:[#allocation2 + $0x170] sm:$0xff]
        %v10187 = vld [vmem:[#allocation2 + $0x178] sm:$0xff]
        %v10188 = vld [vmem:[#allocation2 + $0x188] sm:$0xff]
        %v10189 = vld [vmem:[#allocation2 + $0x190] sm:$0xff]
        %v10190 = vadd.f32 %v10126, %v10158
        %v10191 = vadd.f32 %v10127, %v10159
        %v10192 = vadd.f32 %v10128, %v10160
        %v10193 = vadd.f32 %v10129, %v10161
        %v10194 = vadd.f32 %v10130, %v10162
        %v10195 = vadd.f32 %v10131, %v10163
        %v10196 = vadd.f32 %v10132, %v10164
        %v10197 = vadd.f32 %v10133, %v10165
        %v10198 = vadd.f32 %v10134, %v10166
        %v10199 = vadd.f32 %v10135, %v10167
        %v10200 = vadd.f32 %v10136, %v10168
        %v10201 = vadd.f32 %v10137, %v10169
        %v10202 = vadd.f32 %v10138, %v10170
        %v10203 = vadd.f32 %v10139, %v10171
        %v10204 = vadd.f32 %v10140, %v10172
        %v10205 = vadd.f32 %v10141, %v10173
        %v10206 = vadd.f32 %v10142, %v10174
        %v10207 = vadd.f32 %v10143, %v10175
        %v10208 = vadd.f32 %v10144, %v10176
        %v10209 = vadd.f32 %v10145, %v10177
        %v10210 = vadd.f32 %v10146, %v10178
        %v10211 = vadd.f32 %v10147, %v10179
        %v10212 = vadd.f32 %v10148, %v10180
        %v10213 = vadd.f32 %v10149, %v10181
        %v10214 = vadd.f32 %v10150, %v10182
        %v10215 = vadd.f32 %v10151, %v10183
        %v10216 = vadd.f32 %v10152, %v10184
        %v10217 = vadd.f32 %v10153, %v10185
        %v10218 = vadd.f32 %v10154, %v10186
        %v10219 = vadd.f32 %v10155, %v10187
        %v10220 = vadd.f32 %v10156, %v10188
        %v10221 = vadd.f32 %v10157, %v10189
        %10222 = vxpose.xlu0.b32.start [1/16] %v10190, 128
        %10223 = vxpose.xlu0.b32.cont [2/16] %v10191, 128
        %10224 = vxpose.xlu0.b32.cont [3/16] %v10192, 128
        %10225 = vxpose.xlu0.b32.cont [4/16] %v10193, 128
        %10226 = vxpose.xlu0.b32.cont [5/16] %v10194, 128
        %10227 = vxpose.xlu0.b32.cont [6/16] %v10195, 128
        %10228 = vxpose.xlu0.b32.cont [7/16] %v10196, 128
        %10229 = vxpose.xlu0.b32.cont [8/16] %v10197, 128
        %10230 = vxpose.xlu0.b32.cont [9/16] %v10198, 128
        %10231 = vxpose.xlu0.b32.cont [10/16] %v10199, 128
        %10232 = vxpose.xlu0.b32.cont [11/16] %v10200, 128
        %10233 = vxpose.xlu0.b32.cont [12/16] %v10201, 128
        %10234 = vxpose.xlu0.b32.cont [13/16] %v10202, 128
        %10235 = vxpose.xlu0.b32.cont [14/16] %v10203, 128
        %10236 = vxpose.xlu0.b32.cont [15/16] %v10204, 128
        %10237 = vxpose.xlu0.b32.end [16/16] %v10205, 128
        %v10238 = vpop.trf.xlu0
        %v10239 = vpop.trf.xlu0
        %v10240 = vpop.trf.xlu0
        %v10241 = vpop.trf.xlu0
        %v10242 = vpop.trf.xlu0
        %v10243 = vpop.trf.xlu0
        %v10244 = vpop.trf.xlu0
        %v10245 = vpop.trf.xlu0
        %v10246 = vpop.trf.xlu0
        %v10247 = vpop.trf.xlu0
        %v10248 = vpop.trf.xlu0
        %v10249 = vpop.trf.xlu0
        %v10250 = vpop.trf.xlu0
        %v10251 = vpop.trf.xlu0
        %v10252 = vpop.trf.xlu0
        %v10253 = vpop.trf.xlu0
        %10254 = vxpose.xlu0.b32.start [1/16] %v10206, 128
        %10255 = vxpose.xlu0.b32.cont [2/16] %v10207, 128
        %10256 = vxpose.xlu0.b32.cont [3/16] %v10208, 128
        %10257 = vxpose.xlu0.b32.cont [4/16] %v10209, 128
        %10258 = vxpose.xlu0.b32.cont [5/16] %v10210, 128
        %10259 = vxpose.xlu0.b32.cont [6/16] %v10211, 128
        %10260 = vxpose.xlu0.b32.cont [7/16] %v10212, 128
        %10261 = vxpose.xlu0.b32.cont [8/16] %v10213, 128
        %10262 = vxpose.xlu0.b32.cont [9/16] %v10214, 128
        %10263 = vxpose.xlu0.b32.cont [10/16] %v10215, 128
        %10264 = vxpose.xlu0.b32.cont [11/16] %v10216, 128
        %10265 = vxpose.xlu0.b32.cont [12/16] %v10217, 128
        %10266 = vxpose.xlu0.b32.cont [13/16] %v10218, 128
        %10267 = vxpose.xlu0.b32.cont [14/16] %v10219, 128
        %10268 = vxpose.xlu0.b32.cont [15/16] %v10220, 128
        %10269 = vxpose.xlu0.b32.end [16/16] %v10221, 128
        %v10270 = vpop.trf.xlu0
        %v10271 = vpop.trf.xlu0
        %v10272 = vpop.trf.xlu0
        %v10273 = vpop.trf.xlu0
        %v10274 = vpop.trf.xlu0
        %v10275 = vpop.trf.xlu0
        %v10276 = vpop.trf.xlu0
        %v10277 = vpop.trf.xlu0
        %v10278 = vpop.trf.xlu0
        %v10279 = vpop.trf.xlu0
        %v10280 = vpop.trf.xlu0
        %v10281 = vpop.trf.xlu0
        %v10282 = vpop.trf.xlu0
        %v10283 = vpop.trf.xlu0
        %v10284 = vpop.trf.xlu0
        %v10285 = vpop.trf.xlu0
        %10286 = vst [vmem:[%s239] sm:$0xff] %v10238
        %10287 = vst [vmem:[%s239 + $0x8] sm:$0xff] %v10270
        %10288 = vst [vmem:[%s239 + $0x10] sm:$0xff] %v10239
        %10289 = vst [vmem:[%s239 + $0x18] sm:$0xff] %v10271
        %10290 = vst [vmem:[%s239 + $0x20] sm:$0xff] %v10240
        %10291 = vst [vmem:[%s239 + $0x28] sm:$0xff] %v10272
        %10292 = vst [vmem:[%s239 + $0x30] sm:$0xff] %v10241
        %10293 = vst [vmem:[%s239 + $0x38] sm:$0xff] %v10273
        %10294 = vst [vmem:[%s239 + $0x40] sm:$0xff] %v10242
        %10295 = vst [vmem:[%s239 + $0x48] sm:$0xff] %v10274
        %10296 = vst [vmem:[%s239 + $0x50] sm:$0xff] %v10243
        %10297 = vst [vmem:[%s239 + $0x58] sm:$0xff] %v10275
        %10298 = vst [vmem:[%s239 + $0x60] sm:$0xff] %v10244
        %10299 = vst [vmem:[%s239 + $0x68] sm:$0xff] %v10276
        %10300 = vst [vmem:[%s239 + $0x70] sm:$0xff] %v10245
        %10301 = vst [vmem:[%s239 + $0x78] sm:$0xff] %v10277
        %p10302 = scmp.lt.s32.totalorder %s17, 1
        %s10303 = scalar_select %p10302, %s17, 1
        %s10304 = smul.addr %s10303, 16
        %s10305 = smul.addr %s10304, 8
        %s10306 = scalar_lea.vmem %s5, %s10305
        // Predicated region
        $region45: #{residual_block_pallas.1} parent=39 // pred_check
          %p10307 = pneg %p145
        $region46: #{residual_block_pallas.1} parent=39 // pred_check_branch
          %10309 = sbr.rel (%p10307) target = $region48
        $region47: #{residual_block_pallas.1} parent=39 // pred_region
          _
        $region48: #{residual_block_pallas.1} parent=39 // pred_fallthru
          _
      $region40: #{residual_block_pallas.1} parent=5 // pred_fallthru
        _
      %p10310 = scmp.le.s32.totalorder 2, %s12
      // Predicated region
      $region49: #{residual_block_pallas.1} parent=5 // pred_check
        %p10311 = pneg %p10310
      $region50: #{residual_block_pallas.1} parent=5 // pred_check_branch
        %10313 = sbr.rel (%p10311) target = $region52
      $region51: #{residual_block_pallas.1} parent=5 // pred_region
        %s10314 = ssub.s32 %s12, 2
        // Predicated region
        $region53: #{residual_block_pallas.1} parent=51 // pred_check
          %p10315 = pneg %p151
        $region54: #{residual_block_pallas.1} parent=51 // pred_check_branch
          %10317 = sbr.rel (%p10315) target = $region56
        $region55: #{residual_block_pallas.1} parent=51 // pred_region
          %p10318 = scmp.lt.s32.totalorder %s18, 1
          %s10319 = scalar_select %p10318, %s18, 1
          %s10320 = smul.addr %s10319, 16
          %s10321 = smul.addr %s10320, 8
          %s10322 = scalar_lea.vmem %s5, %s10321
        $region56: #{residual_block_pallas.1} parent=51 // pred_fallthru
          _
      $region52: #{residual_block_pallas.1} parent=5 // pred_fallthru
        _
    $region6: #{residual_block_pallas.1} parent=1 // loop_footer
      %s16 = sadd.s32 1, %s12
    $region7: #{residual_block_pallas.1} parent=1 // loop_footer_branch
      %11 = sbr.rel target = $region3
    $region8: #{residual_block_pallas.1} parent=1 // loop_exit
      _
    %10323 = vsyncpa [#allocation5], 1
    %s10324 = scalar_lea.sflag [#allocation5], 1
    %10325 = vsyncpa %s10324, 1

</llo_original>
